<compile_context>
chip_gen: v7x
topology: tpu7x:2x2x1
jax: 0.10.0
libtpu: 0.0.40
codegen_flags: <defaults>
</compile_context>

<pallas_src>
import functools

import jax
import jax.numpy as jnp
from jax.experimental import pallas as pl
from jax.experimental.pallas import tpu as pltpu

LANE = 128


def _round_up(n, m):
    return ((n + m - 1) // m) * m


def _leaky_relu(h, slope=0.3):
    # nn.LeakyReLU(0.3)
    return jnp.where(h > 0, h, slope * h)


def _mm(x, w_ref, b_ref):
    # bf16 x bf16 MXU matmul, f32 accumulation, f32 bias add.
    return jnp.dot(x.astype(jnp.bfloat16), w_ref[...],
                   preferred_element_type=jnp.float32) + b_ref[...]


# ----------------------------------------------------------------------------
# Fused kernel: shared per-point MLP + per-batch max-pool + FC head
# (one grid step == `bpb` whole batches, fully independent of other steps)
# ----------------------------------------------------------------------------
def fused_kernel(x_ref, w1, b1, w2, b2, w3, b3, w4, b4,
                 w5, b5, w6, b6, w7, b7, out_ref, *, bpb, n_points):
    x = x_ref[...]                                         # (bpb*N, c_pad) bf16
    h = _leaky_relu(_mm(x, w1, b1))                        # (bpb*N, 64)   f32
    h = _leaky_relu(_mm(h, w2, b2))                        # (bpb*N, 128)  f32
    h = _leaky_relu(_mm(h, w3, b3))                        # (bpb*N, 256)  f32
    h = _leaky_relu(_mm(h, w4, b4)).astype(jnp.bfloat16)   # (bpb*N, 1024) bf16

    # MaxPool1d(kernel_size=N) + Flatten: one fused per-batch reduction over the
    # point axis (bf16, half the vreg/VMEM traffic of f32).
    g = jnp.max(h.reshape(bpb, n_points, h.shape[-1]), axis=1)   # (bpb, 1024)

    # FC head.  Dropout(0.5)/Dropout(0.3) are identity (eval mode).
    h = _leaky_relu(_mm(g, w5, b5))                        # (bpb, 512)
    h = _leaky_relu(_mm(h, w6, b6))                        # (bpb, 512)
    out_ref[...] = _mm(h, w7, b7)                          # (bpb, out_pad) f32


# ----------------------------------------------------------------------------
# Wrapper
# ----------------------------------------------------------------------------
@functools.partial(jax.jit, static_argnames=("out_size", "rows_per_step"))
def rotation_estimation_forward(x_bcn, conv_params, fc_params, out_size,
                                rows_per_step=512):
    """x_bcn: PyTorch-layout (B, C_in, N) float32 -> (B, out_size) float32."""
    B, C_in, N = x_bcn.shape
    assert N % 8 == 0, "n_points must be a multiple of 8 (sublane alignment)"

    (w1, b1), (w2, b2), (w3, b3), (w4, b4) = conv_params
    (w5, b5), (w6, b6), (w7, b7) = fc_params
    c_pad = w1.shape[0]        # input channels pre-padded at init (>= 8)
    out_pad = w7.shape[1]      # lane-dense logits (multiple of 128)

    # Batches per grid step: largest divisor of B with bpb*N <= max(N, rows_per_step)
    # (>=256-512 rows per step amortizes the ~0.35us per-step overhead on v5e).
    bpb = 1
    for d in range(min(B, max(1, rows_per_step // N)), 0, -1):
        if B % d == 0:
            bpb = d
            break
    num_steps = B // bpb
    rows = bpb * N

    # Channels-last, flatten batch*points, cast to bf16, pad channels only to
    # c_pad (8) -- no 128-wide f32 padded copy in HBM.
    x_flat = x_bcn.astype(jnp.bfloat16).transpose(0, 2, 1).reshape(B * N, C_in)
    x_flat = jnp.pad(x_flat, ((0, 0), (0, c_pad - C_in)))

    args = [x_flat, w1, b1, w2, b2, w3, b3, w4, b4, w5, b5, w6, b6, w7, b7]

    # x is tiled along rows; all weights/biases use constant index maps so they
    # are DMA'd once and stay resident in VMEM across grid steps.
    in_specs = [pl.BlockSpec((rows, c_pad), lambda i: (i, 0))]
    in_specs += [pl.BlockSpec(a.shape, lambda i: (0, 0)) for a in args[1:]]
    out_specs = pl.BlockSpec((None, bpb, out_pad), lambda i: (i, 0, 0))

    # Advisory cost hint for XLA scheduling.
    flops = 2 * B * N * (c_pad * 64 + 64 * 128 + 128 * 256 + 256 * 1024) \
        + 2 * B * (1024 * 512 + 512 * 512 + 512 * out_pad)
    bytes_accessed = sum(int(a.size) * a.dtype.itemsize for a in args) \
        + B * out_pad * 4
    cost = pl.CostEstimate(flops=flops, transcendentals=0,
                           bytes_accessed=bytes_accessed)

    kernel = functools.partial(fused_kernel, bpb=bpb, n_points=N)
    out = pl.pallas_call(
        kernel,
        out_shape=jax.ShapeDtypeStruct((num_steps, bpb, out_pad), jnp.float32),
        grid_spec=pltpu.PrefetchScalarGridSpec(
            num_scalar_prefetch=0,
            grid=(num_steps,),
            in_specs=in_specs,
            out_specs=out_specs,
        ),
        compiler_params=pltpu.CompilerParams(
            dimension_semantics=("parallel",)),   # 2-TC sharding on v7x
        cost_estimate=cost,
    )(*args)

    return out.reshape(B, out_pad)[:, :out_size]


# ----------------------------------------------------------------------------
# Parameter init (xavier_uniform weights, zero biases), bf16 weight storage,
# with w1 / w7 / b7 pre-padded once here (not in the jitted forward).
# ----------------------------------------------------------------------------
def xavier_uniform(key, fan_in, fan_out):
    bound = jnp.sqrt(6.0 / (fan_in + fan_out))
    # stored as (fan_in, fan_out) so kernels compute x @ W directly
    return jax.random.uniform(key, (fan_in, fan_out), jnp.float32, -bound, bound)


def init_params(key, in_channels, out_size):
    c_pad = max(8, _round_up(in_channels, 8))
    out_pad = max(LANE, _round_up(out_size, LANE))
    dims_conv = [(in_channels, 64), (64, 128), (128, 256), (256, 1024)]
    dims_fc = [(1024, 512), (512, 512), (512, out_size)]
    keys = jax.random.split(key, len(dims_conv) + len(dims_fc))

    conv_params = []
    for i, (k, (fi, fo)) in enumerate(zip(keys[:4], dims_conv)):
        w = xavier_uniform(k, fi, fo)
        if i == 0:
            w = jnp.pad(w, ((0, c_pad - fi), (0, 0)))   # zero rows: padded channels
        conv_params.append((w.astype(jnp.bfloat16), jnp.zeros((1, fo), jnp.float32)))

    fc_params = []
    for i, (k, (fi, fo)) in enumerate(zip(keys[4:], dims_fc)):
        w = xavier_uniform(k, fi, fo)
        b = jnp.zeros((1, fo), jnp.float32)
        if i == 2:
            w = jnp.pad(w, ((0, 0), (0, out_pad - fo)))  # zero cols: lane-dense logits
            b = jnp.pad(b, ((0, 0), (0, out_pad - fo)))
        fc_params.append((w.astype(jnp.bfloat16), b))
    return conv_params, fc_params


# ----------------------------------------------------------------------------
# Pure-JAX reference (same bf16-stored weights, f32 math) for a sanity check.
# ----------------------------------------------------------------------------
def reference_forward(x_bcn, conv_params, fc_params, out_size):
    def lr(h):
        return jnp.where(h > 0, h, 0.3 * h)

    (w1, b1), (w2, b2), (w3, b3), (w4, b4) = conv_params
    (w5, b5), (w6, b6), (w7, b7) = fc_params
    B, C, N = x_bcn.shape
    x = jnp.transpose(x_bcn, (0, 2, 1)).reshape(B * N, C)
    x = jnp.pad(x, ((0, 0), (0, w1.shape[0] - C)))
    h = lr(x @ w1.astype(jnp.float32) + b1)
    h = lr(h @ w2.astype(jnp.float32) + b2)
    h = lr(h @ w3.astype(jnp.float32) + b3)
    h = lr(h @ w4.astype(jnp.float32) + b4)
    g = jnp.max(h.reshape(B, N, -1), axis=1)
    h = lr(g @ w5.astype(jnp.float32) + b5)
    h = lr(h @ w6.astype(jnp.float32) + b6)
    out = h @ w7.astype(jnp.float32) + b7
    return out[:, :out_size]


if __name__ == "__main__":
    # in_size = (3, 128) point cloud, 6D rotation representation output.
    B, C_IN, N_POINTS, OUT_SIZE = 8, 3, 128, 6

    key = jax.random.PRNGKey(0)
    k_x, k_p = jax.random.split(key)
    x = jax.random.normal(k_x, (B, C_IN, N_POINTS), jnp.float32)  # (B, C, N) NCL
    conv_params, fc_params = init_params(k_p, C_IN, OUT_SIZE)

    out = rotation_estimation_forward(x, conv_params, fc_params, OUT_SIZE)
    out = jax.block_until_ready(out)

    assert out.shape == (B, OUT_SIZE)
    assert bool(jnp.all(jnp.isfinite(out)))

    # Loose tolerance: bf16 matmul inputs vs. f32 reference (~1% relative error).
    ref = reference_forward(x, conv_params, fc_params, OUT_SIZE)
    assert bool(jnp.allclose(out, ref, rtol=1e-1, atol=1e-1)), \
        f"mismatch: max abs err {float(jnp.max(jnp.abs(out - ref)))}"

    print("KERNEL_OK")
</pallas_src>

<mosaic_0001>
module attributes {stable_mosaic.version = 11 : i64} {
  func.func @fused_kernel(%arg0: i32, %arg1: memref<512x8xbf16, #tpu.memory_space<vmem>>, %arg2: memref<8x64xbf16, #tpu.memory_space<vmem>>, %arg3: memref<1x64xf32, #tpu.memory_space<vmem>>, %arg4: memref<64x128xbf16, #tpu.memory_space<vmem>>, %arg5: memref<1x128xf32, #tpu.memory_space<vmem>>, %arg6: memref<128x256xbf16, #tpu.memory_space<vmem>>, %arg7: memref<1x256xf32, #tpu.memory_space<vmem>>, %arg8: memref<256x1024xbf16, #tpu.memory_space<vmem>>, %arg9: memref<1x1024xf32, #tpu.memory_space<vmem>>, %arg10: memref<1024x512xbf16, #tpu.memory_space<vmem>>, %arg11: memref<1x512xf32, #tpu.memory_space<vmem>>, %arg12: memref<512x512xbf16, #tpu.memory_space<vmem>>, %arg13: memref<1x512xf32, #tpu.memory_space<vmem>>, %arg14: memref<512x128xbf16, #tpu.memory_space<vmem>>, %arg15: memref<1x128xf32, #tpu.memory_space<vmem>>, %arg16: memref<1x4x128xf32, #tpu.memory_space<vmem>>) attributes {dimension_semantics = [#tpu.dimension_semantics<parallel>], iteration_bounds = array<i64: 2>, scalar_prefetch = 0 : i64, scratch_operands = 0 : i64, tpu.core_type = #tpu.core_type<tc>, window_params = [{transform_indices = @transform_0, window_bounds = array<i64: 512, 8>}, {pipeline_mode = #tpu.pipeline_mode<synchronous>, transform_indices = @transform_1, window_bounds = array<i64: 8, 64>}, {pipeline_mode = #tpu.pipeline_mode<synchronous>, transform_indices = @transform_2, window_bounds = array<i64: 1, 64>}, {pipeline_mode = #tpu.pipeline_mode<synchronous>, transform_indices = @transform_3, window_bounds = array<i64: 64, 128>}, {pipeline_mode = #tpu.pipeline_mode<synchronous>, transform_indices = @transform_4, window_bounds = array<i64: 1, 128>}, {pipeline_mode = #tpu.pipeline_mode<synchronous>, transform_indices = @transform_5, window_bounds = array<i64: 128, 256>}, {pipeline_mode = #tpu.pipeline_mode<synchronous>, transform_indices = @transform_6, window_bounds = array<i64: 1, 256>}, {pipeline_mode = #tpu.pipeline_mode<synchronous>, transform_indices = @transform_7, window_bounds = array<i64: 256, 1024>}, {pipeline_mode = #tpu.pipeline_mode<synchronous>, transform_indices = @transform_8, window_bounds = array<i64: 1, 1024>}, {pipeline_mode = #tpu.pipeline_mode<synchronous>, transform_indices = @transform_9, window_bounds = array<i64: 1024, 512>}, {pipeline_mode = #tpu.pipeline_mode<synchronous>, transform_indices = @transform_10, window_bounds = array<i64: 1, 512>}, {pipeline_mode = #tpu.pipeline_mode<synchronous>, transform_indices = @transform_11, window_bounds = array<i64: 512, 512>}, {pipeline_mode = #tpu.pipeline_mode<synchronous>, transform_indices = @transform_12, window_bounds = array<i64: 1, 512>}, {pipeline_mode = #tpu.pipeline_mode<synchronous>, transform_indices = @transform_13, window_bounds = array<i64: 512, 128>}, {pipeline_mode = #tpu.pipeline_mode<synchronous>, transform_indices = @transform_14, window_bounds = array<i64: 1, 128>}, {transform_indices = @transform_15, window_bounds = array<i64: 1, 4, 128>}]} {
    %c0 = arith.constant 0 : index
    %c0_0 = arith.constant 0 : index
    %0 = vector.load %arg1[%c0, %c0_0] : memref<512x8xbf16, #tpu.memory_space<vmem>>, vector<512x8xbf16>
    %c0_1 = arith.constant 0 : index
    %c0_2 = arith.constant 0 : index
    %1 = vector.load %arg2[%c0_1, %c0_2] : memref<8x64xbf16, #tpu.memory_space<vmem>>, vector<8x64xbf16>
    %cst = arith.constant dense<0.000000e+00> : vector<512x64xf32>
    %2 = tpu.matmul %0, %1, %cst {dimension_numbers = #tpu.dot_dimension_numbers<[1], [0], [0], [1], [0, 0, 1, 1], [], []>} : vector<512x8xbf16>, vector<8x64xbf16>, vector<512x64xf32> -> vector<512x64xf32>
    %c0_3 = arith.constant 0 : index
    %c0_4 = arith.constant 0 : index
    %3 = vector.load %arg3[%c0_3, %c0_4] : memref<1x64xf32, #tpu.memory_space<vmem>>, vector<1x64xf32>
    %4 = vector.broadcast %3 : vector<1x64xf32> to vector<512x64xf32>
    %5 = arith.addf %2, %4 : vector<512x64xf32>
    %cst_5 = arith.constant 0.000000e+00 : f32
    %6 = vector.broadcast %cst_5 : f32 to vector<512x64xf32>
    %7 = arith.cmpf ogt, %5, %6 : vector<512x64xf32>
    %cst_6 = arith.constant 3.000000e-01 : f32
    %8 = vector.broadcast %cst_6 : f32 to vector<512x64xf32>
    %9 = arith.mulf %8, %5 : vector<512x64xf32>
    %10 = arith.select %7, %5, %9 : vector<512x64xi1>, vector<512x64xf32>
    %11 = arith.truncf %10 : vector<512x64xf32> to vector<512x64xbf16>
    %c0_7 = arith.constant 0 : index
    %c0_8 = arith.constant 0 : index
    %12 = vector.load %arg4[%c0_7, %c0_8] : memref<64x128xbf16, #tpu.memory_space<vmem>>, vector<64x128xbf16>
    %cst_9 = arith.constant dense<0.000000e+00> : vector<512x128xf32>
    %13 = tpu.matmul %11, %12, %cst_9 {dimension_numbers = #tpu.dot_dimension_numbers<[1], [0], [0], [1], [0, 0, 1, 1], [], []>} : vector<512x64xbf16>, vector<64x128xbf16>, vector<512x128xf32> -> vector<512x128xf32>
    %c0_10 = arith.constant 0 : index
    %c0_11 = arith.constant 0 : index
    %14 = vector.load %arg5[%c0_10, %c0_11] : memref<1x128xf32, #tpu.memory_space<vmem>>, vector<1x128xf32>
    %15 = vector.broadcast %14 : vector<1x128xf32> to vector<512x128xf32>
    %16 = arith.addf %13, %15 : vector<512x128xf32>
    %cst_12 = arith.constant 0.000000e+00 : f32
    %17 = vector.broadcast %cst_12 : f32 to vector<512x128xf32>
    %18 = arith.cmpf ogt, %16, %17 : vector<512x128xf32>
    %cst_13 = arith.constant 3.000000e-01 : f32
    %19 = vector.broadcast %cst_13 : f32 to vector<512x128xf32>
    %20 = arith.mulf %19, %16 : vector<512x128xf32>
    %21 = arith.select %18, %16, %20 : vector<512x128xi1>, vector<512x128xf32>
    %22 = arith.truncf %21 : vector<512x128xf32> to vector<512x128xbf16>
    %c0_14 = arith.constant 0 : index
    %c0_15 = arith.constant 0 : index
    %23 = vector.load %arg6[%c0_14, %c0_15] : memref<128x256xbf16, #tpu.memory_space<vmem>>, vector<128x256xbf16>
    %cst_16 = arith.constant dense<0.000000e+00> : vector<512x256xf32>
    %24 = tpu.matmul %22, %23, %cst_16 {dimension_numbers = #tpu.dot_dimension_numbers<[1], [0], [0], [1], [0, 0, 1, 1], [], []>} : vector<512x128xbf16>, vector<128x256xbf16>, vector<512x256xf32> -> vector<512x256xf32>
    %c0_17 = arith.constant 0 : index
    %c0_18 = arith.constant 0 : index
    %25 = vector.load %arg7[%c0_17, %c0_18] : memref<1x256xf32, #tpu.memory_space<vmem>>, vector<1x256xf32>
    %26 = vector.broadcast %25 : vector<1x256xf32> to vector<512x256xf32>
    %27 = arith.addf %24, %26 : vector<512x256xf32>
    %cst_19 = arith.constant 0.000000e+00 : f32
    %28 = vector.broadcast %cst_19 : f32 to vector<512x256xf32>
    %29 = arith.cmpf ogt, %27, %28 : vector<512x256xf32>
    %cst_20 = arith.constant 3.000000e-01 : f32
    %30 = vector.broadcast %cst_20 : f32 to vector<512x256xf32>
    %31 = arith.mulf %30, %27 : vector<512x256xf32>
    %32 = arith.select %29, %27, %31 : vector<512x256xi1>, vector<512x256xf32>
    %33 = arith.truncf %32 : vector<512x256xf32> to vector<512x256xbf16>
    %c0_21 = arith.constant 0 : index
    %c0_22 = arith.constant 0 : index
    %34 = vector.load %arg8[%c0_21, %c0_22] : memref<256x1024xbf16, #tpu.memory_space<vmem>>, vector<256x1024xbf16>
    %cst_23 = arith.constant dense<0.000000e+00> : vector<512x1024xf32>
    %35 = tpu.matmul %33, %34, %cst_23 {dimension_numbers = #tpu.dot_dimension_numbers<[1], [0], [0], [1], [0, 0, 1, 1], [], []>} : vector<512x256xbf16>, vector<256x1024xbf16>, vector<512x1024xf32> -> vector<512x1024xf32>
    %c0_24 = arith.constant 0 : index
    %c0_25 = arith.constant 0 : index
    %36 = vector.load %arg9[%c0_24, %c0_25] : memref<1x1024xf32, #tpu.memory_space<vmem>>, vector<1x1024xf32>
    %37 = vector.broadcast %36 : vector<1x1024xf32> to vector<512x1024xf32>
    %38 = arith.addf %35, %37 : vector<512x1024xf32>
    %cst_26 = arith.constant 0.000000e+00 : f32
    %39 = vector.broadcast %cst_26 : f32 to vector<512x1024xf32>
    %40 = arith.cmpf ogt, %38, %39 : vector<512x1024xf32>
    %cst_27 = arith.constant 3.000000e-01 : f32
    %41 = vector.broadcast %cst_27 : f32 to vector<512x1024xf32>
    %42 = arith.mulf %41, %38 : vector<512x1024xf32>
    %43 = arith.select %40, %38, %42 : vector<512x1024xi1>, vector<512x1024xf32>
    %44 = arith.truncf %43 : vector<512x1024xf32> to vector<512x1024xbf16>
    %45 = vector.shape_cast %44 : vector<512x1024xbf16> to vector<4x128x1024xbf16>
    %cst_28 = arith.constant dense<0xFF80> : vector<4x1024xbf16>
    %46 = vector.multi_reduction <maximumf>, %45, %cst_28 [1] : vector<4x128x1024xbf16> to vector<4x1024xbf16>
    %c0_29 = arith.constant 0 : index
    %c0_30 = arith.constant 0 : index
    %47 = vector.load %arg10[%c0_29, %c0_30] : memref<1024x512xbf16, #tpu.memory_space<vmem>>, vector<1024x512xbf16>
    %cst_31 = arith.constant dense<0.000000e+00> : vector<4x512xf32>
    %48 = tpu.matmul %46, %47, %cst_31 {dimension_numbers = #tpu.dot_dimension_numbers<[1], [0], [0], [1], [0, 0, 1, 1], [], []>} : vector<4x1024xbf16>, vector<1024x512xbf16>, vector<4x512xf32> -> vector<4x512xf32>
    %c0_32 = arith.constant 0 : index
    %c0_33 = arith.constant 0 : index
    %49 = vector.load %arg11[%c0_32, %c0_33] : memref<1x512xf32, #tpu.memory_space<vmem>>, vector<1x512xf32>
    %50 = vector.broadcast %49 : vector<1x512xf32> to vector<4x512xf32>
    %51 = arith.addf %48, %50 : vector<4x512xf32>
    %cst_34 = arith.constant 0.000000e+00 : f32
    %52 = vector.broadcast %cst_34 : f32 to vector<4x512xf32>
    %53 = arith.cmpf ogt, %51, %52 : vector<4x512xf32>
    %cst_35 = arith.constant 3.000000e-01 : f32
    %54 = vector.broadcast %cst_35 : f32 to vector<4x512xf32>
    %55 = arith.mulf %54, %51 : vector<4x512xf32>
    %56 = arith.select %53, %51, %55 : vector<4x512xi1>, vector<4x512xf32>
    %57 = arith.truncf %56 : vector<4x512xf32> to vector<4x512xbf16>
    %c0_36 = arith.constant 0 : index
    %c0_37 = arith.constant 0 : index
    %58 = vector.load %arg12[%c0_36, %c0_37] : memref<512x512xbf16, #tpu.memory_space<vmem>>, vector<512x512xbf16>
    %cst_38 = arith.constant dense<0.000000e+00> : vector<4x512xf32>
    %59 = tpu.matmul %57, %58, %cst_38 {dimension_numbers = #tpu.dot_dimension_numbers<[1], [0], [0], [1], [0, 0, 1, 1], [], []>} : vector<4x512xbf16>, vector<512x512xbf16>, vector<4x512xf32> -> vector<4x512xf32>
    %c0_39 = arith.constant 0 : index
    %c0_40 = arith.constant 0 : index
    %60 = vector.load %arg13[%c0_39, %c0_40] : memref<1x512xf32, #tpu.memory_space<vmem>>, vector<1x512xf32>
    %61 = vector.broadcast %60 : vector<1x512xf32> to vector<4x512xf32>
    %62 = arith.addf %59, %61 : vector<4x512xf32>
    %cst_41 = arith.constant 0.000000e+00 : f32
    %63 = vector.broadcast %cst_41 : f32 to vector<4x512xf32>
    %64 = arith.cmpf ogt, %62, %63 : vector<4x512xf32>
    %cst_42 = arith.constant 3.000000e-01 : f32
    %65 = vector.broadcast %cst_42 : f32 to vector<4x512xf32>
    %66 = arith.mulf %65, %62 : vector<4x512xf32>
    %67 = arith.select %64, %62, %66 : vector<4x512xi1>, vector<4x512xf32>
    %68 = arith.truncf %67 : vector<4x512xf32> to vector<4x512xbf16>
    %c0_43 = arith.constant 0 : index
    %c0_44 = arith.constant 0 : index
    %69 = vector.load %arg14[%c0_43, %c0_44] : memref<512x128xbf16, #tpu.memory_space<vmem>>, vector<512x128xbf16>
    %cst_45 = arith.constant dense<0.000000e+00> : vector<4x128xf32>
    %70 = tpu.matmul %68, %69, %cst_45 {dimension_numbers = #tpu.dot_dimension_numbers<[1], [0], [0], [1], [0, 0, 1, 1], [], []>} : vector<4x512xbf16>, vector<512x128xbf16>, vector<4x128xf32> -> vector<4x128xf32>
    %c0_46 = arith.constant 0 : index
    %c0_47 = arith.constant 0 : index
    %71 = vector.load %arg15[%c0_46, %c0_47] : memref<1x128xf32, #tpu.memory_space<vmem>>, vector<1x128xf32>
    %72 = vector.broadcast %71 : vector<1x128xf32> to vector<4x128xf32>
    %73 = arith.addf %70, %72 : vector<4x128xf32>
    %c0_48 = arith.constant 0 : index
    %c0_49 = arith.constant 0 : index
    %c0_50 = arith.constant 0 : index
    %74 = vector.load %arg16[%c0_48, %c0_49, %c0_50] : memref<1x4x128xf32, #tpu.memory_space<vmem>>, vector<1x4x128xf32>
    %75 = vector.shape_cast %74 : vector<1x4x128xf32> to vector<4x128xf32>
    %76 = vector.shape_cast %73 : vector<4x128xf32> to vector<1x4x128xf32>
    tpu.vector_store %arg16[%c0_48, %c0_49, %c0_50], %76 {strides = array<i32>} : memref<1x4x128xf32, #tpu.memory_space<vmem>>, vector<1x4x128xf32>,
    return
  }
  func.func @transform_0(%arg0: i32) -> (i32, i32) {
    %c0_i32 = arith.constant 0 : i32
    %c0_i32_0 = arith.constant 0 : i32
    return %arg0, %c0_i32 : i32, i32
  }
  func.func @transform_1(%arg0: i32) -> (i32, i32) {
    %c0_i32 = arith.constant 0 : i32
    %c0_i32_0 = arith.constant 0 : i32
    %c0_i32_1 = arith.constant 0 : i32
    return %c0_i32, %c0_i32_0 : i32, i32
  }
  func.func @transform_2(%arg0: i32) -> (i32, i32) {
    %c0_i32 = arith.constant 0 : i32
    %c0_i32_0 = arith.constant 0 : i32
    %c0_i32_1 = arith.constant 0 : i32
    return %c0_i32, %c0_i32_0 : i32, i32
  }
  func.func @transform_3(%arg0: i32) -> (i32, i32) {
    %c0_i32 = arith.constant 0 : i32
    %c0_i32_0 = arith.constant 0 : i32
    %c0_i32_1 = arith.constant 0 : i32
    return %c0_i32, %c0_i32_0 : i32, i32
  }
  func.func @transform_4(%arg0: i32) -> (i32, i32) {
    %c0_i32 = arith.constant 0 : i32
    %c0_i32_0 = arith.constant 0 : i32
    %c0_i32_1 = arith.constant 0 : i32
    return %c0_i32, %c0_i32_0 : i32, i32
  }
  func.func @transform_5(%arg0: i32) -> (i32, i32) {
    %c0_i32 = arith.constant 0 : i32
    %c0_i32_0 = arith.constant 0 : i32
    %c0_i32_1 = arith.constant 0 : i32
    return %c0_i32, %c0_i32_0 : i32, i32
  }
  func.func @transform_6(%arg0: i32) -> (i32, i32) {
    %c0_i32 = arith.constant 0 : i32
    %c0_i32_0 = arith.constant 0 : i32
    %c0_i32_1 = arith.constant 0 : i32
    return %c0_i32, %c0_i32_0 : i32, i32
  }
  func.func @transform_7(%arg0: i32) -> (i32, i32) {
    %c0_i32 = arith.constant 0 : i32
    %c0_i32_0 = arith.constant 0 : i32
    %c0_i32_1 = arith.constant 0 : i32
    return %c0_i32, %c0_i32_0 : i32, i32
  }
  func.func @transform_8(%arg0: i32) -> (i32, i32) {
    %c0_i32 = arith.constant 0 : i32
    %c0_i32_0 = arith.constant 0 : i32
    %c0_i32_1 = arith.constant 0 : i32
    return %c0_i32, %c0_i32_0 : i32, i32
  }
  func.func @transform_9(%arg0: i32) -> (i32, i32) {
    %c0_i32 = arith.constant 0 : i32
    %c0_i32_0 = arith.constant 0 : i32
    %c0_i32_1 = arith.constant 0 : i32
    return %c0_i32, %c0_i32_0 : i32, i32
  }
  func.func @transform_10(%arg0: i32) -> (i32, i32) {
    %c0_i32 = arith.constant 0 : i32
    %c0_i32_0 = arith.constant 0 : i32
    %c0_i32_1 = arith.constant 0 : i32
    return %c0_i32, %c0_i32_0 : i32, i32
  }
  func.func @transform_11(%arg0: i32) -> (i32, i32) {
    %c0_i32 = arith.constant 0 : i32
    %c0_i32_0 = arith.constant 0 : i32
    %c0_i32_1 = arith.constant 0 : i32
    return %c0_i32, %c0_i32_0 : i32, i32
  }
  func.func @transform_12(%arg0: i32) -> (i32, i32) {
    %c0_i32 = arith.constant 0 : i32
    %c0_i32_0 = arith.constant 0 : i32
    %c0_i32_1 = arith.constant 0 : i32
    return %c0_i32, %c0_i32_0 : i32, i32
  }
  func.func @transform_13(%arg0: i32) -> (i32, i32) {
    %c0_i32 = arith.constant 0 : i32
    %c0_i32_0 = arith.constant 0 : i32
    %c0_i32_1 = arith.constant 0 : i32
    return %c0_i32, %c0_i32_0 : i32, i32
  }
  func.func @transform_14(%arg0: i32) -> (i32, i32) {
    %c0_i32 = arith.constant 0 : i32
    %c0_i32_0 = arith.constant 0 : i32
    %c0_i32_1 = arith.constant 0 : i32
    return %c0_i32, %c0_i32_0 : i32, i32
  }
  func.func @transform_15(%arg0: i32) -> (i32, i32, i32) {
    %c0_i32 = arith.constant 0 : i32
    %c0_i32_0 = arith.constant 0 : i32
    %c0_i32_1 = arith.constant 0 : i32
    return %arg0, %c0_i32, %c0_i32_0 : i32, i32, i32
  }
}

</mosaic_0001>

<llo_original>
// kernel: rotation_estimation_forward.1
$region0: #{rotation_estimation_forward.1}
  #allocation0 [shape = 'u32[]', space=smem, size = 0x4, offset = 0x4, fixed_abs, tag = 'smem constant byte address 0x4 - core index']
  #allocation1 [shape = 'u32[144,128]{1,0:T(1,128)}', space=vmem, size = 0x12000, scoped, tag = 'internal scratch']
  %s0 = inlined_call_operand.vmem [shape: bf16[1024,8], index: 0, kind: input, shape index: {}]
  %s1 = inlined_call_operand.vmem [shape: bf16[8,64], index: 1, kind: input, shape index: {}]
  %s2 = inlined_call_operand.vmem [shape: f32[1,64], index: 2, kind: input, shape index: {}]
  %s3 = inlined_call_operand.vmem [shape: bf16[64,128], index: 3, kind: input, shape index: {}]
  %s4 = inlined_call_operand.vmem [shape: f32[1,128], index: 4, kind: input, shape index: {}]
  %s5 = inlined_call_operand.vmem [shape: bf16[128,256], index: 5, kind: input, shape index: {}]
  %s6 = inlined_call_operand.vmem [shape: f32[1,256], index: 6, kind: input, shape index: {}]
  %s7 = inlined_call_operand.vmem [shape: bf16[256,1024], index: 7, kind: input, shape index: {}]
  %s8 = inlined_call_operand.vmem [shape: f32[1,1024], index: 8, kind: input, shape index: {}]
  %s9 = inlined_call_operand.hbm [shape: bf16[1024,512], index: 9, kind: input, shape index: {}]
  %s10 = inlined_call_operand.vmem [shape: f32[1,512], index: 10, kind: input, shape index: {}]
  %s11 = inlined_call_operand.hbm [shape: bf16[512,512], index: 11, kind: input, shape index: {}]
  %s12 = inlined_call_operand.vmem [shape: f32[1,512], index: 12, kind: input, shape index: {}]
  %s13 = inlined_call_operand.vmem [shape: bf16[512,128], index: 13, kind: input, shape index: {}]
  %s14 = inlined_call_operand.vmem [shape: f32[1,128], index: 14, kind: input, shape index: {}]
  %s15 = inlined_call_operand.hbm [shape: f32[2,4,128], index: 15, kind: output, shape index: {}]
  %s16 = sld [smem:[#allocation0]]
  $region101: #{rotation_estimation_forward.1} parent=0
    _
  %s18 = ssub.s32 1, %s16
  %s19 = scalar_select 0, %s18, %s16
  $region1: #{rotation_estimation_forward.1} parent=0
    #allocation2 [shape = 'u8[1048576]{0}', space=vmem, size = 0x100000, scoped, tag = 'input window, operand 9, single buffered']
    #allocation3 [shape = 's32[2]{0}', space=sflag, size = 0x8, scoped, tag = 'scoped memory for rotation_estimation_forward.1']
    #allocation4 [shape = 's32[2]{0}', space=sflag, size = 0x8, scoped, tag = 'scoped memory for rotation_estimation_forward.1']
    #allocation5 [shape = 'u8[524288]{0}', space=vmem, size = 0x80000, scoped, tag = 'input window, operand 11, single buffered']
    #allocation6 [shape = 's32[1]{0}', space=sflag, size = 0x4, scoped, tag = 'scoped memory for rotation_estimation_forward.1']
    #allocation7 [shape = 'u8[4096]{0}', space=vmem, size = 0x1000, scoped, tag = 'output window, operand 0']
    %20 = vsyncpa [#allocation3], 0
    %21 = vsyncpa [#allocation6], 0
    %22 = vsyncpa [#allocation4], 0
    %s23 = scalar_lea.sflag [#allocation4], 1
    %24 = vsyncpa %s23, 0
    loop: start=0, step=1, limit=4
    $region2: #{rotation_estimation_forward.1} parent=1 // loop_pre_header
      _
    $region3: #{rotation_estimation_forward.1} parent=1 // loop_header
      %s26 = sphi 0, %s30
      %p27 = scmp.ge.s32.totalorder %s26, 4
      %s36 = sphi 0, %s38
      %s39 = sphi 0, %s36
      %s40 = sphi 0, %s39
      %s56 = sphi 0, %s40
      %s60 = sphi 0, %s60
      %s62 = sphi 0, %s60
      %s63 = sphi 0, %s62
      %s77 = sphi 0, %s63
      %s81 = sphi 0, %s81
      %s83 = sphi 0, %s81
      %s84 = sphi 0, %s83
      %s98 = sphi 0, %s84
      %s102 = sphi 0, %s102
      %s104 = sphi 0, %s102
      %s105 = sphi 0, %s104
      %s119 = sphi 0, %s105
      %s123 = sphi 0, %s123
      %s125 = sphi 0, %s123
      %s126 = sphi 0, %s125
      %s140 = sphi 0, %s126
      %s144 = sphi 0, %s144
      %s146 = sphi 0, %s144
      %s147 = sphi 0, %s146
      %s161 = sphi 0, %s147
      %s165 = sphi 0, %s165
      %s167 = sphi 0, %s165
      %s168 = sphi 0, %s167
      %s182 = sphi 0, %s168
      %s186 = sphi 0, %s186
      %s188 = sphi 0, %s186
      %s189 = sphi 0, %s188
      %s203 = sphi 0, %s189
      %s207 = sphi 0, %s207
      %s209 = sphi 0, %s207
      %s210 = sphi 0, %s209
      %s224 = sphi 0, %s210
      %s228 = sphi 0, %s228
      %s230 = sphi 0, %s228
      %s231 = sphi 0, %s230
      %s245 = sphi 0, %s231
      %s249 = sphi 0, %s249
      %s251 = sphi 0, %s249
      %s252 = sphi 0, %s251
      %s266 = sphi 0, %s252
      %s270 = sphi 0, %s270
      %s272 = sphi 0, %s270
      %s273 = sphi 0, %s272
      %s287 = sphi 0, %s273
      %s291 = sphi 0, %s291
      %s293 = sphi 0, %s291
      %s294 = sphi 0, %s293
      %s308 = sphi 0, %s294
      %s312 = sphi 0, %s312
      %s314 = sphi 0, %s312
      %s315 = sphi 0, %s314
      %s329 = sphi 0, %s315
      %s333 = sphi 0, %s333
      %s335 = sphi 0, %s333
      %s336 = sphi 0, %s335
      %s350 = sphi 0, %s336
      %s356 = sphi 0, %s358
      %s359 = sphi 0, %s356
      %s360 = sphi 0, %s359
      %s376 = sphi 0, %s360
    $region4: #{rotation_estimation_forward.1} parent=1 // loop_header_branch
      %29 = sbr.rel (%p27) target = $region8
    $region5: #{rotation_estimation_forward.1} parent=1 // loop_body
      %s31 = ssub.s32 %s26, 1
      %s32 = ssub.s32 %s26, 2
      %s33 = sadd.s32 %s26, 1
      %s34 = ssub.s32 %s26, %s33
      %p35 = scmp.eq.s32.totalorder %s34, 0
      %s37 = sadd.s32 %s36, 1
      %s38 = scalar_select %p35, %s36, %s37
      %p41 = pneg %p35
      %p42 = scmp.eq.s32.totalorder %s26, 1
      %p43 = por %p41, %p42
      %p44 = scmp.ne.s32.totalorder %s36, %s39
      %p45 = scmp.eq.s32.totalorder %s26, 0
      %p46 = por %p44, %p45
      %p47 = scmp.ne.s32.totalorder %s36, %s39
      %p48 = scmp.eq.s32.totalorder %s31, 1
      %p49 = por %p47, %p48
      %p50 = scmp.ne.s32.totalorder %s39, %s40
      %p51 = scmp.eq.s32.totalorder %s31, 0
      %p52 = por %p50, %p51
      %p53 = scmp.ne.s32.totalorder %s39, %s40
      %p54 = scmp.eq.s32.totalorder %s32, 1
      %p55 = por %p53, %p54
      %p57 = scmp.ne.s32.totalorder %s40, %s56
      %p58 = scmp.eq.s32.totalorder %s32, 0
      %p59 = por %p57, %p58
      %s61 = sadd.s32 %s60, 1
      %p64 = scmp.eq.s32.totalorder %s26, 1
      %p65 = scmp.ne.s32.totalorder %s60, %s62
      %p66 = scmp.eq.s32.totalorder %s26, 0
      %p67 = por %p65, %p66
      %p68 = scmp.ne.s32.totalorder %s60, %s62
      %p69 = scmp.eq.s32.totalorder %s31, 1
      %p70 = por %p68, %p69
      %p71 = scmp.ne.s32.totalorder %s62, %s63
      %p72 = scmp.eq.s32.totalorder %s31, 0
      %p73 = por %p71, %p72
      %p74 = scmp.ne.s32.totalorder %s62, %s63
      %p75 = scmp.eq.s32.totalorder %s32, 1
      %p76 = por %p74, %p75
      %p78 = scmp.ne.s32.totalorder %s63, %s77
      %p79 = scmp.eq.s32.totalorder %s32, 0
      %p80 = por %p78, %p79
      %s82 = sadd.s32 %s81, 1
      %p85 = scmp.eq.s32.totalorder %s26, 1
      %p86 = scmp.ne.s32.totalorder %s81, %s83
      %p87 = scmp.eq.s32.totalorder %s26, 0
      %p88 = por %p86, %p87
      %p89 = scmp.ne.s32.totalorder %s81, %s83
      %p90 = scmp.eq.s32.totalorder %s31, 1
      %p91 = por %p89, %p90
      %p92 = scmp.ne.s32.totalorder %s83, %s84
      %p93 = scmp.eq.s32.totalorder %s31, 0
      %p94 = por %p92, %p93
      %p95 = scmp.ne.s32.totalorder %s83, %s84
      %p96 = scmp.eq.s32.totalorder %s32, 1
      %p97 = por %p95, %p96
      %p99 = scmp.ne.s32.totalorder %s84, %s98
      %p100 = scmp.eq.s32.totalorder %s32, 0
      %p101 = por %p99, %p100
      %s103 = sadd.s32 %s102, 1
      %p106 = scmp.eq.s32.totalorder %s26, 1
      %p107 = scmp.ne.s32.totalorder %s102, %s104
      %p108 = scmp.eq.s32.totalorder %s26, 0
      %p109 = por %p107, %p108
      %p110 = scmp.ne.s32.totalorder %s102, %s104
      %p111 = scmp.eq.s32.totalorder %s31, 1
      %p112 = por %p110, %p111
      %p113 = scmp.ne.s32.totalorder %s104, %s105
      %p114 = scmp.eq.s32.totalorder %s31, 0
      %p115 = por %p113, %p114
      %p116 = scmp.ne.s32.totalorder %s104, %s105
      %p117 = scmp.eq.s32.totalorder %s32, 1
      %p118 = por %p116, %p117
      %p120 = scmp.ne.s32.totalorder %s105, %s119
      %p121 = scmp.eq.s32.totalorder %s32, 0
      %p122 = por %p120, %p121
      %s124 = sadd.s32 %s123, 1
      %p127 = scmp.eq.s32.totalorder %s26, 1
      %p128 = scmp.ne.s32.totalorder %s123, %s125
      %p129 = scmp.eq.s32.totalorder %s26, 0
      %p130 = por %p128, %p129
      %p131 = scmp.ne.s32.totalorder %s123, %s125
      %p132 = scmp.eq.s32.totalorder %s31, 1
      %p133 = por %p131, %p132
      %p134 = scmp.ne.s32.totalorder %s125, %s126
      %p135 = scmp.eq.s32.totalorder %s31, 0
      %p136 = por %p134, %p135
      %p137 = scmp.ne.s32.totalorder %s125, %s126
      %p138 = scmp.eq.s32.totalorder %s32, 1
      %p139 = por %p137, %p138
      %p141 = scmp.ne.s32.totalorder %s126, %s140
      %p142 = scmp.eq.s32.totalorder %s32, 0
      %p143 = por %p141, %p142
      %s145 = sadd.s32 %s144, 1
      %p148 = scmp.eq.s32.totalorder %s26, 1
      %p149 = scmp.ne.s32.totalorder %s144, %s146
      %p150 = scmp.eq.s32.totalorder %s26, 0
      %p151 = por %p149, %p150
      %p152 = scmp.ne.s32.totalorder %s144, %s146
      %p153 = scmp.eq.s32.totalorder %s31, 1
      %p154 = por %p152, %p153
      %p155 = scmp.ne.s32.totalorder %s146, %s147
      %p156 = scmp.eq.s32.totalorder %s31, 0
      %p157 = por %p155, %p156
      %p158 = scmp.ne.s32.totalorder %s146, %s147
      %p159 = scmp.eq.s32.totalorder %s32, 1
      %p160 = por %p158, %p159
      %p162 = scmp.ne.s32.totalorder %s147, %s161
      %p163 = scmp.eq.s32.totalorder %s32, 0
      %p164 = por %p162, %p163
      %s166 = sadd.s32 %s165, 1
      %p169 = scmp.eq.s32.totalorder %s26, 1
      %p170 = scmp.ne.s32.totalorder %s165, %s167
      %p171 = scmp.eq.s32.totalorder %s26, 0
      %p172 = por %p170, %p171
      %p173 = scmp.ne.s32.totalorder %s165, %s167
      %p174 = scmp.eq.s32.totalorder %s31, 1
      %p175 = por %p173, %p174
      %p176 = scmp.ne.s32.totalorder %s167, %s168
      %p177 = scmp.eq.s32.totalorder %s31, 0
      %p178 = por %p176, %p177
      %p179 = scmp.ne.s32.totalorder %s167, %s168
      %p180 = scmp.eq.s32.totalorder %s32, 1
      %p181 = por %p179, %p180
      %p183 = scmp.ne.s32.totalorder %s168, %s182
      %p184 = scmp.eq.s32.totalorder %s32, 0
      %p185 = por %p183, %p184
      %s187 = sadd.s32 %s186, 1
      %p190 = scmp.eq.s32.totalorder %s26, 1
      %p191 = scmp.ne.s32.totalorder %s186, %s188
      %p192 = scmp.eq.s32.totalorder %s26, 0
      %p193 = por %p191, %p192
      %p194 = scmp.ne.s32.totalorder %s186, %s188
      %p195 = scmp.eq.s32.totalorder %s31, 1
      %p196 = por %p194, %p195
      %p197 = scmp.ne.s32.totalorder %s188, %s189
      %p198 = scmp.eq.s32.totalorder %s31, 0
      %p199 = por %p197, %p198
      %p200 = scmp.ne.s32.totalorder %s188, %s189
      %p201 = scmp.eq.s32.totalorder %s32, 1
      %p202 = por %p200, %p201
      %p204 = scmp.ne.s32.totalorder %s189, %s203
      %p205 = scmp.eq.s32.totalorder %s32, 0
      %p206 = por %p204, %p205
      %s208 = sadd.s32 %s207, 1
      %p211 = scmp.eq.s32.totalorder %s26, 1
      %p212 = scmp.ne.s32.totalorder %s207, %s209
      %p213 = scmp.eq.s32.totalorder %s26, 0
      %p214 = por %p212, %p213
      %p215 = scmp.ne.s32.totalorder %s207, %s209
      %p216 = scmp.eq.s32.totalorder %s31, 1
      %p217 = por %p215, %p216
      %p218 = scmp.ne.s32.totalorder %s209, %s210
      %p219 = scmp.eq.s32.totalorder %s31, 0
      %p220 = por %p218, %p219
      %p221 = scmp.ne.s32.totalorder %s209, %s210
      %p222 = scmp.eq.s32.totalorder %s32, 1
      %p223 = por %p221, %p222
      %p225 = scmp.ne.s32.totalorder %s210, %s224
      %p226 = scmp.eq.s32.totalorder %s32, 0
      %p227 = por %p225, %p226
      %s229 = sadd.s32 %s228, 1
      %p232 = scmp.eq.s32.totalorder %s26, 1
      %p233 = scmp.ne.s32.totalorder %s228, %s230
      %p234 = scmp.eq.s32.totalorder %s26, 0
      %p235 = por %p233, %p234
      %p236 = scmp.ne.s32.totalorder %s228, %s230
      %p237 = scmp.eq.s32.totalorder %s31, 1
      %p238 = por %p236, %p237
      %p239 = scmp.ne.s32.totalorder %s230, %s231
      %p240 = scmp.eq.s32.totalorder %s31, 0
      %p241 = por %p239, %p240
      %p242 = scmp.ne.s32.totalorder %s230, %s231
      %p243 = scmp.eq.s32.totalorder %s32, 1
      %p244 = por %p242, %p243
      %p246 = scmp.ne.s32.totalorder %s231, %s245
      %p247 = scmp.eq.s32.totalorder %s32, 0
      %p248 = por %p246, %p247
      %s250 = sadd.s32 %s249, 1
      %p253 = scmp.eq.s32.totalorder %s26, 1
      %p254 = scmp.ne.s32.totalorder %s249, %s251
      %p255 = scmp.eq.s32.totalorder %s26, 0
      %p256 = por %p254, %p255
      %p257 = scmp.ne.s32.totalorder %s249, %s251
      %p258 = scmp.eq.s32.totalorder %s31, 1
      %p259 = por %p257, %p258
      %p260 = scmp.ne.s32.totalorder %s251, %s252
      %p261 = scmp.eq.s32.totalorder %s31, 0
      %p262 = por %p260, %p261
      %p263 = scmp.ne.s32.totalorder %s251, %s252
      %p264 = scmp.eq.s32.totalorder %s32, 1
      %p265 = por %p263, %p264
      %p267 = scmp.ne.s32.totalorder %s252, %s266
      %p268 = scmp.eq.s32.totalorder %s32, 0
      %p269 = por %p267, %p268
      %s271 = sadd.s32 %s270, 1
      %p274 = scmp.eq.s32.totalorder %s26, 1
      %p275 = scmp.ne.s32.totalorder %s270, %s272
      %p276 = scmp.eq.s32.totalorder %s26, 0
      %p277 = por %p275, %p276
      %p278 = scmp.ne.s32.totalorder %s270, %s272
      %p279 = scmp.eq.s32.totalorder %s31, 1
      %p280 = por %p278, %p279
      %p281 = scmp.ne.s32.totalorder %s272, %s273
      %p282 = scmp.eq.s32.totalorder %s31, 0
      %p283 = por %p281, %p282
      %p284 = scmp.ne.s32.totalorder %s272, %s273
      %p285 = scmp.eq.s32.totalorder %s32, 1
      %p286 = por %p284, %p285
      %p288 = scmp.ne.s32.totalorder %s273, %s287
      %p289 = scmp.eq.s32.totalorder %s32, 0
      %p290 = por %p288, %p289
      %s292 = sadd.s32 %s291, 1
      %p295 = scmp.eq.s32.totalorder %s26, 1
      %p296 = scmp.ne.s32.totalorder %s291, %s293
      %p297 = scmp.eq.s32.totalorder %s26, 0
      %p298 = por %p296, %p297
      %p299 = scmp.ne.s32.totalorder %s291, %s293
      %p300 = scmp.eq.s32.totalorder %s31, 1
      %p301 = por %p299, %p300
      %p302 = scmp.ne.s32.totalorder %s293, %s294
      %p303 = scmp.eq.s32.totalorder %s31, 0
      %p304 = por %p302, %p303
      %p305 = scmp.ne.s32.totalorder %s293, %s294
      %p306 = scmp.eq.s32.totalorder %s32, 1
      %p307 = por %p305, %p306
      %p309 = scmp.ne.s32.totalorder %s294, %s308
      %p310 = scmp.eq.s32.totalorder %s32, 0
      %p311 = por %p309, %p310
      %s313 = sadd.s32 %s312, 1
      %p316 = scmp.eq.s32.totalorder %s26, 1
      %p317 = scmp.ne.s32.totalorder %s312, %s314
      %p318 = scmp.eq.s32.totalorder %s26, 0
      %p319 = por %p317, %p318
      %p320 = scmp.ne.s32.totalorder %s312, %s314
      %p321 = scmp.eq.s32.totalorder %s31, 1
      %p322 = por %p320, %p321
      %p323 = scmp.ne.s32.totalorder %s314, %s315
      %p324 = scmp.eq.s32.totalorder %s31, 0
      %p325 = por %p323, %p324
      %p326 = scmp.ne.s32.totalorder %s314, %s315
      %p327 = scmp.eq.s32.totalorder %s32, 1
      %p328 = por %p326, %p327
      %p330 = scmp.ne.s32.totalorder %s315, %s329
      %p331 = scmp.eq.s32.totalorder %s32, 0
      %p332 = por %p330, %p331
      %s334 = sadd.s32 %s333, 1
      %p337 = scmp.eq.s32.totalorder %s26, 1
      %p338 = scmp.ne.s32.totalorder %s333, %s335
      %p339 = scmp.eq.s32.totalorder %s26, 0
      %p340 = por %p338, %p339
      %p341 = scmp.ne.s32.totalorder %s333, %s335
      %p342 = scmp.eq.s32.totalorder %s31, 1
      %p343 = por %p341, %p342
      %p344 = scmp.ne.s32.totalorder %s335, %s336
      %p345 = scmp.eq.s32.totalorder %s31, 0
      %p346 = por %p344, %p345
      %p347 = scmp.ne.s32.totalorder %s335, %s336
      %p348 = scmp.eq.s32.totalorder %s32, 1
      %p349 = por %p347, %p348
      %p351 = scmp.ne.s32.totalorder %s336, %s350
      %p352 = scmp.eq.s32.totalorder %s32, 0
      %p353 = por %p351, %p352
      %s354 = ssub.s32 %s26, %s33
      %p355 = scmp.eq.s32.totalorder %s354, 0
      %s357 = sadd.s32 %s356, 1
      %s358 = scalar_select %p355, %s356, %s357
      %p361 = pneg %p355
      %p362 = scmp.eq.s32.totalorder %s26, 1
      %p363 = por %p361, %p362
      %p364 = scmp.ne.s32.totalorder %s356, %s359
      %p365 = scmp.eq.s32.totalorder %s26, 0
      %p366 = por %p364, %p365
      %p367 = scmp.ne.s32.totalorder %s356, %s359
      %p368 = scmp.eq.s32.totalorder %s31, 1
      %p369 = por %p367, %p368
      %p370 = scmp.ne.s32.totalorder %s359, %s360
      %p371 = scmp.eq.s32.totalorder %s31, 0
      %p372 = por %p370, %p371
      %p373 = scmp.ne.s32.totalorder %s359, %s360
      %p374 = scmp.eq.s32.totalorder %s32, 1
      %p375 = por %p373, %p374
      %p377 = scmp.ne.s32.totalorder %s360, %s376
      %p378 = scmp.eq.s32.totalorder %s32, 0
      %p379 = por %p377, %p378
      %p380 = scmp.le.s32.totalorder 1, %s26
      %p381 = scmp.lt.s32.totalorder %s26, 3
      %p382 = pnand %p380, %p381
      %p383 = pneg %p382
      // Predicated region
      $region9: #{rotation_estimation_forward.1} parent=5 // pred_check
        _
      $region10: #{rotation_estimation_forward.1} parent=5 // pred_check_branch
        %385 = sbr.rel (%p382) target = $region12
      $region11: #{rotation_estimation_forward.1} parent=5 // pred_region
        %s386 = ssub.s32 %s26, 1
        // Predicated region
        $region13: #{rotation_estimation_forward.1} parent=11 // pred_check
          %p387 = pneg %p73
        $region14: #{rotation_estimation_forward.1} parent=11 // pred_check_branch
          %389 = sbr.rel (%p387) target = $region16
        $region15: #{rotation_estimation_forward.1} parent=11 // pred_region
          _
        $region16: #{rotation_estimation_forward.1} parent=11 // pred_fallthru
          _
        // Predicated region
        $region17: #{rotation_estimation_forward.1} parent=11 // pred_check
          %p390 = pneg %p94
        $region18: #{rotation_estimation_forward.1} parent=11 // pred_check_branch
          %392 = sbr.rel (%p390) target = $region20
        $region19: #{rotation_estimation_forward.1} parent=11 // pred_region
          _
        $region20: #{rotation_estimation_forward.1} parent=11 // pred_fallthru
          _
        // Predicated region
        $region21: #{rotation_estimation_forward.1} parent=11 // pred_check
          %p393 = pneg %p115
        $region22: #{rotation_estimation_forward.1} parent=11 // pred_check_branch
          %395 = sbr.rel (%p393) target = $region24
        $region23: #{rotation_estimation_forward.1} parent=11 // pred_region
          _
        $region24: #{rotation_estimation_forward.1} parent=11 // pred_fallthru
          _
        // Predicated region
        $region25: #{rotation_estimation_forward.1} parent=11 // pred_check
          %p396 = pneg %p136
        $region26: #{rotation_estimation_forward.1} parent=11 // pred_check_branch
          %398 = sbr.rel (%p396) target = $region28
        $region27: #{rotation_estimation_forward.1} parent=11 // pred_region
          _
        $region28: #{rotation_estimation_forward.1} parent=11 // pred_fallthru
          _
        // Predicated region
        $region29: #{rotation_estimation_forward.1} parent=11 // pred_check
          %p399 = pneg %p157
        $region30: #{rotation_estimation_forward.1} parent=11 // pred_check_branch
          %401 = sbr.rel (%p399) target = $region32
        $region31: #{rotation_estimation_forward.1} parent=11 // pred_region
          _
        $region32: #{rotation_estimation_forward.1} parent=11 // pred_fallthru
          _
        // Predicated region
        $region33: #{rotation_estimation_forward.1} parent=11 // pred_check
          %p402 = pneg %p178
        $region34: #{rotation_estimation_forward.1} parent=11 // pred_check_branch
          %404 = sbr.rel (%p402) target = $region36
        $region35: #{rotation_estimation_forward.1} parent=11 // pred_region
          _
        $region36: #{rotation_estimation_forward.1} parent=11 // pred_fallthru
          _
        // Predicated region
        $region37: #{rotation_estimation_forward.1} parent=11 // pred_check
          %p405 = pneg %p199
        $region38: #{rotation_estimation_forward.1} parent=11 // pred_check_branch
          %407 = sbr.rel (%p405) target = $region40
        $region39: #{rotation_estimation_forward.1} parent=11 // pred_region
          _
        $region40: #{rotation_estimation_forward.1} parent=11 // pred_fallthru
          _
        // Predicated region
        $region41: #{rotation_estimation_forward.1} parent=11 // pred_check
          %p408 = pneg %p220
        $region42: #{rotation_estimation_forward.1} parent=11 // pred_check_branch
          %410 = sbr.rel (%p408) target = $region44
        $region43: #{rotation_estimation_forward.1} parent=11 // pred_region
          _
        $region44: #{rotation_estimation_forward.1} parent=11 // pred_fallthru
          _
        // Predicated region
        $region45: #{rotation_estimation_forward.1} parent=11 // pred_check
          %p411 = pneg %p241
        $region46: #{rotation_estimation_forward.1} parent=11 // pred_check_branch
          %413 = sbr.rel (%p411) target = $region48
        $region47: #{rotation_estimation_forward.1} parent=11 // pred_region
          %s415 = ssub.s32 32768, 32768
          %416 = vsyncadd [#allocation3], %s415
          %s417 = sshll.u32 [#allocation2], 4
          %s418 = int_to_ptr.vmem [resolvable:$true] %s417
          %423 = dma.hbm_to_vmem [thread:$0]  %s9, 32768, %s418, [#allocation3], 256, 256, 16
        $region48: #{rotation_estimation_forward.1} parent=11 // pred_fallthru
          _
        // Predicated region
        $region49: #{rotation_estimation_forward.1} parent=11 // pred_check
          %p424 = pneg %p262
        $region50: #{rotation_estimation_forward.1} parent=11 // pred_check_branch
          %426 = sbr.rel (%p424) target = $region52
        $region51: #{rotation_estimation_forward.1} parent=11 // pred_region
          _
        $region52: #{rotation_estimation_forward.1} parent=11 // pred_fallthru
          _
        // Predicated region
        $region53: #{rotation_estimation_forward.1} parent=11 // pred_check
          %p427 = pneg %p283
        $region54: #{rotation_estimation_forward.1} parent=11 // pred_check_branch
          %429 = sbr.rel (%p427) target = $region56
        $region55: #{rotation_estimation_forward.1} parent=11 // pred_region
          %s431 = ssub.s32 16384, 16384
          %432 = vsyncadd [#allocation6], %s431
          %s433 = sshll.u32 [#allocation5], 4
          %s434 = int_to_ptr.vmem [resolvable:$true] %s433
          %439 = dma.hbm_to_vmem [thread:$0]  %s11, 16384, %s434, [#allocation6], 256, 256, 16
        $region56: #{rotation_estimation_forward.1} parent=11 // pred_fallthru
          _
        // Predicated region
        $region57: #{rotation_estimation_forward.1} parent=11 // pred_check
          %p440 = pneg %p304
        $region58: #{rotation_estimation_forward.1} parent=11 // pred_check_branch
          %442 = sbr.rel (%p440) target = $region60
        $region59: #{rotation_estimation_forward.1} parent=11 // pred_region
          _
        $region60: #{rotation_estimation_forward.1} parent=11 // pred_fallthru
          _
        // Predicated region
        $region61: #{rotation_estimation_forward.1} parent=11 // pred_check
          %p443 = pneg %p325
        $region62: #{rotation_estimation_forward.1} parent=11 // pred_check_branch
          %445 = sbr.rel (%p443) target = $region64
        $region63: #{rotation_estimation_forward.1} parent=11 // pred_region
          _
        $region64: #{rotation_estimation_forward.1} parent=11 // pred_fallthru
          _
        // Predicated region
        $region65: #{rotation_estimation_forward.1} parent=11 // pred_check
          %p446 = pneg %p346
        $region66: #{rotation_estimation_forward.1} parent=11 // pred_check_branch
          %448 = sbr.rel (%p446) target = $region68
        $region67: #{rotation_estimation_forward.1} parent=11 // pred_region
          _
        $region68: #{rotation_estimation_forward.1} parent=11 // pred_fallthru
          _
      $region12: #{rotation_estimation_forward.1} parent=5 // pred_fallthru
        _
      %p449 = scmp.lt.s32.totalorder %s26, 2
      // Predicated region
      $region69: #{rotation_estimation_forward.1} parent=5 // pred_check
        %p450 = pneg %p449
      $region70: #{rotation_estimation_forward.1} parent=5 // pred_check_branch
        %452 = sbr.rel (%p450) target = $region72
      $region71: #{rotation_estimation_forward.1} parent=5 // pred_region
        // Predicated region
        $region73: #{rotation_estimation_forward.1} parent=71 // pred_check
          %p453 = pneg %p46
        $region74: #{rotation_estimation_forward.1} parent=71 // pred_check_branch
          %455 = sbr.rel (%p453) target = $region76
        $region75: #{rotation_estimation_forward.1} parent=71 // pred_region
          %s456 = smul.u32 64, %s26
          %p457 = scmp.lt.s32.totalorder %s456, 127
          %s458 = scalar_select %p457, %s456, 127
          %s459 = smul.addr %s458, 4
          %s460 = scalar_lea.vmem %s0, %s459
          %s461 = smul.u32 64, %s26
        $region76: #{rotation_estimation_forward.1} parent=71 // pred_fallthru
          _
      $region72: #{rotation_estimation_forward.1} parent=5 // pred_fallthru
        _
      %p462 = scmp.le.s32.totalorder 1, %s26
      %p463 = scmp.lt.s32.totalorder %s26, 3
      %p464 = pnand %p462, %p463
      %p465 = pneg %p464
      // Predicated region
      $region77: #{rotation_estimation_forward.1} parent=5 // pred_check
        _
      $region78: #{rotation_estimation_forward.1} parent=5 // pred_check_branch
        %467 = sbr.rel (%p464) target = $region80
      $region79: #{rotation_estimation_forward.1} parent=5 // pred_region
        %s468 = ssub.s32 %s26, 1
        // Predicated region
        $region81: #{rotation_estimation_forward.1} parent=79 // pred_check
          %p469 = pneg %p241
        $region82: #{rotation_estimation_forward.1} parent=79 // pred_check_branch
          %471 = sbr.rel (%p469) target = $region84
        $region83: #{rotation_estimation_forward.1} parent=79 // pred_region
          %472 = dma.done [#allocation3], 32768
        $region84: #{rotation_estimation_forward.1} parent=79 // pred_fallthru
          _
        // Predicated region
        $region85: #{rotation_estimation_forward.1} parent=79 // pred_check
          %p473 = pneg %p283
        $region86: #{rotation_estimation_forward.1} parent=79 // pred_check_branch
          %475 = sbr.rel (%p473) target = $region88
        $region87: #{rotation_estimation_forward.1} parent=79 // pred_region
          %476 = dma.done [#allocation6], 16384
        $region88: #{rotation_estimation_forward.1} parent=79 // pred_fallthru
          _
        %s477 = smul.u32 64, %s31
        %p478 = scmp.lt.s32.totalorder %s477, 127
        %s479 = scalar_select %p478, %s477, 127
        %s480 = smul.addr %s479, 4
        %s481 = scalar_lea.vmem %s0, %s480
        %p482 = pneg %p52
        %p483 = pneg %p49
        %p484 = pneg %p73
        %p485 = pneg %p70
        %p486 = pneg %p94
        %p487 = pneg %p91
        %p488 = pneg %p115
        %p489 = pneg %p112
        %p490 = pneg %p136
        %p491 = pneg %p133
        %p492 = pneg %p157
        %p493 = pneg %p154
        %p494 = pneg %p178
        %p495 = pneg %p175
        %p496 = pneg %p199
        %p497 = pneg %p196
        %p498 = pneg %p220
        %p499 = pneg %p217
        %p500 = pneg %p241
        %p501 = pneg %p238
        %p502 = pneg %p262
        %p503 = pneg %p259
        %p504 = pneg %p283
        %p505 = pneg %p280
        %p506 = pneg %p304
        %p507 = pneg %p301
        %p508 = pneg %p325
        %p509 = pneg %p322
        %p510 = pneg %p346
        %p511 = pneg %p343
        %p512 = pneg %p372
        %p513 = pneg %p369
        %s514 = sand.u32 %s359, 1
        %s515 = scalar_lea.sflag [#allocation4], %s514
        %s516 = sand.u32 %s359, 1
        %s517 = smul.addr %s516, 4
        %s518 = scalar_lea.vmem [#allocation7], %s517
        %s519 = smul.u32 64, %s31
        %p520 = scmp.lt.s32.totalorder %s519, 127
        %s521 = scalar_select %p520, %s519, 127
        %s522 = smul.addr %s521, 4
        %s523 = scalar_lea.vmem %s0, %s522
        %s524 = smul.u32 64, %s31
        %v526 = vld [vmem:[%s523] sm:$0xf]
        %v527 = vld [vmem:[%s523 + $0x4] sm:$0xf]
        %v528 = vld [vmem:[%s523 + $0x8] sm:$0xf]
        %v529 = vld [vmem:[%s523 + $0xc] sm:$0xf]
        %v530 = vld [vmem:[%s523 + $0x10] sm:$0xf]
        %v531 = vld [vmem:[%s523 + $0x14] sm:$0xf]
        %v532 = vld [vmem:[%s523 + $0x18] sm:$0xf]
        %v533 = vld [vmem:[%s523 + $0x1c] sm:$0xf]
        %v534 = vld [vmem:[%s523 + $0x20] sm:$0xf]
        %v535 = vld [vmem:[%s523 + $0x24] sm:$0xf]
        %v536 = vld [vmem:[%s523 + $0x28] sm:$0xf]
        %v537 = vld [vmem:[%s523 + $0x2c] sm:$0xf]
        %v538 = vld [vmem:[%s523 + $0x30] sm:$0xf]
        %v539 = vld [vmem:[%s523 + $0x34] sm:$0xf]
        %v540 = vld [vmem:[%s523 + $0x38] sm:$0xf]
        %v541 = vld [vmem:[%s523 + $0x3c] sm:$0xf]
        %v542 = vld [vmem:[%s523 + $0x40] sm:$0xf]
        %v543 = vld [vmem:[%s523 + $0x44] sm:$0xf]
        %v544 = vld [vmem:[%s523 + $0x48] sm:$0xf]
        %v545 = vld [vmem:[%s523 + $0x4c] sm:$0xf]
        %v546 = vld [vmem:[%s523 + $0x50] sm:$0xf]
        %v547 = vld [vmem:[%s523 + $0x54] sm:$0xf]
        %v548 = vld [vmem:[%s523 + $0x58] sm:$0xf]
        %v549 = vld [vmem:[%s523 + $0x5c] sm:$0xf]
        %v550 = vld [vmem:[%s523 + $0x60] sm:$0xf]
        %v551 = vld [vmem:[%s523 + $0x64] sm:$0xf]
        %v552 = vld [vmem:[%s523 + $0x68] sm:$0xf]
        %v553 = vld [vmem:[%s523 + $0x6c] sm:$0xf]
        %v554 = vld [vmem:[%s523 + $0x70] sm:$0xf]
        %v555 = vld [vmem:[%s523 + $0x74] sm:$0xf]
        %v556 = vld [vmem:[%s523 + $0x78] sm:$0xf]
        %v557 = vld [vmem:[%s523 + $0x7c] sm:$0xf]
        %v558 = vld [vmem:[%s523 + $0x80] sm:$0xf]
        %v559 = vld [vmem:[%s523 + $0x84] sm:$0xf]
        %v560 = vld [vmem:[%s523 + $0x88] sm:$0xf]
        %v561 = vld [vmem:[%s523 + $0x8c] sm:$0xf]
        %v562 = vld [vmem:[%s523 + $0x90] sm:$0xf]
        %v563 = vld [vmem:[%s523 + $0x94] sm:$0xf]
        %v564 = vld [vmem:[%s523 + $0x98] sm:$0xf]
        %v565 = vld [vmem:[%s523 + $0x9c] sm:$0xf]
        %v566 = vld [vmem:[%s523 + $0xa0] sm:$0xf]
        %v567 = vld [vmem:[%s523 + $0xa4] sm:$0xf]
        %v568 = vld [vmem:[%s523 + $0xa8] sm:$0xf]
        %v569 = vld [vmem:[%s523 + $0xac] sm:$0xf]
        %v570 = vld [vmem:[%s523 + $0xb0] sm:$0xf]
        %v571 = vld [vmem:[%s523 + $0xb4] sm:$0xf]
        %v572 = vld [vmem:[%s523 + $0xb8] sm:$0xf]
        %v573 = vld [vmem:[%s523 + $0xbc] sm:$0xf]
        %v574 = vld [vmem:[%s523 + $0xc0] sm:$0xf]
        %v575 = vld [vmem:[%s523 + $0xc4] sm:$0xf]
        %v576 = vld [vmem:[%s523 + $0xc8] sm:$0xf]
        %v577 = vld [vmem:[%s523 + $0xcc] sm:$0xf]
        %v578 = vld [vmem:[%s523 + $0xd0] sm:$0xf]
        %v579 = vld [vmem:[%s523 + $0xd4] sm:$0xf]
        %v580 = vld [vmem:[%s523 + $0xd8] sm:$0xf]
        %v581 = vld [vmem:[%s523 + $0xdc] sm:$0xf]
        %v582 = vld [vmem:[%s523 + $0xe0] sm:$0xf]
        %v583 = vld [vmem:[%s523 + $0xe4] sm:$0xf]
        %v584 = vld [vmem:[%s523 + $0xe8] sm:$0xf]
        %v585 = vld [vmem:[%s523 + $0xec] sm:$0xf]
        %v586 = vld [vmem:[%s523 + $0xf0] sm:$0xf]
        %v587 = vld [vmem:[%s523 + $0xf4] sm:$0xf]
        %v588 = vld [vmem:[%s523 + $0xf8] sm:$0xf]
        %v589 = vld [vmem:[%s523 + $0xfc] sm:$0xf]
        %v590 = vld [vmem:[%s1] sm:$0xf]
        %v591 = vld [vmem:[%s2] sm:$0x1]
        %v593 = vlaneseq
        %v594 = vshrl.u32 %v593, 7
        %v595 = vsub.s32 0, %v594
        %v596 = vrot.slane %v591, %v595
        %v662 = vunpack.c.l.b16 %v526
        %v663 = vunpack.c.l.b16 %v527
        %v664 = vunpack.c.l.b16 %v528
        %v665 = vunpack.c.l.b16 %v529
        %v666 = vunpack.c.l.b16 %v530
        %v667 = vunpack.c.l.b16 %v531
        %v668 = vunpack.c.l.b16 %v532
        %v669 = vunpack.c.l.b16 %v533
        %v670 = vunpack.c.l.b16 %v534
        %v671 = vunpack.c.l.b16 %v535
        %v672 = vunpack.c.l.b16 %v536
        %v673 = vunpack.c.l.b16 %v537
        %v674 = vunpack.c.l.b16 %v538
        %v675 = vunpack.c.l.b16 %v539
        %v676 = vunpack.c.l.b16 %v540
        %v677 = vunpack.c.l.b16 %v541
        %v678 = vunpack.c.l.b16 %v542
        %v679 = vunpack.c.l.b16 %v543
        %v680 = vunpack.c.l.b16 %v544
        %v681 = vunpack.c.l.b16 %v545
        %v682 = vunpack.c.l.b16 %v546
        %v683 = vunpack.c.l.b16 %v547
        %v684 = vunpack.c.l.b16 %v548
        %v685 = vunpack.c.l.b16 %v549
        %v686 = vunpack.c.l.b16 %v550
        %v687 = vunpack.c.l.b16 %v551
        %v688 = vunpack.c.l.b16 %v552
        %v689 = vunpack.c.l.b16 %v553
        %v690 = vunpack.c.l.b16 %v554
        %v691 = vunpack.c.l.b16 %v555
        %v692 = vunpack.c.l.b16 %v556
        %v693 = vunpack.c.l.b16 %v557
        %v694 = vunpack.c.l.b16 %v558
        %v695 = vunpack.c.l.b16 %v559
        %v696 = vunpack.c.l.b16 %v560
        %v697 = vunpack.c.l.b16 %v561
        %v698 = vunpack.c.l.b16 %v562
        %v699 = vunpack.c.l.b16 %v563
        %v700 = vunpack.c.l.b16 %v564
        %v701 = vunpack.c.l.b16 %v565
        %v702 = vunpack.c.l.b16 %v566
        %v703 = vunpack.c.l.b16 %v567
        %v704 = vunpack.c.l.b16 %v568
        %v705 = vunpack.c.l.b16 %v569
        %v706 = vunpack.c.l.b16 %v570
        %v707 = vunpack.c.l.b16 %v571
        %v708 = vunpack.c.l.b16 %v572
        %v709 = vunpack.c.l.b16 %v573
        %v710 = vunpack.c.l.b16 %v574
        %v711 = vunpack.c.l.b16 %v575
        %v712 = vunpack.c.l.b16 %v576
        %v713 = vunpack.c.l.b16 %v577
        %v714 = vunpack.c.l.b16 %v578
        %v715 = vunpack.c.l.b16 %v579
        %v716 = vunpack.c.l.b16 %v580
        %v717 = vunpack.c.l.b16 %v581
        %v718 = vunpack.c.l.b16 %v582
        %v719 = vunpack.c.l.b16 %v583
        %v720 = vunpack.c.l.b16 %v584
        %v721 = vunpack.c.l.b16 %v585
        %v722 = vunpack.c.l.b16 %v586
        %v723 = vunpack.c.l.b16 %v587
        %v724 = vunpack.c.l.b16 %v588
        %v725 = vunpack.c.l.b16 %v589
        %v726 = vpack.c.b16 %v663, %v662
        %v727 = vpack.c.b16 %v665, %v664
        %v728 = vpack.c.b16 %v667, %v666
        %v729 = vpack.c.b16 %v669, %v668
        %v730 = vpack.c.b16 %v671, %v670
        %v731 = vpack.c.b16 %v673, %v672
        %v732 = vpack.c.b16 %v675, %v674
        %v733 = vpack.c.b16 %v677, %v676
        %v734 = vpack.c.b16 %v679, %v678
        %v735 = vpack.c.b16 %v681, %v680
        %v736 = vpack.c.b16 %v683, %v682
        %v737 = vpack.c.b16 %v685, %v684
        %v738 = vpack.c.b16 %v687, %v686
        %v739 = vpack.c.b16 %v689, %v688
        %v740 = vpack.c.b16 %v691, %v690
        %v741 = vpack.c.b16 %v693, %v692
        %v742 = vpack.c.b16 %v695, %v694
        %v743 = vpack.c.b16 %v697, %v696
        %v744 = vpack.c.b16 %v699, %v698
        %v745 = vpack.c.b16 %v701, %v700
        %v746 = vpack.c.b16 %v703, %v702
        %v747 = vpack.c.b16 %v705, %v704
        %v748 = vpack.c.b16 %v707, %v706
        %v749 = vpack.c.b16 %v709, %v708
        %v750 = vpack.c.b16 %v711, %v710
        %v751 = vpack.c.b16 %v713, %v712
        %v752 = vpack.c.b16 %v715, %v714
        %v753 = vpack.c.b16 %v717, %v716
        %v754 = vpack.c.b16 %v719, %v718
        %v755 = vpack.c.b16 %v721, %v720
        %v756 = vpack.c.b16 %v723, %v722
        %v757 = vpack.c.b16 %v725, %v724
        %vm758 = vcmask 64512
        %v760 = vsel %vm758, %v726, 0
        %v763 = vsel %vm758, %v727, 0
        %v766 = vsel %vm758, %v728, 0
        %v769 = vsel %vm758, %v729, 0
        %v772 = vsel %vm758, %v730, 0
        %v775 = vsel %vm758, %v731, 0
        %v778 = vsel %vm758, %v732, 0
        %v781 = vsel %vm758, %v733, 0
        %v784 = vsel %vm758, %v734, 0
        %v787 = vsel %vm758, %v735, 0
        %v790 = vsel %vm758, %v736, 0
        %v793 = vsel %vm758, %v737, 0
        %v796 = vsel %vm758, %v738, 0
        %v799 = vsel %vm758, %v739, 0
        %v802 = vsel %vm758, %v740, 0
        %v805 = vsel %vm758, %v741, 0
        %v808 = vsel %vm758, %v742, 0
        %v811 = vsel %vm758, %v743, 0
        %v814 = vsel %vm758, %v744, 0
        %v817 = vsel %vm758, %v745, 0
        %v820 = vsel %vm758, %v746, 0
        %v823 = vsel %vm758, %v747, 0
        %v826 = vsel %vm758, %v748, 0
        %v829 = vsel %vm758, %v749, 0
        %v832 = vsel %vm758, %v750, 0
        %v835 = vsel %vm758, %v751, 0
        %v838 = vsel %vm758, %v752, 0
        %v841 = vsel %vm758, %v753, 0
        %v844 = vsel %vm758, %v754, 0
        %v847 = vsel %vm758, %v755, 0
        %v850 = vsel %vm758, %v756, 0
        %v853 = vsel %vm758, %v757, 0
        %vm855 = vcmask 1043456
        %v857 = vsel %vm855, %v590, 0
        %859 = vmatprep.subr.bf16.mxu0 0
        %860 = vmatpush1.bf16.msra.mxu0 %v857
        %861 = vmatprep.subr.bf16.mxu0 0
        %862 = vmatpush1.bf16.msra.mxu0 0
        %863 = vmatprep.subr.bf16.mxu0 0
        %864 = vmatpush1.bf16.msra.mxu0 0
        %865 = vmatprep.subr.bf16.mxu0 0
        %866 = vmatpush1.bf16.msra.mxu0 0
        %867 = vmatprep.subr.bf16.mxu0 0
        %868 = vmatpush1.bf16.msra.mxu0 0
        %869 = vmatprep.subr.bf16.mxu0 0
        %870 = vmatpush1.bf16.msra.mxu0 0
        %871 = vmatprep.subr.bf16.mxu0 0
        %872 = vmatpush1.bf16.msra.mxu0 0
        %873 = vmatprep.subr.bf16.mxu0 0
        %874 = vmatpush1.bf16.msra.mxu0 0
        %875 = vmatprep.subr.bf16.mxu0 0
        %876 = vmatpush1.bf16.msra.mxu0 0
        %877 = vmatprep.subr.bf16.mxu0 0
        %878 = vmatpush1.bf16.msra.mxu0 0
        %879 = vmatprep.subr.bf16.mxu0 0
        %880 = vmatpush1.bf16.msra.mxu0 0
        %881 = vmatprep.subr.bf16.mxu0 0
        %882 = vmatpush1.bf16.msra.mxu0 0
        %883 = vmatprep.subr.bf16.mxu0 0
        %884 = vmatpush1.bf16.msra.mxu0 0
        %885 = vmatprep.subr.bf16.mxu0 0
        %886 = vmatpush1.bf16.msra.mxu0 0
        %887 = vmatprep.subr.bf16.mxu0 0
        %888 = vmatpush1.bf16.msra.mxu0 0
        %889 = vmatprep.subr.bf16.mxu0 0
        %890 = vmatpush1.bf16.msra.mxu0 0
        %891 = vmatprep.mubr.bf16.mxu0 0
        %892 = vmatmul.mubr.bf16.gmra.mrb[0].mxu0 %v760
        %v893 = vpop.f32.mrb[0].mxu0
        %v894 = vadd.f32 %v596, %v893
        %v895 = vpop.f32.mrb[0].mxu0
        %v896 = vpop.f32.mrb[0].mxu0
        %v897 = vadd.f32 %v596, %v896
        %v898 = vpop.f32.mrb[0].mxu0
        %899 = vmatprep.mubr.bf16.mxu0 0
        %900 = vmatmul.mubr.bf16.gmra.mrb[0].mxu0 %v763
        %v901 = vpop.f32.mrb[0].mxu0
        %v902 = vadd.f32 %v596, %v901
        %v903 = vpop.f32.mrb[0].mxu0
        %v904 = vpop.f32.mrb[0].mxu0
        %v905 = vadd.f32 %v596, %v904
        %v906 = vpop.f32.mrb[0].mxu0
        %907 = vmatprep.mubr.bf16.mxu0 0
        %908 = vmatmul.mubr.bf16.gmra.mrb[0].mxu0 %v766
        %v909 = vpop.f32.mrb[0].mxu0
        %v910 = vadd.f32 %v596, %v909
        %v911 = vpop.f32.mrb[0].mxu0
        %v912 = vpop.f32.mrb[0].mxu0
        %v913 = vadd.f32 %v596, %v912
        %v914 = vpop.f32.mrb[0].mxu0
        %915 = vmatprep.mubr.bf16.mxu0 0
        %916 = vmatmul.mubr.bf16.gmra.mrb[0].mxu0 %v769
        %v917 = vpop.f32.mrb[0].mxu0
        %v918 = vadd.f32 %v596, %v917
        %v919 = vpop.f32.mrb[0].mxu0
        %v920 = vpop.f32.mrb[0].mxu0
        %v921 = vadd.f32 %v596, %v920
        %v922 = vpop.f32.mrb[0].mxu0
        %923 = vmatprep.mubr.bf16.mxu0 0
        %924 = vmatmul.mubr.bf16.gmra.mrb[0].mxu0 %v772
        %v925 = vpop.f32.mrb[0].mxu0
        %v926 = vadd.f32 %v596, %v925
        %v927 = vpop.f32.mrb[0].mxu0
        %v928 = vpop.f32.mrb[0].mxu0
        %v929 = vadd.f32 %v596, %v928
        %v930 = vpop.f32.mrb[0].mxu0
        %931 = vmatprep.mubr.bf16.mxu0 0
        %932 = vmatmul.mubr.bf16.gmra.mrb[0].mxu0 %v775
        %v933 = vpop.f32.mrb[0].mxu0
        %v934 = vadd.f32 %v596, %v933
        %v935 = vpop.f32.mrb[0].mxu0
        %v936 = vpop.f32.mrb[0].mxu0
        %v937 = vadd.f32 %v596, %v936
        %v938 = vpop.f32.mrb[0].mxu0
        %939 = vmatprep.mubr.bf16.mxu0 0
        %940 = vmatmul.mubr.bf16.gmra.mrb[0].mxu0 %v778
        %v941 = vpop.f32.mrb[0].mxu0
        %v942 = vadd.f32 %v596, %v941
        %v943 = vpop.f32.mrb[0].mxu0
        %v944 = vpop.f32.mrb[0].mxu0
        %v945 = vadd.f32 %v596, %v944
        %v946 = vpop.f32.mrb[0].mxu0
        %947 = vmatprep.mubr.bf16.mxu0 0
        %948 = vmatmul.mubr.bf16.gmra.mrb[0].mxu0 %v781
        %v949 = vpop.f32.mrb[0].mxu0
        %v950 = vadd.f32 %v596, %v949
        %v951 = vpop.f32.mrb[0].mxu0
        %v952 = vpop.f32.mrb[0].mxu0
        %v953 = vadd.f32 %v596, %v952
        %v954 = vpop.f32.mrb[0].mxu0
        %955 = vmatprep.mubr.bf16.mxu0 0
        %956 = vmatmul.mubr.bf16.gmra.mrb[0].mxu0 %v784
        %v957 = vpop.f32.mrb[0].mxu0
        %v958 = vadd.f32 %v596, %v957
        %v959 = vpop.f32.mrb[0].mxu0
        %v960 = vpop.f32.mrb[0].mxu0
        %v961 = vadd.f32 %v596, %v960
        %v962 = vpop.f32.mrb[0].mxu0
        %963 = vmatprep.mubr.bf16.mxu0 0
        %964 = vmatmul.mubr.bf16.gmra.mrb[0].mxu0 %v787
        %v965 = vpop.f32.mrb[0].mxu0
        %v966 = vadd.f32 %v596, %v965
        %v967 = vpop.f32.mrb[0].mxu0
        %v968 = vpop.f32.mrb[0].mxu0
        %v969 = vadd.f32 %v596, %v968
        %v970 = vpop.f32.mrb[0].mxu0
        %971 = vmatprep.mubr.bf16.mxu0 0
        %972 = vmatmul.mubr.bf16.gmra.mrb[0].mxu0 %v790
        %v973 = vpop.f32.mrb[0].mxu0
        %v974 = vadd.f32 %v596, %v973
        %v975 = vpop.f32.mrb[0].mxu0
        %v976 = vpop.f32.mrb[0].mxu0
        %v977 = vadd.f32 %v596, %v976
        %v978 = vpop.f32.mrb[0].mxu0
        %979 = vmatprep.mubr.bf16.mxu0 0
        %980 = vmatmul.mubr.bf16.gmra.mrb[0].mxu0 %v793
        %v981 = vpop.f32.mrb[0].mxu0
        %v982 = vadd.f32 %v596, %v981
        %v983 = vpop.f32.mrb[0].mxu0
        %v984 = vpop.f32.mrb[0].mxu0
        %v985 = vadd.f32 %v596, %v984
        %v986 = vpop.f32.mrb[0].mxu0
        %987 = vmatprep.mubr.bf16.mxu0 0
        %988 = vmatmul.mubr.bf16.gmra.mrb[0].mxu0 %v796
        %v989 = vpop.f32.mrb[0].mxu0
        %v990 = vadd.f32 %v596, %v989
        %v991 = vpop.f32.mrb[0].mxu0
        %v992 = vpop.f32.mrb[0].mxu0
        %v993 = vadd.f32 %v596, %v992
        %v994 = vpop.f32.mrb[0].mxu0
        %995 = vmatprep.mubr.bf16.mxu0 0
        %996 = vmatmul.mubr.bf16.gmra.mrb[0].mxu0 %v799
        %v997 = vpop.f32.mrb[0].mxu0
        %v998 = vadd.f32 %v596, %v997
        %v999 = vpop.f32.mrb[0].mxu0
        %v1000 = vpop.f32.mrb[0].mxu0
        %v1001 = vadd.f32 %v596, %v1000
        %v1002 = vpop.f32.mrb[0].mxu0
        %1003 = vmatprep.mubr.bf16.mxu0 0
        %1004 = vmatmul.mubr.bf16.gmra.mrb[0].mxu0 %v802
        %v1005 = vpop.f32.mrb[0].mxu0
        %v1006 = vadd.f32 %v596, %v1005
        %v1007 = vpop.f32.mrb[0].mxu0
        %v1008 = vpop.f32.mrb[0].mxu0
        %v1009 = vadd.f32 %v596, %v1008
        %v1010 = vpop.f32.mrb[0].mxu0
        %1011 = vmatprep.mubr.bf16.mxu0 0
        %1012 = vmatmul.mubr.bf16.gmra.mrb[0].mxu0 %v805
        %v1013 = vpop.f32.mrb[0].mxu0
        %v1014 = vadd.f32 %v596, %v1013
        %v1015 = vpop.f32.mrb[0].mxu0
        %v1016 = vpop.f32.mrb[0].mxu0
        %v1017 = vadd.f32 %v596, %v1016
        %v1018 = vpop.f32.mrb[0].mxu0
        %1019 = vmatprep.mubr.bf16.mxu0 0
        %1020 = vmatmul.mubr.bf16.gmra.mrb[0].mxu0 %v808
        %v1021 = vpop.f32.mrb[0].mxu0
        %v1022 = vadd.f32 %v596, %v1021
        %v1023 = vpop.f32.mrb[0].mxu0
        %v1024 = vpop.f32.mrb[0].mxu0
        %v1025 = vadd.f32 %v596, %v1024
        %v1026 = vpop.f32.mrb[0].mxu0
        %1027 = vmatprep.mubr.bf16.mxu0 0
        %1028 = vmatmul.mubr.bf16.gmra.mrb[0].mxu0 %v811
        %v1029 = vpop.f32.mrb[0].mxu0
        %v1030 = vadd.f32 %v596, %v1029
        %v1031 = vpop.f32.mrb[0].mxu0
        %v1032 = vpop.f32.mrb[0].mxu0
        %v1033 = vadd.f32 %v596, %v1032
        %v1034 = vpop.f32.mrb[0].mxu0
        %1035 = vmatprep.mubr.bf16.mxu0 0
        %1036 = vmatmul.mubr.bf16.gmra.mrb[0].mxu0 %v814
        %v1037 = vpop.f32.mrb[0].mxu0
        %v1038 = vadd.f32 %v596, %v1037
        %v1039 = vpop.f32.mrb[0].mxu0
        %v1040 = vpop.f32.mrb[0].mxu0
        %v1041 = vadd.f32 %v596, %v1040
        %v1042 = vpop.f32.mrb[0].mxu0
        %1043 = vmatprep.mubr.bf16.mxu0 0
        %1044 = vmatmul.mubr.bf16.gmra.mrb[0].mxu0 %v817
        %v1045 = vpop.f32.mrb[0].mxu0
        %v1046 = vadd.f32 %v596, %v1045
        %v1047 = vpop.f32.mrb[0].mxu0
        %v1048 = vpop.f32.mrb[0].mxu0
        %v1049 = vadd.f32 %v596, %v1048
        %v1050 = vpop.f32.mrb[0].mxu0
        %1051 = vmatprep.mubr.bf16.mxu0 0
        %1052 = vmatmul.mubr.bf16.gmra.mrb[0].mxu0 %v820
        %v1053 = vpop.f32.mrb[0].mxu0
        %v1054 = vadd.f32 %v596, %v1053
        %v1055 = vpop.f32.mrb[0].mxu0
        %v1056 = vpop.f32.mrb[0].mxu0
        %v1057 = vadd.f32 %v596, %v1056
        %v1058 = vpop.f32.mrb[0].mxu0
        %1059 = vmatprep.mubr.bf16.mxu0 0
        %1060 = vmatmul.mubr.bf16.gmra.mrb[0].mxu0 %v823
        %v1061 = vpop.f32.mrb[0].mxu0
        %v1062 = vadd.f32 %v596, %v1061
        %v1063 = vpop.f32.mrb[0].mxu0
        %v1064 = vpop.f32.mrb[0].mxu0
        %v1065 = vadd.f32 %v596, %v1064
        %v1066 = vpop.f32.mrb[0].mxu0
        %1067 = vmatprep.mubr.bf16.mxu0 0
        %1068 = vmatmul.mubr.bf16.gmra.mrb[0].mxu0 %v826
        %v1069 = vpop.f32.mrb[0].mxu0
        %v1070 = vadd.f32 %v596, %v1069
        %v1071 = vpop.f32.mrb[0].mxu0
        %v1072 = vpop.f32.mrb[0].mxu0
        %v1073 = vadd.f32 %v596, %v1072
        %v1074 = vpop.f32.mrb[0].mxu0
        %1075 = vmatprep.mubr.bf16.mxu0 0
        %1076 = vmatmul.mubr.bf16.gmra.mrb[0].mxu0 %v829
        %v1077 = vpop.f32.mrb[0].mxu0
        %v1078 = vadd.f32 %v596, %v1077
        %v1079 = vpop.f32.mrb[0].mxu0
        %v1080 = vpop.f32.mrb[0].mxu0
        %v1081 = vadd.f32 %v596, %v1080
        %v1082 = vpop.f32.mrb[0].mxu0
        %1083 = vmatprep.mubr.bf16.mxu0 0
        %1084 = vmatmul.mubr.bf16.gmra.mrb[0].mxu0 %v832
        %v1085 = vpop.f32.mrb[0].mxu0
        %v1086 = vadd.f32 %v596, %v1085
        %v1087 = vpop.f32.mrb[0].mxu0
        %v1088 = vpop.f32.mrb[0].mxu0
        %v1089 = vadd.f32 %v596, %v1088
        %v1090 = vpop.f32.mrb[0].mxu0
        %1091 = vmatprep.mubr.bf16.mxu0 0
        %1092 = vmatmul.mubr.bf16.gmra.mrb[0].mxu0 %v835
        %v1093 = vpop.f32.mrb[0].mxu0
        %v1094 = vadd.f32 %v596, %v1093
        %v1095 = vpop.f32.mrb[0].mxu0
        %v1096 = vpop.f32.mrb[0].mxu0
        %v1097 = vadd.f32 %v596, %v1096
        %v1098 = vpop.f32.mrb[0].mxu0
        %1099 = vmatprep.mubr.bf16.mxu0 0
        %1100 = vmatmul.mubr.bf16.gmra.mrb[0].mxu0 %v838
        %v1101 = vpop.f32.mrb[0].mxu0
        %v1102 = vadd.f32 %v596, %v1101
        %v1103 = vpop.f32.mrb[0].mxu0
        %v1104 = vpop.f32.mrb[0].mxu0
        %v1105 = vadd.f32 %v596, %v1104
        %v1106 = vpop.f32.mrb[0].mxu0
        %1107 = vmatprep.mubr.bf16.mxu0 0
        %1108 = vmatmul.mubr.bf16.gmra.mrb[0].mxu0 %v841
        %v1109 = vpop.f32.mrb[0].mxu0
        %v1110 = vadd.f32 %v596, %v1109
        %v1111 = vpop.f32.mrb[0].mxu0
        %v1112 = vpop.f32.mrb[0].mxu0
        %v1113 = vadd.f32 %v596, %v1112
        %v1114 = vpop.f32.mrb[0].mxu0
        %1115 = vmatprep.mubr.bf16.mxu0 0
        %1116 = vmatmul.mubr.bf16.gmra.mrb[0].mxu0 %v844
        %v1117 = vpop.f32.mrb[0].mxu0
        %v1118 = vadd.f32 %v596, %v1117
        %v1119 = vpop.f32.mrb[0].mxu0
        %v1120 = vpop.f32.mrb[0].mxu0
        %v1121 = vadd.f32 %v596, %v1120
        %v1122 = vpop.f32.mrb[0].mxu0
        %1123 = vmatprep.mubr.bf16.mxu0 0
        %1124 = vmatmul.mubr.bf16.gmra.mrb[0].mxu0 %v847
        %v1125 = vpop.f32.mrb[0].mxu0
        %v1126 = vadd.f32 %v596, %v1125
        %v1127 = vpop.f32.mrb[0].mxu0
        %v1128 = vpop.f32.mrb[0].mxu0
        %v1129 = vadd.f32 %v596, %v1128
        %v1130 = vpop.f32.mrb[0].mxu0
        %1131 = vmatprep.mubr.bf16.mxu0 0
        %1132 = vmatmul.mubr.bf16.gmra.mrb[0].mxu0 %v850
        %v1133 = vpop.f32.mrb[0].mxu0
        %v1134 = vadd.f32 %v596, %v1133
        %v1135 = vpop.f32.mrb[0].mxu0
        %v1136 = vpop.f32.mrb[0].mxu0
        %v1137 = vadd.f32 %v596, %v1136
        %v1138 = vpop.f32.mrb[0].mxu0
        %1139 = vmatprep.mubr.bf16.mxu0 0
        %1140 = vmatmul.mubr.bf16.gmra.mrb[0].mxu0 %v853
        %v1141 = vpop.f32.mrb[0].mxu0
        %v1142 = vadd.f32 %v596, %v1141
        %v1143 = vpop.f32.mrb[0].mxu0
        %v1144 = vpop.f32.mrb[0].mxu0
        %v1145 = vadd.f32 %v596, %v1144
        %v1146 = vpop.f32.mrb[0].mxu0
        %1147 = vdwg.mxu0
        %vm1148 = vcmp.gt.f32.partialorder %v894, 0.0
        %vm1149 = vcmp.gt.f32.partialorder %v897, 0.0
        %vm1150 = vcmp.gt.f32.partialorder %v902, 0.0
        %vm1151 = vcmp.gt.f32.partialorder %v905, 0.0
        %vm1152 = vcmp.gt.f32.partialorder %v910, 0.0
        %vm1153 = vcmp.gt.f32.partialorder %v913, 0.0
        %vm1154 = vcmp.gt.f32.partialorder %v918, 0.0
        %vm1155 = vcmp.gt.f32.partialorder %v921, 0.0
        %vm1156 = vcmp.gt.f32.partialorder %v926, 0.0
        %vm1157 = vcmp.gt.f32.partialorder %v929, 0.0
        %vm1158 = vcmp.gt.f32.partialorder %v934, 0.0
        %vm1159 = vcmp.gt.f32.partialorder %v937, 0.0
        %vm1160 = vcmp.gt.f32.partialorder %v942, 0.0
        %vm1161 = vcmp.gt.f32.partialorder %v945, 0.0
        %vm1162 = vcmp.gt.f32.partialorder %v950, 0.0
        %vm1163 = vcmp.gt.f32.partialorder %v953, 0.0
        %vm1164 = vcmp.gt.f32.partialorder %v958, 0.0
        %vm1165 = vcmp.gt.f32.partialorder %v961, 0.0
        %vm1166 = vcmp.gt.f32.partialorder %v966, 0.0
        %vm1167 = vcmp.gt.f32.partialorder %v969, 0.0
        %vm1168 = vcmp.gt.f32.partialorder %v974, 0.0
        %vm1169 = vcmp.gt.f32.partialorder %v977, 0.0
        %vm1170 = vcmp.gt.f32.partialorder %v982, 0.0
        %vm1171 = vcmp.gt.f32.partialorder %v985, 0.0
        %vm1172 = vcmp.gt.f32.partialorder %v990, 0.0
        %vm1173 = vcmp.gt.f32.partialorder %v993, 0.0
        %vm1174 = vcmp.gt.f32.partialorder %v998, 0.0
        %vm1175 = vcmp.gt.f32.partialorder %v1001, 0.0
        %vm1176 = vcmp.gt.f32.partialorder %v1006, 0.0
        %vm1177 = vcmp.gt.f32.partialorder %v1009, 0.0
        %vm1178 = vcmp.gt.f32.partialorder %v1014, 0.0
        %vm1179 = vcmp.gt.f32.partialorder %v1017, 0.0
        %vm1180 = vcmp.gt.f32.partialorder %v1022, 0.0
        %vm1181 = vcmp.gt.f32.partialorder %v1025, 0.0
        %vm1182 = vcmp.gt.f32.partialorder %v1030, 0.0
        %vm1183 = vcmp.gt.f32.partialorder %v1033, 0.0
        %vm1184 = vcmp.gt.f32.partialorder %v1038, 0.0
        %vm1185 = vcmp.gt.f32.partialorder %v1041, 0.0
        %vm1186 = vcmp.gt.f32.partialorder %v1046, 0.0
        %vm1187 = vcmp.gt.f32.partialorder %v1049, 0.0
        %vm1188 = vcmp.gt.f32.partialorder %v1054, 0.0
        %vm1189 = vcmp.gt.f32.partialorder %v1057, 0.0
        %vm1190 = vcmp.gt.f32.partialorder %v1062, 0.0
        %vm1191 = vcmp.gt.f32.partialorder %v1065, 0.0
        %vm1192 = vcmp.gt.f32.partialorder %v1070, 0.0
        %vm1193 = vcmp.gt.f32.partialorder %v1073, 0.0
        %vm1194 = vcmp.gt.f32.partialorder %v1078, 0.0
        %vm1195 = vcmp.gt.f32.partialorder %v1081, 0.0
        %vm1196 = vcmp.gt.f32.partialorder %v1086, 0.0
        %vm1197 = vcmp.gt.f32.partialorder %v1089, 0.0
        %vm1198 = vcmp.gt.f32.partialorder %v1094, 0.0
        %vm1199 = vcmp.gt.f32.partialorder %v1097, 0.0
        %vm1200 = vcmp.gt.f32.partialorder %v1102, 0.0
        %vm1201 = vcmp.gt.f32.partialorder %v1105, 0.0
        %vm1202 = vcmp.gt.f32.partialorder %v1110, 0.0
        %vm1203 = vcmp.gt.f32.partialorder %v1113, 0.0
        %vm1204 = vcmp.gt.f32.partialorder %v1118, 0.0
        %vm1205 = vcmp.gt.f32.partialorder %v1121, 0.0
        %vm1206 = vcmp.gt.f32.partialorder %v1126, 0.0
        %vm1207 = vcmp.gt.f32.partialorder %v1129, 0.0
        %vm1208 = vcmp.gt.f32.partialorder %v1134, 0.0
        %vm1209 = vcmp.gt.f32.partialorder %v1137, 0.0
        %vm1210 = vcmp.gt.f32.partialorder %v1142, 0.0
        %vm1211 = vcmp.gt.f32.partialorder %v1145, 0.0
        %v1212 = vmul.f32 %v894, 0.3
        %v1213 = vmul.f32 %v897, 0.3
        %v1214 = vmul.f32 %v902, 0.3
        %v1215 = vmul.f32 %v905, 0.3
        %v1216 = vmul.f32 %v910, 0.3
        %v1217 = vmul.f32 %v913, 0.3
        %v1218 = vmul.f32 %v918, 0.3
        %v1219 = vmul.f32 %v921, 0.3
        %v1220 = vmul.f32 %v926, 0.3
        %v1221 = vmul.f32 %v929, 0.3
        %v1222 = vmul.f32 %v934, 0.3
        %v1223 = vmul.f32 %v937, 0.3
        %v1224 = vmul.f32 %v942, 0.3
        %v1225 = vmul.f32 %v945, 0.3
        %v1226 = vmul.f32 %v950, 0.3
        %v1227 = vmul.f32 %v953, 0.3
        %v1228 = vmul.f32 %v958, 0.3
        %v1229 = vmul.f32 %v961, 0.3
        %v1230 = vmul.f32 %v966, 0.3
        %v1231 = vmul.f32 %v969, 0.3
        %v1232 = vmul.f32 %v974, 0.3
        %v1233 = vmul.f32 %v977, 0.3
        %v1234 = vmul.f32 %v982, 0.3
        %v1235 = vmul.f32 %v985, 0.3
        %v1236 = vmul.f32 %v990, 0.3
        %v1237 = vmul.f32 %v993, 0.3
        %v1238 = vmul.f32 %v998, 0.3
        %v1239 = vmul.f32 %v1001, 0.3
        %v1240 = vmul.f32 %v1006, 0.3
        %v1241 = vmul.f32 %v1009, 0.3
        %v1242 = vmul.f32 %v1014, 0.3
        %v1243 = vmul.f32 %v1017, 0.3
        %v1244 = vmul.f32 %v1022, 0.3
        %v1245 = vmul.f32 %v1025, 0.3
        %v1246 = vmul.f32 %v1030, 0.3
        %v1247 = vmul.f32 %v1033, 0.3
        %v1248 = vmul.f32 %v1038, 0.3
        %v1249 = vmul.f32 %v1041, 0.3
        %v1250 = vmul.f32 %v1046, 0.3
        %v1251 = vmul.f32 %v1049, 0.3
        %v1252 = vmul.f32 %v1054, 0.3
        %v1253 = vmul.f32 %v1057, 0.3
        %v1254 = vmul.f32 %v1062, 0.3
        %v1255 = vmul.f32 %v1065, 0.3
        %v1256 = vmul.f32 %v1070, 0.3
        %v1257 = vmul.f32 %v1073, 0.3
        %v1258 = vmul.f32 %v1078, 0.3
        %v1259 = vmul.f32 %v1081, 0.3
        %v1260 = vmul.f32 %v1086, 0.3
        %v1261 = vmul.f32 %v1089, 0.3
        %v1262 = vmul.f32 %v1094, 0.3
        %v1263 = vmul.f32 %v1097, 0.3
        %v1264 = vmul.f32 %v1102, 0.3
        %v1265 = vmul.f32 %v1105, 0.3
        %v1266 = vmul.f32 %v1110, 0.3
        %v1267 = vmul.f32 %v1113, 0.3
        %v1268 = vmul.f32 %v1118, 0.3
        %v1269 = vmul.f32 %v1121, 0.3
        %v1270 = vmul.f32 %v1126, 0.3
        %v1271 = vmul.f32 %v1129, 0.3
        %v1272 = vmul.f32 %v1134, 0.3
        %v1273 = vmul.f32 %v1137, 0.3
        %v1274 = vmul.f32 %v1142, 0.3
        %v1275 = vmul.f32 %v1145, 0.3
        %v1276 = vsel %vm1148, %v894, %v1212
        %v1277 = vsel %vm1149, %v897, %v1213
        %v1278 = vsel %vm1150, %v902, %v1214
        %v1279 = vsel %vm1151, %v905, %v1215
        %v1280 = vsel %vm1152, %v910, %v1216
        %v1281 = vsel %vm1153, %v913, %v1217
        %v1282 = vsel %vm1154, %v918, %v1218
        %v1283 = vsel %vm1155, %v921, %v1219
        %v1284 = vsel %vm1156, %v926, %v1220
        %v1285 = vsel %vm1157, %v929, %v1221
        %v1286 = vsel %vm1158, %v934, %v1222
        %v1287 = vsel %vm1159, %v937, %v1223
        %v1288 = vsel %vm1160, %v942, %v1224
        %v1289 = vsel %vm1161, %v945, %v1225
        %v1290 = vsel %vm1162, %v950, %v1226
        %v1291 = vsel %vm1163, %v953, %v1227
        %v1292 = vsel %vm1164, %v958, %v1228
        %v1293 = vsel %vm1165, %v961, %v1229
        %v1294 = vsel %vm1166, %v966, %v1230
        %v1295 = vsel %vm1167, %v969, %v1231
        %v1296 = vsel %vm1168, %v974, %v1232
        %v1297 = vsel %vm1169, %v977, %v1233
        %v1298 = vsel %vm1170, %v982, %v1234
        %v1299 = vsel %vm1171, %v985, %v1235
        %v1300 = vsel %vm1172, %v990, %v1236
        %v1301 = vsel %vm1173, %v993, %v1237
        %v1302 = vsel %vm1174, %v998, %v1238
        %v1303 = vsel %vm1175, %v1001, %v1239
        %v1304 = vsel %vm1176, %v1006, %v1240
        %v1305 = vsel %vm1177, %v1009, %v1241
        %v1306 = vsel %vm1178, %v1014, %v1242
        %v1307 = vsel %vm1179, %v1017, %v1243
        %v1308 = vsel %vm1180, %v1022, %v1244
        %v1309 = vsel %vm1181, %v1025, %v1245
        %v1310 = vsel %vm1182, %v1030, %v1246
        %v1311 = vsel %vm1183, %v1033, %v1247
        %v1312 = vsel %vm1184, %v1038, %v1248
        %v1313 = vsel %vm1185, %v1041, %v1249
        %v1314 = vsel %vm1186, %v1046, %v1250
        %v1315 = vsel %vm1187, %v1049, %v1251
        %v1316 = vsel %vm1188, %v1054, %v1252
        %v1317 = vsel %vm1189, %v1057, %v1253
        %v1318 = vsel %vm1190, %v1062, %v1254
        %v1319 = vsel %vm1191, %v1065, %v1255
        %v1320 = vsel %vm1192, %v1070, %v1256
        %v1321 = vsel %vm1193, %v1073, %v1257
        %v1322 = vsel %vm1194, %v1078, %v1258
        %v1323 = vsel %vm1195, %v1081, %v1259
        %v1324 = vsel %vm1196, %v1086, %v1260
        %v1325 = vsel %vm1197, %v1089, %v1261
        %v1326 = vsel %vm1198, %v1094, %v1262
        %v1327 = vsel %vm1199, %v1097, %v1263
        %v1328 = vsel %vm1200, %v1102, %v1264
        %v1329 = vsel %vm1201, %v1105, %v1265
        %v1330 = vsel %vm1202, %v1110, %v1266
        %v1331 = vsel %vm1203, %v1113, %v1267
        %v1332 = vsel %vm1204, %v1118, %v1268
        %v1333 = vsel %vm1205, %v1121, %v1269
        %v1334 = vsel %vm1206, %v1126, %v1270
        %v1335 = vsel %vm1207, %v1129, %v1271
        %v1336 = vsel %vm1208, %v1134, %v1272
        %v1337 = vsel %vm1209, %v1137, %v1273
        %v1338 = vsel %vm1210, %v1142, %v1274
        %v1339 = vsel %vm1211, %v1145, %v1275
        %v1340 = vpack.c.bf16 %v1277, %v1276
        %v1341 = vpack.c.bf16 %v1279, %v1278
        %v1342 = vpack.c.bf16 %v1281, %v1280
        %v1343 = vpack.c.bf16 %v1283, %v1282
        %v1344 = vpack.c.bf16 %v1285, %v1284
        %v1345 = vpack.c.bf16 %v1287, %v1286
        %v1346 = vpack.c.bf16 %v1289, %v1288
        %v1347 = vpack.c.bf16 %v1291, %v1290
        %v1348 = vpack.c.bf16 %v1293, %v1292
        %v1349 = vpack.c.bf16 %v1295, %v1294
        %v1350 = vpack.c.bf16 %v1297, %v1296
        %v1351 = vpack.c.bf16 %v1299, %v1298
        %v1352 = vpack.c.bf16 %v1301, %v1300
        %v1353 = vpack.c.bf16 %v1303, %v1302
        %v1354 = vpack.c.bf16 %v1305, %v1304
        %v1355 = vpack.c.bf16 %v1307, %v1306
        %v1356 = vpack.c.bf16 %v1309, %v1308
        %v1357 = vpack.c.bf16 %v1311, %v1310
        %v1358 = vpack.c.bf16 %v1313, %v1312
        %v1359 = vpack.c.bf16 %v1315, %v1314
        %v1360 = vpack.c.bf16 %v1317, %v1316
        %v1361 = vpack.c.bf16 %v1319, %v1318
        %v1362 = vpack.c.bf16 %v1321, %v1320
        %v1363 = vpack.c.bf16 %v1323, %v1322
        %v1364 = vpack.c.bf16 %v1325, %v1324
        %v1365 = vpack.c.bf16 %v1327, %v1326
        %v1366 = vpack.c.bf16 %v1329, %v1328
        %v1367 = vpack.c.bf16 %v1331, %v1330
        %v1368 = vpack.c.bf16 %v1333, %v1332
        %v1369 = vpack.c.bf16 %v1335, %v1334
        %v1370 = vpack.c.bf16 %v1337, %v1336
        %v1371 = vpack.c.bf16 %v1339, %v1338
        %v1372 = vld [vmem:[%s3] sm:$0xf]
        %v1373 = vld [vmem:[%s3 + $0x4] sm:$0xf]
        %v1374 = vld [vmem:[%s3 + $0x8] sm:$0xf]
        %v1375 = vld [vmem:[%s3 + $0xc] sm:$0xf]
        %v1376 = vld [vmem:[%s3 + $0x10] sm:$0xf]
        %v1377 = vld [vmem:[%s3 + $0x14] sm:$0xf]
        %v1378 = vld [vmem:[%s3 + $0x18] sm:$0xf]
        %v1379 = vld [vmem:[%s3 + $0x1c] sm:$0xf]
        %v1380 = vld [vmem:[%s4] sm:$0x1]
        %v1382 = vlaneseq
        %v1383 = vshrl.u32 %v1382, 7
        %v1384 = vsub.s32 0, %v1383
        %v1385 = vrot.slane %v1380, %v1384
        %v1395 = vunpack.c.l.b16 %v1372
        %v1396 = vunpack.c.l.b16 %v1373
        %v1397 = vunpack.c.l.b16 %v1374
        %v1398 = vunpack.c.l.b16 %v1375
        %v1399 = vunpack.c.l.b16 %v1376
        %v1400 = vunpack.c.l.b16 %v1377
        %v1401 = vunpack.c.l.b16 %v1378
        %v1402 = vunpack.c.l.b16 %v1379
        %v1403 = vpack.c.b16 %v1396, %v1395
        %v1404 = vpack.c.b16 %v1398, %v1397
        %v1405 = vpack.c.b16 %v1400, %v1399
        %v1406 = vpack.c.b16 %v1402, %v1401
        %vm1411 = vcmask 523264
        %v1413 = vsel %vm1411, %v1340, 0
        %v1416 = vsel %vm1411, %v1341, 0
        %v1419 = vsel %vm1411, %v1342, 0
        %v1422 = vsel %vm1411, %v1343, 0
        %v1425 = vsel %vm1411, %v1344, 0
        %v1428 = vsel %vm1411, %v1345, 0
        %v1431 = vsel %vm1411, %v1346, 0
        %v1434 = vsel %vm1411, %v1347, 0
        %v1437 = vsel %vm1411, %v1348, 0
        %v1440 = vsel %vm1411, %v1349, 0
        %v1443 = vsel %vm1411, %v1350, 0
        %v1446 = vsel %vm1411, %v1351, 0
        %v1449 = vsel %vm1411, %v1352, 0
        %v1452 = vsel %vm1411, %v1353, 0
        %v1455 = vsel %vm1411, %v1354, 0
        %v1458 = vsel %vm1411, %v1355, 0
        %v1461 = vsel %vm1411, %v1356, 0
        %v1464 = vsel %vm1411, %v1357, 0
        %v1467 = vsel %vm1411, %v1358, 0
        %v1470 = vsel %vm1411, %v1359, 0
        %v1473 = vsel %vm1411, %v1360, 0
        %v1476 = vsel %vm1411, %v1361, 0
        %v1479 = vsel %vm1411, %v1362, 0
        %v1482 = vsel %vm1411, %v1363, 0
        %v1485 = vsel %vm1411, %v1364, 0
        %v1488 = vsel %vm1411, %v1365, 0
        %v1491 = vsel %vm1411, %v1366, 0
        %v1494 = vsel %vm1411, %v1367, 0
        %v1497 = vsel %vm1411, %v1368, 0
        %v1500 = vsel %vm1411, %v1369, 0
        %v1503 = vsel %vm1411, %v1370, 0
        %v1506 = vsel %vm1411, %v1371, 0
        %1508 = vmatprep.subr.bf16.mxu0 0
        %1509 = vmatpush1.bf16.msra.mxu0 %v1403
        %1510 = vmatprep.subr.bf16.mxu0 0
        %1511 = vmatpush1.bf16.msra.mxu0 %v1404
        %1512 = vmatprep.subr.bf16.mxu0 0
        %1513 = vmatpush1.bf16.msra.mxu0 %v1405
        %1514 = vmatprep.subr.bf16.mxu0 0
        %1515 = vmatpush1.bf16.msra.mxu0 %v1406
        %1516 = vmatprep.subr.bf16.mxu0 0
        %1517 = vmatpush1.bf16.msra.mxu0 0
        %1518 = vmatprep.subr.bf16.mxu0 0
        %1519 = vmatpush1.bf16.msra.mxu0 0
        %1520 = vmatprep.subr.bf16.mxu0 0
        %1521 = vmatpush1.bf16.msra.mxu0 0
        %1522 = vmatprep.subr.bf16.mxu0 0
        %1523 = vmatpush1.bf16.msra.mxu0 0
        %1524 = vmatprep.subr.bf16.mxu0 0
        %1525 = vmatpush1.bf16.msra.mxu0 0
        %1526 = vmatprep.subr.bf16.mxu0 0
        %1527 = vmatpush1.bf16.msra.mxu0 0
        %1528 = vmatprep.subr.bf16.mxu0 0
        %1529 = vmatpush1.bf16.msra.mxu0 0
        %1530 = vmatprep.subr.bf16.mxu0 0
        %1531 = vmatpush1.bf16.msra.mxu0 0
        %1532 = vmatprep.subr.bf16.mxu0 0
        %1533 = vmatpush1.bf16.msra.mxu0 0
        %1534 = vmatprep.subr.bf16.mxu0 0
        %1535 = vmatpush1.bf16.msra.mxu0 0
        %1536 = vmatprep.subr.bf16.mxu0 0
        %1537 = vmatpush1.bf16.msra.mxu0 0
        %1538 = vmatprep.subr.bf16.mxu0 0
        %1539 = vmatpush1.bf16.msra.mxu0 0
        %1540 = vmatprep.mubr.bf16.mxu0 0
        %1541 = vmatmul.mubr.bf16.gmra.mrb[0].mxu0 %v1413
        %v1542 = vpop.f32.mrb[0].mxu0
        %v1543 = vadd.f32 %v1385, %v1542
        %v1544 = vpop.f32.mrb[0].mxu0
        %v1545 = vpop.f32.mrb[0].mxu0
        %v1546 = vadd.f32 %v1385, %v1545
        %v1547 = vpop.f32.mrb[0].mxu0
        %1548 = vmatprep.mubr.bf16.mxu0 0
        %1549 = vmatmul.mubr.bf16.gmra.mrb[0].mxu0 %v1416
        %v1550 = vpop.f32.mrb[0].mxu0
        %v1551 = vadd.f32 %v1385, %v1550
        %v1552 = vpop.f32.mrb[0].mxu0
        %v1553 = vpop.f32.mrb[0].mxu0
        %v1554 = vadd.f32 %v1385, %v1553
        %v1555 = vpop.f32.mrb[0].mxu0
        %1556 = vmatprep.mubr.bf16.mxu0 0
        %1557 = vmatmul.mubr.bf16.gmra.mrb[0].mxu0 %v1419
        %v1558 = vpop.f32.mrb[0].mxu0
        %v1559 = vadd.f32 %v1385, %v1558
        %v1560 = vpop.f32.mrb[0].mxu0
        %v1561 = vpop.f32.mrb[0].mxu0
        %v1562 = vadd.f32 %v1385, %v1561
        %v1563 = vpop.f32.mrb[0].mxu0
        %1564 = vmatprep.mubr.bf16.mxu0 0
        %1565 = vmatmul.mubr.bf16.gmra.mrb[0].mxu0 %v1422
        %v1566 = vpop.f32.mrb[0].mxu0
        %v1567 = vadd.f32 %v1385, %v1566
        %v1568 = vpop.f32.mrb[0].mxu0
        %v1569 = vpop.f32.mrb[0].mxu0
        %v1570 = vadd.f32 %v1385, %v1569
        %v1571 = vpop.f32.mrb[0].mxu0
        %1572 = vmatprep.mubr.bf16.mxu0 0
        %1573 = vmatmul.mubr.bf16.gmra.mrb[0].mxu0 %v1425
        %v1574 = vpop.f32.mrb[0].mxu0
        %v1575 = vadd.f32 %v1385, %v1574
        %v1576 = vpop.f32.mrb[0].mxu0
        %v1577 = vpop.f32.mrb[0].mxu0
        %v1578 = vadd.f32 %v1385, %v1577
        %v1579 = vpop.f32.mrb[0].mxu0
        %1580 = vmatprep.mubr.bf16.mxu0 0
        %1581 = vmatmul.mubr.bf16.gmra.mrb[0].mxu0 %v1428
        %v1582 = vpop.f32.mrb[0].mxu0
        %v1583 = vadd.f32 %v1385, %v1582
        %v1584 = vpop.f32.mrb[0].mxu0
        %v1585 = vpop.f32.mrb[0].mxu0
        %v1586 = vadd.f32 %v1385, %v1585
        %v1587 = vpop.f32.mrb[0].mxu0
        %1588 = vmatprep.mubr.bf16.mxu0 0
        %1589 = vmatmul.mubr.bf16.gmra.mrb[0].mxu0 %v1431
        %v1590 = vpop.f32.mrb[0].mxu0
        %v1591 = vadd.f32 %v1385, %v1590
        %v1592 = vpop.f32.mrb[0].mxu0
        %v1593 = vpop.f32.mrb[0].mxu0
        %v1594 = vadd.f32 %v1385, %v1593
        %v1595 = vpop.f32.mrb[0].mxu0
        %1596 = vmatprep.mubr.bf16.mxu0 0
        %1597 = vmatmul.mubr.bf16.gmra.mrb[0].mxu0 %v1434
        %v1598 = vpop.f32.mrb[0].mxu0
        %v1599 = vadd.f32 %v1385, %v1598
        %v1600 = vpop.f32.mrb[0].mxu0
        %v1601 = vpop.f32.mrb[0].mxu0
        %v1602 = vadd.f32 %v1385, %v1601
        %v1603 = vpop.f32.mrb[0].mxu0
        %1604 = vmatprep.mubr.bf16.mxu0 0
        %1605 = vmatmul.mubr.bf16.gmra.mrb[0].mxu0 %v1437
        %v1606 = vpop.f32.mrb[0].mxu0
        %v1607 = vadd.f32 %v1385, %v1606
        %v1608 = vpop.f32.mrb[0].mxu0
        %v1609 = vpop.f32.mrb[0].mxu0
        %v1610 = vadd.f32 %v1385, %v1609
        %v1611 = vpop.f32.mrb[0].mxu0
        %1612 = vmatprep.mubr.bf16.mxu0 0
        %1613 = vmatmul.mubr.bf16.gmra.mrb[0].mxu0 %v1440
        %v1614 = vpop.f32.mrb[0].mxu0
        %v1615 = vadd.f32 %v1385, %v1614
        %v1616 = vpop.f32.mrb[0].mxu0
        %v1617 = vpop.f32.mrb[0].mxu0
        %v1618 = vadd.f32 %v1385, %v1617
        %v1619 = vpop.f32.mrb[0].mxu0
        %1620 = vmatprep.mubr.bf16.mxu0 0
        %1621 = vmatmul.mubr.bf16.gmra.mrb[0].mxu0 %v1443
        %v1622 = vpop.f32.mrb[0].mxu0
        %v1623 = vadd.f32 %v1385, %v1622
        %v1624 = vpop.f32.mrb[0].mxu0
        %v1625 = vpop.f32.mrb[0].mxu0
        %v1626 = vadd.f32 %v1385, %v1625
        %v1627 = vpop.f32.mrb[0].mxu0
        %1628 = vmatprep.mubr.bf16.mxu0 0
        %1629 = vmatmul.mubr.bf16.gmra.mrb[0].mxu0 %v1446
        %v1630 = vpop.f32.mrb[0].mxu0
        %v1631 = vadd.f32 %v1385, %v1630
        %v1632 = vpop.f32.mrb[0].mxu0
        %v1633 = vpop.f32.mrb[0].mxu0
        %v1634 = vadd.f32 %v1385, %v1633
        %v1635 = vpop.f32.mrb[0].mxu0
        %1636 = vmatprep.mubr.bf16.mxu0 0
        %1637 = vmatmul.mubr.bf16.gmra.mrb[0].mxu0 %v1449
        %v1638 = vpop.f32.mrb[0].mxu0
        %v1639 = vadd.f32 %v1385, %v1638
        %v1640 = vpop.f32.mrb[0].mxu0
        %v1641 = vpop.f32.mrb[0].mxu0
        %v1642 = vadd.f32 %v1385, %v1641
        %v1643 = vpop.f32.mrb[0].mxu0
        %1644 = vmatprep.mubr.bf16.mxu0 0
        %1645 = vmatmul.mubr.bf16.gmra.mrb[0].mxu0 %v1452
        %v1646 = vpop.f32.mrb[0].mxu0
        %v1647 = vadd.f32 %v1385, %v1646
        %v1648 = vpop.f32.mrb[0].mxu0
        %v1649 = vpop.f32.mrb[0].mxu0
        %v1650 = vadd.f32 %v1385, %v1649
        %v1651 = vpop.f32.mrb[0].mxu0
        %1652 = vmatprep.mubr.bf16.mxu0 0
        %1653 = vmatmul.mubr.bf16.gmra.mrb[0].mxu0 %v1455
        %v1654 = vpop.f32.mrb[0].mxu0
        %v1655 = vadd.f32 %v1385, %v1654
        %v1656 = vpop.f32.mrb[0].mxu0
        %v1657 = vpop.f32.mrb[0].mxu0
        %v1658 = vadd.f32 %v1385, %v1657
        %v1659 = vpop.f32.mrb[0].mxu0
        %1660 = vmatprep.mubr.bf16.mxu0 0
        %1661 = vmatmul.mubr.bf16.gmra.mrb[0].mxu0 %v1458
        %v1662 = vpop.f32.mrb[0].mxu0
        %v1663 = vadd.f32 %v1385, %v1662
        %v1664 = vpop.f32.mrb[0].mxu0
        %v1665 = vpop.f32.mrb[0].mxu0
        %v1666 = vadd.f32 %v1385, %v1665
        %v1667 = vpop.f32.mrb[0].mxu0
        %1668 = vmatprep.mubr.bf16.mxu0 0
        %1669 = vmatmul.mubr.bf16.gmra.mrb[0].mxu0 %v1461
        %v1670 = vpop.f32.mrb[0].mxu0
        %v1671 = vadd.f32 %v1385, %v1670
        %v1672 = vpop.f32.mrb[0].mxu0
        %v1673 = vpop.f32.mrb[0].mxu0
        %v1674 = vadd.f32 %v1385, %v1673
        %v1675 = vpop.f32.mrb[0].mxu0
        %1676 = vmatprep.mubr.bf16.mxu0 0
        %1677 = vmatmul.mubr.bf16.gmra.mrb[0].mxu0 %v1464
        %v1678 = vpop.f32.mrb[0].mxu0
        %v1679 = vadd.f32 %v1385, %v1678
        %v1680 = vpop.f32.mrb[0].mxu0
        %v1681 = vpop.f32.mrb[0].mxu0
        %v1682 = vadd.f32 %v1385, %v1681
        %v1683 = vpop.f32.mrb[0].mxu0
        %1684 = vmatprep.mubr.bf16.mxu0 0
        %1685 = vmatmul.mubr.bf16.gmra.mrb[0].mxu0 %v1467
        %v1686 = vpop.f32.mrb[0].mxu0
        %v1687 = vadd.f32 %v1385, %v1686
        %v1688 = vpop.f32.mrb[0].mxu0
        %v1689 = vpop.f32.mrb[0].mxu0
        %v1690 = vadd.f32 %v1385, %v1689
        %v1691 = vpop.f32.mrb[0].mxu0
        %1692 = vmatprep.mubr.bf16.mxu0 0
        %1693 = vmatmul.mubr.bf16.gmra.mrb[0].mxu0 %v1470
        %v1694 = vpop.f32.mrb[0].mxu0
        %v1695 = vadd.f32 %v1385, %v1694
        %v1696 = vpop.f32.mrb[0].mxu0
        %v1697 = vpop.f32.mrb[0].mxu0
        %v1698 = vadd.f32 %v1385, %v1697
        %v1699 = vpop.f32.mrb[0].mxu0
        %1700 = vmatprep.mubr.bf16.mxu0 0
        %1701 = vmatmul.mubr.bf16.gmra.mrb[0].mxu0 %v1473
        %v1702 = vpop.f32.mrb[0].mxu0
        %v1703 = vadd.f32 %v1385, %v1702
        %v1704 = vpop.f32.mrb[0].mxu0
        %v1705 = vpop.f32.mrb[0].mxu0
        %v1706 = vadd.f32 %v1385, %v1705
        %v1707 = vpop.f32.mrb[0].mxu0
        %1708 = vmatprep.mubr.bf16.mxu0 0
        %1709 = vmatmul.mubr.bf16.gmra.mrb[0].mxu0 %v1476
        %v1710 = vpop.f32.mrb[0].mxu0
        %v1711 = vadd.f32 %v1385, %v1710
        %v1712 = vpop.f32.mrb[0].mxu0
        %v1713 = vpop.f32.mrb[0].mxu0
        %v1714 = vadd.f32 %v1385, %v1713
        %v1715 = vpop.f32.mrb[0].mxu0
        %1716 = vmatprep.mubr.bf16.mxu0 0
        %1717 = vmatmul.mubr.bf16.gmra.mrb[0].mxu0 %v1479
        %v1718 = vpop.f32.mrb[0].mxu0
        %v1719 = vadd.f32 %v1385, %v1718
        %v1720 = vpop.f32.mrb[0].mxu0
        %v1721 = vpop.f32.mrb[0].mxu0
        %v1722 = vadd.f32 %v1385, %v1721
        %v1723 = vpop.f32.mrb[0].mxu0
        %1724 = vmatprep.mubr.bf16.mxu0 0
        %1725 = vmatmul.mubr.bf16.gmra.mrb[0].mxu0 %v1482
        %v1726 = vpop.f32.mrb[0].mxu0
        %v1727 = vadd.f32 %v1385, %v1726
        %v1728 = vpop.f32.mrb[0].mxu0
        %v1729 = vpop.f32.mrb[0].mxu0
        %v1730 = vadd.f32 %v1385, %v1729
        %v1731 = vpop.f32.mrb[0].mxu0
        %1732 = vmatprep.mubr.bf16.mxu0 0
        %1733 = vmatmul.mubr.bf16.gmra.mrb[0].mxu0 %v1485
        %v1734 = vpop.f32.mrb[0].mxu0
        %v1735 = vadd.f32 %v1385, %v1734
        %v1736 = vpop.f32.mrb[0].mxu0
        %v1737 = vpop.f32.mrb[0].mxu0
        %v1738 = vadd.f32 %v1385, %v1737
        %v1739 = vpop.f32.mrb[0].mxu0
        %1740 = vmatprep.mubr.bf16.mxu0 0
        %1741 = vmatmul.mubr.bf16.gmra.mrb[0].mxu0 %v1488
        %v1742 = vpop.f32.mrb[0].mxu0
        %v1743 = vadd.f32 %v1385, %v1742
        %v1744 = vpop.f32.mrb[0].mxu0
        %v1745 = vpop.f32.mrb[0].mxu0
        %v1746 = vadd.f32 %v1385, %v1745
        %v1747 = vpop.f32.mrb[0].mxu0
        %1748 = vmatprep.mubr.bf16.mxu0 0
        %1749 = vmatmul.mubr.bf16.gmra.mrb[0].mxu0 %v1491
        %v1750 = vpop.f32.mrb[0].mxu0
        %v1751 = vadd.f32 %v1385, %v1750
        %v1752 = vpop.f32.mrb[0].mxu0
        %v1753 = vpop.f32.mrb[0].mxu0
        %v1754 = vadd.f32 %v1385, %v1753
        %v1755 = vpop.f32.mrb[0].mxu0
        %1756 = vmatprep.mubr.bf16.mxu0 0
        %1757 = vmatmul.mubr.bf16.gmra.mrb[0].mxu0 %v1494
        %v1758 = vpop.f32.mrb[0].mxu0
        %v1759 = vadd.f32 %v1385, %v1758
        %v1760 = vpop.f32.mrb[0].mxu0
        %v1761 = vpop.f32.mrb[0].mxu0
        %v1762 = vadd.f32 %v1385, %v1761
        %v1763 = vpop.f32.mrb[0].mxu0
        %1764 = vmatprep.mubr.bf16.mxu0 0
        %1765 = vmatmul.mubr.bf16.gmra.mrb[0].mxu0 %v1497
        %v1766 = vpop.f32.mrb[0].mxu0
        %v1767 = vadd.f32 %v1385, %v1766
        %v1768 = vpop.f32.mrb[0].mxu0
        %v1769 = vpop.f32.mrb[0].mxu0
        %v1770 = vadd.f32 %v1385, %v1769
        %v1771 = vpop.f32.mrb[0].mxu0
        %1772 = vmatprep.mubr.bf16.mxu0 0
        %1773 = vmatmul.mubr.bf16.gmra.mrb[0].mxu0 %v1500
        %v1774 = vpop.f32.mrb[0].mxu0
        %v1775 = vadd.f32 %v1385, %v1774
        %v1776 = vpop.f32.mrb[0].mxu0
        %v1777 = vpop.f32.mrb[0].mxu0
        %v1778 = vadd.f32 %v1385, %v1777
        %v1779 = vpop.f32.mrb[0].mxu0
        %1780 = vmatprep.mubr.bf16.mxu0 0
        %1781 = vmatmul.mubr.bf16.gmra.mrb[0].mxu0 %v1503
        %v1782 = vpop.f32.mrb[0].mxu0
        %v1783 = vadd.f32 %v1385, %v1782
        %v1784 = vpop.f32.mrb[0].mxu0
        %v1785 = vpop.f32.mrb[0].mxu0
        %v1786 = vadd.f32 %v1385, %v1785
        %v1787 = vpop.f32.mrb[0].mxu0
        %1788 = vmatprep.mubr.bf16.mxu0 0
        %1789 = vmatmul.mubr.bf16.gmra.mrb[0].mxu0 %v1506
        %v1790 = vpop.f32.mrb[0].mxu0
        %v1791 = vadd.f32 %v1385, %v1790
        %v1792 = vpop.f32.mrb[0].mxu0
        %v1793 = vpop.f32.mrb[0].mxu0
        %v1794 = vadd.f32 %v1385, %v1793
        %v1795 = vpop.f32.mrb[0].mxu0
        %1796 = vdwg.mxu0
        %vm1797 = vcmp.gt.f32.partialorder %v1543, 0.0
        %vm1798 = vcmp.gt.f32.partialorder %v1546, 0.0
        %vm1799 = vcmp.gt.f32.partialorder %v1551, 0.0
        %vm1800 = vcmp.gt.f32.partialorder %v1554, 0.0
        %vm1801 = vcmp.gt.f32.partialorder %v1559, 0.0
        %vm1802 = vcmp.gt.f32.partialorder %v1562, 0.0
        %vm1803 = vcmp.gt.f32.partialorder %v1567, 0.0
        %vm1804 = vcmp.gt.f32.partialorder %v1570, 0.0
        %vm1805 = vcmp.gt.f32.partialorder %v1575, 0.0
        %vm1806 = vcmp.gt.f32.partialorder %v1578, 0.0
        %vm1807 = vcmp.gt.f32.partialorder %v1583, 0.0
        %vm1808 = vcmp.gt.f32.partialorder %v1586, 0.0
        %vm1809 = vcmp.gt.f32.partialorder %v1591, 0.0
        %vm1810 = vcmp.gt.f32.partialorder %v1594, 0.0
        %vm1811 = vcmp.gt.f32.partialorder %v1599, 0.0
        %vm1812 = vcmp.gt.f32.partialorder %v1602, 0.0
        %vm1813 = vcmp.gt.f32.partialorder %v1607, 0.0
        %vm1814 = vcmp.gt.f32.partialorder %v1610, 0.0
        %vm1815 = vcmp.gt.f32.partialorder %v1615, 0.0
        %vm1816 = vcmp.gt.f32.partialorder %v1618, 0.0
        %vm1817 = vcmp.gt.f32.partialorder %v1623, 0.0
        %vm1818 = vcmp.gt.f32.partialorder %v1626, 0.0
        %vm1819 = vcmp.gt.f32.partialorder %v1631, 0.0
        %vm1820 = vcmp.gt.f32.partialorder %v1634, 0.0
        %vm1821 = vcmp.gt.f32.partialorder %v1639, 0.0
        %vm1822 = vcmp.gt.f32.partialorder %v1642, 0.0
        %vm1823 = vcmp.gt.f32.partialorder %v1647, 0.0
        %vm1824 = vcmp.gt.f32.partialorder %v1650, 0.0
        %vm1825 = vcmp.gt.f32.partialorder %v1655, 0.0
        %vm1826 = vcmp.gt.f32.partialorder %v1658, 0.0
        %vm1827 = vcmp.gt.f32.partialorder %v1663, 0.0
        %vm1828 = vcmp.gt.f32.partialorder %v1666, 0.0
        %vm1829 = vcmp.gt.f32.partialorder %v1671, 0.0
        %vm1830 = vcmp.gt.f32.partialorder %v1674, 0.0
        %vm1831 = vcmp.gt.f32.partialorder %v1679, 0.0
        %vm1832 = vcmp.gt.f32.partialorder %v1682, 0.0
        %vm1833 = vcmp.gt.f32.partialorder %v1687, 0.0
        %vm1834 = vcmp.gt.f32.partialorder %v1690, 0.0
        %vm1835 = vcmp.gt.f32.partialorder %v1695, 0.0
        %vm1836 = vcmp.gt.f32.partialorder %v1698, 0.0
        %vm1837 = vcmp.gt.f32.partialorder %v1703, 0.0
        %vm1838 = vcmp.gt.f32.partialorder %v1706, 0.0
        %vm1839 = vcmp.gt.f32.partialorder %v1711, 0.0
        %vm1840 = vcmp.gt.f32.partialorder %v1714, 0.0
        %vm1841 = vcmp.gt.f32.partialorder %v1719, 0.0
        %vm1842 = vcmp.gt.f32.partialorder %v1722, 0.0
        %vm1843 = vcmp.gt.f32.partialorder %v1727, 0.0
        %vm1844 = vcmp.gt.f32.partialorder %v1730, 0.0
        %vm1845 = vcmp.gt.f32.partialorder %v1735, 0.0
        %vm1846 = vcmp.gt.f32.partialorder %v1738, 0.0
        %vm1847 = vcmp.gt.f32.partialorder %v1743, 0.0
        %vm1848 = vcmp.gt.f32.partialorder %v1746, 0.0
        %vm1849 = vcmp.gt.f32.partialorder %v1751, 0.0
        %vm1850 = vcmp.gt.f32.partialorder %v1754, 0.0
        %vm1851 = vcmp.gt.f32.partialorder %v1759, 0.0
        %vm1852 = vcmp.gt.f32.partialorder %v1762, 0.0
        %vm1853 = vcmp.gt.f32.partialorder %v1767, 0.0
        %vm1854 = vcmp.gt.f32.partialorder %v1770, 0.0
        %vm1855 = vcmp.gt.f32.partialorder %v1775, 0.0
        %vm1856 = vcmp.gt.f32.partialorder %v1778, 0.0
        %vm1857 = vcmp.gt.f32.partialorder %v1783, 0.0
        %vm1858 = vcmp.gt.f32.partialorder %v1786, 0.0
        %vm1859 = vcmp.gt.f32.partialorder %v1791, 0.0
        %vm1860 = vcmp.gt.f32.partialorder %v1794, 0.0
        %v1861 = vmul.f32 %v1543, 0.3
        %v1862 = vmul.f32 %v1546, 0.3
        %v1863 = vmul.f32 %v1551, 0.3
        %v1864 = vmul.f32 %v1554, 0.3
        %v1865 = vmul.f32 %v1559, 0.3
        %v1866 = vmul.f32 %v1562, 0.3
        %v1867 = vmul.f32 %v1567, 0.3
        %v1868 = vmul.f32 %v1570, 0.3
        %v1869 = vmul.f32 %v1575, 0.3
        %v1870 = vmul.f32 %v1578, 0.3
        %v1871 = vmul.f32 %v1583, 0.3
        %v1872 = vmul.f32 %v1586, 0.3
        %v1873 = vmul.f32 %v1591, 0.3
        %v1874 = vmul.f32 %v1594, 0.3
        %v1875 = vmul.f32 %v1599, 0.3
        %v1876 = vmul.f32 %v1602, 0.3
        %v1877 = vmul.f32 %v1607, 0.3
        %v1878 = vmul.f32 %v1610, 0.3
        %v1879 = vmul.f32 %v1615, 0.3
        %v1880 = vmul.f32 %v1618, 0.3
        %v1881 = vmul.f32 %v1623, 0.3
        %v1882 = vmul.f32 %v1626, 0.3
        %v1883 = vmul.f32 %v1631, 0.3
        %v1884 = vmul.f32 %v1634, 0.3
        %v1885 = vmul.f32 %v1639, 0.3
        %v1886 = vmul.f32 %v1642, 0.3
        %v1887 = vmul.f32 %v1647, 0.3
        %v1888 = vmul.f32 %v1650, 0.3
        %v1889 = vmul.f32 %v1655, 0.3
        %v1890 = vmul.f32 %v1658, 0.3
        %v1891 = vmul.f32 %v1663, 0.3
        %v1892 = vmul.f32 %v1666, 0.3
        %v1893 = vmul.f32 %v1671, 0.3
        %v1894 = vmul.f32 %v1674, 0.3
        %v1895 = vmul.f32 %v1679, 0.3
        %v1896 = vmul.f32 %v1682, 0.3
        %v1897 = vmul.f32 %v1687, 0.3
        %v1898 = vmul.f32 %v1690, 0.3
        %v1899 = vmul.f32 %v1695, 0.3
        %v1900 = vmul.f32 %v1698, 0.3
        %v1901 = vmul.f32 %v1703, 0.3
        %v1902 = vmul.f32 %v1706, 0.3
        %v1903 = vmul.f32 %v1711, 0.3
        %v1904 = vmul.f32 %v1714, 0.3
        %v1905 = vmul.f32 %v1719, 0.3
        %v1906 = vmul.f32 %v1722, 0.3
        %v1907 = vmul.f32 %v1727, 0.3
        %v1908 = vmul.f32 %v1730, 0.3
        %v1909 = vmul.f32 %v1735, 0.3
        %v1910 = vmul.f32 %v1738, 0.3
        %v1911 = vmul.f32 %v1743, 0.3
        %v1912 = vmul.f32 %v1746, 0.3
        %v1913 = vmul.f32 %v1751, 0.3
        %v1914 = vmul.f32 %v1754, 0.3
        %v1915 = vmul.f32 %v1759, 0.3
        %v1916 = vmul.f32 %v1762, 0.3
        %v1917 = vmul.f32 %v1767, 0.3
        %v1918 = vmul.f32 %v1770, 0.3
        %v1919 = vmul.f32 %v1775, 0.3
        %v1920 = vmul.f32 %v1778, 0.3
        %v1921 = vmul.f32 %v1783, 0.3
        %v1922 = vmul.f32 %v1786, 0.3
        %v1923 = vmul.f32 %v1791, 0.3
        %v1924 = vmul.f32 %v1794, 0.3
        %v1925 = vsel %vm1797, %v1543, %v1861
        %v1926 = vsel %vm1798, %v1546, %v1862
        %v1927 = vsel %vm1799, %v1551, %v1863
        %v1928 = vsel %vm1800, %v1554, %v1864
        %v1929 = vsel %vm1801, %v1559, %v1865
        %v1930 = vsel %vm1802, %v1562, %v1866
        %v1931 = vsel %vm1803, %v1567, %v1867
        %v1932 = vsel %vm1804, %v1570, %v1868
        %v1933 = vsel %vm1805, %v1575, %v1869
        %v1934 = vsel %vm1806, %v1578, %v1870
        %v1935 = vsel %vm1807, %v1583, %v1871
        %v1936 = vsel %vm1808, %v1586, %v1872
        %v1937 = vsel %vm1809, %v1591, %v1873
        %v1938 = vsel %vm1810, %v1594, %v1874
        %v1939 = vsel %vm1811, %v1599, %v1875
        %v1940 = vsel %vm1812, %v1602, %v1876
        %v1941 = vsel %vm1813, %v1607, %v1877
        %v1942 = vsel %vm1814, %v1610, %v1878
        %v1943 = vsel %vm1815, %v1615, %v1879
        %v1944 = vsel %vm1816, %v1618, %v1880
        %v1945 = vsel %vm1817, %v1623, %v1881
        %v1946 = vsel %vm1818, %v1626, %v1882
        %v1947 = vsel %vm1819, %v1631, %v1883
        %v1948 = vsel %vm1820, %v1634, %v1884
        %v1949 = vsel %vm1821, %v1639, %v1885
        %v1950 = vsel %vm1822, %v1642, %v1886
        %v1951 = vsel %vm1823, %v1647, %v1887
        %v1952 = vsel %vm1824, %v1650, %v1888
        %v1953 = vsel %vm1825, %v1655, %v1889
        %v1954 = vsel %vm1826, %v1658, %v1890
        %v1955 = vsel %vm1827, %v1663, %v1891
        %v1956 = vsel %vm1828, %v1666, %v1892
        %v1957 = vsel %vm1829, %v1671, %v1893
        %v1958 = vsel %vm1830, %v1674, %v1894
        %v1959 = vsel %vm1831, %v1679, %v1895
        %v1960 = vsel %vm1832, %v1682, %v1896
        %v1961 = vsel %vm1833, %v1687, %v1897
        %v1962 = vsel %vm1834, %v1690, %v1898
        %v1963 = vsel %vm1835, %v1695, %v1899
        %v1964 = vsel %vm1836, %v1698, %v1900
        %v1965 = vsel %vm1837, %v1703, %v1901
        %v1966 = vsel %vm1838, %v1706, %v1902
        %v1967 = vsel %vm1839, %v1711, %v1903
        %v1968 = vsel %vm1840, %v1714, %v1904
        %v1969 = vsel %vm1841, %v1719, %v1905
        %v1970 = vsel %vm1842, %v1722, %v1906
        %v1971 = vsel %vm1843, %v1727, %v1907
        %v1972 = vsel %vm1844, %v1730, %v1908
        %v1973 = vsel %vm1845, %v1735, %v1909
        %v1974 = vsel %vm1846, %v1738, %v1910
        %v1975 = vsel %vm1847, %v1743, %v1911
        %v1976 = vsel %vm1848, %v1746, %v1912
        %v1977 = vsel %vm1849, %v1751, %v1913
        %v1978 = vsel %vm1850, %v1754, %v1914
        %v1979 = vsel %vm1851, %v1759, %v1915
        %v1980 = vsel %vm1852, %v1762, %v1916
        %v1981 = vsel %vm1853, %v1767, %v1917
        %v1982 = vsel %vm1854, %v1770, %v1918
        %v1983 = vsel %vm1855, %v1775, %v1919
        %v1984 = vsel %vm1856, %v1778, %v1920
        %v1985 = vsel %vm1857, %v1783, %v1921
        %v1986 = vsel %vm1858, %v1786, %v1922
        %v1987 = vsel %vm1859, %v1791, %v1923
        %v1988 = vsel %vm1860, %v1794, %v1924
        %v1989 = vpack.c.bf16 %v1926, %v1925
        %v1990 = vpack.c.bf16 %v1928, %v1927
        %v1991 = vpack.c.bf16 %v1930, %v1929
        %v1992 = vpack.c.bf16 %v1932, %v1931
        %v1993 = vpack.c.bf16 %v1934, %v1933
        %v1994 = vpack.c.bf16 %v1936, %v1935
        %v1995 = vpack.c.bf16 %v1938, %v1937
        %v1996 = vpack.c.bf16 %v1940, %v1939
        %v1997 = vpack.c.bf16 %v1942, %v1941
        %v1998 = vpack.c.bf16 %v1944, %v1943
        %v1999 = vpack.c.bf16 %v1946, %v1945
        %v2000 = vpack.c.bf16 %v1948, %v1947
        %v2001 = vpack.c.bf16 %v1950, %v1949
        %v2002 = vpack.c.bf16 %v1952, %v1951
        %v2003 = vpack.c.bf16 %v1954, %v1953
        %v2004 = vpack.c.bf16 %v1956, %v1955
        %v2005 = vpack.c.bf16 %v1958, %v1957
        %v2006 = vpack.c.bf16 %v1960, %v1959
        %v2007 = vpack.c.bf16 %v1962, %v1961
        %v2008 = vpack.c.bf16 %v1964, %v1963
        %v2009 = vpack.c.bf16 %v1966, %v1965
        %v2010 = vpack.c.bf16 %v1968, %v1967
        %v2011 = vpack.c.bf16 %v1970, %v1969
        %v2012 = vpack.c.bf16 %v1972, %v1971
        %v2013 = vpack.c.bf16 %v1974, %v1973
        %v2014 = vpack.c.bf16 %v1976, %v1975
        %v2015 = vpack.c.bf16 %v1978, %v1977
        %v2016 = vpack.c.bf16 %v1980, %v1979
        %v2017 = vpack.c.bf16 %v1982, %v1981
        %v2018 = vpack.c.bf16 %v1984, %v1983
        %v2019 = vpack.c.bf16 %v1986, %v1985
        %v2020 = vpack.c.bf16 %v1988, %v1987
        %v2021 = vld [vmem:[%s5] sm:$0xff]
        %v2022 = vld [vmem:[%s5 + $0x8] sm:$0xff]
        %v2023 = vld [vmem:[%s5 + $0x10] sm:$0xff]
        %v2024 = vld [vmem:[%s5 + $0x18] sm:$0xff]
        %v2025 = vld [vmem:[%s5 + $0x20] sm:$0xff]
        %v2026 = vld [vmem:[%s5 + $0x28] sm:$0xff]
        %v2027 = vld [vmem:[%s5 + $0x30] sm:$0xff]
        %v2028 = vld [vmem:[%s5 + $0x38] sm:$0xff]
        %v2029 = vld [vmem:[%s5 + $0x40] sm:$0xff]
        %v2030 = vld [vmem:[%s5 + $0x48] sm:$0xff]
        %v2031 = vld [vmem:[%s5 + $0x50] sm:$0xff]
        %v2032 = vld [vmem:[%s5 + $0x58] sm:$0xff]
        %v2033 = vld [vmem:[%s5 + $0x60] sm:$0xff]
        %v2034 = vld [vmem:[%s5 + $0x68] sm:$0xff]
        %v2035 = vld [vmem:[%s5 + $0x70] sm:$0xff]
        %v2036 = vld [vmem:[%s5 + $0x78] sm:$0xff]
        %v2037 = vld [vmem:[%s6] sm:$0x3]
        %v2039 = vlaneseq
        %v2040 = vshrl.u32 %v2039, 7
        %v2041 = vsub.s32 0, %v2040
        %v2042 = vrot.slane %v2037, %v2041
        %v2043 = vlaneseq
        %v2044 = vshrl.u32 %v2043, 7
        %v2045 = vsub.s32 1, %v2044
        %v2046 = vrot.slane %v2037, %v2045
        %v2065 = vunpack.c.l.b16 %v2021
        %v2066 = vunpack.c.h.b16 %v2021
        %v2067 = vunpack.c.l.b16 %v2022
        %v2068 = vunpack.c.h.b16 %v2022
        %v2069 = vunpack.c.l.b16 %v2023
        %v2070 = vunpack.c.h.b16 %v2023
        %v2071 = vunpack.c.l.b16 %v2024
        %v2072 = vunpack.c.h.b16 %v2024
        %v2073 = vunpack.c.l.b16 %v2025
        %v2074 = vunpack.c.h.b16 %v2025
        %v2075 = vunpack.c.l.b16 %v2026
        %v2076 = vunpack.c.h.b16 %v2026
        %v2077 = vunpack.c.l.b16 %v2027
        %v2078 = vunpack.c.h.b16 %v2027
        %v2079 = vunpack.c.l.b16 %v2028
        %v2080 = vunpack.c.h.b16 %v2028
        %v2081 = vunpack.c.l.b16 %v2029
        %v2082 = vunpack.c.h.b16 %v2029
        %v2083 = vunpack.c.l.b16 %v2030
        %v2084 = vunpack.c.h.b16 %v2030
        %v2085 = vunpack.c.l.b16 %v2031
        %v2086 = vunpack.c.h.b16 %v2031
        %v2087 = vunpack.c.l.b16 %v2032
        %v2088 = vunpack.c.h.b16 %v2032
        %v2089 = vunpack.c.l.b16 %v2033
        %v2090 = vunpack.c.h.b16 %v2033
        %v2091 = vunpack.c.l.b16 %v2034
        %v2092 = vunpack.c.h.b16 %v2034
        %v2093 = vunpack.c.l.b16 %v2035
        %v2094 = vunpack.c.h.b16 %v2035
        %v2095 = vunpack.c.l.b16 %v2036
        %v2096 = vunpack.c.h.b16 %v2036
        %v2097 = vpack.c.b16 %v2067, %v2065
        %v2098 = vpack.c.b16 %v2068, %v2066
        %v2099 = vpack.c.b16 %v2071, %v2069
        %v2100 = vpack.c.b16 %v2072, %v2070
        %v2101 = vpack.c.b16 %v2075, %v2073
        %v2102 = vpack.c.b16 %v2076, %v2074
        %v2103 = vpack.c.b16 %v2079, %v2077
        %v2104 = vpack.c.b16 %v2080, %v2078
        %v2105 = vpack.c.b16 %v2083, %v2081
        %v2106 = vpack.c.b16 %v2084, %v2082
        %v2107 = vpack.c.b16 %v2087, %v2085
        %v2108 = vpack.c.b16 %v2088, %v2086
        %v2109 = vpack.c.b16 %v2091, %v2089
        %v2110 = vpack.c.b16 %v2092, %v2090
        %v2111 = vpack.c.b16 %v2095, %v2093
        %v2112 = vpack.c.b16 %v2096, %v2094
        %2129 = vmatprep.subr.bf16.mxu0 %v2098
        %2130 = vmatpush1.bf16.msra.mxu0 %v2097
        %2131 = vmatprep.subr.bf16.mxu0 %v2100
        %2132 = vmatpush1.bf16.msra.mxu0 %v2099
        %2133 = vmatprep.subr.bf16.mxu0 %v2102
        %2134 = vmatpush1.bf16.msra.mxu0 %v2101
        %2135 = vmatprep.subr.bf16.mxu0 %v2104
        %2136 = vmatpush1.bf16.msra.mxu0 %v2103
        %2137 = vmatprep.subr.bf16.mxu0 %v2106
        %2138 = vmatpush1.bf16.msra.mxu0 %v2105
        %2139 = vmatprep.subr.bf16.mxu0 %v2108
        %2140 = vmatpush1.bf16.msra.mxu0 %v2107
        %2141 = vmatprep.subr.bf16.mxu0 %v2110
        %2142 = vmatpush1.bf16.msra.mxu0 %v2109
        %2143 = vmatprep.subr.bf16.mxu0 %v2112
        %2144 = vmatpush1.bf16.msra.mxu0 %v2111
        %2145 = vmatprep.subr.bf16.mxu0 0
        %2146 = vmatpush1.bf16.msra.mxu0 0
        %2147 = vmatprep.subr.bf16.mxu0 0
        %2148 = vmatpush1.bf16.msra.mxu0 0
        %2149 = vmatprep.subr.bf16.mxu0 0
        %2150 = vmatpush1.bf16.msra.mxu0 0
        %2151 = vmatprep.subr.bf16.mxu0 0
        %2152 = vmatpush1.bf16.msra.mxu0 0
        %2153 = vmatprep.subr.bf16.mxu0 0
        %2154 = vmatpush1.bf16.msra.mxu0 0
        %2155 = vmatprep.subr.bf16.mxu0 0
        %2156 = vmatpush1.bf16.msra.mxu0 0
        %2157 = vmatprep.subr.bf16.mxu0 0
        %2158 = vmatpush1.bf16.msra.mxu0 0
        %2159 = vmatprep.subr.bf16.mxu0 0
        %2160 = vmatpush1.bf16.msra.mxu0 0
        %2161 = vmatprep.mubr.bf16.mxu0 0
        %2162 = vmatmul.mubr.bf16.gmra.mrb[0].mxu0 %v1989
        %v2163 = vpop.f32.mrb[0].mxu0
        %v2164 = vadd.f32 %v2042, %v2163
        %v2165 = vpop.f32.mrb[0].mxu0
        %v2166 = vadd.f32 %v2046, %v2165
        %v2167 = vpop.f32.mrb[0].mxu0
        %v2168 = vadd.f32 %v2042, %v2167
        %v2169 = vpop.f32.mrb[0].mxu0
        %v2170 = vadd.f32 %v2046, %v2169
        %2171 = vmatprep.mubr.bf16.mxu0 0
        %2172 = vmatmul.mubr.bf16.gmra.mrb[0].mxu0 %v1990
        %v2173 = vpop.f32.mrb[0].mxu0
        %v2174 = vadd.f32 %v2042, %v2173
        %v2175 = vpop.f32.mrb[0].mxu0
        %v2176 = vadd.f32 %v2046, %v2175
        %v2177 = vpop.f32.mrb[0].mxu0
        %v2178 = vadd.f32 %v2042, %v2177
        %v2179 = vpop.f32.mrb[0].mxu0
        %v2180 = vadd.f32 %v2046, %v2179
        %2181 = vmatprep.mubr.bf16.mxu0 0
        %2182 = vmatmul.mubr.bf16.gmra.mrb[0].mxu0 %v1991
        %v2183 = vpop.f32.mrb[0].mxu0
        %v2184 = vadd.f32 %v2042, %v2183
        %v2185 = vpop.f32.mrb[0].mxu0
        %v2186 = vadd.f32 %v2046, %v2185
        %v2187 = vpop.f32.mrb[0].mxu0
        %v2188 = vadd.f32 %v2042, %v2187
        %v2189 = vpop.f32.mrb[0].mxu0
        %v2190 = vadd.f32 %v2046, %v2189
        %2191 = vmatprep.mubr.bf16.mxu0 0
        %2192 = vmatmul.mubr.bf16.gmra.mrb[0].mxu0 %v1992
        %v2193 = vpop.f32.mrb[0].mxu0
        %v2194 = vadd.f32 %v2042, %v2193
        %v2195 = vpop.f32.mrb[0].mxu0
        %v2196 = vadd.f32 %v2046, %v2195
        %v2197 = vpop.f32.mrb[0].mxu0
        %v2198 = vadd.f32 %v2042, %v2197
        %v2199 = vpop.f32.mrb[0].mxu0
        %v2200 = vadd.f32 %v2046, %v2199
        %2201 = vmatprep.mubr.bf16.mxu0 0
        %2202 = vmatmul.mubr.bf16.gmra.mrb[0].mxu0 %v1993
        %v2203 = vpop.f32.mrb[0].mxu0
        %v2204 = vadd.f32 %v2042, %v2203
        %v2205 = vpop.f32.mrb[0].mxu0
        %v2206 = vadd.f32 %v2046, %v2205
        %v2207 = vpop.f32.mrb[0].mxu0
        %v2208 = vadd.f32 %v2042, %v2207
        %v2209 = vpop.f32.mrb[0].mxu0
        %v2210 = vadd.f32 %v2046, %v2209
        %2211 = vmatprep.mubr.bf16.mxu0 0
        %2212 = vmatmul.mubr.bf16.gmra.mrb[0].mxu0 %v1994
        %v2213 = vpop.f32.mrb[0].mxu0
        %v2214 = vadd.f32 %v2042, %v2213
        %v2215 = vpop.f32.mrb[0].mxu0
        %v2216 = vadd.f32 %v2046, %v2215
        %v2217 = vpop.f32.mrb[0].mxu0
        %v2218 = vadd.f32 %v2042, %v2217
        %v2219 = vpop.f32.mrb[0].mxu0
        %v2220 = vadd.f32 %v2046, %v2219
        %2221 = vmatprep.mubr.bf16.mxu0 0
        %2222 = vmatmul.mubr.bf16.gmra.mrb[0].mxu0 %v1995
        %v2223 = vpop.f32.mrb[0].mxu0
        %v2224 = vadd.f32 %v2042, %v2223
        %v2225 = vpop.f32.mrb[0].mxu0
        %v2226 = vadd.f32 %v2046, %v2225
        %v2227 = vpop.f32.mrb[0].mxu0
        %v2228 = vadd.f32 %v2042, %v2227
        %v2229 = vpop.f32.mrb[0].mxu0
        %v2230 = vadd.f32 %v2046, %v2229
        %2231 = vmatprep.mubr.bf16.mxu0 0
        %2232 = vmatmul.mubr.bf16.gmra.mrb[0].mxu0 %v1996
        %v2233 = vpop.f32.mrb[0].mxu0
        %v2234 = vadd.f32 %v2042, %v2233
        %v2235 = vpop.f32.mrb[0].mxu0
        %v2236 = vadd.f32 %v2046, %v2235
        %v2237 = vpop.f32.mrb[0].mxu0
        %v2238 = vadd.f32 %v2042, %v2237
        %v2239 = vpop.f32.mrb[0].mxu0
        %v2240 = vadd.f32 %v2046, %v2239
        %2241 = vmatprep.mubr.bf16.mxu0 0
        %2242 = vmatmul.mubr.bf16.gmra.mrb[0].mxu0 %v1997
        %v2243 = vpop.f32.mrb[0].mxu0
        %v2244 = vadd.f32 %v2042, %v2243
        %v2245 = vpop.f32.mrb[0].mxu0
        %v2246 = vadd.f32 %v2046, %v2245
        %v2247 = vpop.f32.mrb[0].mxu0
        %v2248 = vadd.f32 %v2042, %v2247
        %v2249 = vpop.f32.mrb[0].mxu0
        %v2250 = vadd.f32 %v2046, %v2249
        %2251 = vmatprep.mubr.bf16.mxu0 0
        %2252 = vmatmul.mubr.bf16.gmra.mrb[0].mxu0 %v1998
        %v2253 = vpop.f32.mrb[0].mxu0
        %v2254 = vadd.f32 %v2042, %v2253
        %v2255 = vpop.f32.mrb[0].mxu0
        %v2256 = vadd.f32 %v2046, %v2255
        %v2257 = vpop.f32.mrb[0].mxu0
        %v2258 = vadd.f32 %v2042, %v2257
        %v2259 = vpop.f32.mrb[0].mxu0
        %v2260 = vadd.f32 %v2046, %v2259
        %2261 = vmatprep.mubr.bf16.mxu0 0
        %2262 = vmatmul.mubr.bf16.gmra.mrb[0].mxu0 %v1999
        %v2263 = vpop.f32.mrb[0].mxu0
        %v2264 = vadd.f32 %v2042, %v2263
        %v2265 = vpop.f32.mrb[0].mxu0
        %v2266 = vadd.f32 %v2046, %v2265
        %v2267 = vpop.f32.mrb[0].mxu0
        %v2268 = vadd.f32 %v2042, %v2267
        %v2269 = vpop.f32.mrb[0].mxu0
        %v2270 = vadd.f32 %v2046, %v2269
        %2271 = vmatprep.mubr.bf16.mxu0 0
        %2272 = vmatmul.mubr.bf16.gmra.mrb[0].mxu0 %v2000
        %v2273 = vpop.f32.mrb[0].mxu0
        %v2274 = vadd.f32 %v2042, %v2273
        %v2275 = vpop.f32.mrb[0].mxu0
        %v2276 = vadd.f32 %v2046, %v2275
        %v2277 = vpop.f32.mrb[0].mxu0
        %v2278 = vadd.f32 %v2042, %v2277
        %v2279 = vpop.f32.mrb[0].mxu0
        %v2280 = vadd.f32 %v2046, %v2279
        %2281 = vmatprep.mubr.bf16.mxu0 0
        %2282 = vmatmul.mubr.bf16.gmra.mrb[0].mxu0 %v2001
        %v2283 = vpop.f32.mrb[0].mxu0
        %v2284 = vadd.f32 %v2042, %v2283
        %v2285 = vpop.f32.mrb[0].mxu0
        %v2286 = vadd.f32 %v2046, %v2285
        %v2287 = vpop.f32.mrb[0].mxu0
        %v2288 = vadd.f32 %v2042, %v2287
        %v2289 = vpop.f32.mrb[0].mxu0
        %v2290 = vadd.f32 %v2046, %v2289
        %2291 = vmatprep.mubr.bf16.mxu0 0
        %2292 = vmatmul.mubr.bf16.gmra.mrb[0].mxu0 %v2002
        %v2293 = vpop.f32.mrb[0].mxu0
        %v2294 = vadd.f32 %v2042, %v2293
        %v2295 = vpop.f32.mrb[0].mxu0
        %v2296 = vadd.f32 %v2046, %v2295
        %v2297 = vpop.f32.mrb[0].mxu0
        %v2298 = vadd.f32 %v2042, %v2297
        %v2299 = vpop.f32.mrb[0].mxu0
        %v2300 = vadd.f32 %v2046, %v2299
        %2301 = vmatprep.mubr.bf16.mxu0 0
        %2302 = vmatmul.mubr.bf16.gmra.mrb[0].mxu0 %v2003
        %v2303 = vpop.f32.mrb[0].mxu0
        %v2304 = vadd.f32 %v2042, %v2303
        %v2305 = vpop.f32.mrb[0].mxu0
        %v2306 = vadd.f32 %v2046, %v2305
        %v2307 = vpop.f32.mrb[0].mxu0
        %v2308 = vadd.f32 %v2042, %v2307
        %v2309 = vpop.f32.mrb[0].mxu0
        %v2310 = vadd.f32 %v2046, %v2309
        %2311 = vmatprep.mubr.bf16.mxu0 0
        %2312 = vmatmul.mubr.bf16.gmra.mrb[0].mxu0 %v2004
        %v2313 = vpop.f32.mrb[0].mxu0
        %v2314 = vadd.f32 %v2042, %v2313
        %v2315 = vpop.f32.mrb[0].mxu0
        %v2316 = vadd.f32 %v2046, %v2315
        %v2317 = vpop.f32.mrb[0].mxu0
        %v2318 = vadd.f32 %v2042, %v2317
        %v2319 = vpop.f32.mrb[0].mxu0
        %v2320 = vadd.f32 %v2046, %v2319
        %2321 = vmatprep.mubr.bf16.mxu0 0
        %2322 = vmatmul.mubr.bf16.gmra.mrb[0].mxu0 %v2005
        %v2323 = vpop.f32.mrb[0].mxu0
        %v2324 = vadd.f32 %v2042, %v2323
        %v2325 = vpop.f32.mrb[0].mxu0
        %v2326 = vadd.f32 %v2046, %v2325
        %v2327 = vpop.f32.mrb[0].mxu0
        %v2328 = vadd.f32 %v2042, %v2327
        %v2329 = vpop.f32.mrb[0].mxu0
        %v2330 = vadd.f32 %v2046, %v2329
        %2331 = vmatprep.mubr.bf16.mxu0 0
        %2332 = vmatmul.mubr.bf16.gmra.mrb[0].mxu0 %v2006
        %v2333 = vpop.f32.mrb[0].mxu0
        %v2334 = vadd.f32 %v2042, %v2333
        %v2335 = vpop.f32.mrb[0].mxu0
        %v2336 = vadd.f32 %v2046, %v2335
        %v2337 = vpop.f32.mrb[0].mxu0
        %v2338 = vadd.f32 %v2042, %v2337
        %v2339 = vpop.f32.mrb[0].mxu0
        %v2340 = vadd.f32 %v2046, %v2339
        %2341 = vmatprep.mubr.bf16.mxu0 0
        %2342 = vmatmul.mubr.bf16.gmra.mrb[0].mxu0 %v2007
        %v2343 = vpop.f32.mrb[0].mxu0
        %v2344 = vadd.f32 %v2042, %v2343
        %v2345 = vpop.f32.mrb[0].mxu0
        %v2346 = vadd.f32 %v2046, %v2345
        %v2347 = vpop.f32.mrb[0].mxu0
        %v2348 = vadd.f32 %v2042, %v2347
        %v2349 = vpop.f32.mrb[0].mxu0
        %v2350 = vadd.f32 %v2046, %v2349
        %2351 = vmatprep.mubr.bf16.mxu0 0
        %2352 = vmatmul.mubr.bf16.gmra.mrb[0].mxu0 %v2008
        %v2353 = vpop.f32.mrb[0].mxu0
        %v2354 = vadd.f32 %v2042, %v2353
        %v2355 = vpop.f32.mrb[0].mxu0
        %v2356 = vadd.f32 %v2046, %v2355
        %v2357 = vpop.f32.mrb[0].mxu0
        %v2358 = vadd.f32 %v2042, %v2357
        %v2359 = vpop.f32.mrb[0].mxu0
        %v2360 = vadd.f32 %v2046, %v2359
        %2361 = vmatprep.mubr.bf16.mxu0 0
        %2362 = vmatmul.mubr.bf16.gmra.mrb[0].mxu0 %v2009
        %v2363 = vpop.f32.mrb[0].mxu0
        %v2364 = vadd.f32 %v2042, %v2363
        %v2365 = vpop.f32.mrb[0].mxu0
        %v2366 = vadd.f32 %v2046, %v2365
        %v2367 = vpop.f32.mrb[0].mxu0
        %v2368 = vadd.f32 %v2042, %v2367
        %v2369 = vpop.f32.mrb[0].mxu0
        %v2370 = vadd.f32 %v2046, %v2369
        %2371 = vmatprep.mubr.bf16.mxu0 0
        %2372 = vmatmul.mubr.bf16.gmra.mrb[0].mxu0 %v2010
        %v2373 = vpop.f32.mrb[0].mxu0
        %v2374 = vadd.f32 %v2042, %v2373
        %v2375 = vpop.f32.mrb[0].mxu0
        %v2376 = vadd.f32 %v2046, %v2375
        %v2377 = vpop.f32.mrb[0].mxu0
        %v2378 = vadd.f32 %v2042, %v2377
        %v2379 = vpop.f32.mrb[0].mxu0
        %v2380 = vadd.f32 %v2046, %v2379
        %2381 = vmatprep.mubr.bf16.mxu0 0
        %2382 = vmatmul.mubr.bf16.gmra.mrb[0].mxu0 %v2011
        %v2383 = vpop.f32.mrb[0].mxu0
        %v2384 = vadd.f32 %v2042, %v2383
        %v2385 = vpop.f32.mrb[0].mxu0
        %v2386 = vadd.f32 %v2046, %v2385
        %v2387 = vpop.f32.mrb[0].mxu0
        %v2388 = vadd.f32 %v2042, %v2387
        %v2389 = vpop.f32.mrb[0].mxu0
        %v2390 = vadd.f32 %v2046, %v2389
        %2391 = vmatprep.mubr.bf16.mxu0 0
        %2392 = vmatmul.mubr.bf16.gmra.mrb[0].mxu0 %v2012
        %v2393 = vpop.f32.mrb[0].mxu0
        %v2394 = vadd.f32 %v2042, %v2393
        %v2395 = vpop.f32.mrb[0].mxu0
        %v2396 = vadd.f32 %v2046, %v2395
        %v2397 = vpop.f32.mrb[0].mxu0
        %v2398 = vadd.f32 %v2042, %v2397
        %v2399 = vpop.f32.mrb[0].mxu0
        %v2400 = vadd.f32 %v2046, %v2399
        %2401 = vmatprep.mubr.bf16.mxu0 0
        %2402 = vmatmul.mubr.bf16.gmra.mrb[0].mxu0 %v2013
        %v2403 = vpop.f32.mrb[0].mxu0
        %v2404 = vadd.f32 %v2042, %v2403
        %v2405 = vpop.f32.mrb[0].mxu0
        %v2406 = vadd.f32 %v2046, %v2405
        %v2407 = vpop.f32.mrb[0].mxu0
        %v2408 = vadd.f32 %v2042, %v2407
        %v2409 = vpop.f32.mrb[0].mxu0
        %v2410 = vadd.f32 %v2046, %v2409
        %2411 = vmatprep.mubr.bf16.mxu0 0
        %2412 = vmatmul.mubr.bf16.gmra.mrb[0].mxu0 %v2014
        %v2413 = vpop.f32.mrb[0].mxu0
        %v2414 = vadd.f32 %v2042, %v2413
        %v2415 = vpop.f32.mrb[0].mxu0
        %v2416 = vadd.f32 %v2046, %v2415
        %v2417 = vpop.f32.mrb[0].mxu0
        %v2418 = vadd.f32 %v2042, %v2417
        %v2419 = vpop.f32.mrb[0].mxu0
        %v2420 = vadd.f32 %v2046, %v2419
        %2421 = vmatprep.mubr.bf16.mxu0 0
        %2422 = vmatmul.mubr.bf16.gmra.mrb[0].mxu0 %v2015
        %v2423 = vpop.f32.mrb[0].mxu0
        %v2424 = vadd.f32 %v2042, %v2423
        %v2425 = vpop.f32.mrb[0].mxu0
        %v2426 = vadd.f32 %v2046, %v2425
        %v2427 = vpop.f32.mrb[0].mxu0
        %v2428 = vadd.f32 %v2042, %v2427
        %v2429 = vpop.f32.mrb[0].mxu0
        %v2430 = vadd.f32 %v2046, %v2429
        %2431 = vmatprep.mubr.bf16.mxu0 0
        %2432 = vmatmul.mubr.bf16.gmra.mrb[0].mxu0 %v2016
        %v2433 = vpop.f32.mrb[0].mxu0
        %v2434 = vadd.f32 %v2042, %v2433
        %v2435 = vpop.f32.mrb[0].mxu0
        %v2436 = vadd.f32 %v2046, %v2435
        %v2437 = vpop.f32.mrb[0].mxu0
        %v2438 = vadd.f32 %v2042, %v2437
        %v2439 = vpop.f32.mrb[0].mxu0
        %v2440 = vadd.f32 %v2046, %v2439
        %2441 = vmatprep.mubr.bf16.mxu0 0
        %2442 = vmatmul.mubr.bf16.gmra.mrb[0].mxu0 %v2017
        %v2443 = vpop.f32.mrb[0].mxu0
        %v2444 = vadd.f32 %v2042, %v2443
        %v2445 = vpop.f32.mrb[0].mxu0
        %v2446 = vadd.f32 %v2046, %v2445
        %v2447 = vpop.f32.mrb[0].mxu0
        %v2448 = vadd.f32 %v2042, %v2447
        %v2449 = vpop.f32.mrb[0].mxu0
        %v2450 = vadd.f32 %v2046, %v2449
        %2451 = vmatprep.mubr.bf16.mxu0 0
        %2452 = vmatmul.mubr.bf16.gmra.mrb[0].mxu0 %v2018
        %v2453 = vpop.f32.mrb[0].mxu0
        %v2454 = vadd.f32 %v2042, %v2453
        %v2455 = vpop.f32.mrb[0].mxu0
        %v2456 = vadd.f32 %v2046, %v2455
        %v2457 = vpop.f32.mrb[0].mxu0
        %v2458 = vadd.f32 %v2042, %v2457
        %v2459 = vpop.f32.mrb[0].mxu0
        %v2460 = vadd.f32 %v2046, %v2459
        %2461 = vmatprep.mubr.bf16.mxu0 0
        %2462 = vmatmul.mubr.bf16.gmra.mrb[0].mxu0 %v2019
        %v2463 = vpop.f32.mrb[0].mxu0
        %v2464 = vadd.f32 %v2042, %v2463
        %v2465 = vpop.f32.mrb[0].mxu0
        %v2466 = vadd.f32 %v2046, %v2465
        %v2467 = vpop.f32.mrb[0].mxu0
        %v2468 = vadd.f32 %v2042, %v2467
        %v2469 = vpop.f32.mrb[0].mxu0
        %v2470 = vadd.f32 %v2046, %v2469
        %2471 = vmatprep.mubr.bf16.mxu0 0
        %2472 = vmatmul.mubr.bf16.gmra.mrb[0].mxu0 %v2020
        %v2473 = vpop.f32.mrb[0].mxu0
        %v2474 = vadd.f32 %v2042, %v2473
        %v2475 = vpop.f32.mrb[0].mxu0
        %v2476 = vadd.f32 %v2046, %v2475
        %v2477 = vpop.f32.mrb[0].mxu0
        %v2478 = vadd.f32 %v2042, %v2477
        %v2479 = vpop.f32.mrb[0].mxu0
        %v2480 = vadd.f32 %v2046, %v2479
        %2481 = vdwg.mxu0
        %vm2482 = vcmp.gt.f32.partialorder %v2164, 0.0
        %vm2483 = vcmp.gt.f32.partialorder %v2166, 0.0
        %vm2484 = vcmp.gt.f32.partialorder %v2168, 0.0
        %vm2485 = vcmp.gt.f32.partialorder %v2170, 0.0
        %vm2486 = vcmp.gt.f32.partialorder %v2174, 0.0
        %vm2487 = vcmp.gt.f32.partialorder %v2176, 0.0
        %vm2488 = vcmp.gt.f32.partialorder %v2178, 0.0
        %vm2489 = vcmp.gt.f32.partialorder %v2180, 0.0
        %vm2490 = vcmp.gt.f32.partialorder %v2184, 0.0
        %vm2491 = vcmp.gt.f32.partialorder %v2186, 0.0
        %vm2492 = vcmp.gt.f32.partialorder %v2188, 0.0
        %vm2493 = vcmp.gt.f32.partialorder %v2190, 0.0
        %vm2494 = vcmp.gt.f32.partialorder %v2194, 0.0
        %vm2495 = vcmp.gt.f32.partialorder %v2196, 0.0
        %vm2496 = vcmp.gt.f32.partialorder %v2198, 0.0
        %vm2497 = vcmp.gt.f32.partialorder %v2200, 0.0
        %vm2498 = vcmp.gt.f32.partialorder %v2204, 0.0
        %vm2499 = vcmp.gt.f32.partialorder %v2206, 0.0
        %vm2500 = vcmp.gt.f32.partialorder %v2208, 0.0
        %vm2501 = vcmp.gt.f32.partialorder %v2210, 0.0
        %vm2502 = vcmp.gt.f32.partialorder %v2214, 0.0
        %vm2503 = vcmp.gt.f32.partialorder %v2216, 0.0
        %vm2504 = vcmp.gt.f32.partialorder %v2218, 0.0
        %vm2505 = vcmp.gt.f32.partialorder %v2220, 0.0
        %vm2506 = vcmp.gt.f32.partialorder %v2224, 0.0
        %vm2507 = vcmp.gt.f32.partialorder %v2226, 0.0
        %vm2508 = vcmp.gt.f32.partialorder %v2228, 0.0
        %vm2509 = vcmp.gt.f32.partialorder %v2230, 0.0
        %vm2510 = vcmp.gt.f32.partialorder %v2234, 0.0
        %vm2511 = vcmp.gt.f32.partialorder %v2236, 0.0
        %vm2512 = vcmp.gt.f32.partialorder %v2238, 0.0
        %vm2513 = vcmp.gt.f32.partialorder %v2240, 0.0
        %vm2514 = vcmp.gt.f32.partialorder %v2244, 0.0
        %vm2515 = vcmp.gt.f32.partialorder %v2246, 0.0
        %vm2516 = vcmp.gt.f32.partialorder %v2248, 0.0
        %vm2517 = vcmp.gt.f32.partialorder %v2250, 0.0
        %vm2518 = vcmp.gt.f32.partialorder %v2254, 0.0
        %vm2519 = vcmp.gt.f32.partialorder %v2256, 0.0
        %vm2520 = vcmp.gt.f32.partialorder %v2258, 0.0
        %vm2521 = vcmp.gt.f32.partialorder %v2260, 0.0
        %vm2522 = vcmp.gt.f32.partialorder %v2264, 0.0
        %vm2523 = vcmp.gt.f32.partialorder %v2266, 0.0
        %vm2524 = vcmp.gt.f32.partialorder %v2268, 0.0
        %vm2525 = vcmp.gt.f32.partialorder %v2270, 0.0
        %vm2526 = vcmp.gt.f32.partialorder %v2274, 0.0
        %vm2527 = vcmp.gt.f32.partialorder %v2276, 0.0
        %vm2528 = vcmp.gt.f32.partialorder %v2278, 0.0
        %vm2529 = vcmp.gt.f32.partialorder %v2280, 0.0
        %vm2530 = vcmp.gt.f32.partialorder %v2284, 0.0
        %vm2531 = vcmp.gt.f32.partialorder %v2286, 0.0
        %vm2532 = vcmp.gt.f32.partialorder %v2288, 0.0
        %vm2533 = vcmp.gt.f32.partialorder %v2290, 0.0
        %vm2534 = vcmp.gt.f32.partialorder %v2294, 0.0
        %vm2535 = vcmp.gt.f32.partialorder %v2296, 0.0
        %vm2536 = vcmp.gt.f32.partialorder %v2298, 0.0
        %vm2537 = vcmp.gt.f32.partialorder %v2300, 0.0
        %vm2538 = vcmp.gt.f32.partialorder %v2304, 0.0
        %vm2539 = vcmp.gt.f32.partialorder %v2306, 0.0
        %vm2540 = vcmp.gt.f32.partialorder %v2308, 0.0
        %vm2541 = vcmp.gt.f32.partialorder %v2310, 0.0
        %vm2542 = vcmp.gt.f32.partialorder %v2314, 0.0
        %vm2543 = vcmp.gt.f32.partialorder %v2316, 0.0
        %vm2544 = vcmp.gt.f32.partialorder %v2318, 0.0
        %vm2545 = vcmp.gt.f32.partialorder %v2320, 0.0
        %vm2546 = vcmp.gt.f32.partialorder %v2324, 0.0
        %vm2547 = vcmp.gt.f32.partialorder %v2326, 0.0
        %vm2548 = vcmp.gt.f32.partialorder %v2328, 0.0
        %vm2549 = vcmp.gt.f32.partialorder %v2330, 0.0
        %vm2550 = vcmp.gt.f32.partialorder %v2334, 0.0
        %vm2551 = vcmp.gt.f32.partialorder %v2336, 0.0
        %vm2552 = vcmp.gt.f32.partialorder %v2338, 0.0
        %vm2553 = vcmp.gt.f32.partialorder %v2340, 0.0
        %vm2554 = vcmp.gt.f32.partialorder %v2344, 0.0
        %vm2555 = vcmp.gt.f32.partialorder %v2346, 0.0
        %vm2556 = vcmp.gt.f32.partialorder %v2348, 0.0
        %vm2557 = vcmp.gt.f32.partialorder %v2350, 0.0
        %vm2558 = vcmp.gt.f32.partialorder %v2354, 0.0
        %vm2559 = vcmp.gt.f32.partialorder %v2356, 0.0
        %vm2560 = vcmp.gt.f32.partialorder %v2358, 0.0
        %vm2561 = vcmp.gt.f32.partialorder %v2360, 0.0
        %vm2562 = vcmp.gt.f32.partialorder %v2364, 0.0
        %vm2563 = vcmp.gt.f32.partialorder %v2366, 0.0
        %vm2564 = vcmp.gt.f32.partialorder %v2368, 0.0
        %vm2565 = vcmp.gt.f32.partialorder %v2370, 0.0
        %vm2566 = vcmp.gt.f32.partialorder %v2374, 0.0
        %vm2567 = vcmp.gt.f32.partialorder %v2376, 0.0
        %vm2568 = vcmp.gt.f32.partialorder %v2378, 0.0
        %vm2569 = vcmp.gt.f32.partialorder %v2380, 0.0
        %vm2570 = vcmp.gt.f32.partialorder %v2384, 0.0
        %vm2571 = vcmp.gt.f32.partialorder %v2386, 0.0
        %vm2572 = vcmp.gt.f32.partialorder %v2388, 0.0
        %vm2573 = vcmp.gt.f32.partialorder %v2390, 0.0
        %vm2574 = vcmp.gt.f32.partialorder %v2394, 0.0
        %vm2575 = vcmp.gt.f32.partialorder %v2396, 0.0
        %vm2576 = vcmp.gt.f32.partialorder %v2398, 0.0
        %vm2577 = vcmp.gt.f32.partialorder %v2400, 0.0
        %vm2578 = vcmp.gt.f32.partialorder %v2404, 0.0
        %vm2579 = vcmp.gt.f32.partialorder %v2406, 0.0
        %vm2580 = vcmp.gt.f32.partialorder %v2408, 0.0
        %vm2581 = vcmp.gt.f32.partialorder %v2410, 0.0
        %vm2582 = vcmp.gt.f32.partialorder %v2414, 0.0
        %vm2583 = vcmp.gt.f32.partialorder %v2416, 0.0
        %vm2584 = vcmp.gt.f32.partialorder %v2418, 0.0
        %vm2585 = vcmp.gt.f32.partialorder %v2420, 0.0
        %vm2586 = vcmp.gt.f32.partialorder %v2424, 0.0
        %vm2587 = vcmp.gt.f32.partialorder %v2426, 0.0
        %vm2588 = vcmp.gt.f32.partialorder %v2428, 0.0
        %vm2589 = vcmp.gt.f32.partialorder %v2430, 0.0
        %vm2590 = vcmp.gt.f32.partialorder %v2434, 0.0
        %vm2591 = vcmp.gt.f32.partialorder %v2436, 0.0
        %vm2592 = vcmp.gt.f32.partialorder %v2438, 0.0
        %vm2593 = vcmp.gt.f32.partialorder %v2440, 0.0
        %vm2594 = vcmp.gt.f32.partialorder %v2444, 0.0
        %vm2595 = vcmp.gt.f32.partialorder %v2446, 0.0
        %vm2596 = vcmp.gt.f32.partialorder %v2448, 0.0
        %vm2597 = vcmp.gt.f32.partialorder %v2450, 0.0
        %vm2598 = vcmp.gt.f32.partialorder %v2454, 0.0
        %vm2599 = vcmp.gt.f32.partialorder %v2456, 0.0
        %vm2600 = vcmp.gt.f32.partialorder %v2458, 0.0
        %vm2601 = vcmp.gt.f32.partialorder %v2460, 0.0
        %vm2602 = vcmp.gt.f32.partialorder %v2464, 0.0
        %vm2603 = vcmp.gt.f32.partialorder %v2466, 0.0
        %vm2604 = vcmp.gt.f32.partialorder %v2468, 0.0
        %vm2605 = vcmp.gt.f32.partialorder %v2470, 0.0
        %vm2606 = vcmp.gt.f32.partialorder %v2474, 0.0
        %vm2607 = vcmp.gt.f32.partialorder %v2476, 0.0
        %vm2608 = vcmp.gt.f32.partialorder %v2478, 0.0
        %vm2609 = vcmp.gt.f32.partialorder %v2480, 0.0
        %v2610 = vmul.f32 %v2164, 0.3
        %v2611 = vmul.f32 %v2166, 0.3
        %v2612 = vmul.f32 %v2168, 0.3
        %v2613 = vmul.f32 %v2170, 0.3
        %v2614 = vmul.f32 %v2174, 0.3
        %v2615 = vmul.f32 %v2176, 0.3
        %v2616 = vmul.f32 %v2178, 0.3
        %v2617 = vmul.f32 %v2180, 0.3
        %v2618 = vmul.f32 %v2184, 0.3
        %v2619 = vmul.f32 %v2186, 0.3
        %v2620 = vmul.f32 %v2188, 0.3
        %v2621 = vmul.f32 %v2190, 0.3
        %v2622 = vmul.f32 %v2194, 0.3
        %v2623 = vmul.f32 %v2196, 0.3
        %v2624 = vmul.f32 %v2198, 0.3
        %v2625 = vmul.f32 %v2200, 0.3
        %v2626 = vmul.f32 %v2204, 0.3
        %v2627 = vmul.f32 %v2206, 0.3
        %v2628 = vmul.f32 %v2208, 0.3
        %v2629 = vmul.f32 %v2210, 0.3
        %v2630 = vmul.f32 %v2214, 0.3
        %v2631 = vmul.f32 %v2216, 0.3
        %v2632 = vmul.f32 %v2218, 0.3
        %v2633 = vmul.f32 %v2220, 0.3
        %v2634 = vmul.f32 %v2224, 0.3
        %v2635 = vmul.f32 %v2226, 0.3
        %v2636 = vmul.f32 %v2228, 0.3
        %v2637 = vmul.f32 %v2230, 0.3
        %v2638 = vmul.f32 %v2234, 0.3
        %v2639 = vmul.f32 %v2236, 0.3
        %v2640 = vmul.f32 %v2238, 0.3
        %v2641 = vmul.f32 %v2240, 0.3
        %v2642 = vmul.f32 %v2244, 0.3
        %v2643 = vmul.f32 %v2246, 0.3
        %v2644 = vmul.f32 %v2248, 0.3
        %v2645 = vmul.f32 %v2250, 0.3
        %v2646 = vmul.f32 %v2254, 0.3
        %v2647 = vmul.f32 %v2256, 0.3
        %v2648 = vmul.f32 %v2258, 0.3
        %v2649 = vmul.f32 %v2260, 0.3
        %v2650 = vmul.f32 %v2264, 0.3
        %v2651 = vmul.f32 %v2266, 0.3
        %v2652 = vmul.f32 %v2268, 0.3
        %v2653 = vmul.f32 %v2270, 0.3
        %v2654 = vmul.f32 %v2274, 0.3
        %v2655 = vmul.f32 %v2276, 0.3
        %v2656 = vmul.f32 %v2278, 0.3
        %v2657 = vmul.f32 %v2280, 0.3
        %v2658 = vmul.f32 %v2284, 0.3
        %v2659 = vmul.f32 %v2286, 0.3
        %v2660 = vmul.f32 %v2288, 0.3
        %v2661 = vmul.f32 %v2290, 0.3
        %v2662 = vmul.f32 %v2294, 0.3
        %v2663 = vmul.f32 %v2296, 0.3
        %v2664 = vmul.f32 %v2298, 0.3
        %v2665 = vmul.f32 %v2300, 0.3
        %v2666 = vmul.f32 %v2304, 0.3
        %v2667 = vmul.f32 %v2306, 0.3
        %v2668 = vmul.f32 %v2308, 0.3
        %v2669 = vmul.f32 %v2310, 0.3
        %v2670 = vmul.f32 %v2314, 0.3
        %v2671 = vmul.f32 %v2316, 0.3
        %v2672 = vmul.f32 %v2318, 0.3
        %v2673 = vmul.f32 %v2320, 0.3
        %v2674 = vmul.f32 %v2324, 0.3
        %v2675 = vmul.f32 %v2326, 0.3
        %v2676 = vmul.f32 %v2328, 0.3
        %v2677 = vmul.f32 %v2330, 0.3
        %v2678 = vmul.f32 %v2334, 0.3
        %v2679 = vmul.f32 %v2336, 0.3
        %v2680 = vmul.f32 %v2338, 0.3
        %v2681 = vmul.f32 %v2340, 0.3
        %v2682 = vmul.f32 %v2344, 0.3
        %v2683 = vmul.f32 %v2346, 0.3
        %v2684 = vmul.f32 %v2348, 0.3
        %v2685 = vmul.f32 %v2350, 0.3
        %v2686 = vmul.f32 %v2354, 0.3
        %v2687 = vmul.f32 %v2356, 0.3
        %v2688 = vmul.f32 %v2358, 0.3
        %v2689 = vmul.f32 %v2360, 0.3
        %v2690 = vmul.f32 %v2364, 0.3
        %v2691 = vmul.f32 %v2366, 0.3
        %v2692 = vmul.f32 %v2368, 0.3
        %v2693 = vmul.f32 %v2370, 0.3
        %v2694 = vmul.f32 %v2374, 0.3
        %v2695 = vmul.f32 %v2376, 0.3
        %v2696 = vmul.f32 %v2378, 0.3
        %v2697 = vmul.f32 %v2380, 0.3
        %v2698 = vmul.f32 %v2384, 0.3
        %v2699 = vmul.f32 %v2386, 0.3
        %v2700 = vmul.f32 %v2388, 0.3
        %v2701 = vmul.f32 %v2390, 0.3
        %v2702 = vmul.f32 %v2394, 0.3
        %v2703 = vmul.f32 %v2396, 0.3
        %v2704 = vmul.f32 %v2398, 0.3
        %v2705 = vmul.f32 %v2400, 0.3
        %v2706 = vmul.f32 %v2404, 0.3
        %v2707 = vmul.f32 %v2406, 0.3
        %v2708 = vmul.f32 %v2408, 0.3
        %v2709 = vmul.f32 %v2410, 0.3
        %v2710 = vmul.f32 %v2414, 0.3
        %v2711 = vmul.f32 %v2416, 0.3
        %v2712 = vmul.f32 %v2418, 0.3
        %v2713 = vmul.f32 %v2420, 0.3
        %v2714 = vmul.f32 %v2424, 0.3
        %v2715 = vmul.f32 %v2426, 0.3
        %v2716 = vmul.f32 %v2428, 0.3
        %v2717 = vmul.f32 %v2430, 0.3
        %v2718 = vmul.f32 %v2434, 0.3
        %v2719 = vmul.f32 %v2436, 0.3
        %v2720 = vmul.f32 %v2438, 0.3
        %v2721 = vmul.f32 %v2440, 0.3
        %v2722 = vmul.f32 %v2444, 0.3
        %v2723 = vmul.f32 %v2446, 0.3
        %v2724 = vmul.f32 %v2448, 0.3
        %v2725 = vmul.f32 %v2450, 0.3
        %v2726 = vmul.f32 %v2454, 0.3
        %v2727 = vmul.f32 %v2456, 0.3
        %v2728 = vmul.f32 %v2458, 0.3
        %v2729 = vmul.f32 %v2460, 0.3
        %v2730 = vmul.f32 %v2464, 0.3
        %v2731 = vmul.f32 %v2466, 0.3
        %v2732 = vmul.f32 %v2468, 0.3
        %v2733 = vmul.f32 %v2470, 0.3
        %v2734 = vmul.f32 %v2474, 0.3
        %v2735 = vmul.f32 %v2476, 0.3
        %v2736 = vmul.f32 %v2478, 0.3
        %v2737 = vmul.f32 %v2480, 0.3
        %v2738 = vsel %vm2482, %v2164, %v2610
        %v2739 = vsel %vm2483, %v2166, %v2611
        %v2740 = vsel %vm2484, %v2168, %v2612
        %v2741 = vsel %vm2485, %v2170, %v2613
        %v2742 = vsel %vm2486, %v2174, %v2614
        %v2743 = vsel %vm2487, %v2176, %v2615
        %v2744 = vsel %vm2488, %v2178, %v2616
        %v2745 = vsel %vm2489, %v2180, %v2617
        %v2746 = vsel %vm2490, %v2184, %v2618
        %v2747 = vsel %vm2491, %v2186, %v2619
        %v2748 = vsel %vm2492, %v2188, %v2620
        %v2749 = vsel %vm2493, %v2190, %v2621
        %v2750 = vsel %vm2494, %v2194, %v2622
        %v2751 = vsel %vm2495, %v2196, %v2623
        %v2752 = vsel %vm2496, %v2198, %v2624
        %v2753 = vsel %vm2497, %v2200, %v2625
        %v2754 = vsel %vm2498, %v2204, %v2626
        %v2755 = vsel %vm2499, %v2206, %v2627
        %v2756 = vsel %vm2500, %v2208, %v2628
        %v2757 = vsel %vm2501, %v2210, %v2629
        %v2758 = vsel %vm2502, %v2214, %v2630
        %v2759 = vsel %vm2503, %v2216, %v2631
        %v2760 = vsel %vm2504, %v2218, %v2632
        %v2761 = vsel %vm2505, %v2220, %v2633
        %v2762 = vsel %vm2506, %v2224, %v2634
        %v2763 = vsel %vm2507, %v2226, %v2635
        %v2764 = vsel %vm2508, %v2228, %v2636
        %v2765 = vsel %vm2509, %v2230, %v2637
        %v2766 = vsel %vm2510, %v2234, %v2638
        %v2767 = vsel %vm2511, %v2236, %v2639
        %v2768 = vsel %vm2512, %v2238, %v2640
        %v2769 = vsel %vm2513, %v2240, %v2641
        %v2770 = vsel %vm2514, %v2244, %v2642
        %v2771 = vsel %vm2515, %v2246, %v2643
        %v2772 = vsel %vm2516, %v2248, %v2644
        %v2773 = vsel %vm2517, %v2250, %v2645
        %v2774 = vsel %vm2518, %v2254, %v2646
        %v2775 = vsel %vm2519, %v2256, %v2647
        %v2776 = vsel %vm2520, %v2258, %v2648
        %v2777 = vsel %vm2521, %v2260, %v2649
        %v2778 = vsel %vm2522, %v2264, %v2650
        %v2779 = vsel %vm2523, %v2266, %v2651
        %v2780 = vsel %vm2524, %v2268, %v2652
        %v2781 = vsel %vm2525, %v2270, %v2653
        %v2782 = vsel %vm2526, %v2274, %v2654
        %v2783 = vsel %vm2527, %v2276, %v2655
        %v2784 = vsel %vm2528, %v2278, %v2656
        %v2785 = vsel %vm2529, %v2280, %v2657
        %v2786 = vsel %vm2530, %v2284, %v2658
        %v2787 = vsel %vm2531, %v2286, %v2659
        %v2788 = vsel %vm2532, %v2288, %v2660
        %v2789 = vsel %vm2533, %v2290, %v2661
        %v2790 = vsel %vm2534, %v2294, %v2662
        %v2791 = vsel %vm2535, %v2296, %v2663
        %v2792 = vsel %vm2536, %v2298, %v2664
        %v2793 = vsel %vm2537, %v2300, %v2665
        %v2794 = vsel %vm2538, %v2304, %v2666
        %v2795 = vsel %vm2539, %v2306, %v2667
        %v2796 = vsel %vm2540, %v2308, %v2668
        %v2797 = vsel %vm2541, %v2310, %v2669
        %v2798 = vsel %vm2542, %v2314, %v2670
        %v2799 = vsel %vm2543, %v2316, %v2671
        %v2800 = vsel %vm2544, %v2318, %v2672
        %v2801 = vsel %vm2545, %v2320, %v2673
        %v2802 = vsel %vm2546, %v2324, %v2674
        %v2803 = vsel %vm2547, %v2326, %v2675
        %v2804 = vsel %vm2548, %v2328, %v2676
        %v2805 = vsel %vm2549, %v2330, %v2677
        %v2806 = vsel %vm2550, %v2334, %v2678
        %v2807 = vsel %vm2551, %v2336, %v2679
        %v2808 = vsel %vm2552, %v2338, %v2680
        %v2809 = vsel %vm2553, %v2340, %v2681
        %v2810 = vsel %vm2554, %v2344, %v2682
        %v2811 = vsel %vm2555, %v2346, %v2683
        %v2812 = vsel %vm2556, %v2348, %v2684
        %v2813 = vsel %vm2557, %v2350, %v2685
        %v2814 = vsel %vm2558, %v2354, %v2686
        %v2815 = vsel %vm2559, %v2356, %v2687
        %v2816 = vsel %vm2560, %v2358, %v2688
        %v2817 = vsel %vm2561, %v2360, %v2689
        %v2818 = vsel %vm2562, %v2364, %v2690
        %v2819 = vsel %vm2563, %v2366, %v2691
        %v2820 = vsel %vm2564, %v2368, %v2692
        %v2821 = vsel %vm2565, %v2370, %v2693
        %v2822 = vsel %vm2566, %v2374, %v2694
        %v2823 = vsel %vm2567, %v2376, %v2695
        %v2824 = vsel %vm2568, %v2378, %v2696
        %v2825 = vsel %vm2569, %v2380, %v2697
        %v2826 = vsel %vm2570, %v2384, %v2698
        %v2827 = vsel %vm2571, %v2386, %v2699
        %v2828 = vsel %vm2572, %v2388, %v2700
        %v2829 = vsel %vm2573, %v2390, %v2701
        %v2830 = vsel %vm2574, %v2394, %v2702
        %v2831 = vsel %vm2575, %v2396, %v2703
        %v2832 = vsel %vm2576, %v2398, %v2704
        %v2833 = vsel %vm2577, %v2400, %v2705
        %v2834 = vsel %vm2578, %v2404, %v2706
        %v2835 = vsel %vm2579, %v2406, %v2707
        %v2836 = vsel %vm2580, %v2408, %v2708
        %v2837 = vsel %vm2581, %v2410, %v2709
        %v2838 = vsel %vm2582, %v2414, %v2710
        %v2839 = vsel %vm2583, %v2416, %v2711
        %v2840 = vsel %vm2584, %v2418, %v2712
        %v2841 = vsel %vm2585, %v2420, %v2713
        %v2842 = vsel %vm2586, %v2424, %v2714
        %v2843 = vsel %vm2587, %v2426, %v2715
        %v2844 = vsel %vm2588, %v2428, %v2716
        %v2845 = vsel %vm2589, %v2430, %v2717
        %v2846 = vsel %vm2590, %v2434, %v2718
        %v2847 = vsel %vm2591, %v2436, %v2719
        %v2848 = vsel %vm2592, %v2438, %v2720
        %v2849 = vsel %vm2593, %v2440, %v2721
        %v2850 = vsel %vm2594, %v2444, %v2722
        %v2851 = vsel %vm2595, %v2446, %v2723
        %v2852 = vsel %vm2596, %v2448, %v2724
        %v2853 = vsel %vm2597, %v2450, %v2725
        %v2854 = vsel %vm2598, %v2454, %v2726
        %v2855 = vsel %vm2599, %v2456, %v2727
        %v2856 = vsel %vm2600, %v2458, %v2728
        %v2857 = vsel %vm2601, %v2460, %v2729
        %v2858 = vsel %vm2602, %v2464, %v2730
        %v2859 = vsel %vm2603, %v2466, %v2731
        %v2860 = vsel %vm2604, %v2468, %v2732
        %v2861 = vsel %vm2605, %v2470, %v2733
        %v2862 = vsel %vm2606, %v2474, %v2734
        %v2863 = vsel %vm2607, %v2476, %v2735
        %v2864 = vsel %vm2608, %v2478, %v2736
        %v2865 = vsel %vm2609, %v2480, %v2737
        %v2866 = vpack.c.bf16 %v2740, %v2738
        %v2867 = vpack.c.bf16 %v2741, %v2739
        %v2868 = vpack.c.bf16 %v2744, %v2742
        %v2869 = vpack.c.bf16 %v2745, %v2743
        %v2870 = vpack.c.bf16 %v2748, %v2746
        %v2871 = vpack.c.bf16 %v2749, %v2747
        %v2872 = vpack.c.bf16 %v2752, %v2750
        %v2873 = vpack.c.bf16 %v2753, %v2751
        %v2874 = vpack.c.bf16 %v2756, %v2754
        %v2875 = vpack.c.bf16 %v2757, %v2755
        %v2876 = vpack.c.bf16 %v2760, %v2758
        %v2877 = vpack.c.bf16 %v2761, %v2759
        %v2878 = vpack.c.bf16 %v2764, %v2762
        %v2879 = vpack.c.bf16 %v2765, %v2763
        %v2880 = vpack.c.bf16 %v2768, %v2766
        %v2881 = vpack.c.bf16 %v2769, %v2767
        %v2882 = vpack.c.bf16 %v2772, %v2770
        %v2883 = vpack.c.bf16 %v2773, %v2771
        %v2884 = vpack.c.bf16 %v2776, %v2774
        %v2885 = vpack.c.bf16 %v2777, %v2775
        %v2886 = vpack.c.bf16 %v2780, %v2778
        %v2887 = vpack.c.bf16 %v2781, %v2779
        %v2888 = vpack.c.bf16 %v2784, %v2782
        %v2889 = vpack.c.bf16 %v2785, %v2783
        %v2890 = vpack.c.bf16 %v2788, %v2786
        %v2891 = vpack.c.bf16 %v2789, %v2787
        %v2892 = vpack.c.bf16 %v2792, %v2790
        %v2893 = vpack.c.bf16 %v2793, %v2791
        %v2894 = vpack.c.bf16 %v2796, %v2794
        %v2895 = vpack.c.bf16 %v2797, %v2795
        %v2896 = vpack.c.bf16 %v2800, %v2798
        %v2897 = vpack.c.bf16 %v2801, %v2799
        %v2898 = vpack.c.bf16 %v2804, %v2802
        %v2899 = vpack.c.bf16 %v2805, %v2803
        %v2900 = vpack.c.bf16 %v2808, %v2806
        %v2901 = vpack.c.bf16 %v2809, %v2807
        %v2902 = vpack.c.bf16 %v2812, %v2810
        %v2903 = vpack.c.bf16 %v2813, %v2811
        %v2904 = vpack.c.bf16 %v2816, %v2814
        %v2905 = vpack.c.bf16 %v2817, %v2815
        %v2906 = vpack.c.bf16 %v2820, %v2818
        %v2907 = vpack.c.bf16 %v2821, %v2819
        %v2908 = vpack.c.bf16 %v2824, %v2822
        %v2909 = vpack.c.bf16 %v2825, %v2823
        %v2910 = vpack.c.bf16 %v2828, %v2826
        %v2911 = vpack.c.bf16 %v2829, %v2827
        %v2912 = vpack.c.bf16 %v2832, %v2830
        %v2913 = vpack.c.bf16 %v2833, %v2831
        %v2914 = vpack.c.bf16 %v2836, %v2834
        %v2915 = vpack.c.bf16 %v2837, %v2835
        %v2916 = vpack.c.bf16 %v2840, %v2838
        %v2917 = vpack.c.bf16 %v2841, %v2839
        %v2918 = vpack.c.bf16 %v2844, %v2842
        %v2919 = vpack.c.bf16 %v2845, %v2843
        %v2920 = vpack.c.bf16 %v2848, %v2846
        %v2921 = vpack.c.bf16 %v2849, %v2847
        %v2922 = vpack.c.bf16 %v2852, %v2850
        %v2923 = vpack.c.bf16 %v2853, %v2851
        %v2924 = vpack.c.bf16 %v2856, %v2854
        %v2925 = vpack.c.bf16 %v2857, %v2855
        %v2926 = vpack.c.bf16 %v2860, %v2858
        %v2927 = vpack.c.bf16 %v2861, %v2859
        %v2928 = vpack.c.bf16 %v2864, %v2862
        %v2929 = vpack.c.bf16 %v2865, %v2863
        %v2930 = vld [vmem:[%s7] sm:$0xff]
        %v2931 = vld [vmem:[%s7 + $0x8] sm:$0xff]
        %v2932 = vld [vmem:[%s7 + $0x10] sm:$0xff]
        %v2933 = vld [vmem:[%s7 + $0x18] sm:$0xff]
        %v2934 = vld [vmem:[%s7 + $0x20] sm:$0xff]
        %v2935 = vld [vmem:[%s7 + $0x28] sm:$0xff]
        %v2936 = vld [vmem:[%s7 + $0x30] sm:$0xff]
        %v2937 = vld [vmem:[%s7 + $0x38] sm:$0xff]
        %v2938 = vld [vmem:[%s7 + $0x40] sm:$0xff]
        %v2939 = vld [vmem:[%s7 + $0x48] sm:$0xff]
        %v2940 = vld [vmem:[%s7 + $0x50] sm:$0xff]
        %v2941 = vld [vmem:[%s7 + $0x58] sm:$0xff]
        %v2942 = vld [vmem:[%s7 + $0x60] sm:$0xff]
        %v2943 = vld [vmem:[%s7 + $0x68] sm:$0xff]
        %v2944 = vld [vmem:[%s7 + $0x70] sm:$0xff]
        %v2945 = vld [vmem:[%s7 + $0x78] sm:$0xff]
        %v2946 = vld [vmem:[%s7 + $0x80] sm:$0xff]
        %v2947 = vld [vmem:[%s7 + $0x88] sm:$0xff]
        %v2948 = vld [vmem:[%s7 + $0x90] sm:$0xff]
        %v2949 = vld [vmem:[%s7 + $0x98] sm:$0xff]
        %v2950 = vld [vmem:[%s7 + $0xa0] sm:$0xff]
        %v2951 = vld [vmem:[%s7 + $0xa8] sm:$0xff]
        %v2952 = vld [vmem:[%s7 + $0xb0] sm:$0xff]
        %v2953 = vld [vmem:[%s7 + $0xb8] sm:$0xff]
        %v2954 = vld [vmem:[%s7 + $0xc0] sm:$0xff]
        %v2955 = vld [vmem:[%s7 + $0xc8] sm:$0xff]
        %v2956 = vld [vmem:[%s7 + $0xd0] sm:$0xff]
        %v2957 = vld [vmem:[%s7 + $0xd8] sm:$0xff]
        %v2958 = vld [vmem:[%s7 + $0xe0] sm:$0xff]
        %v2959 = vld [vmem:[%s7 + $0xe8] sm:$0xff]
        %v2960 = vld [vmem:[%s7 + $0xf0] sm:$0xff]
        %v2961 = vld [vmem:[%s7 + $0xf8] sm:$0xff]
        %v2962 = vld [vmem:[%s7 + $0x100] sm:$0xff]
        %v2963 = vld [vmem:[%s7 + $0x108] sm:$0xff]
        %v2964 = vld [vmem:[%s7 + $0x110] sm:$0xff]
        %v2965 = vld [vmem:[%s7 + $0x118] sm:$0xff]
        %v2966 = vld [vmem:[%s7 + $0x120] sm:$0xff]
        %v2967 = vld [vmem:[%s7 + $0x128] sm:$0xff]
        %v2968 = vld [vmem:[%s7 + $0x130] sm:$0xff]
        %v2969 = vld [vmem:[%s7 + $0x138] sm:$0xff]
        %v2970 = vld [vmem:[%s7 + $0x140] sm:$0xff]
        %v2971 = vld [vmem:[%s7 + $0x148] sm:$0xff]
        %v2972 = vld [vmem:[%s7 + $0x150] sm:$0xff]
        %v2973 = vld [vmem:[%s7 + $0x158] sm:$0xff]
        %v2974 = vld [vmem:[%s7 + $0x160] sm:$0xff]
        %v2975 = vld [vmem:[%s7 + $0x168] sm:$0xff]
        %v2976 = vld [vmem:[%s7 + $0x170] sm:$0xff]
        %v2977 = vld [vmem:[%s7 + $0x178] sm:$0xff]
        %v2978 = vld [vmem:[%s7 + $0x180] sm:$0xff]
        %v2979 = vld [vmem:[%s7 + $0x188] sm:$0xff]
        %v2980 = vld [vmem:[%s7 + $0x190] sm:$0xff]
        %v2981 = vld [vmem:[%s7 + $0x198] sm:$0xff]
        %v2982 = vld [vmem:[%s7 + $0x1a0] sm:$0xff]
        %v2983 = vld [vmem:[%s7 + $0x1a8] sm:$0xff]
        %v2984 = vld [vmem:[%s7 + $0x1b0] sm:$0xff]
        %v2985 = vld [vmem:[%s7 + $0x1b8] sm:$0xff]
        %v2986 = vld [vmem:[%s7 + $0x1c0] sm:$0xff]
        %v2987 = vld [vmem:[%s7 + $0x1c8] sm:$0xff]
        %v2988 = vld [vmem:[%s7 + $0x1d0] sm:$0xff]
        %v2989 = vld [vmem:[%s7 + $0x1d8] sm:$0xff]
        %v2990 = vld [vmem:[%s7 + $0x1e0] sm:$0xff]
        %v2991 = vld [vmem:[%s7 + $0x1e8] sm:$0xff]
        %v2992 = vld [vmem:[%s7 + $0x1f0] sm:$0xff]
        %v2993 = vld [vmem:[%s7 + $0x1f8] sm:$0xff]
        %v2994 = vld [vmem:[%s7 + $0x200] sm:$0xff]
        %v2995 = vld [vmem:[%s7 + $0x208] sm:$0xff]
        %v2996 = vld [vmem:[%s7 + $0x210] sm:$0xff]
        %v2997 = vld [vmem:[%s7 + $0x218] sm:$0xff]
        %v2998 = vld [vmem:[%s7 + $0x220] sm:$0xff]
        %v2999 = vld [vmem:[%s7 + $0x228] sm:$0xff]
        %v3000 = vld [vmem:[%s7 + $0x230] sm:$0xff]
        %v3001 = vld [vmem:[%s7 + $0x238] sm:$0xff]
        %v3002 = vld [vmem:[%s7 + $0x240] sm:$0xff]
        %v3003 = vld [vmem:[%s7 + $0x248] sm:$0xff]
        %v3004 = vld [vmem:[%s7 + $0x250] sm:$0xff]
        %v3005 = vld [vmem:[%s7 + $0x258] sm:$0xff]
        %v3006 = vld [vmem:[%s7 + $0x260] sm:$0xff]
        %v3007 = vld [vmem:[%s7 + $0x268] sm:$0xff]
        %v3008 = vld [vmem:[%s7 + $0x270] sm:$0xff]
        %v3009 = vld [vmem:[%s7 + $0x278] sm:$0xff]
        %v3010 = vld [vmem:[%s7 + $0x280] sm:$0xff]
        %v3011 = vld [vmem:[%s7 + $0x288] sm:$0xff]
        %v3012 = vld [vmem:[%s7 + $0x290] sm:$0xff]
        %v3013 = vld [vmem:[%s7 + $0x298] sm:$0xff]
        %v3014 = vld [vmem:[%s7 + $0x2a0] sm:$0xff]
        %v3015 = vld [vmem:[%s7 + $0x2a8] sm:$0xff]
        %v3016 = vld [vmem:[%s7 + $0x2b0] sm:$0xff]
        %v3017 = vld [vmem:[%s7 + $0x2b8] sm:$0xff]
        %v3018 = vld [vmem:[%s7 + $0x2c0] sm:$0xff]
        %v3019 = vld [vmem:[%s7 + $0x2c8] sm:$0xff]
        %v3020 = vld [vmem:[%s7 + $0x2d0] sm:$0xff]
        %v3021 = vld [vmem:[%s7 + $0x2d8] sm:$0xff]
        %v3022 = vld [vmem:[%s7 + $0x2e0] sm:$0xff]
        %v3023 = vld [vmem:[%s7 + $0x2e8] sm:$0xff]
        %v3024 = vld [vmem:[%s7 + $0x2f0] sm:$0xff]
        %v3025 = vld [vmem:[%s7 + $0x2f8] sm:$0xff]
        %v3026 = vld [vmem:[%s7 + $0x300] sm:$0xff]
        %v3027 = vld [vmem:[%s7 + $0x308] sm:$0xff]
        %v3028 = vld [vmem:[%s7 + $0x310] sm:$0xff]
        %v3029 = vld [vmem:[%s7 + $0x318] sm:$0xff]
        %v3030 = vld [vmem:[%s7 + $0x320] sm:$0xff]
        %v3031 = vld [vmem:[%s7 + $0x328] sm:$0xff]
        %v3032 = vld [vmem:[%s7 + $0x330] sm:$0xff]
        %v3033 = vld [vmem:[%s7 + $0x338] sm:$0xff]
        %v3034 = vld [vmem:[%s7 + $0x340] sm:$0xff]
        %v3035 = vld [vmem:[%s7 + $0x348] sm:$0xff]
        %v3036 = vld [vmem:[%s7 + $0x350] sm:$0xff]
        %v3037 = vld [vmem:[%s7 + $0x358] sm:$0xff]
        %v3038 = vld [vmem:[%s7 + $0x360] sm:$0xff]
        %v3039 = vld [vmem:[%s7 + $0x368] sm:$0xff]
        %v3040 = vld [vmem:[%s7 + $0x370] sm:$0xff]
        %v3041 = vld [vmem:[%s7 + $0x378] sm:$0xff]
        %v3042 = vld [vmem:[%s7 + $0x380] sm:$0xff]
        %v3043 = vld [vmem:[%s7 + $0x388] sm:$0xff]
        %v3044 = vld [vmem:[%s7 + $0x390] sm:$0xff]
        %v3045 = vld [vmem:[%s7 + $0x398] sm:$0xff]
        %v3046 = vld [vmem:[%s7 + $0x3a0] sm:$0xff]
        %v3047 = vld [vmem:[%s7 + $0x3a8] sm:$0xff]
        %v3048 = vld [vmem:[%s7 + $0x3b0] sm:$0xff]
        %v3049 = vld [vmem:[%s7 + $0x3b8] sm:$0xff]
        %v3050 = vld [vmem:[%s7 + $0x3c0] sm:$0xff]
        %v3051 = vld [vmem:[%s7 + $0x3c8] sm:$0xff]
        %v3052 = vld [vmem:[%s7 + $0x3d0] sm:$0xff]
        %v3053 = vld [vmem:[%s7 + $0x3d8] sm:$0xff]
        %v3054 = vld [vmem:[%s7 + $0x3e0] sm:$0xff]
        %v3055 = vld [vmem:[%s7 + $0x3e8] sm:$0xff]
        %v3056 = vld [vmem:[%s7 + $0x3f0] sm:$0xff]
        %v3057 = vld [vmem:[%s7 + $0x3f8] sm:$0xff]
        %v3058 = vld [vmem:[%s8] sm:$0xff]
        %v3060 = vlaneseq
        %v3061 = vshrl.u32 %v3060, 7
        %v3062 = vsub.s32 0, %v3061
        %v3063 = vrot.slane %v3058, %v3062
        %v3064 = vlaneseq
        %v3065 = vshrl.u32 %v3064, 7
        %v3066 = vsub.s32 1, %v3065
        %v3067 = vrot.slane %v3058, %v3066
        %v3068 = vlaneseq
        %v3069 = vshrl.u32 %v3068, 7
        %v3070 = vsub.s32 2, %v3069
        %v3071 = vrot.slane %v3058, %v3070
        %v3072 = vlaneseq
        %v3073 = vshrl.u32 %v3072, 7
        %v3074 = vsub.s32 3, %v3073
        %v3075 = vrot.slane %v3058, %v3074
        %v3076 = vlaneseq
        %v3077 = vshrl.u32 %v3076, 7
        %v3078 = vsub.s32 4, %v3077
        %v3079 = vrot.slane %v3058, %v3078
        %v3080 = vlaneseq
        %v3081 = vshrl.u32 %v3080, 7
        %v3082 = vsub.s32 5, %v3081
        %v3083 = vrot.slane %v3058, %v3082
        %v3084 = vlaneseq
        %v3085 = vshrl.u32 %v3084, 7
        %v3086 = vsub.s32 6, %v3085
        %v3087 = vrot.slane %v3058, %v3086
        %v3088 = vlaneseq
        %v3089 = vshrl.u32 %v3088, 7
        %v3090 = vsub.s32 7, %v3089
        %v3091 = vrot.slane %v3058, %v3090
        %v3228 = vunpack.c.l.b16 %v2930
        %v3229 = vunpack.c.h.b16 %v2930
        %v3230 = vunpack.c.l.b16 %v2931
        %v3231 = vunpack.c.h.b16 %v2931
        %v3232 = vunpack.c.l.b16 %v2932
        %v3233 = vunpack.c.h.b16 %v2932
        %v3234 = vunpack.c.l.b16 %v2933
        %v3235 = vunpack.c.h.b16 %v2933
        %v3236 = vunpack.c.l.b16 %v2934
        %v3237 = vunpack.c.h.b16 %v2934
        %v3238 = vunpack.c.l.b16 %v2935
        %v3239 = vunpack.c.h.b16 %v2935
        %v3240 = vunpack.c.l.b16 %v2936
        %v3241 = vunpack.c.h.b16 %v2936
        %v3242 = vunpack.c.l.b16 %v2937
        %v3243 = vunpack.c.h.b16 %v2937
        %v3244 = vunpack.c.l.b16 %v2938
        %v3245 = vunpack.c.h.b16 %v2938
        %v3246 = vunpack.c.l.b16 %v2939
        %v3247 = vunpack.c.h.b16 %v2939
        %v3248 = vunpack.c.l.b16 %v2940
        %v3249 = vunpack.c.h.b16 %v2940
        %v3250 = vunpack.c.l.b16 %v2941
        %v3251 = vunpack.c.h.b16 %v2941
        %v3252 = vunpack.c.l.b16 %v2942
        %v3253 = vunpack.c.h.b16 %v2942
        %v3254 = vunpack.c.l.b16 %v2943
        %v3255 = vunpack.c.h.b16 %v2943
        %v3256 = vunpack.c.l.b16 %v2944
        %v3257 = vunpack.c.h.b16 %v2944
        %v3258 = vunpack.c.l.b16 %v2945
        %v3259 = vunpack.c.h.b16 %v2945
        %v3260 = vunpack.c.l.b16 %v2946
        %v3261 = vunpack.c.h.b16 %v2946
        %v3262 = vunpack.c.l.b16 %v2947
        %v3263 = vunpack.c.h.b16 %v2947
        %v3264 = vunpack.c.l.b16 %v2948
        %v3265 = vunpack.c.h.b16 %v2948
        %v3266 = vunpack.c.l.b16 %v2949
        %v3267 = vunpack.c.h.b16 %v2949
        %v3268 = vunpack.c.l.b16 %v2950
        %v3269 = vunpack.c.h.b16 %v2950
        %v3270 = vunpack.c.l.b16 %v2951
        %v3271 = vunpack.c.h.b16 %v2951
        %v3272 = vunpack.c.l.b16 %v2952
        %v3273 = vunpack.c.h.b16 %v2952
        %v3274 = vunpack.c.l.b16 %v2953
        %v3275 = vunpack.c.h.b16 %v2953
        %v3276 = vunpack.c.l.b16 %v2954
        %v3277 = vunpack.c.h.b16 %v2954
        %v3278 = vunpack.c.l.b16 %v2955
        %v3279 = vunpack.c.h.b16 %v2955
        %v3280 = vunpack.c.l.b16 %v2956
        %v3281 = vunpack.c.h.b16 %v2956
        %v3282 = vunpack.c.l.b16 %v2957
        %v3283 = vunpack.c.h.b16 %v2957
        %v3284 = vunpack.c.l.b16 %v2958
        %v3285 = vunpack.c.h.b16 %v2958
        %v3286 = vunpack.c.l.b16 %v2959
        %v3287 = vunpack.c.h.b16 %v2959
        %v3288 = vunpack.c.l.b16 %v2960
        %v3289 = vunpack.c.h.b16 %v2960
        %v3290 = vunpack.c.l.b16 %v2961
        %v3291 = vunpack.c.h.b16 %v2961
        %v3292 = vunpack.c.l.b16 %v2962
        %v3293 = vunpack.c.h.b16 %v2962
        %v3294 = vunpack.c.l.b16 %v2963
        %v3295 = vunpack.c.h.b16 %v2963
        %v3296 = vunpack.c.l.b16 %v2964
        %v3297 = vunpack.c.h.b16 %v2964
        %v3298 = vunpack.c.l.b16 %v2965
        %v3299 = vunpack.c.h.b16 %v2965
        %v3300 = vunpack.c.l.b16 %v2966
        %v3301 = vunpack.c.h.b16 %v2966
        %v3302 = vunpack.c.l.b16 %v2967
        %v3303 = vunpack.c.h.b16 %v2967
        %v3304 = vunpack.c.l.b16 %v2968
        %v3305 = vunpack.c.h.b16 %v2968
        %v3306 = vunpack.c.l.b16 %v2969
        %v3307 = vunpack.c.h.b16 %v2969
        %v3308 = vunpack.c.l.b16 %v2970
        %v3309 = vunpack.c.h.b16 %v2970
        %v3310 = vunpack.c.l.b16 %v2971
        %v3311 = vunpack.c.h.b16 %v2971
        %v3312 = vunpack.c.l.b16 %v2972
        %v3313 = vunpack.c.h.b16 %v2972
        %v3314 = vunpack.c.l.b16 %v2973
        %v3315 = vunpack.c.h.b16 %v2973
        %v3316 = vunpack.c.l.b16 %v2974
        %v3317 = vunpack.c.h.b16 %v2974
        %v3318 = vunpack.c.l.b16 %v2975
        %v3319 = vunpack.c.h.b16 %v2975
        %v3320 = vunpack.c.l.b16 %v2976
        %v3321 = vunpack.c.h.b16 %v2976
        %v3322 = vunpack.c.l.b16 %v2977
        %v3323 = vunpack.c.h.b16 %v2977
        %v3324 = vunpack.c.l.b16 %v2978
        %v3325 = vunpack.c.h.b16 %v2978
        %v3326 = vunpack.c.l.b16 %v2979
        %v3327 = vunpack.c.h.b16 %v2979
        %v3328 = vunpack.c.l.b16 %v2980
        %v3329 = vunpack.c.h.b16 %v2980
        %v3330 = vunpack.c.l.b16 %v2981
        %v3331 = vunpack.c.h.b16 %v2981
        %v3332 = vunpack.c.l.b16 %v2982
        %v3333 = vunpack.c.h.b16 %v2982
        %v3334 = vunpack.c.l.b16 %v2983
        %v3335 = vunpack.c.h.b16 %v2983
        %v3336 = vunpack.c.l.b16 %v2984
        %v3337 = vunpack.c.h.b16 %v2984
        %v3338 = vunpack.c.l.b16 %v2985
        %v3339 = vunpack.c.h.b16 %v2985
        %v3340 = vunpack.c.l.b16 %v2986
        %v3341 = vunpack.c.h.b16 %v2986
        %v3342 = vunpack.c.l.b16 %v2987
        %v3343 = vunpack.c.h.b16 %v2987
        %v3344 = vunpack.c.l.b16 %v2988
        %v3345 = vunpack.c.h.b16 %v2988
        %v3346 = vunpack.c.l.b16 %v2989
        %v3347 = vunpack.c.h.b16 %v2989
        %v3348 = vunpack.c.l.b16 %v2990
        %v3349 = vunpack.c.h.b16 %v2990
        %v3350 = vunpack.c.l.b16 %v2991
        %v3351 = vunpack.c.h.b16 %v2991
        %v3352 = vunpack.c.l.b16 %v2992
        %v3353 = vunpack.c.h.b16 %v2992
        %v3354 = vunpack.c.l.b16 %v2993
        %v3355 = vunpack.c.h.b16 %v2993
        %v3356 = vunpack.c.l.b16 %v2994
        %v3357 = vunpack.c.h.b16 %v2994
        %v3358 = vunpack.c.l.b16 %v2995
        %v3359 = vunpack.c.h.b16 %v2995
        %v3360 = vunpack.c.l.b16 %v2996
        %v3361 = vunpack.c.h.b16 %v2996
        %v3362 = vunpack.c.l.b16 %v2997
        %v3363 = vunpack.c.h.b16 %v2997
        %v3364 = vunpack.c.l.b16 %v2998
        %v3365 = vunpack.c.h.b16 %v2998
        %v3366 = vunpack.c.l.b16 %v2999
        %v3367 = vunpack.c.h.b16 %v2999
        %v3368 = vunpack.c.l.b16 %v3000
        %v3369 = vunpack.c.h.b16 %v3000
        %v3370 = vunpack.c.l.b16 %v3001
        %v3371 = vunpack.c.h.b16 %v3001
        %v3372 = vunpack.c.l.b16 %v3002
        %v3373 = vunpack.c.h.b16 %v3002
        %v3374 = vunpack.c.l.b16 %v3003
        %v3375 = vunpack.c.h.b16 %v3003
        %v3376 = vunpack.c.l.b16 %v3004
        %v3377 = vunpack.c.h.b16 %v3004
        %v3378 = vunpack.c.l.b16 %v3005
        %v3379 = vunpack.c.h.b16 %v3005
        %v3380 = vunpack.c.l.b16 %v3006
        %v3381 = vunpack.c.h.b16 %v3006
        %v3382 = vunpack.c.l.b16 %v3007
        %v3383 = vunpack.c.h.b16 %v3007
        %v3384 = vunpack.c.l.b16 %v3008
        %v3385 = vunpack.c.h.b16 %v3008
        %v3386 = vunpack.c.l.b16 %v3009
        %v3387 = vunpack.c.h.b16 %v3009
        %v3388 = vunpack.c.l.b16 %v3010
        %v3389 = vunpack.c.h.b16 %v3010
        %v3390 = vunpack.c.l.b16 %v3011
        %v3391 = vunpack.c.h.b16 %v3011
        %v3392 = vunpack.c.l.b16 %v3012
        %v3393 = vunpack.c.h.b16 %v3012
        %v3394 = vunpack.c.l.b16 %v3013
        %v3395 = vunpack.c.h.b16 %v3013
        %v3396 = vunpack.c.l.b16 %v3014
        %v3397 = vunpack.c.h.b16 %v3014
        %v3398 = vunpack.c.l.b16 %v3015
        %v3399 = vunpack.c.h.b16 %v3015
        %v3400 = vunpack.c.l.b16 %v3016
        %v3401 = vunpack.c.h.b16 %v3016
        %v3402 = vunpack.c.l.b16 %v3017
        %v3403 = vunpack.c.h.b16 %v3017
        %v3404 = vunpack.c.l.b16 %v3018
        %v3405 = vunpack.c.h.b16 %v3018
        %v3406 = vunpack.c.l.b16 %v3019
        %v3407 = vunpack.c.h.b16 %v3019
        %v3408 = vunpack.c.l.b16 %v3020
        %v3409 = vunpack.c.h.b16 %v3020
        %v3410 = vunpack.c.l.b16 %v3021
        %v3411 = vunpack.c.h.b16 %v3021
        %v3412 = vunpack.c.l.b16 %v3022
        %v3413 = vunpack.c.h.b16 %v3022
        %v3414 = vunpack.c.l.b16 %v3023
        %v3415 = vunpack.c.h.b16 %v3023
        %v3416 = vunpack.c.l.b16 %v3024
        %v3417 = vunpack.c.h.b16 %v3024
        %v3418 = vunpack.c.l.b16 %v3025
        %v3419 = vunpack.c.h.b16 %v3025
        %v3420 = vunpack.c.l.b16 %v3026
        %v3421 = vunpack.c.h.b16 %v3026
        %v3422 = vunpack.c.l.b16 %v3027
        %v3423 = vunpack.c.h.b16 %v3027
        %v3424 = vunpack.c.l.b16 %v3028
        %v3425 = vunpack.c.h.b16 %v3028
        %v3426 = vunpack.c.l.b16 %v3029
        %v3427 = vunpack.c.h.b16 %v3029
        %v3428 = vunpack.c.l.b16 %v3030
        %v3429 = vunpack.c.h.b16 %v3030
        %v3430 = vunpack.c.l.b16 %v3031
        %v3431 = vunpack.c.h.b16 %v3031
        %v3432 = vunpack.c.l.b16 %v3032
        %v3433 = vunpack.c.h.b16 %v3032
        %v3434 = vunpack.c.l.b16 %v3033
        %v3435 = vunpack.c.h.b16 %v3033
        %v3436 = vunpack.c.l.b16 %v3034
        %v3437 = vunpack.c.h.b16 %v3034
        %v3438 = vunpack.c.l.b16 %v3035
        %v3439 = vunpack.c.h.b16 %v3035
        %v3440 = vunpack.c.l.b16 %v3036
        %v3441 = vunpack.c.h.b16 %v3036
        %v3442 = vunpack.c.l.b16 %v3037
        %v3443 = vunpack.c.h.b16 %v3037
        %v3444 = vunpack.c.l.b16 %v3038
        %v3445 = vunpack.c.h.b16 %v3038
        %v3446 = vunpack.c.l.b16 %v3039
        %v3447 = vunpack.c.h.b16 %v3039
        %v3448 = vunpack.c.l.b16 %v3040
        %v3449 = vunpack.c.h.b16 %v3040
        %v3450 = vunpack.c.l.b16 %v3041
        %v3451 = vunpack.c.h.b16 %v3041
        %v3452 = vunpack.c.l.b16 %v3042
        %v3453 = vunpack.c.h.b16 %v3042
        %v3454 = vunpack.c.l.b16 %v3043
        %v3455 = vunpack.c.h.b16 %v3043
        %v3456 = vunpack.c.l.b16 %v3044
        %v3457 = vunpack.c.h.b16 %v3044
        %v3458 = vunpack.c.l.b16 %v3045
        %v3459 = vunpack.c.h.b16 %v3045
        %v3460 = vunpack.c.l.b16 %v3046
        %v3461 = vunpack.c.h.b16 %v3046
        %v3462 = vunpack.c.l.b16 %v3047
        %v3463 = vunpack.c.h.b16 %v3047
        %v3464 = vunpack.c.l.b16 %v3048
        %v3465 = vunpack.c.h.b16 %v3048
        %v3466 = vunpack.c.l.b16 %v3049
        %v3467 = vunpack.c.h.b16 %v3049
        %v3468 = vunpack.c.l.b16 %v3050
        %v3469 = vunpack.c.h.b16 %v3050
        %v3470 = vunpack.c.l.b16 %v3051
        %v3471 = vunpack.c.h.b16 %v3051
        %v3472 = vunpack.c.l.b16 %v3052
        %v3473 = vunpack.c.h.b16 %v3052
        %v3474 = vunpack.c.l.b16 %v3053
        %v3475 = vunpack.c.h.b16 %v3053
        %v3476 = vunpack.c.l.b16 %v3054
        %v3477 = vunpack.c.h.b16 %v3054
        %v3478 = vunpack.c.l.b16 %v3055
        %v3479 = vunpack.c.h.b16 %v3055
        %v3480 = vunpack.c.l.b16 %v3056
        %v3481 = vunpack.c.h.b16 %v3056
        %v3482 = vunpack.c.l.b16 %v3057
        %v3483 = vunpack.c.h.b16 %v3057
        %v3484 = vpack.c.b16 %v3236, %v3228
        %v3485 = vpack.c.b16 %v3237, %v3229
        %v3486 = vpack.c.b16 %v3238, %v3230
        %v3487 = vpack.c.b16 %v3239, %v3231
        %v3488 = vpack.c.b16 %v3240, %v3232
        %v3489 = vpack.c.b16 %v3241, %v3233
        %v3490 = vpack.c.b16 %v3242, %v3234
        %v3491 = vpack.c.b16 %v3243, %v3235
        %v3492 = vpack.c.b16 %v3252, %v3244
        %v3493 = vpack.c.b16 %v3253, %v3245
        %v3494 = vpack.c.b16 %v3254, %v3246
        %v3495 = vpack.c.b16 %v3255, %v3247
        %v3496 = vpack.c.b16 %v3256, %v3248
        %v3497 = vpack.c.b16 %v3257, %v3249
        %v3498 = vpack.c.b16 %v3258, %v3250
        %v3499 = vpack.c.b16 %v3259, %v3251
        %v3500 = vpack.c.b16 %v3268, %v3260
        %v3501 = vpack.c.b16 %v3269, %v3261
        %v3502 = vpack.c.b16 %v3270, %v3262
        %v3503 = vpack.c.b16 %v3271, %v3263
        %v3504 = vpack.c.b16 %v3272, %v3264
        %v3505 = vpack.c.b16 %v3273, %v3265
        %v3506 = vpack.c.b16 %v3274, %v3266
        %v3507 = vpack.c.b16 %v3275, %v3267
        %v3508 = vpack.c.b16 %v3284, %v3276
        %v3509 = vpack.c.b16 %v3285, %v3277
        %v3510 = vpack.c.b16 %v3286, %v3278
        %v3511 = vpack.c.b16 %v3287, %v3279
        %v3512 = vpack.c.b16 %v3288, %v3280
        %v3513 = vpack.c.b16 %v3289, %v3281
        %v3514 = vpack.c.b16 %v3290, %v3282
        %v3515 = vpack.c.b16 %v3291, %v3283
        %v3516 = vpack.c.b16 %v3300, %v3292
        %v3517 = vpack.c.b16 %v3301, %v3293
        %v3518 = vpack.c.b16 %v3302, %v3294
        %v3519 = vpack.c.b16 %v3303, %v3295
        %v3520 = vpack.c.b16 %v3304, %v3296
        %v3521 = vpack.c.b16 %v3305, %v3297
        %v3522 = vpack.c.b16 %v3306, %v3298
        %v3523 = vpack.c.b16 %v3307, %v3299
        %v3524 = vpack.c.b16 %v3316, %v3308
        %v3525 = vpack.c.b16 %v3317, %v3309
        %v3526 = vpack.c.b16 %v3318, %v3310
        %v3527 = vpack.c.b16 %v3319, %v3311
        %v3528 = vpack.c.b16 %v3320, %v3312
        %v3529 = vpack.c.b16 %v3321, %v3313
        %v3530 = vpack.c.b16 %v3322, %v3314
        %v3531 = vpack.c.b16 %v3323, %v3315
        %v3532 = vpack.c.b16 %v3332, %v3324
        %v3533 = vpack.c.b16 %v3333, %v3325
        %v3534 = vpack.c.b16 %v3334, %v3326
        %v3535 = vpack.c.b16 %v3335, %v3327
        %v3536 = vpack.c.b16 %v3336, %v3328
        %v3537 = vpack.c.b16 %v3337, %v3329
        %v3538 = vpack.c.b16 %v3338, %v3330
        %v3539 = vpack.c.b16 %v3339, %v3331
        %v3540 = vpack.c.b16 %v3348, %v3340
        %v3541 = vpack.c.b16 %v3349, %v3341
        %v3542 = vpack.c.b16 %v3350, %v3342
        %v3543 = vpack.c.b16 %v3351, %v3343
        %v3544 = vpack.c.b16 %v3352, %v3344
        %v3545 = vpack.c.b16 %v3353, %v3345
        %v3546 = vpack.c.b16 %v3354, %v3346
        %v3547 = vpack.c.b16 %v3355, %v3347
        %v3548 = vpack.c.b16 %v3364, %v3356
        %v3549 = vpack.c.b16 %v3365, %v3357
        %v3550 = vpack.c.b16 %v3366, %v3358
        %v3551 = vpack.c.b16 %v3367, %v3359
        %v3552 = vpack.c.b16 %v3368, %v3360
        %v3553 = vpack.c.b16 %v3369, %v3361
        %v3554 = vpack.c.b16 %v3370, %v3362
        %v3555 = vpack.c.b16 %v3371, %v3363
        %v3556 = vpack.c.b16 %v3380, %v3372
        %v3557 = vpack.c.b16 %v3381, %v3373
        %v3558 = vpack.c.b16 %v3382, %v3374
        %v3559 = vpack.c.b16 %v3383, %v3375
        %v3560 = vpack.c.b16 %v3384, %v3376
        %v3561 = vpack.c.b16 %v3385, %v3377
        %v3562 = vpack.c.b16 %v3386, %v3378
        %v3563 = vpack.c.b16 %v3387, %v3379
        %v3564 = vpack.c.b16 %v3396, %v3388
        %v3565 = vpack.c.b16 %v3397, %v3389
        %v3566 = vpack.c.b16 %v3398, %v3390
        %v3567 = vpack.c.b16 %v3399, %v3391
        %v3568 = vpack.c.b16 %v3400, %v3392
        %v3569 = vpack.c.b16 %v3401, %v3393
        %v3570 = vpack.c.b16 %v3402, %v3394
        %v3571 = vpack.c.b16 %v3403, %v3395
        %v3572 = vpack.c.b16 %v3412, %v3404
        %v3573 = vpack.c.b16 %v3413, %v3405
        %v3574 = vpack.c.b16 %v3414, %v3406
        %v3575 = vpack.c.b16 %v3415, %v3407
        %v3576 = vpack.c.b16 %v3416, %v3408
        %v3577 = vpack.c.b16 %v3417, %v3409
        %v3578 = vpack.c.b16 %v3418, %v3410
        %v3579 = vpack.c.b16 %v3419, %v3411
        %v3580 = vpack.c.b16 %v3428, %v3420
        %v3581 = vpack.c.b16 %v3429, %v3421
        %v3582 = vpack.c.b16 %v3430, %v3422
        %v3583 = vpack.c.b16 %v3431, %v3423
        %v3584 = vpack.c.b16 %v3432, %v3424
        %v3585 = vpack.c.b16 %v3433, %v3425
        %v3586 = vpack.c.b16 %v3434, %v3426
        %v3587 = vpack.c.b16 %v3435, %v3427
        %v3588 = vpack.c.b16 %v3444, %v3436
        %v3589 = vpack.c.b16 %v3445, %v3437
        %v3590 = vpack.c.b16 %v3446, %v3438
        %v3591 = vpack.c.b16 %v3447, %v3439
        %v3592 = vpack.c.b16 %v3448, %v3440
        %v3593 = vpack.c.b16 %v3449, %v3441
        %v3594 = vpack.c.b16 %v3450, %v3442
        %v3595 = vpack.c.b16 %v3451, %v3443
        %v3596 = vpack.c.b16 %v3460, %v3452
        %v3597 = vpack.c.b16 %v3461, %v3453
        %v3598 = vpack.c.b16 %v3462, %v3454
        %v3599 = vpack.c.b16 %v3463, %v3455
        %v3600 = vpack.c.b16 %v3464, %v3456
        %v3601 = vpack.c.b16 %v3465, %v3457
        %v3602 = vpack.c.b16 %v3466, %v3458
        %v3603 = vpack.c.b16 %v3467, %v3459
        %v3604 = vpack.c.b16 %v3476, %v3468
        %v3605 = vpack.c.b16 %v3477, %v3469
        %v3606 = vpack.c.b16 %v3478, %v3470
        %v3607 = vpack.c.b16 %v3479, %v3471
        %v3608 = vpack.c.b16 %v3480, %v3472
        %v3609 = vpack.c.b16 %v3481, %v3473
        %v3610 = vpack.c.b16 %v3482, %v3474
        %v3611 = vpack.c.b16 %v3483, %v3475
        %3740 = vmatprep.subr.bf16.mxu0 %v3485
        %3741 = vmatpush1.bf16.msra.mxu0 %v3484
        %3742 = vmatprep.subr.bf16.mxu0 %v3493
        %3743 = vmatpush1.bf16.msra.mxu0 %v3492
        %3744 = vmatprep.subr.bf16.mxu0 %v3501
        %3745 = vmatpush1.bf16.msra.mxu0 %v3500
        %3746 = vmatprep.subr.bf16.mxu0 %v3509
        %3747 = vmatpush1.bf16.msra.mxu0 %v3508
        %3748 = vmatprep.subr.bf16.mxu0 %v3517
        %3749 = vmatpush1.bf16.msra.mxu0 %v3516
        %3750 = vmatprep.subr.bf16.mxu0 %v3525
        %3751 = vmatpush1.bf16.msra.mxu0 %v3524
        %3752 = vmatprep.subr.bf16.mxu0 %v3533
        %3753 = vmatpush1.bf16.msra.mxu0 %v3532
        %3754 = vmatprep.subr.bf16.mxu0 %v3541
        %3755 = vmatpush1.bf16.msra.mxu0 %v3540
        %3756 = vmatprep.subr.bf16.mxu0 %v3549
        %3757 = vmatpush1.bf16.msra.mxu0 %v3548
        %3758 = vmatprep.subr.bf16.mxu0 %v3557
        %3759 = vmatpush1.bf16.msra.mxu0 %v3556
        %3760 = vmatprep.subr.bf16.mxu0 %v3565
        %3761 = vmatpush1.bf16.msra.mxu0 %v3564
        %3762 = vmatprep.subr.bf16.mxu0 %v3573
        %3763 = vmatpush1.bf16.msra.mxu0 %v3572
        %3764 = vmatprep.subr.bf16.mxu0 %v3581
        %3765 = vmatpush1.bf16.msra.mxu0 %v3580
        %3766 = vmatprep.subr.bf16.mxu0 %v3589
        %3767 = vmatpush1.bf16.msra.mxu0 %v3588
        %3768 = vmatprep.subr.bf16.mxu0 %v3597
        %3769 = vmatpush1.bf16.msra.mxu0 %v3596
        %3770 = vmatprep.subr.bf16.mxu0 %v3605
        %3771 = vmatpush1.bf16.msra.mxu0 %v3604
        %3772 = vmatprep.mubr.bf16.mxu0 %v2867
        %3773 = vmatmul.mubr.bf16.gmra.mrb[0].mxu0 %v2866
        %v3774 = vpop.f32.mrb[0].mxu0
        %v3775 = vadd.f32 %v3063, %v3774
        %v3776 = vpop.f32.mrb[0].mxu0
        %v3777 = vadd.f32 %v3067, %v3776
        %v3778 = vpop.f32.mrb[0].mxu0
        %v3779 = vadd.f32 %v3063, %v3778
        %v3780 = vpop.f32.mrb[0].mxu0
        %v3781 = vadd.f32 %v3067, %v3780
        %3782 = vmatprep.mubr.bf16.mxu0 %v2869
        %3783 = vmatmul.mubr.bf16.gmra.mrb[0].mxu0 %v2868
        %v3784 = vpop.f32.mrb[0].mxu0
        %v3785 = vadd.f32 %v3063, %v3784
        %v3786 = vpop.f32.mrb[0].mxu0
        %v3787 = vadd.f32 %v3067, %v3786
        %v3788 = vpop.f32.mrb[0].mxu0
        %v3789 = vadd.f32 %v3063, %v3788
        %v3790 = vpop.f32.mrb[0].mxu0
        %v3791 = vadd.f32 %v3067, %v3790
        %3792 = vmatprep.mubr.bf16.mxu0 %v2871
        %3793 = vmatmul.mubr.bf16.gmra.mrb[0].mxu0 %v2870
        %v3794 = vpop.f32.mrb[0].mxu0
        %v3795 = vadd.f32 %v3063, %v3794
        %v3796 = vpop.f32.mrb[0].mxu0
        %v3797 = vadd.f32 %v3067, %v3796
        %v3798 = vpop.f32.mrb[0].mxu0
        %v3799 = vadd.f32 %v3063, %v3798
        %v3800 = vpop.f32.mrb[0].mxu0
        %v3801 = vadd.f32 %v3067, %v3800
        %3802 = vmatprep.mubr.bf16.mxu0 %v2873
        %3803 = vmatmul.mubr.bf16.gmra.mrb[0].mxu0 %v2872
        %v3804 = vpop.f32.mrb[0].mxu0
        %v3805 = vadd.f32 %v3063, %v3804
        %v3806 = vpop.f32.mrb[0].mxu0
        %v3807 = vadd.f32 %v3067, %v3806
        %v3808 = vpop.f32.mrb[0].mxu0
        %v3809 = vadd.f32 %v3063, %v3808
        %v3810 = vpop.f32.mrb[0].mxu0
        %v3811 = vadd.f32 %v3067, %v3810
        %3812 = vmatprep.mubr.bf16.mxu0 %v2875
        %3813 = vmatmul.mubr.bf16.gmra.mrb[0].mxu0 %v2874
        %v3814 = vpop.f32.mrb[0].mxu0
        %v3815 = vadd.f32 %v3063, %v3814
        %v3816 = vpop.f32.mrb[0].mxu0
        %v3817 = vadd.f32 %v3067, %v3816
        %v3818 = vpop.f32.mrb[0].mxu0
        %v3819 = vadd.f32 %v3063, %v3818
        %v3820 = vpop.f32.mrb[0].mxu0
        %v3821 = vadd.f32 %v3067, %v3820
        %3822 = vmatprep.mubr.bf16.mxu0 %v2877
        %3823 = vmatmul.mubr.bf16.gmra.mrb[0].mxu0 %v2876
        %v3824 = vpop.f32.mrb[0].mxu0
        %v3825 = vadd.f32 %v3063, %v3824
        %v3826 = vpop.f32.mrb[0].mxu0
        %v3827 = vadd.f32 %v3067, %v3826
        %v3828 = vpop.f32.mrb[0].mxu0
        %v3829 = vadd.f32 %v3063, %v3828
        %v3830 = vpop.f32.mrb[0].mxu0
        %v3831 = vadd.f32 %v3067, %v3830
        %3832 = vmatprep.mubr.bf16.mxu0 %v2879
        %3833 = vmatmul.mubr.bf16.gmra.mrb[0].mxu0 %v2878
        %v3834 = vpop.f32.mrb[0].mxu0
        %v3835 = vadd.f32 %v3063, %v3834
        %v3836 = vpop.f32.mrb[0].mxu0
        %v3837 = vadd.f32 %v3067, %v3836
        %v3838 = vpop.f32.mrb[0].mxu0
        %v3839 = vadd.f32 %v3063, %v3838
        %v3840 = vpop.f32.mrb[0].mxu0
        %v3841 = vadd.f32 %v3067, %v3840
        %3842 = vmatprep.mubr.bf16.mxu0 %v2881
        %3843 = vmatmul.mubr.bf16.gmra.mrb[0].mxu0 %v2880
        %v3844 = vpop.f32.mrb[0].mxu0
        %v3845 = vadd.f32 %v3063, %v3844
        %v3846 = vpop.f32.mrb[0].mxu0
        %v3847 = vadd.f32 %v3067, %v3846
        %v3848 = vpop.f32.mrb[0].mxu0
        %v3849 = vadd.f32 %v3063, %v3848
        %v3850 = vpop.f32.mrb[0].mxu0
        %v3851 = vadd.f32 %v3067, %v3850
        %3852 = vmatprep.mubr.bf16.mxu0 %v2883
        %3853 = vmatmul.mubr.bf16.gmra.mrb[0].mxu0 %v2882
        %v3854 = vpop.f32.mrb[0].mxu0
        %v3855 = vadd.f32 %v3063, %v3854
        %v3856 = vpop.f32.mrb[0].mxu0
        %v3857 = vadd.f32 %v3067, %v3856
        %v3858 = vpop.f32.mrb[0].mxu0
        %v3859 = vadd.f32 %v3063, %v3858
        %v3860 = vpop.f32.mrb[0].mxu0
        %v3861 = vadd.f32 %v3067, %v3860
        %3862 = vmatprep.mubr.bf16.mxu0 %v2885
        %3863 = vmatmul.mubr.bf16.gmra.mrb[0].mxu0 %v2884
        %v3864 = vpop.f32.mrb[0].mxu0
        %v3865 = vadd.f32 %v3063, %v3864
        %v3866 = vpop.f32.mrb[0].mxu0
        %v3867 = vadd.f32 %v3067, %v3866
        %v3868 = vpop.f32.mrb[0].mxu0
        %v3869 = vadd.f32 %v3063, %v3868
        %v3870 = vpop.f32.mrb[0].mxu0
        %v3871 = vadd.f32 %v3067, %v3870
        %3872 = vmatprep.mubr.bf16.mxu0 %v2887
        %3873 = vmatmul.mubr.bf16.gmra.mrb[0].mxu0 %v2886
        %v3874 = vpop.f32.mrb[0].mxu0
        %v3875 = vadd.f32 %v3063, %v3874
        %v3876 = vpop.f32.mrb[0].mxu0
        %v3877 = vadd.f32 %v3067, %v3876
        %v3878 = vpop.f32.mrb[0].mxu0
        %v3879 = vadd.f32 %v3063, %v3878
        %v3880 = vpop.f32.mrb[0].mxu0
        %v3881 = vadd.f32 %v3067, %v3880
        %3882 = vmatprep.mubr.bf16.mxu0 %v2889
        %3883 = vmatmul.mubr.bf16.gmra.mrb[0].mxu0 %v2888
        %v3884 = vpop.f32.mrb[0].mxu0
        %v3885 = vadd.f32 %v3063, %v3884
        %v3886 = vpop.f32.mrb[0].mxu0
        %v3887 = vadd.f32 %v3067, %v3886
        %v3888 = vpop.f32.mrb[0].mxu0
        %v3889 = vadd.f32 %v3063, %v3888
        %v3890 = vpop.f32.mrb[0].mxu0
        %v3891 = vadd.f32 %v3067, %v3890
        %3892 = vmatprep.mubr.bf16.mxu0 %v2891
        %3893 = vmatmul.mubr.bf16.gmra.mrb[0].mxu0 %v2890
        %v3894 = vpop.f32.mrb[0].mxu0
        %v3895 = vadd.f32 %v3063, %v3894
        %v3896 = vpop.f32.mrb[0].mxu0
        %v3897 = vadd.f32 %v3067, %v3896
        %v3898 = vpop.f32.mrb[0].mxu0
        %v3899 = vadd.f32 %v3063, %v3898
        %v3900 = vpop.f32.mrb[0].mxu0
        %v3901 = vadd.f32 %v3067, %v3900
        %3902 = vmatprep.mubr.bf16.mxu0 %v2893
        %3903 = vmatmul.mubr.bf16.gmra.mrb[0].mxu0 %v2892
        %v3904 = vpop.f32.mrb[0].mxu0
        %v3905 = vadd.f32 %v3063, %v3904
        %v3906 = vpop.f32.mrb[0].mxu0
        %v3907 = vadd.f32 %v3067, %v3906
        %v3908 = vpop.f32.mrb[0].mxu0
        %v3909 = vadd.f32 %v3063, %v3908
        %v3910 = vpop.f32.mrb[0].mxu0
        %v3911 = vadd.f32 %v3067, %v3910
        %3912 = vmatprep.mubr.bf16.mxu0 %v2895
        %3913 = vmatmul.mubr.bf16.gmra.mrb[0].mxu0 %v2894
        %v3914 = vpop.f32.mrb[0].mxu0
        %v3915 = vadd.f32 %v3063, %v3914
        %v3916 = vpop.f32.mrb[0].mxu0
        %v3917 = vadd.f32 %v3067, %v3916
        %v3918 = vpop.f32.mrb[0].mxu0
        %v3919 = vadd.f32 %v3063, %v3918
        %v3920 = vpop.f32.mrb[0].mxu0
        %v3921 = vadd.f32 %v3067, %v3920
        %3922 = vmatprep.mubr.bf16.mxu0 %v2897
        %3923 = vmatmul.mubr.bf16.gmra.mrb[0].mxu0 %v2896
        %v3924 = vpop.f32.mrb[0].mxu0
        %v3925 = vadd.f32 %v3063, %v3924
        %v3926 = vpop.f32.mrb[0].mxu0
        %v3927 = vadd.f32 %v3067, %v3926
        %v3928 = vpop.f32.mrb[0].mxu0
        %v3929 = vadd.f32 %v3063, %v3928
        %v3930 = vpop.f32.mrb[0].mxu0
        %v3931 = vadd.f32 %v3067, %v3930
        %3932 = vmatprep.mubr.bf16.mxu0 %v2899
        %3933 = vmatmul.mubr.bf16.gmra.mrb[0].mxu0 %v2898
        %v3934 = vpop.f32.mrb[0].mxu0
        %v3935 = vadd.f32 %v3063, %v3934
        %v3936 = vpop.f32.mrb[0].mxu0
        %v3937 = vadd.f32 %v3067, %v3936
        %v3938 = vpop.f32.mrb[0].mxu0
        %v3939 = vadd.f32 %v3063, %v3938
        %v3940 = vpop.f32.mrb[0].mxu0
        %v3941 = vadd.f32 %v3067, %v3940
        %3942 = vmatprep.mubr.bf16.mxu0 %v2901
        %3943 = vmatmul.mubr.bf16.gmra.mrb[0].mxu0 %v2900
        %v3944 = vpop.f32.mrb[0].mxu0
        %v3945 = vadd.f32 %v3063, %v3944
        %v3946 = vpop.f32.mrb[0].mxu0
        %v3947 = vadd.f32 %v3067, %v3946
        %v3948 = vpop.f32.mrb[0].mxu0
        %v3949 = vadd.f32 %v3063, %v3948
        %v3950 = vpop.f32.mrb[0].mxu0
        %v3951 = vadd.f32 %v3067, %v3950
        %3952 = vmatprep.mubr.bf16.mxu0 %v2903
        %3953 = vmatmul.mubr.bf16.gmra.mrb[0].mxu0 %v2902
        %v3954 = vpop.f32.mrb[0].mxu0
        %v3955 = vadd.f32 %v3063, %v3954
        %v3956 = vpop.f32.mrb[0].mxu0
        %v3957 = vadd.f32 %v3067, %v3956
        %v3958 = vpop.f32.mrb[0].mxu0
        %v3959 = vadd.f32 %v3063, %v3958
        %v3960 = vpop.f32.mrb[0].mxu0
        %v3961 = vadd.f32 %v3067, %v3960
        %3962 = vmatprep.mubr.bf16.mxu0 %v2905
        %3963 = vmatmul.mubr.bf16.gmra.mrb[0].mxu0 %v2904
        %v3964 = vpop.f32.mrb[0].mxu0
        %v3965 = vadd.f32 %v3063, %v3964
        %v3966 = vpop.f32.mrb[0].mxu0
        %v3967 = vadd.f32 %v3067, %v3966
        %v3968 = vpop.f32.mrb[0].mxu0
        %v3969 = vadd.f32 %v3063, %v3968
        %v3970 = vpop.f32.mrb[0].mxu0
        %v3971 = vadd.f32 %v3067, %v3970
        %3972 = vmatprep.mubr.bf16.mxu0 %v2907
        %3973 = vmatmul.mubr.bf16.gmra.mrb[0].mxu0 %v2906
        %v3974 = vpop.f32.mrb[0].mxu0
        %v3975 = vadd.f32 %v3063, %v3974
        %v3976 = vpop.f32.mrb[0].mxu0
        %v3977 = vadd.f32 %v3067, %v3976
        %v3978 = vpop.f32.mrb[0].mxu0
        %v3979 = vadd.f32 %v3063, %v3978
        %v3980 = vpop.f32.mrb[0].mxu0
        %v3981 = vadd.f32 %v3067, %v3980
        %3982 = vmatprep.mubr.bf16.mxu0 %v2909
        %3983 = vmatmul.mubr.bf16.gmra.mrb[0].mxu0 %v2908
        %v3984 = vpop.f32.mrb[0].mxu0
        %v3985 = vadd.f32 %v3063, %v3984
        %v3986 = vpop.f32.mrb[0].mxu0
        %v3987 = vadd.f32 %v3067, %v3986
        %v3988 = vpop.f32.mrb[0].mxu0
        %v3989 = vadd.f32 %v3063, %v3988
        %v3990 = vpop.f32.mrb[0].mxu0
        %v3991 = vadd.f32 %v3067, %v3990
        %3992 = vmatprep.mubr.bf16.mxu0 %v2911
        %3993 = vmatmul.mubr.bf16.gmra.mrb[0].mxu0 %v2910
        %v3994 = vpop.f32.mrb[0].mxu0
        %v3995 = vadd.f32 %v3063, %v3994
        %v3996 = vpop.f32.mrb[0].mxu0
        %v3997 = vadd.f32 %v3067, %v3996
        %v3998 = vpop.f32.mrb[0].mxu0
        %v3999 = vadd.f32 %v3063, %v3998
        %v4000 = vpop.f32.mrb[0].mxu0
        %v4001 = vadd.f32 %v3067, %v4000
        %4002 = vmatprep.mubr.bf16.mxu0 %v2913
        %4003 = vmatmul.mubr.bf16.gmra.mrb[0].mxu0 %v2912
        %v4004 = vpop.f32.mrb[0].mxu0
        %v4005 = vadd.f32 %v3063, %v4004
        %v4006 = vpop.f32.mrb[0].mxu0
        %v4007 = vadd.f32 %v3067, %v4006
        %v4008 = vpop.f32.mrb[0].mxu0
        %v4009 = vadd.f32 %v3063, %v4008
        %v4010 = vpop.f32.mrb[0].mxu0
        %v4011 = vadd.f32 %v3067, %v4010
        %4012 = vmatprep.mubr.bf16.mxu0 %v2915
        %4013 = vmatmul.mubr.bf16.gmra.mrb[0].mxu0 %v2914
        %v4014 = vpop.f32.mrb[0].mxu0
        %v4015 = vadd.f32 %v3063, %v4014
        %v4016 = vpop.f32.mrb[0].mxu0
        %v4017 = vadd.f32 %v3067, %v4016
        %v4018 = vpop.f32.mrb[0].mxu0
        %v4019 = vadd.f32 %v3063, %v4018
        %v4020 = vpop.f32.mrb[0].mxu0
        %v4021 = vadd.f32 %v3067, %v4020
        %4022 = vmatprep.mubr.bf16.mxu0 %v2917
        %4023 = vmatmul.mubr.bf16.gmra.mrb[0].mxu0 %v2916
        %v4024 = vpop.f32.mrb[0].mxu0
        %v4025 = vadd.f32 %v3063, %v4024
        %v4026 = vpop.f32.mrb[0].mxu0
        %v4027 = vadd.f32 %v3067, %v4026
        %v4028 = vpop.f32.mrb[0].mxu0
        %v4029 = vadd.f32 %v3063, %v4028
        %v4030 = vpop.f32.mrb[0].mxu0
        %v4031 = vadd.f32 %v3067, %v4030
        %4032 = vmatprep.mubr.bf16.mxu0 %v2919
        %4033 = vmatmul.mubr.bf16.gmra.mrb[0].mxu0 %v2918
        %v4034 = vpop.f32.mrb[0].mxu0
        %v4035 = vadd.f32 %v3063, %v4034
        %v4036 = vpop.f32.mrb[0].mxu0
        %v4037 = vadd.f32 %v3067, %v4036
        %v4038 = vpop.f32.mrb[0].mxu0
        %v4039 = vadd.f32 %v3063, %v4038
        %v4040 = vpop.f32.mrb[0].mxu0
        %v4041 = vadd.f32 %v3067, %v4040
        %4042 = vmatprep.mubr.bf16.mxu0 %v2921
        %4043 = vmatmul.mubr.bf16.gmra.mrb[0].mxu0 %v2920
        %v4044 = vpop.f32.mrb[0].mxu0
        %v4045 = vadd.f32 %v3063, %v4044
        %v4046 = vpop.f32.mrb[0].mxu0
        %v4047 = vadd.f32 %v3067, %v4046
        %v4048 = vpop.f32.mrb[0].mxu0
        %v4049 = vadd.f32 %v3063, %v4048
        %v4050 = vpop.f32.mrb[0].mxu0
        %v4051 = vadd.f32 %v3067, %v4050
        %4052 = vmatprep.mubr.bf16.mxu0 %v2923
        %4053 = vmatmul.mubr.bf16.gmra.mrb[0].mxu0 %v2922
        %v4054 = vpop.f32.mrb[0].mxu0
        %v4055 = vadd.f32 %v3063, %v4054
        %v4056 = vpop.f32.mrb[0].mxu0
        %v4057 = vadd.f32 %v3067, %v4056
        %v4058 = vpop.f32.mrb[0].mxu0
        %v4059 = vadd.f32 %v3063, %v4058
        %v4060 = vpop.f32.mrb[0].mxu0
        %v4061 = vadd.f32 %v3067, %v4060
        %4062 = vmatprep.mubr.bf16.mxu0 %v2925
        %4063 = vmatmul.mubr.bf16.gmra.mrb[0].mxu0 %v2924
        %v4064 = vpop.f32.mrb[0].mxu0
        %v4065 = vadd.f32 %v3063, %v4064
        %v4066 = vpop.f32.mrb[0].mxu0
        %v4067 = vadd.f32 %v3067, %v4066
        %v4068 = vpop.f32.mrb[0].mxu0
        %v4069 = vadd.f32 %v3063, %v4068
        %v4070 = vpop.f32.mrb[0].mxu0
        %v4071 = vadd.f32 %v3067, %v4070
        %4072 = vmatprep.mubr.bf16.mxu0 %v2927
        %4073 = vmatmul.mubr.bf16.gmra.mrb[0].mxu0 %v2926
        %v4074 = vpop.f32.mrb[0].mxu0
        %v4075 = vadd.f32 %v3063, %v4074
        %v4076 = vpop.f32.mrb[0].mxu0
        %v4077 = vadd.f32 %v3067, %v4076
        %v4078 = vpop.f32.mrb[0].mxu0
        %v4079 = vadd.f32 %v3063, %v4078
        %v4080 = vpop.f32.mrb[0].mxu0
        %v4081 = vadd.f32 %v3067, %v4080
        %4082 = vmatprep.mubr.bf16.mxu0 %v2929
        %4083 = vmatmul.mubr.bf16.gmra.mrb[0].mxu0 %v2928
        %v4084 = vpop.f32.mrb[0].mxu0
        %v4085 = vadd.f32 %v3063, %v4084
        %v4086 = vpop.f32.mrb[0].mxu0
        %v4087 = vadd.f32 %v3067, %v4086
        %v4088 = vpop.f32.mrb[0].mxu0
        %v4089 = vadd.f32 %v3063, %v4088
        %v4090 = vpop.f32.mrb[0].mxu0
        %v4091 = vadd.f32 %v3067, %v4090
        %4092 = vdwg.mxu0
        %4093 = vmatprep.subr.bf16.mxu0 %v3487
        %4094 = vmatpush1.bf16.msra.mxu0 %v3486
        %4095 = vmatprep.subr.bf16.mxu0 %v3495
        %4096 = vmatpush1.bf16.msra.mxu0 %v3494
        %4097 = vmatprep.subr.bf16.mxu0 %v3503
        %4098 = vmatpush1.bf16.msra.mxu0 %v3502
        %4099 = vmatprep.subr.bf16.mxu0 %v3511
        %4100 = vmatpush1.bf16.msra.mxu0 %v3510
        %4101 = vmatprep.subr.bf16.mxu0 %v3519
        %4102 = vmatpush1.bf16.msra.mxu0 %v3518
        %4103 = vmatprep.subr.bf16.mxu0 %v3527
        %4104 = vmatpush1.bf16.msra.mxu0 %v3526
        %4105 = vmatprep.subr.bf16.mxu0 %v3535
        %4106 = vmatpush1.bf16.msra.mxu0 %v3534
        %4107 = vmatprep.subr.bf16.mxu0 %v3543
        %4108 = vmatpush1.bf16.msra.mxu0 %v3542
        %4109 = vmatprep.subr.bf16.mxu0 %v3551
        %4110 = vmatpush1.bf16.msra.mxu0 %v3550
        %4111 = vmatprep.subr.bf16.mxu0 %v3559
        %4112 = vmatpush1.bf16.msra.mxu0 %v3558
        %4113 = vmatprep.subr.bf16.mxu0 %v3567
        %4114 = vmatpush1.bf16.msra.mxu0 %v3566
        %4115 = vmatprep.subr.bf16.mxu0 %v3575
        %4116 = vmatpush1.bf16.msra.mxu0 %v3574
        %4117 = vmatprep.subr.bf16.mxu0 %v3583
        %4118 = vmatpush1.bf16.msra.mxu0 %v3582
        %4119 = vmatprep.subr.bf16.mxu0 %v3591
        %4120 = vmatpush1.bf16.msra.mxu0 %v3590
        %4121 = vmatprep.subr.bf16.mxu0 %v3599
        %4122 = vmatpush1.bf16.msra.mxu0 %v3598
        %4123 = vmatprep.subr.bf16.mxu0 %v3607
        %4124 = vmatpush1.bf16.msra.mxu0 %v3606
        %4125 = vmatprep.mubr.bf16.mxu0 %v2867
        %4126 = vmatmul.mubr.bf16.gmra.mrb[0].mxu0 %v2866
        %v4127 = vpop.f32.mrb[0].mxu0
        %v4128 = vadd.f32 %v3071, %v4127
        %v4129 = vpop.f32.mrb[0].mxu0
        %v4130 = vadd.f32 %v3075, %v4129
        %v4131 = vpop.f32.mrb[0].mxu0
        %v4132 = vadd.f32 %v3071, %v4131
        %v4133 = vpop.f32.mrb[0].mxu0
        %v4134 = vadd.f32 %v3075, %v4133
        %4135 = vmatprep.mubr.bf16.mxu0 %v2869
        %4136 = vmatmul.mubr.bf16.gmra.mrb[0].mxu0 %v2868
        %v4137 = vpop.f32.mrb[0].mxu0
        %v4138 = vadd.f32 %v3071, %v4137
        %v4139 = vpop.f32.mrb[0].mxu0
        %v4140 = vadd.f32 %v3075, %v4139
        %v4141 = vpop.f32.mrb[0].mxu0
        %v4142 = vadd.f32 %v3071, %v4141
        %v4143 = vpop.f32.mrb[0].mxu0
        %v4144 = vadd.f32 %v3075, %v4143
        %4145 = vmatprep.mubr.bf16.mxu0 %v2871
        %4146 = vmatmul.mubr.bf16.gmra.mrb[0].mxu0 %v2870
        %v4147 = vpop.f32.mrb[0].mxu0
        %v4148 = vadd.f32 %v3071, %v4147
        %v4149 = vpop.f32.mrb[0].mxu0
        %v4150 = vadd.f32 %v3075, %v4149
        %v4151 = vpop.f32.mrb[0].mxu0
        %v4152 = vadd.f32 %v3071, %v4151
        %v4153 = vpop.f32.mrb[0].mxu0
        %v4154 = vadd.f32 %v3075, %v4153
        %4155 = vmatprep.mubr.bf16.mxu0 %v2873
        %4156 = vmatmul.mubr.bf16.gmra.mrb[0].mxu0 %v2872
        %v4157 = vpop.f32.mrb[0].mxu0
        %v4158 = vadd.f32 %v3071, %v4157
        %v4159 = vpop.f32.mrb[0].mxu0
        %v4160 = vadd.f32 %v3075, %v4159
        %v4161 = vpop.f32.mrb[0].mxu0
        %v4162 = vadd.f32 %v3071, %v4161
        %v4163 = vpop.f32.mrb[0].mxu0
        %v4164 = vadd.f32 %v3075, %v4163
        %4165 = vmatprep.mubr.bf16.mxu0 %v2875
        %4166 = vmatmul.mubr.bf16.gmra.mrb[0].mxu0 %v2874
        %v4167 = vpop.f32.mrb[0].mxu0
        %v4168 = vadd.f32 %v3071, %v4167
        %v4169 = vpop.f32.mrb[0].mxu0
        %v4170 = vadd.f32 %v3075, %v4169
        %v4171 = vpop.f32.mrb[0].mxu0
        %v4172 = vadd.f32 %v3071, %v4171
        %v4173 = vpop.f32.mrb[0].mxu0
        %v4174 = vadd.f32 %v3075, %v4173
        %4175 = vmatprep.mubr.bf16.mxu0 %v2877
        %4176 = vmatmul.mubr.bf16.gmra.mrb[0].mxu0 %v2876
        %v4177 = vpop.f32.mrb[0].mxu0
        %v4178 = vadd.f32 %v3071, %v4177
        %v4179 = vpop.f32.mrb[0].mxu0
        %v4180 = vadd.f32 %v3075, %v4179
        %v4181 = vpop.f32.mrb[0].mxu0
        %v4182 = vadd.f32 %v3071, %v4181
        %v4183 = vpop.f32.mrb[0].mxu0
        %v4184 = vadd.f32 %v3075, %v4183
        %4185 = vmatprep.mubr.bf16.mxu0 %v2879
        %4186 = vmatmul.mubr.bf16.gmra.mrb[0].mxu0 %v2878
        %v4187 = vpop.f32.mrb[0].mxu0
        %v4188 = vadd.f32 %v3071, %v4187
        %v4189 = vpop.f32.mrb[0].mxu0
        %v4190 = vadd.f32 %v3075, %v4189
        %v4191 = vpop.f32.mrb[0].mxu0
        %v4192 = vadd.f32 %v3071, %v4191
        %v4193 = vpop.f32.mrb[0].mxu0
        %v4194 = vadd.f32 %v3075, %v4193
        %4195 = vmatprep.mubr.bf16.mxu0 %v2881
        %4196 = vmatmul.mubr.bf16.gmra.mrb[0].mxu0 %v2880
        %v4197 = vpop.f32.mrb[0].mxu0
        %v4198 = vadd.f32 %v3071, %v4197
        %v4199 = vpop.f32.mrb[0].mxu0
        %v4200 = vadd.f32 %v3075, %v4199
        %v4201 = vpop.f32.mrb[0].mxu0
        %v4202 = vadd.f32 %v3071, %v4201
        %v4203 = vpop.f32.mrb[0].mxu0
        %v4204 = vadd.f32 %v3075, %v4203
        %4205 = vmatprep.mubr.bf16.mxu0 %v2883
        %4206 = vmatmul.mubr.bf16.gmra.mrb[0].mxu0 %v2882
        %v4207 = vpop.f32.mrb[0].mxu0
        %v4208 = vadd.f32 %v3071, %v4207
        %v4209 = vpop.f32.mrb[0].mxu0
        %v4210 = vadd.f32 %v3075, %v4209
        %v4211 = vpop.f32.mrb[0].mxu0
        %v4212 = vadd.f32 %v3071, %v4211
        %v4213 = vpop.f32.mrb[0].mxu0
        %v4214 = vadd.f32 %v3075, %v4213
        %4215 = vmatprep.mubr.bf16.mxu0 %v2885
        %4216 = vmatmul.mubr.bf16.gmra.mrb[0].mxu0 %v2884
        %v4217 = vpop.f32.mrb[0].mxu0
        %v4218 = vadd.f32 %v3071, %v4217
        %v4219 = vpop.f32.mrb[0].mxu0
        %v4220 = vadd.f32 %v3075, %v4219
        %v4221 = vpop.f32.mrb[0].mxu0
        %v4222 = vadd.f32 %v3071, %v4221
        %v4223 = vpop.f32.mrb[0].mxu0
        %v4224 = vadd.f32 %v3075, %v4223
        %4225 = vmatprep.mubr.bf16.mxu0 %v2887
        %4226 = vmatmul.mubr.bf16.gmra.mrb[0].mxu0 %v2886
        %v4227 = vpop.f32.mrb[0].mxu0
        %v4228 = vadd.f32 %v3071, %v4227
        %v4229 = vpop.f32.mrb[0].mxu0
        %v4230 = vadd.f32 %v3075, %v4229
        %v4231 = vpop.f32.mrb[0].mxu0
        %v4232 = vadd.f32 %v3071, %v4231
        %v4233 = vpop.f32.mrb[0].mxu0
        %v4234 = vadd.f32 %v3075, %v4233
        %4235 = vmatprep.mubr.bf16.mxu0 %v2889
        %4236 = vmatmul.mubr.bf16.gmra.mrb[0].mxu0 %v2888
        %v4237 = vpop.f32.mrb[0].mxu0
        %v4238 = vadd.f32 %v3071, %v4237
        %v4239 = vpop.f32.mrb[0].mxu0
        %v4240 = vadd.f32 %v3075, %v4239
        %v4241 = vpop.f32.mrb[0].mxu0
        %v4242 = vadd.f32 %v3071, %v4241
        %v4243 = vpop.f32.mrb[0].mxu0
        %v4244 = vadd.f32 %v3075, %v4243
        %4245 = vmatprep.mubr.bf16.mxu0 %v2891
        %4246 = vmatmul.mubr.bf16.gmra.mrb[0].mxu0 %v2890
        %v4247 = vpop.f32.mrb[0].mxu0
        %v4248 = vadd.f32 %v3071, %v4247
        %v4249 = vpop.f32.mrb[0].mxu0
        %v4250 = vadd.f32 %v3075, %v4249
        %v4251 = vpop.f32.mrb[0].mxu0
        %v4252 = vadd.f32 %v3071, %v4251
        %v4253 = vpop.f32.mrb[0].mxu0
        %v4254 = vadd.f32 %v3075, %v4253
        %4255 = vmatprep.mubr.bf16.mxu0 %v2893
        %4256 = vmatmul.mubr.bf16.gmra.mrb[0].mxu0 %v2892
        %v4257 = vpop.f32.mrb[0].mxu0
        %v4258 = vadd.f32 %v3071, %v4257
        %v4259 = vpop.f32.mrb[0].mxu0
        %v4260 = vadd.f32 %v3075, %v4259
        %v4261 = vpop.f32.mrb[0].mxu0
        %v4262 = vadd.f32 %v3071, %v4261
        %v4263 = vpop.f32.mrb[0].mxu0
        %v4264 = vadd.f32 %v3075, %v4263
        %4265 = vmatprep.mubr.bf16.mxu0 %v2895
        %4266 = vmatmul.mubr.bf16.gmra.mrb[0].mxu0 %v2894
        %v4267 = vpop.f32.mrb[0].mxu0
        %v4268 = vadd.f32 %v3071, %v4267
        %v4269 = vpop.f32.mrb[0].mxu0
        %v4270 = vadd.f32 %v3075, %v4269
        %v4271 = vpop.f32.mrb[0].mxu0
        %v4272 = vadd.f32 %v3071, %v4271
        %v4273 = vpop.f32.mrb[0].mxu0
        %v4274 = vadd.f32 %v3075, %v4273
        %4275 = vmatprep.mubr.bf16.mxu0 %v2897
        %4276 = vmatmul.mubr.bf16.gmra.mrb[0].mxu0 %v2896
        %v4277 = vpop.f32.mrb[0].mxu0
        %v4278 = vadd.f32 %v3071, %v4277
        %v4279 = vpop.f32.mrb[0].mxu0
        %v4280 = vadd.f32 %v3075, %v4279
        %v4281 = vpop.f32.mrb[0].mxu0
        %v4282 = vadd.f32 %v3071, %v4281
        %v4283 = vpop.f32.mrb[0].mxu0
        %v4284 = vadd.f32 %v3075, %v4283
        %4285 = vmatprep.mubr.bf16.mxu0 %v2899
        %4286 = vmatmul.mubr.bf16.gmra.mrb[0].mxu0 %v2898
        %v4287 = vpop.f32.mrb[0].mxu0
        %v4288 = vadd.f32 %v3071, %v4287
        %v4289 = vpop.f32.mrb[0].mxu0
        %v4290 = vadd.f32 %v3075, %v4289
        %v4291 = vpop.f32.mrb[0].mxu0
        %v4292 = vadd.f32 %v3071, %v4291
        %v4293 = vpop.f32.mrb[0].mxu0
        %v4294 = vadd.f32 %v3075, %v4293
        %4295 = vmatprep.mubr.bf16.mxu0 %v2901
        %4296 = vmatmul.mubr.bf16.gmra.mrb[0].mxu0 %v2900
        %v4297 = vpop.f32.mrb[0].mxu0
        %v4298 = vadd.f32 %v3071, %v4297
        %v4299 = vpop.f32.mrb[0].mxu0
        %v4300 = vadd.f32 %v3075, %v4299
        %v4301 = vpop.f32.mrb[0].mxu0
        %v4302 = vadd.f32 %v3071, %v4301
        %v4303 = vpop.f32.mrb[0].mxu0
        %v4304 = vadd.f32 %v3075, %v4303
        %4305 = vmatprep.mubr.bf16.mxu0 %v2903
        %4306 = vmatmul.mubr.bf16.gmra.mrb[0].mxu0 %v2902
        %v4307 = vpop.f32.mrb[0].mxu0
        %v4308 = vadd.f32 %v3071, %v4307
        %v4309 = vpop.f32.mrb[0].mxu0
        %v4310 = vadd.f32 %v3075, %v4309
        %v4311 = vpop.f32.mrb[0].mxu0
        %v4312 = vadd.f32 %v3071, %v4311
        %v4313 = vpop.f32.mrb[0].mxu0
        %v4314 = vadd.f32 %v3075, %v4313
        %4315 = vmatprep.mubr.bf16.mxu0 %v2905
        %4316 = vmatmul.mubr.bf16.gmra.mrb[0].mxu0 %v2904
        %v4317 = vpop.f32.mrb[0].mxu0
        %v4318 = vadd.f32 %v3071, %v4317
        %v4319 = vpop.f32.mrb[0].mxu0
        %v4320 = vadd.f32 %v3075, %v4319
        %v4321 = vpop.f32.mrb[0].mxu0
        %v4322 = vadd.f32 %v3071, %v4321
        %v4323 = vpop.f32.mrb[0].mxu0
        %v4324 = vadd.f32 %v3075, %v4323
        %4325 = vmatprep.mubr.bf16.mxu0 %v2907
        %4326 = vmatmul.mubr.bf16.gmra.mrb[0].mxu0 %v2906
        %v4327 = vpop.f32.mrb[0].mxu0
        %v4328 = vadd.f32 %v3071, %v4327
        %v4329 = vpop.f32.mrb[0].mxu0
        %v4330 = vadd.f32 %v3075, %v4329
        %v4331 = vpop.f32.mrb[0].mxu0
        %v4332 = vadd.f32 %v3071, %v4331
        %v4333 = vpop.f32.mrb[0].mxu0
        %v4334 = vadd.f32 %v3075, %v4333
        %4335 = vmatprep.mubr.bf16.mxu0 %v2909
        %4336 = vmatmul.mubr.bf16.gmra.mrb[0].mxu0 %v2908
        %v4337 = vpop.f32.mrb[0].mxu0
        %v4338 = vadd.f32 %v3071, %v4337
        %v4339 = vpop.f32.mrb[0].mxu0
        %v4340 = vadd.f32 %v3075, %v4339
        %v4341 = vpop.f32.mrb[0].mxu0
        %v4342 = vadd.f32 %v3071, %v4341
        %v4343 = vpop.f32.mrb[0].mxu0
        %v4344 = vadd.f32 %v3075, %v4343
        %4345 = vmatprep.mubr.bf16.mxu0 %v2911
        %4346 = vmatmul.mubr.bf16.gmra.mrb[0].mxu0 %v2910
        %v4347 = vpop.f32.mrb[0].mxu0
        %v4348 = vadd.f32 %v3071, %v4347
        %v4349 = vpop.f32.mrb[0].mxu0
        %v4350 = vadd.f32 %v3075, %v4349
        %v4351 = vpop.f32.mrb[0].mxu0
        %v4352 = vadd.f32 %v3071, %v4351
        %v4353 = vpop.f32.mrb[0].mxu0
        %v4354 = vadd.f32 %v3075, %v4353
        %4355 = vmatprep.mubr.bf16.mxu0 %v2913
        %4356 = vmatmul.mubr.bf16.gmra.mrb[0].mxu0 %v2912
        %v4357 = vpop.f32.mrb[0].mxu0
        %v4358 = vadd.f32 %v3071, %v4357
        %v4359 = vpop.f32.mrb[0].mxu0
        %v4360 = vadd.f32 %v3075, %v4359
        %v4361 = vpop.f32.mrb[0].mxu0
        %v4362 = vadd.f32 %v3071, %v4361
        %v4363 = vpop.f32.mrb[0].mxu0
        %v4364 = vadd.f32 %v3075, %v4363
        %4365 = vmatprep.mubr.bf16.mxu0 %v2915
        %4366 = vmatmul.mubr.bf16.gmra.mrb[0].mxu0 %v2914
        %v4367 = vpop.f32.mrb[0].mxu0
        %v4368 = vadd.f32 %v3071, %v4367
        %v4369 = vpop.f32.mrb[0].mxu0
        %v4370 = vadd.f32 %v3075, %v4369
        %v4371 = vpop.f32.mrb[0].mxu0
        %v4372 = vadd.f32 %v3071, %v4371
        %v4373 = vpop.f32.mrb[0].mxu0
        %v4374 = vadd.f32 %v3075, %v4373
        %4375 = vmatprep.mubr.bf16.mxu0 %v2917
        %4376 = vmatmul.mubr.bf16.gmra.mrb[0].mxu0 %v2916
        %v4377 = vpop.f32.mrb[0].mxu0
        %v4378 = vadd.f32 %v3071, %v4377
        %v4379 = vpop.f32.mrb[0].mxu0
        %v4380 = vadd.f32 %v3075, %v4379
        %v4381 = vpop.f32.mrb[0].mxu0
        %v4382 = vadd.f32 %v3071, %v4381
        %v4383 = vpop.f32.mrb[0].mxu0
        %v4384 = vadd.f32 %v3075, %v4383
        %4385 = vmatprep.mubr.bf16.mxu0 %v2919
        %4386 = vmatmul.mubr.bf16.gmra.mrb[0].mxu0 %v2918
        %v4387 = vpop.f32.mrb[0].mxu0
        %v4388 = vadd.f32 %v3071, %v4387
        %v4389 = vpop.f32.mrb[0].mxu0
        %v4390 = vadd.f32 %v3075, %v4389
        %v4391 = vpop.f32.mrb[0].mxu0
        %v4392 = vadd.f32 %v3071, %v4391
        %v4393 = vpop.f32.mrb[0].mxu0
        %v4394 = vadd.f32 %v3075, %v4393
        %4395 = vmatprep.mubr.bf16.mxu0 %v2921
        %4396 = vmatmul.mubr.bf16.gmra.mrb[0].mxu0 %v2920
        %v4397 = vpop.f32.mrb[0].mxu0
        %v4398 = vadd.f32 %v3071, %v4397
        %v4399 = vpop.f32.mrb[0].mxu0
        %v4400 = vadd.f32 %v3075, %v4399
        %v4401 = vpop.f32.mrb[0].mxu0
        %v4402 = vadd.f32 %v3071, %v4401
        %v4403 = vpop.f32.mrb[0].mxu0
        %v4404 = vadd.f32 %v3075, %v4403
        %4405 = vmatprep.mubr.bf16.mxu0 %v2923
        %4406 = vmatmul.mubr.bf16.gmra.mrb[0].mxu0 %v2922
        %v4407 = vpop.f32.mrb[0].mxu0
        %v4408 = vadd.f32 %v3071, %v4407
        %v4409 = vpop.f32.mrb[0].mxu0
        %v4410 = vadd.f32 %v3075, %v4409
        %v4411 = vpop.f32.mrb[0].mxu0
        %v4412 = vadd.f32 %v3071, %v4411
        %v4413 = vpop.f32.mrb[0].mxu0
        %v4414 = vadd.f32 %v3075, %v4413
        %4415 = vmatprep.mubr.bf16.mxu0 %v2925
        %4416 = vmatmul.mubr.bf16.gmra.mrb[0].mxu0 %v2924
        %v4417 = vpop.f32.mrb[0].mxu0
        %v4418 = vadd.f32 %v3071, %v4417
        %v4419 = vpop.f32.mrb[0].mxu0
        %v4420 = vadd.f32 %v3075, %v4419
        %v4421 = vpop.f32.mrb[0].mxu0
        %v4422 = vadd.f32 %v3071, %v4421
        %v4423 = vpop.f32.mrb[0].mxu0
        %v4424 = vadd.f32 %v3075, %v4423
        %4425 = vmatprep.mubr.bf16.mxu0 %v2927
        %4426 = vmatmul.mubr.bf16.gmra.mrb[0].mxu0 %v2926
        %v4427 = vpop.f32.mrb[0].mxu0
        %v4428 = vadd.f32 %v3071, %v4427
        %v4429 = vpop.f32.mrb[0].mxu0
        %v4430 = vadd.f32 %v3075, %v4429
        %v4431 = vpop.f32.mrb[0].mxu0
        %v4432 = vadd.f32 %v3071, %v4431
        %v4433 = vpop.f32.mrb[0].mxu0
        %v4434 = vadd.f32 %v3075, %v4433
        %4435 = vmatprep.mubr.bf16.mxu0 %v2929
        %4436 = vmatmul.mubr.bf16.gmra.mrb[0].mxu0 %v2928
        %v4437 = vpop.f32.mrb[0].mxu0
        %v4438 = vadd.f32 %v3071, %v4437
        %v4439 = vpop.f32.mrb[0].mxu0
        %v4440 = vadd.f32 %v3075, %v4439
        %v4441 = vpop.f32.mrb[0].mxu0
        %v4442 = vadd.f32 %v3071, %v4441
        %v4443 = vpop.f32.mrb[0].mxu0
        %v4444 = vadd.f32 %v3075, %v4443
        %4445 = vdwg.mxu0
        %4446 = vmatprep.subr.bf16.mxu0 %v3489
        %4447 = vmatpush1.bf16.msra.mxu0 %v3488
        %4448 = vmatprep.subr.bf16.mxu0 %v3497
        %4449 = vmatpush1.bf16.msra.mxu0 %v3496
        %4450 = vmatprep.subr.bf16.mxu0 %v3505
        %4451 = vmatpush1.bf16.msra.mxu0 %v3504
        %4452 = vmatprep.subr.bf16.mxu0 %v3513
        %4453 = vmatpush1.bf16.msra.mxu0 %v3512
        %4454 = vmatprep.subr.bf16.mxu0 %v3521
        %4455 = vmatpush1.bf16.msra.mxu0 %v3520
        %4456 = vmatprep.subr.bf16.mxu0 %v3529
        %4457 = vmatpush1.bf16.msra.mxu0 %v3528
        %4458 = vmatprep.subr.bf16.mxu0 %v3537
        %4459 = vmatpush1.bf16.msra.mxu0 %v3536
        %4460 = vmatprep.subr.bf16.mxu0 %v3545
        %4461 = vmatpush1.bf16.msra.mxu0 %v3544
        %4462 = vmatprep.subr.bf16.mxu0 %v3553
        %4463 = vmatpush1.bf16.msra.mxu0 %v3552
        %4464 = vmatprep.subr.bf16.mxu0 %v3561
        %4465 = vmatpush1.bf16.msra.mxu0 %v3560
        %4466 = vmatprep.subr.bf16.mxu0 %v3569
        %4467 = vmatpush1.bf16.msra.mxu0 %v3568
        %4468 = vmatprep.subr.bf16.mxu0 %v3577
        %4469 = vmatpush1.bf16.msra.mxu0 %v3576
        %4470 = vmatprep.subr.bf16.mxu0 %v3585
        %4471 = vmatpush1.bf16.msra.mxu0 %v3584
        %4472 = vmatprep.subr.bf16.mxu0 %v3593
        %4473 = vmatpush1.bf16.msra.mxu0 %v3592
        %4474 = vmatprep.subr.bf16.mxu0 %v3601
        %4475 = vmatpush1.bf16.msra.mxu0 %v3600
        %4476 = vmatprep.subr.bf16.mxu0 %v3609
        %4477 = vmatpush1.bf16.msra.mxu0 %v3608
        %4478 = vmatprep.mubr.bf16.mxu0 %v2867
        %4479 = vmatmul.mubr.bf16.gmra.mrb[0].mxu0 %v2866
        %v4480 = vpop.f32.mrb[0].mxu0
        %v4481 = vadd.f32 %v3079, %v4480
        %v4482 = vpop.f32.mrb[0].mxu0
        %v4483 = vadd.f32 %v3083, %v4482
        %v4484 = vpop.f32.mrb[0].mxu0
        %v4485 = vadd.f32 %v3079, %v4484
        %v4486 = vpop.f32.mrb[0].mxu0
        %v4487 = vadd.f32 %v3083, %v4486
        %4488 = vmatprep.mubr.bf16.mxu0 %v2869
        %4489 = vmatmul.mubr.bf16.gmra.mrb[0].mxu0 %v2868
        %v4490 = vpop.f32.mrb[0].mxu0
        %v4491 = vadd.f32 %v3079, %v4490
        %v4492 = vpop.f32.mrb[0].mxu0
        %v4493 = vadd.f32 %v3083, %v4492
        %v4494 = vpop.f32.mrb[0].mxu0
        %v4495 = vadd.f32 %v3079, %v4494
        %v4496 = vpop.f32.mrb[0].mxu0
        %v4497 = vadd.f32 %v3083, %v4496
        %4498 = vmatprep.mubr.bf16.mxu0 %v2871
        %4499 = vmatmul.mubr.bf16.gmra.mrb[0].mxu0 %v2870
        %v4500 = vpop.f32.mrb[0].mxu0
        %v4501 = vadd.f32 %v3079, %v4500
        %v4502 = vpop.f32.mrb[0].mxu0
        %v4503 = vadd.f32 %v3083, %v4502
        %v4504 = vpop.f32.mrb[0].mxu0
        %v4505 = vadd.f32 %v3079, %v4504
        %v4506 = vpop.f32.mrb[0].mxu0
        %v4507 = vadd.f32 %v3083, %v4506
        %4508 = vmatprep.mubr.bf16.mxu0 %v2873
        %4509 = vmatmul.mubr.bf16.gmra.mrb[0].mxu0 %v2872
        %v4510 = vpop.f32.mrb[0].mxu0
        %v4511 = vadd.f32 %v3079, %v4510
        %v4512 = vpop.f32.mrb[0].mxu0
        %v4513 = vadd.f32 %v3083, %v4512
        %v4514 = vpop.f32.mrb[0].mxu0
        %v4515 = vadd.f32 %v3079, %v4514
        %v4516 = vpop.f32.mrb[0].mxu0
        %v4517 = vadd.f32 %v3083, %v4516
        %4518 = vmatprep.mubr.bf16.mxu0 %v2875
        %4519 = vmatmul.mubr.bf16.gmra.mrb[0].mxu0 %v2874
        %v4520 = vpop.f32.mrb[0].mxu0
        %v4521 = vadd.f32 %v3079, %v4520
        %v4522 = vpop.f32.mrb[0].mxu0
        %v4523 = vadd.f32 %v3083, %v4522
        %v4524 = vpop.f32.mrb[0].mxu0
        %v4525 = vadd.f32 %v3079, %v4524
        %v4526 = vpop.f32.mrb[0].mxu0
        %v4527 = vadd.f32 %v3083, %v4526
        %4528 = vmatprep.mubr.bf16.mxu0 %v2877
        %4529 = vmatmul.mubr.bf16.gmra.mrb[0].mxu0 %v2876
        %v4530 = vpop.f32.mrb[0].mxu0
        %v4531 = vadd.f32 %v3079, %v4530
        %v4532 = vpop.f32.mrb[0].mxu0
        %v4533 = vadd.f32 %v3083, %v4532
        %v4534 = vpop.f32.mrb[0].mxu0
        %v4535 = vadd.f32 %v3079, %v4534
        %v4536 = vpop.f32.mrb[0].mxu0
        %v4537 = vadd.f32 %v3083, %v4536
        %4538 = vmatprep.mubr.bf16.mxu0 %v2879
        %4539 = vmatmul.mubr.bf16.gmra.mrb[0].mxu0 %v2878
        %v4540 = vpop.f32.mrb[0].mxu0
        %v4541 = vadd.f32 %v3079, %v4540
        %v4542 = vpop.f32.mrb[0].mxu0
        %v4543 = vadd.f32 %v3083, %v4542
        %v4544 = vpop.f32.mrb[0].mxu0
        %v4545 = vadd.f32 %v3079, %v4544
        %v4546 = vpop.f32.mrb[0].mxu0
        %v4547 = vadd.f32 %v3083, %v4546
        %4548 = vmatprep.mubr.bf16.mxu0 %v2881
        %4549 = vmatmul.mubr.bf16.gmra.mrb[0].mxu0 %v2880
        %v4550 = vpop.f32.mrb[0].mxu0
        %v4551 = vadd.f32 %v3079, %v4550
        %v4552 = vpop.f32.mrb[0].mxu0
        %v4553 = vadd.f32 %v3083, %v4552
        %v4554 = vpop.f32.mrb[0].mxu0
        %v4555 = vadd.f32 %v3079, %v4554
        %v4556 = vpop.f32.mrb[0].mxu0
        %v4557 = vadd.f32 %v3083, %v4556
        %4558 = vmatprep.mubr.bf16.mxu0 %v2883
        %4559 = vmatmul.mubr.bf16.gmra.mrb[0].mxu0 %v2882
        %v4560 = vpop.f32.mrb[0].mxu0
        %v4561 = vadd.f32 %v3079, %v4560
        %v4562 = vpop.f32.mrb[0].mxu0
        %v4563 = vadd.f32 %v3083, %v4562
        %v4564 = vpop.f32.mrb[0].mxu0
        %v4565 = vadd.f32 %v3079, %v4564
        %v4566 = vpop.f32.mrb[0].mxu0
        %v4567 = vadd.f32 %v3083, %v4566
        %4568 = vmatprep.mubr.bf16.mxu0 %v2885
        %4569 = vmatmul.mubr.bf16.gmra.mrb[0].mxu0 %v2884
        %v4570 = vpop.f32.mrb[0].mxu0
        %v4571 = vadd.f32 %v3079, %v4570
        %v4572 = vpop.f32.mrb[0].mxu0
        %v4573 = vadd.f32 %v3083, %v4572
        %v4574 = vpop.f32.mrb[0].mxu0
        %v4575 = vadd.f32 %v3079, %v4574
        %v4576 = vpop.f32.mrb[0].mxu0
        %v4577 = vadd.f32 %v3083, %v4576
        %4578 = vmatprep.mubr.bf16.mxu0 %v2887
        %4579 = vmatmul.mubr.bf16.gmra.mrb[0].mxu0 %v2886
        %v4580 = vpop.f32.mrb[0].mxu0
        %v4581 = vadd.f32 %v3079, %v4580
        %v4582 = vpop.f32.mrb[0].mxu0
        %v4583 = vadd.f32 %v3083, %v4582
        %v4584 = vpop.f32.mrb[0].mxu0
        %v4585 = vadd.f32 %v3079, %v4584
        %v4586 = vpop.f32.mrb[0].mxu0
        %v4587 = vadd.f32 %v3083, %v4586
        %4588 = vmatprep.mubr.bf16.mxu0 %v2889
        %4589 = vmatmul.mubr.bf16.gmra.mrb[0].mxu0 %v2888
        %v4590 = vpop.f32.mrb[0].mxu0
        %v4591 = vadd.f32 %v3079, %v4590
        %v4592 = vpop.f32.mrb[0].mxu0
        %v4593 = vadd.f32 %v3083, %v4592
        %v4594 = vpop.f32.mrb[0].mxu0
        %v4595 = vadd.f32 %v3079, %v4594
        %v4596 = vpop.f32.mrb[0].mxu0
        %v4597 = vadd.f32 %v3083, %v4596
        %4598 = vmatprep.mubr.bf16.mxu0 %v2891
        %4599 = vmatmul.mubr.bf16.gmra.mrb[0].mxu0 %v2890
        %v4600 = vpop.f32.mrb[0].mxu0
        %v4601 = vadd.f32 %v3079, %v4600
        %v4602 = vpop.f32.mrb[0].mxu0
        %v4603 = vadd.f32 %v3083, %v4602
        %v4604 = vpop.f32.mrb[0].mxu0
        %v4605 = vadd.f32 %v3079, %v4604
        %v4606 = vpop.f32.mrb[0].mxu0
        %v4607 = vadd.f32 %v3083, %v4606
        %4608 = vmatprep.mubr.bf16.mxu0 %v2893
        %4609 = vmatmul.mubr.bf16.gmra.mrb[0].mxu0 %v2892
        %v4610 = vpop.f32.mrb[0].mxu0
        %v4611 = vadd.f32 %v3079, %v4610
        %v4612 = vpop.f32.mrb[0].mxu0
        %v4613 = vadd.f32 %v3083, %v4612
        %v4614 = vpop.f32.mrb[0].mxu0
        %v4615 = vadd.f32 %v3079, %v4614
        %v4616 = vpop.f32.mrb[0].mxu0
        %v4617 = vadd.f32 %v3083, %v4616
        %4618 = vmatprep.mubr.bf16.mxu0 %v2895
        %4619 = vmatmul.mubr.bf16.gmra.mrb[0].mxu0 %v2894
        %v4620 = vpop.f32.mrb[0].mxu0
        %v4621 = vadd.f32 %v3079, %v4620
        %v4622 = vpop.f32.mrb[0].mxu0
        %v4623 = vadd.f32 %v3083, %v4622
        %v4624 = vpop.f32.mrb[0].mxu0
        %v4625 = vadd.f32 %v3079, %v4624
        %v4626 = vpop.f32.mrb[0].mxu0
        %v4627 = vadd.f32 %v3083, %v4626
        %4628 = vmatprep.mubr.bf16.mxu0 %v2897
        %4629 = vmatmul.mubr.bf16.gmra.mrb[0].mxu0 %v2896
        %v4630 = vpop.f32.mrb[0].mxu0
        %v4631 = vadd.f32 %v3079, %v4630
        %v4632 = vpop.f32.mrb[0].mxu0
        %v4633 = vadd.f32 %v3083, %v4632
        %v4634 = vpop.f32.mrb[0].mxu0
        %v4635 = vadd.f32 %v3079, %v4634
        %v4636 = vpop.f32.mrb[0].mxu0
        %v4637 = vadd.f32 %v3083, %v4636
        %4638 = vmatprep.mubr.bf16.mxu0 %v2899
        %4639 = vmatmul.mubr.bf16.gmra.mrb[0].mxu0 %v2898
        %v4640 = vpop.f32.mrb[0].mxu0
        %v4641 = vadd.f32 %v3079, %v4640
        %v4642 = vpop.f32.mrb[0].mxu0
        %v4643 = vadd.f32 %v3083, %v4642
        %v4644 = vpop.f32.mrb[0].mxu0
        %v4645 = vadd.f32 %v3079, %v4644
        %v4646 = vpop.f32.mrb[0].mxu0
        %v4647 = vadd.f32 %v3083, %v4646
        %4648 = vmatprep.mubr.bf16.mxu0 %v2901
        %4649 = vmatmul.mubr.bf16.gmra.mrb[0].mxu0 %v2900
        %v4650 = vpop.f32.mrb[0].mxu0
        %v4651 = vadd.f32 %v3079, %v4650
        %v4652 = vpop.f32.mrb[0].mxu0
        %v4653 = vadd.f32 %v3083, %v4652
        %v4654 = vpop.f32.mrb[0].mxu0
        %v4655 = vadd.f32 %v3079, %v4654
        %v4656 = vpop.f32.mrb[0].mxu0
        %v4657 = vadd.f32 %v3083, %v4656
        %4658 = vmatprep.mubr.bf16.mxu0 %v2903
        %4659 = vmatmul.mubr.bf16.gmra.mrb[0].mxu0 %v2902
        %v4660 = vpop.f32.mrb[0].mxu0
        %v4661 = vadd.f32 %v3079, %v4660
        %v4662 = vpop.f32.mrb[0].mxu0
        %v4663 = vadd.f32 %v3083, %v4662
        %v4664 = vpop.f32.mrb[0].mxu0
        %v4665 = vadd.f32 %v3079, %v4664
        %v4666 = vpop.f32.mrb[0].mxu0
        %v4667 = vadd.f32 %v3083, %v4666
        %4668 = vmatprep.mubr.bf16.mxu0 %v2905
        %4669 = vmatmul.mubr.bf16.gmra.mrb[0].mxu0 %v2904
        %v4670 = vpop.f32.mrb[0].mxu0
        %v4671 = vadd.f32 %v3079, %v4670
        %v4672 = vpop.f32.mrb[0].mxu0
        %v4673 = vadd.f32 %v3083, %v4672
        %v4674 = vpop.f32.mrb[0].mxu0
        %v4675 = vadd.f32 %v3079, %v4674
        %v4676 = vpop.f32.mrb[0].mxu0
        %v4677 = vadd.f32 %v3083, %v4676
        %4678 = vmatprep.mubr.bf16.mxu0 %v2907
        %4679 = vmatmul.mubr.bf16.gmra.mrb[0].mxu0 %v2906
        %v4680 = vpop.f32.mrb[0].mxu0
        %v4681 = vadd.f32 %v3079, %v4680
        %v4682 = vpop.f32.mrb[0].mxu0
        %v4683 = vadd.f32 %v3083, %v4682
        %v4684 = vpop.f32.mrb[0].mxu0
        %v4685 = vadd.f32 %v3079, %v4684
        %v4686 = vpop.f32.mrb[0].mxu0
        %v4687 = vadd.f32 %v3083, %v4686
        %4688 = vmatprep.mubr.bf16.mxu0 %v2909
        %4689 = vmatmul.mubr.bf16.gmra.mrb[0].mxu0 %v2908
        %v4690 = vpop.f32.mrb[0].mxu0
        %v4691 = vadd.f32 %v3079, %v4690
        %v4692 = vpop.f32.mrb[0].mxu0
        %v4693 = vadd.f32 %v3083, %v4692
        %v4694 = vpop.f32.mrb[0].mxu0
        %v4695 = vadd.f32 %v3079, %v4694
        %v4696 = vpop.f32.mrb[0].mxu0
        %v4697 = vadd.f32 %v3083, %v4696
        %4698 = vmatprep.mubr.bf16.mxu0 %v2911
        %4699 = vmatmul.mubr.bf16.gmra.mrb[0].mxu0 %v2910
        %v4700 = vpop.f32.mrb[0].mxu0
        %v4701 = vadd.f32 %v3079, %v4700
        %v4702 = vpop.f32.mrb[0].mxu0
        %v4703 = vadd.f32 %v3083, %v4702
        %v4704 = vpop.f32.mrb[0].mxu0
        %v4705 = vadd.f32 %v3079, %v4704
        %v4706 = vpop.f32.mrb[0].mxu0
        %v4707 = vadd.f32 %v3083, %v4706
        %4708 = vmatprep.mubr.bf16.mxu0 %v2913
        %4709 = vmatmul.mubr.bf16.gmra.mrb[0].mxu0 %v2912
        %v4710 = vpop.f32.mrb[0].mxu0
        %v4711 = vadd.f32 %v3079, %v4710
        %v4712 = vpop.f32.mrb[0].mxu0
        %v4713 = vadd.f32 %v3083, %v4712
        %v4714 = vpop.f32.mrb[0].mxu0
        %v4715 = vadd.f32 %v3079, %v4714
        %v4716 = vpop.f32.mrb[0].mxu0
        %v4717 = vadd.f32 %v3083, %v4716
        %4718 = vmatprep.mubr.bf16.mxu0 %v2915
        %4719 = vmatmul.mubr.bf16.gmra.mrb[0].mxu0 %v2914
        %v4720 = vpop.f32.mrb[0].mxu0
        %v4721 = vadd.f32 %v3079, %v4720
        %v4722 = vpop.f32.mrb[0].mxu0
        %v4723 = vadd.f32 %v3083, %v4722
        %v4724 = vpop.f32.mrb[0].mxu0
        %v4725 = vadd.f32 %v3079, %v4724
        %v4726 = vpop.f32.mrb[0].mxu0
        %v4727 = vadd.f32 %v3083, %v4726
        %4728 = vmatprep.mubr.bf16.mxu0 %v2917
        %4729 = vmatmul.mubr.bf16.gmra.mrb[0].mxu0 %v2916
        %v4730 = vpop.f32.mrb[0].mxu0
        %v4731 = vadd.f32 %v3079, %v4730
        %v4732 = vpop.f32.mrb[0].mxu0
        %v4733 = vadd.f32 %v3083, %v4732
        %v4734 = vpop.f32.mrb[0].mxu0
        %v4735 = vadd.f32 %v3079, %v4734
        %v4736 = vpop.f32.mrb[0].mxu0
        %v4737 = vadd.f32 %v3083, %v4736
        %4738 = vmatprep.mubr.bf16.mxu0 %v2919
        %4739 = vmatmul.mubr.bf16.gmra.mrb[0].mxu0 %v2918
        %v4740 = vpop.f32.mrb[0].mxu0
        %v4741 = vadd.f32 %v3079, %v4740
        %v4742 = vpop.f32.mrb[0].mxu0
        %v4743 = vadd.f32 %v3083, %v4742
        %v4744 = vpop.f32.mrb[0].mxu0
        %v4745 = vadd.f32 %v3079, %v4744
        %v4746 = vpop.f32.mrb[0].mxu0
        %v4747 = vadd.f32 %v3083, %v4746
        %4748 = vmatprep.mubr.bf16.mxu0 %v2921
        %4749 = vmatmul.mubr.bf16.gmra.mrb[0].mxu0 %v2920
        %v4750 = vpop.f32.mrb[0].mxu0
        %v4751 = vadd.f32 %v3079, %v4750
        %v4752 = vpop.f32.mrb[0].mxu0
        %v4753 = vadd.f32 %v3083, %v4752
        %v4754 = vpop.f32.mrb[0].mxu0
        %v4755 = vadd.f32 %v3079, %v4754
        %v4756 = vpop.f32.mrb[0].mxu0
        %v4757 = vadd.f32 %v3083, %v4756
        %4758 = vmatprep.mubr.bf16.mxu0 %v2923
        %4759 = vmatmul.mubr.bf16.gmra.mrb[0].mxu0 %v2922
        %v4760 = vpop.f32.mrb[0].mxu0
        %v4761 = vadd.f32 %v3079, %v4760
        %v4762 = vpop.f32.mrb[0].mxu0
        %v4763 = vadd.f32 %v3083, %v4762
        %v4764 = vpop.f32.mrb[0].mxu0
        %v4765 = vadd.f32 %v3079, %v4764
        %v4766 = vpop.f32.mrb[0].mxu0
        %v4767 = vadd.f32 %v3083, %v4766
        %4768 = vmatprep.mubr.bf16.mxu0 %v2925
        %4769 = vmatmul.mubr.bf16.gmra.mrb[0].mxu0 %v2924
        %v4770 = vpop.f32.mrb[0].mxu0
        %v4771 = vadd.f32 %v3079, %v4770
        %v4772 = vpop.f32.mrb[0].mxu0
        %v4773 = vadd.f32 %v3083, %v4772
        %v4774 = vpop.f32.mrb[0].mxu0
        %v4775 = vadd.f32 %v3079, %v4774
        %v4776 = vpop.f32.mrb[0].mxu0
        %v4777 = vadd.f32 %v3083, %v4776
        %4778 = vmatprep.mubr.bf16.mxu0 %v2927
        %4779 = vmatmul.mubr.bf16.gmra.mrb[0].mxu0 %v2926
        %v4780 = vpop.f32.mrb[0].mxu0
        %v4781 = vadd.f32 %v3079, %v4780
        %v4782 = vpop.f32.mrb[0].mxu0
        %v4783 = vadd.f32 %v3083, %v4782
        %v4784 = vpop.f32.mrb[0].mxu0
        %v4785 = vadd.f32 %v3079, %v4784
        %v4786 = vpop.f32.mrb[0].mxu0
        %v4787 = vadd.f32 %v3083, %v4786
        %4788 = vmatprep.mubr.bf16.mxu0 %v2929
        %4789 = vmatmul.mubr.bf16.gmra.mrb[0].mxu0 %v2928
        %v4790 = vpop.f32.mrb[0].mxu0
        %v4791 = vadd.f32 %v3079, %v4790
        %v4792 = vpop.f32.mrb[0].mxu0
        %v4793 = vadd.f32 %v3083, %v4792
        %v4794 = vpop.f32.mrb[0].mxu0
        %v4795 = vadd.f32 %v3079, %v4794
        %v4796 = vpop.f32.mrb[0].mxu0
        %v4797 = vadd.f32 %v3083, %v4796
        %4798 = vdwg.mxu0
        %4799 = vmatprep.subr.bf16.mxu0 %v3491
        %4800 = vmatpush1.bf16.msra.mxu0 %v3490
        %4801 = vmatprep.subr.bf16.mxu0 %v3499
        %4802 = vmatpush1.bf16.msra.mxu0 %v3498
        %4803 = vmatprep.subr.bf16.mxu0 %v3507
        %4804 = vmatpush1.bf16.msra.mxu0 %v3506
        %4805 = vmatprep.subr.bf16.mxu0 %v3515
        %4806 = vmatpush1.bf16.msra.mxu0 %v3514
        %4807 = vmatprep.subr.bf16.mxu0 %v3523
        %4808 = vmatpush1.bf16.msra.mxu0 %v3522
        %4809 = vmatprep.subr.bf16.mxu0 %v3531
        %4810 = vmatpush1.bf16.msra.mxu0 %v3530
        %4811 = vmatprep.subr.bf16.mxu0 %v3539
        %4812 = vmatpush1.bf16.msra.mxu0 %v3538
        %4813 = vmatprep.subr.bf16.mxu0 %v3547
        %4814 = vmatpush1.bf16.msra.mxu0 %v3546
        %4815 = vmatprep.subr.bf16.mxu0 %v3555
        %4816 = vmatpush1.bf16.msra.mxu0 %v3554
        %4817 = vmatprep.subr.bf16.mxu0 %v3563
        %4818 = vmatpush1.bf16.msra.mxu0 %v3562
        %4819 = vmatprep.subr.bf16.mxu0 %v3571
        %4820 = vmatpush1.bf16.msra.mxu0 %v3570
        %4821 = vmatprep.subr.bf16.mxu0 %v3579
        %4822 = vmatpush1.bf16.msra.mxu0 %v3578
        %4823 = vmatprep.subr.bf16.mxu0 %v3587
        %4824 = vmatpush1.bf16.msra.mxu0 %v3586
        %4825 = vmatprep.subr.bf16.mxu0 %v3595
        %4826 = vmatpush1.bf16.msra.mxu0 %v3594
        %4827 = vmatprep.subr.bf16.mxu0 %v3603
        %4828 = vmatpush1.bf16.msra.mxu0 %v3602
        %4829 = vmatprep.subr.bf16.mxu0 %v3611
        %4830 = vmatpush1.bf16.msra.mxu0 %v3610
        %4831 = vmatprep.mubr.bf16.mxu0 %v2867
        %4832 = vmatmul.mubr.bf16.gmra.mrb[0].mxu0 %v2866
        %v4833 = vpop.f32.mrb[0].mxu0
        %v4834 = vadd.f32 %v3087, %v4833
        %v4835 = vpop.f32.mrb[0].mxu0
        %v4836 = vadd.f32 %v3091, %v4835
        %v4837 = vpop.f32.mrb[0].mxu0
        %v4838 = vadd.f32 %v3087, %v4837
        %v4839 = vpop.f32.mrb[0].mxu0
        %v4840 = vadd.f32 %v3091, %v4839
        %4841 = vmatprep.mubr.bf16.mxu0 %v2869
        %4842 = vmatmul.mubr.bf16.gmra.mrb[0].mxu0 %v2868
        %v4843 = vpop.f32.mrb[0].mxu0
        %v4844 = vadd.f32 %v3087, %v4843
        %v4845 = vpop.f32.mrb[0].mxu0
        %v4846 = vadd.f32 %v3091, %v4845
        %v4847 = vpop.f32.mrb[0].mxu0
        %v4848 = vadd.f32 %v3087, %v4847
        %v4849 = vpop.f32.mrb[0].mxu0
        %v4850 = vadd.f32 %v3091, %v4849
        %4851 = vmatprep.mubr.bf16.mxu0 %v2871
        %4852 = vmatmul.mubr.bf16.gmra.mrb[0].mxu0 %v2870
        %v4853 = vpop.f32.mrb[0].mxu0
        %v4854 = vadd.f32 %v3087, %v4853
        %v4855 = vpop.f32.mrb[0].mxu0
        %v4856 = vadd.f32 %v3091, %v4855
        %v4857 = vpop.f32.mrb[0].mxu0
        %v4858 = vadd.f32 %v3087, %v4857
        %v4859 = vpop.f32.mrb[0].mxu0
        %v4860 = vadd.f32 %v3091, %v4859
        %4861 = vmatprep.mubr.bf16.mxu0 %v2873
        %4862 = vmatmul.mubr.bf16.gmra.mrb[0].mxu0 %v2872
        %v4863 = vpop.f32.mrb[0].mxu0
        %v4864 = vadd.f32 %v3087, %v4863
        %v4865 = vpop.f32.mrb[0].mxu0
        %v4866 = vadd.f32 %v3091, %v4865
        %v4867 = vpop.f32.mrb[0].mxu0
        %v4868 = vadd.f32 %v3087, %v4867
        %v4869 = vpop.f32.mrb[0].mxu0
        %v4870 = vadd.f32 %v3091, %v4869
        %4871 = vmatprep.mubr.bf16.mxu0 %v2875
        %4872 = vmatmul.mubr.bf16.gmra.mrb[0].mxu0 %v2874
        %v4873 = vpop.f32.mrb[0].mxu0
        %v4874 = vadd.f32 %v3087, %v4873
        %v4875 = vpop.f32.mrb[0].mxu0
        %v4876 = vadd.f32 %v3091, %v4875
        %v4877 = vpop.f32.mrb[0].mxu0
        %v4878 = vadd.f32 %v3087, %v4877
        %v4879 = vpop.f32.mrb[0].mxu0
        %v4880 = vadd.f32 %v3091, %v4879
        %4881 = vmatprep.mubr.bf16.mxu0 %v2877
        %4882 = vmatmul.mubr.bf16.gmra.mrb[0].mxu0 %v2876
        %v4883 = vpop.f32.mrb[0].mxu0
        %v4884 = vadd.f32 %v3087, %v4883
        %v4885 = vpop.f32.mrb[0].mxu0
        %v4886 = vadd.f32 %v3091, %v4885
        %v4887 = vpop.f32.mrb[0].mxu0
        %v4888 = vadd.f32 %v3087, %v4887
        %v4889 = vpop.f32.mrb[0].mxu0
        %v4890 = vadd.f32 %v3091, %v4889
        %4891 = vmatprep.mubr.bf16.mxu0 %v2879
        %4892 = vmatmul.mubr.bf16.gmra.mrb[0].mxu0 %v2878
        %v4893 = vpop.f32.mrb[0].mxu0
        %v4894 = vadd.f32 %v3087, %v4893
        %v4895 = vpop.f32.mrb[0].mxu0
        %v4896 = vadd.f32 %v3091, %v4895
        %v4897 = vpop.f32.mrb[0].mxu0
        %v4898 = vadd.f32 %v3087, %v4897
        %v4899 = vpop.f32.mrb[0].mxu0
        %v4900 = vadd.f32 %v3091, %v4899
        %4901 = vmatprep.mubr.bf16.mxu0 %v2881
        %4902 = vmatmul.mubr.bf16.gmra.mrb[0].mxu0 %v2880
        %v4903 = vpop.f32.mrb[0].mxu0
        %v4904 = vadd.f32 %v3087, %v4903
        %v4905 = vpop.f32.mrb[0].mxu0
        %v4906 = vadd.f32 %v3091, %v4905
        %v4907 = vpop.f32.mrb[0].mxu0
        %v4908 = vadd.f32 %v3087, %v4907
        %v4909 = vpop.f32.mrb[0].mxu0
        %v4910 = vadd.f32 %v3091, %v4909
        %4911 = vmatprep.mubr.bf16.mxu0 %v2883
        %4912 = vmatmul.mubr.bf16.gmra.mrb[0].mxu0 %v2882
        %v4913 = vpop.f32.mrb[0].mxu0
        %v4914 = vadd.f32 %v3087, %v4913
        %v4915 = vpop.f32.mrb[0].mxu0
        %v4916 = vadd.f32 %v3091, %v4915
        %v4917 = vpop.f32.mrb[0].mxu0
        %v4918 = vadd.f32 %v3087, %v4917
        %v4919 = vpop.f32.mrb[0].mxu0
        %v4920 = vadd.f32 %v3091, %v4919
        %4921 = vmatprep.mubr.bf16.mxu0 %v2885
        %4922 = vmatmul.mubr.bf16.gmra.mrb[0].mxu0 %v2884
        %v4923 = vpop.f32.mrb[0].mxu0
        %v4924 = vadd.f32 %v3087, %v4923
        %v4925 = vpop.f32.mrb[0].mxu0
        %v4926 = vadd.f32 %v3091, %v4925
        %v4927 = vpop.f32.mrb[0].mxu0
        %v4928 = vadd.f32 %v3087, %v4927
        %v4929 = vpop.f32.mrb[0].mxu0
        %v4930 = vadd.f32 %v3091, %v4929
        %4931 = vmatprep.mubr.bf16.mxu0 %v2887
        %4932 = vmatmul.mubr.bf16.gmra.mrb[0].mxu0 %v2886
        %v4933 = vpop.f32.mrb[0].mxu0
        %v4934 = vadd.f32 %v3087, %v4933
        %v4935 = vpop.f32.mrb[0].mxu0
        %v4936 = vadd.f32 %v3091, %v4935
        %v4937 = vpop.f32.mrb[0].mxu0
        %v4938 = vadd.f32 %v3087, %v4937
        %v4939 = vpop.f32.mrb[0].mxu0
        %v4940 = vadd.f32 %v3091, %v4939
        %4941 = vmatprep.mubr.bf16.mxu0 %v2889
        %4942 = vmatmul.mubr.bf16.gmra.mrb[0].mxu0 %v2888
        %v4943 = vpop.f32.mrb[0].mxu0
        %v4944 = vadd.f32 %v3087, %v4943
        %v4945 = vpop.f32.mrb[0].mxu0
        %v4946 = vadd.f32 %v3091, %v4945
        %v4947 = vpop.f32.mrb[0].mxu0
        %v4948 = vadd.f32 %v3087, %v4947
        %v4949 = vpop.f32.mrb[0].mxu0
        %v4950 = vadd.f32 %v3091, %v4949
        %4951 = vmatprep.mubr.bf16.mxu0 %v2891
        %4952 = vmatmul.mubr.bf16.gmra.mrb[0].mxu0 %v2890
        %v4953 = vpop.f32.mrb[0].mxu0
        %v4954 = vadd.f32 %v3087, %v4953
        %v4955 = vpop.f32.mrb[0].mxu0
        %v4956 = vadd.f32 %v3091, %v4955
        %v4957 = vpop.f32.mrb[0].mxu0
        %v4958 = vadd.f32 %v3087, %v4957
        %v4959 = vpop.f32.mrb[0].mxu0
        %v4960 = vadd.f32 %v3091, %v4959
        %4961 = vmatprep.mubr.bf16.mxu0 %v2893
        %4962 = vmatmul.mubr.bf16.gmra.mrb[0].mxu0 %v2892
        %v4963 = vpop.f32.mrb[0].mxu0
        %v4964 = vadd.f32 %v3087, %v4963
        %v4965 = vpop.f32.mrb[0].mxu0
        %v4966 = vadd.f32 %v3091, %v4965
        %v4967 = vpop.f32.mrb[0].mxu0
        %v4968 = vadd.f32 %v3087, %v4967
        %v4969 = vpop.f32.mrb[0].mxu0
        %v4970 = vadd.f32 %v3091, %v4969
        %4971 = vmatprep.mubr.bf16.mxu0 %v2895
        %4972 = vmatmul.mubr.bf16.gmra.mrb[0].mxu0 %v2894
        %v4973 = vpop.f32.mrb[0].mxu0
        %v4974 = vadd.f32 %v3087, %v4973
        %v4975 = vpop.f32.mrb[0].mxu0
        %v4976 = vadd.f32 %v3091, %v4975
        %v4977 = vpop.f32.mrb[0].mxu0
        %v4978 = vadd.f32 %v3087, %v4977
        %v4979 = vpop.f32.mrb[0].mxu0
        %v4980 = vadd.f32 %v3091, %v4979
        %4981 = vmatprep.mubr.bf16.mxu0 %v2897
        %4982 = vmatmul.mubr.bf16.gmra.mrb[0].mxu0 %v2896
        %v4983 = vpop.f32.mrb[0].mxu0
        %v4984 = vadd.f32 %v3087, %v4983
        %v4985 = vpop.f32.mrb[0].mxu0
        %v4986 = vadd.f32 %v3091, %v4985
        %v4987 = vpop.f32.mrb[0].mxu0
        %v4988 = vadd.f32 %v3087, %v4987
        %v4989 = vpop.f32.mrb[0].mxu0
        %v4990 = vadd.f32 %v3091, %v4989
        %4991 = vmatprep.mubr.bf16.mxu0 %v2899
        %4992 = vmatmul.mubr.bf16.gmra.mrb[0].mxu0 %v2898
        %v4993 = vpop.f32.mrb[0].mxu0
        %v4994 = vadd.f32 %v3087, %v4993
        %v4995 = vpop.f32.mrb[0].mxu0
        %v4996 = vadd.f32 %v3091, %v4995
        %v4997 = vpop.f32.mrb[0].mxu0
        %v4998 = vadd.f32 %v3087, %v4997
        %v4999 = vpop.f32.mrb[0].mxu0
        %v5000 = vadd.f32 %v3091, %v4999
        %5001 = vmatprep.mubr.bf16.mxu0 %v2901
        %5002 = vmatmul.mubr.bf16.gmra.mrb[0].mxu0 %v2900
        %v5003 = vpop.f32.mrb[0].mxu0
        %v5004 = vadd.f32 %v3087, %v5003
        %v5005 = vpop.f32.mrb[0].mxu0
        %v5006 = vadd.f32 %v3091, %v5005
        %v5007 = vpop.f32.mrb[0].mxu0
        %v5008 = vadd.f32 %v3087, %v5007
        %v5009 = vpop.f32.mrb[0].mxu0
        %v5010 = vadd.f32 %v3091, %v5009
        %5011 = vmatprep.mubr.bf16.mxu0 %v2903
        %5012 = vmatmul.mubr.bf16.gmra.mrb[0].mxu0 %v2902
        %v5013 = vpop.f32.mrb[0].mxu0
        %v5014 = vadd.f32 %v3087, %v5013
        %v5015 = vpop.f32.mrb[0].mxu0
        %v5016 = vadd.f32 %v3091, %v5015
        %v5017 = vpop.f32.mrb[0].mxu0
        %v5018 = vadd.f32 %v3087, %v5017
        %v5019 = vpop.f32.mrb[0].mxu0
        %v5020 = vadd.f32 %v3091, %v5019
        %5021 = vmatprep.mubr.bf16.mxu0 %v2905
        %5022 = vmatmul.mubr.bf16.gmra.mrb[0].mxu0 %v2904
        %v5023 = vpop.f32.mrb[0].mxu0
        %v5024 = vadd.f32 %v3087, %v5023
        %v5025 = vpop.f32.mrb[0].mxu0
        %v5026 = vadd.f32 %v3091, %v5025
        %v5027 = vpop.f32.mrb[0].mxu0
        %v5028 = vadd.f32 %v3087, %v5027
        %v5029 = vpop.f32.mrb[0].mxu0
        %v5030 = vadd.f32 %v3091, %v5029
        %5031 = vmatprep.mubr.bf16.mxu0 %v2907
        %5032 = vmatmul.mubr.bf16.gmra.mrb[0].mxu0 %v2906
        %v5033 = vpop.f32.mrb[0].mxu0
        %v5034 = vadd.f32 %v3087, %v5033
        %v5035 = vpop.f32.mrb[0].mxu0
        %v5036 = vadd.f32 %v3091, %v5035
        %v5037 = vpop.f32.mrb[0].mxu0
        %v5038 = vadd.f32 %v3087, %v5037
        %v5039 = vpop.f32.mrb[0].mxu0
        %v5040 = vadd.f32 %v3091, %v5039
        %5041 = vmatprep.mubr.bf16.mxu0 %v2909
        %5042 = vmatmul.mubr.bf16.gmra.mrb[0].mxu0 %v2908
        %v5043 = vpop.f32.mrb[0].mxu0
        %v5044 = vadd.f32 %v3087, %v5043
        %v5045 = vpop.f32.mrb[0].mxu0
        %v5046 = vadd.f32 %v3091, %v5045
        %v5047 = vpop.f32.mrb[0].mxu0
        %v5048 = vadd.f32 %v3087, %v5047
        %v5049 = vpop.f32.mrb[0].mxu0
        %v5050 = vadd.f32 %v3091, %v5049
        %5051 = vmatprep.mubr.bf16.mxu0 %v2911
        %5052 = vmatmul.mubr.bf16.gmra.mrb[0].mxu0 %v2910
        %v5053 = vpop.f32.mrb[0].mxu0
        %v5054 = vadd.f32 %v3087, %v5053
        %v5055 = vpop.f32.mrb[0].mxu0
        %v5056 = vadd.f32 %v3091, %v5055
        %v5057 = vpop.f32.mrb[0].mxu0
        %v5058 = vadd.f32 %v3087, %v5057
        %v5059 = vpop.f32.mrb[0].mxu0
        %v5060 = vadd.f32 %v3091, %v5059
        %5061 = vmatprep.mubr.bf16.mxu0 %v2913
        %5062 = vmatmul.mubr.bf16.gmra.mrb[0].mxu0 %v2912
        %v5063 = vpop.f32.mrb[0].mxu0
        %v5064 = vadd.f32 %v3087, %v5063
        %v5065 = vpop.f32.mrb[0].mxu0
        %v5066 = vadd.f32 %v3091, %v5065
        %v5067 = vpop.f32.mrb[0].mxu0
        %v5068 = vadd.f32 %v3087, %v5067
        %v5069 = vpop.f32.mrb[0].mxu0
        %v5070 = vadd.f32 %v3091, %v5069
        %5071 = vmatprep.mubr.bf16.mxu0 %v2915
        %5072 = vmatmul.mubr.bf16.gmra.mrb[0].mxu0 %v2914
        %v5073 = vpop.f32.mrb[0].mxu0
        %v5074 = vadd.f32 %v3087, %v5073
        %v5075 = vpop.f32.mrb[0].mxu0
        %v5076 = vadd.f32 %v3091, %v5075
        %v5077 = vpop.f32.mrb[0].mxu0
        %v5078 = vadd.f32 %v3087, %v5077
        %v5079 = vpop.f32.mrb[0].mxu0
        %v5080 = vadd.f32 %v3091, %v5079
        %5081 = vmatprep.mubr.bf16.mxu0 %v2917
        %5082 = vmatmul.mubr.bf16.gmra.mrb[0].mxu0 %v2916
        %v5083 = vpop.f32.mrb[0].mxu0
        %v5084 = vadd.f32 %v3087, %v5083
        %v5085 = vpop.f32.mrb[0].mxu0
        %v5086 = vadd.f32 %v3091, %v5085
        %v5087 = vpop.f32.mrb[0].mxu0
        %v5088 = vadd.f32 %v3087, %v5087
        %v5089 = vpop.f32.mrb[0].mxu0
        %v5090 = vadd.f32 %v3091, %v5089
        %5091 = vmatprep.mubr.bf16.mxu0 %v2919
        %5092 = vmatmul.mubr.bf16.gmra.mrb[0].mxu0 %v2918
        %v5093 = vpop.f32.mrb[0].mxu0
        %v5094 = vadd.f32 %v3087, %v5093
        %v5095 = vpop.f32.mrb[0].mxu0
        %v5096 = vadd.f32 %v3091, %v5095
        %v5097 = vpop.f32.mrb[0].mxu0
        %v5098 = vadd.f32 %v3087, %v5097
        %v5099 = vpop.f32.mrb[0].mxu0
        %v5100 = vadd.f32 %v3091, %v5099
        %5101 = vmatprep.mubr.bf16.mxu0 %v2921
        %5102 = vmatmul.mubr.bf16.gmra.mrb[0].mxu0 %v2920
        %v5103 = vpop.f32.mrb[0].mxu0
        %v5104 = vadd.f32 %v3087, %v5103
        %v5105 = vpop.f32.mrb[0].mxu0
        %v5106 = vadd.f32 %v3091, %v5105
        %v5107 = vpop.f32.mrb[0].mxu0
        %v5108 = vadd.f32 %v3087, %v5107
        %v5109 = vpop.f32.mrb[0].mxu0
        %v5110 = vadd.f32 %v3091, %v5109
        %5111 = vmatprep.mubr.bf16.mxu0 %v2923
        %5112 = vmatmul.mubr.bf16.gmra.mrb[0].mxu0 %v2922
        %v5113 = vpop.f32.mrb[0].mxu0
        %v5114 = vadd.f32 %v3087, %v5113
        %v5115 = vpop.f32.mrb[0].mxu0
        %v5116 = vadd.f32 %v3091, %v5115
        %v5117 = vpop.f32.mrb[0].mxu0
        %v5118 = vadd.f32 %v3087, %v5117
        %v5119 = vpop.f32.mrb[0].mxu0
        %v5120 = vadd.f32 %v3091, %v5119
        %5121 = vmatprep.mubr.bf16.mxu0 %v2925
        %5122 = vmatmul.mubr.bf16.gmra.mrb[0].mxu0 %v2924
        %v5123 = vpop.f32.mrb[0].mxu0
        %v5124 = vadd.f32 %v3087, %v5123
        %v5125 = vpop.f32.mrb[0].mxu0
        %v5126 = vadd.f32 %v3091, %v5125
        %v5127 = vpop.f32.mrb[0].mxu0
        %v5128 = vadd.f32 %v3087, %v5127
        %v5129 = vpop.f32.mrb[0].mxu0
        %v5130 = vadd.f32 %v3091, %v5129
        %5131 = vmatprep.mubr.bf16.mxu0 %v2927
        %5132 = vmatmul.mubr.bf16.gmra.mrb[0].mxu0 %v2926
        %v5133 = vpop.f32.mrb[0].mxu0
        %v5134 = vadd.f32 %v3087, %v5133
        %v5135 = vpop.f32.mrb[0].mxu0
        %v5136 = vadd.f32 %v3091, %v5135
        %v5137 = vpop.f32.mrb[0].mxu0
        %v5138 = vadd.f32 %v3087, %v5137
        %v5139 = vpop.f32.mrb[0].mxu0
        %v5140 = vadd.f32 %v3091, %v5139
        %5141 = vmatprep.mubr.bf16.mxu0 %v2929
        %5142 = vmatmul.mubr.bf16.gmra.mrb[0].mxu0 %v2928
        %v5143 = vpop.f32.mrb[0].mxu0
        %v5144 = vadd.f32 %v3087, %v5143
        %v5145 = vpop.f32.mrb[0].mxu0
        %v5146 = vadd.f32 %v3091, %v5145
        %v5147 = vpop.f32.mrb[0].mxu0
        %v5148 = vadd.f32 %v3087, %v5147
        %v5149 = vpop.f32.mrb[0].mxu0
        %v5150 = vadd.f32 %v3091, %v5149
        %5151 = vdwg.mxu0
        %vm5152 = vcmp.gt.f32.partialorder %v3775, 0.0
        %vm5153 = vcmp.gt.f32.partialorder %v3777, 0.0
        %vm5154 = vcmp.gt.f32.partialorder %v4128, 0.0
        %vm5155 = vcmp.gt.f32.partialorder %v4130, 0.0
        %vm5156 = vcmp.gt.f32.partialorder %v4481, 0.0
        %vm5157 = vcmp.gt.f32.partialorder %v4483, 0.0
        %vm5158 = vcmp.gt.f32.partialorder %v4834, 0.0
        %vm5159 = vcmp.gt.f32.partialorder %v4836, 0.0
        %vm5160 = vcmp.gt.f32.partialorder %v3779, 0.0
        %vm5161 = vcmp.gt.f32.partialorder %v3781, 0.0
        %vm5162 = vcmp.gt.f32.partialorder %v4132, 0.0
        %vm5163 = vcmp.gt.f32.partialorder %v4134, 0.0
        %vm5164 = vcmp.gt.f32.partialorder %v4485, 0.0
        %vm5165 = vcmp.gt.f32.partialorder %v4487, 0.0
        %vm5166 = vcmp.gt.f32.partialorder %v4838, 0.0
        %vm5167 = vcmp.gt.f32.partialorder %v4840, 0.0
        %vm5168 = vcmp.gt.f32.partialorder %v3785, 0.0
        %vm5169 = vcmp.gt.f32.partialorder %v3787, 0.0
        %vm5170 = vcmp.gt.f32.partialorder %v4138, 0.0
        %vm5171 = vcmp.gt.f32.partialorder %v4140, 0.0
        %vm5172 = vcmp.gt.f32.partialorder %v4491, 0.0
        %vm5173 = vcmp.gt.f32.partialorder %v4493, 0.0
        %vm5174 = vcmp.gt.f32.partialorder %v4844, 0.0
        %vm5175 = vcmp.gt.f32.partialorder %v4846, 0.0
        %vm5176 = vcmp.gt.f32.partialorder %v3789, 0.0
        %vm5177 = vcmp.gt.f32.partialorder %v3791, 0.0
        %vm5178 = vcmp.gt.f32.partialorder %v4142, 0.0
        %vm5179 = vcmp.gt.f32.partialorder %v4144, 0.0
        %vm5180 = vcmp.gt.f32.partialorder %v4495, 0.0
        %vm5181 = vcmp.gt.f32.partialorder %v4497, 0.0
        %vm5182 = vcmp.gt.f32.partialorder %v4848, 0.0
        %vm5183 = vcmp.gt.f32.partialorder %v4850, 0.0
        %vm5184 = vcmp.gt.f32.partialorder %v3795, 0.0
        %vm5185 = vcmp.gt.f32.partialorder %v3797, 0.0
        %vm5186 = vcmp.gt.f32.partialorder %v4148, 0.0
        %vm5187 = vcmp.gt.f32.partialorder %v4150, 0.0
        %vm5188 = vcmp.gt.f32.partialorder %v4501, 0.0
        %vm5189 = vcmp.gt.f32.partialorder %v4503, 0.0
        %vm5190 = vcmp.gt.f32.partialorder %v4854, 0.0
        %vm5191 = vcmp.gt.f32.partialorder %v4856, 0.0
        %vm5192 = vcmp.gt.f32.partialorder %v3799, 0.0
        %vm5193 = vcmp.gt.f32.partialorder %v3801, 0.0
        %vm5194 = vcmp.gt.f32.partialorder %v4152, 0.0
        %vm5195 = vcmp.gt.f32.partialorder %v4154, 0.0
        %vm5196 = vcmp.gt.f32.partialorder %v4505, 0.0
        %vm5197 = vcmp.gt.f32.partialorder %v4507, 0.0
        %vm5198 = vcmp.gt.f32.partialorder %v4858, 0.0
        %vm5199 = vcmp.gt.f32.partialorder %v4860, 0.0
        %vm5200 = vcmp.gt.f32.partialorder %v3805, 0.0
        %vm5201 = vcmp.gt.f32.partialorder %v3807, 0.0
        %vm5202 = vcmp.gt.f32.partialorder %v4158, 0.0
        %vm5203 = vcmp.gt.f32.partialorder %v4160, 0.0
        %vm5204 = vcmp.gt.f32.partialorder %v4511, 0.0
        %vm5205 = vcmp.gt.f32.partialorder %v4513, 0.0
        %vm5206 = vcmp.gt.f32.partialorder %v4864, 0.0
        %vm5207 = vcmp.gt.f32.partialorder %v4866, 0.0
        %vm5208 = vcmp.gt.f32.partialorder %v3809, 0.0
        %vm5209 = vcmp.gt.f32.partialorder %v3811, 0.0
        %vm5210 = vcmp.gt.f32.partialorder %v4162, 0.0
        %vm5211 = vcmp.gt.f32.partialorder %v4164, 0.0
        %vm5212 = vcmp.gt.f32.partialorder %v4515, 0.0
        %vm5213 = vcmp.gt.f32.partialorder %v4517, 0.0
        %vm5214 = vcmp.gt.f32.partialorder %v4868, 0.0
        %vm5215 = vcmp.gt.f32.partialorder %v4870, 0.0
        %vm5216 = vcmp.gt.f32.partialorder %v3815, 0.0
        %vm5217 = vcmp.gt.f32.partialorder %v3817, 0.0
        %vm5218 = vcmp.gt.f32.partialorder %v4168, 0.0
        %vm5219 = vcmp.gt.f32.partialorder %v4170, 0.0
        %vm5220 = vcmp.gt.f32.partialorder %v4521, 0.0
        %vm5221 = vcmp.gt.f32.partialorder %v4523, 0.0
        %vm5222 = vcmp.gt.f32.partialorder %v4874, 0.0
        %vm5223 = vcmp.gt.f32.partialorder %v4876, 0.0
        %vm5224 = vcmp.gt.f32.partialorder %v3819, 0.0
        %vm5225 = vcmp.gt.f32.partialorder %v3821, 0.0
        %vm5226 = vcmp.gt.f32.partialorder %v4172, 0.0
        %vm5227 = vcmp.gt.f32.partialorder %v4174, 0.0
        %vm5228 = vcmp.gt.f32.partialorder %v4525, 0.0
        %vm5229 = vcmp.gt.f32.partialorder %v4527, 0.0
        %vm5230 = vcmp.gt.f32.partialorder %v4878, 0.0
        %vm5231 = vcmp.gt.f32.partialorder %v4880, 0.0
        %vm5232 = vcmp.gt.f32.partialorder %v3825, 0.0
        %vm5233 = vcmp.gt.f32.partialorder %v3827, 0.0
        %vm5234 = vcmp.gt.f32.partialorder %v4178, 0.0
        %vm5235 = vcmp.gt.f32.partialorder %v4180, 0.0
        %vm5236 = vcmp.gt.f32.partialorder %v4531, 0.0
        %vm5237 = vcmp.gt.f32.partialorder %v4533, 0.0
        %vm5238 = vcmp.gt.f32.partialorder %v4884, 0.0
        %vm5239 = vcmp.gt.f32.partialorder %v4886, 0.0
        %vm5240 = vcmp.gt.f32.partialorder %v3829, 0.0
        %vm5241 = vcmp.gt.f32.partialorder %v3831, 0.0
        %vm5242 = vcmp.gt.f32.partialorder %v4182, 0.0
        %vm5243 = vcmp.gt.f32.partialorder %v4184, 0.0
        %vm5244 = vcmp.gt.f32.partialorder %v4535, 0.0
        %vm5245 = vcmp.gt.f32.partialorder %v4537, 0.0
        %vm5246 = vcmp.gt.f32.partialorder %v4888, 0.0
        %vm5247 = vcmp.gt.f32.partialorder %v4890, 0.0
        %vm5248 = vcmp.gt.f32.partialorder %v3835, 0.0
        %vm5249 = vcmp.gt.f32.partialorder %v3837, 0.0
        %vm5250 = vcmp.gt.f32.partialorder %v4188, 0.0
        %vm5251 = vcmp.gt.f32.partialorder %v4190, 0.0
        %vm5252 = vcmp.gt.f32.partialorder %v4541, 0.0
        %vm5253 = vcmp.gt.f32.partialorder %v4543, 0.0
        %vm5254 = vcmp.gt.f32.partialorder %v4894, 0.0
        %vm5255 = vcmp.gt.f32.partialorder %v4896, 0.0
        %vm5256 = vcmp.gt.f32.partialorder %v3839, 0.0
        %vm5257 = vcmp.gt.f32.partialorder %v3841, 0.0
        %vm5258 = vcmp.gt.f32.partialorder %v4192, 0.0
        %vm5259 = vcmp.gt.f32.partialorder %v4194, 0.0
        %vm5260 = vcmp.gt.f32.partialorder %v4545, 0.0
        %vm5261 = vcmp.gt.f32.partialorder %v4547, 0.0
        %vm5262 = vcmp.gt.f32.partialorder %v4898, 0.0
        %vm5263 = vcmp.gt.f32.partialorder %v4900, 0.0
        %vm5264 = vcmp.gt.f32.partialorder %v3845, 0.0
        %vm5265 = vcmp.gt.f32.partialorder %v3847, 0.0
        %vm5266 = vcmp.gt.f32.partialorder %v4198, 0.0
        %vm5267 = vcmp.gt.f32.partialorder %v4200, 0.0
        %vm5268 = vcmp.gt.f32.partialorder %v4551, 0.0
        %vm5269 = vcmp.gt.f32.partialorder %v4553, 0.0
        %vm5270 = vcmp.gt.f32.partialorder %v4904, 0.0
        %vm5271 = vcmp.gt.f32.partialorder %v4906, 0.0
        %vm5272 = vcmp.gt.f32.partialorder %v3849, 0.0
        %vm5273 = vcmp.gt.f32.partialorder %v3851, 0.0
        %vm5274 = vcmp.gt.f32.partialorder %v4202, 0.0
        %vm5275 = vcmp.gt.f32.partialorder %v4204, 0.0
        %vm5276 = vcmp.gt.f32.partialorder %v4555, 0.0
        %vm5277 = vcmp.gt.f32.partialorder %v4557, 0.0
        %vm5278 = vcmp.gt.f32.partialorder %v4908, 0.0
        %vm5279 = vcmp.gt.f32.partialorder %v4910, 0.0
        %vm5280 = vcmp.gt.f32.partialorder %v3855, 0.0
        %vm5281 = vcmp.gt.f32.partialorder %v3857, 0.0
        %vm5282 = vcmp.gt.f32.partialorder %v4208, 0.0
        %vm5283 = vcmp.gt.f32.partialorder %v4210, 0.0
        %vm5284 = vcmp.gt.f32.partialorder %v4561, 0.0
        %vm5285 = vcmp.gt.f32.partialorder %v4563, 0.0
        %vm5286 = vcmp.gt.f32.partialorder %v4914, 0.0
        %vm5287 = vcmp.gt.f32.partialorder %v4916, 0.0
        %vm5288 = vcmp.gt.f32.partialorder %v3859, 0.0
        %vm5289 = vcmp.gt.f32.partialorder %v3861, 0.0
        %vm5290 = vcmp.gt.f32.partialorder %v4212, 0.0
        %vm5291 = vcmp.gt.f32.partialorder %v4214, 0.0
        %vm5292 = vcmp.gt.f32.partialorder %v4565, 0.0
        %vm5293 = vcmp.gt.f32.partialorder %v4567, 0.0
        %vm5294 = vcmp.gt.f32.partialorder %v4918, 0.0
        %vm5295 = vcmp.gt.f32.partialorder %v4920, 0.0
        %vm5296 = vcmp.gt.f32.partialorder %v3865, 0.0
        %vm5297 = vcmp.gt.f32.partialorder %v3867, 0.0
        %vm5298 = vcmp.gt.f32.partialorder %v4218, 0.0
        %vm5299 = vcmp.gt.f32.partialorder %v4220, 0.0
        %vm5300 = vcmp.gt.f32.partialorder %v4571, 0.0
        %vm5301 = vcmp.gt.f32.partialorder %v4573, 0.0
        %vm5302 = vcmp.gt.f32.partialorder %v4924, 0.0
        %vm5303 = vcmp.gt.f32.partialorder %v4926, 0.0
        %vm5304 = vcmp.gt.f32.partialorder %v3869, 0.0
        %vm5305 = vcmp.gt.f32.partialorder %v3871, 0.0
        %vm5306 = vcmp.gt.f32.partialorder %v4222, 0.0
        %vm5307 = vcmp.gt.f32.partialorder %v4224, 0.0
        %vm5308 = vcmp.gt.f32.partialorder %v4575, 0.0
        %vm5309 = vcmp.gt.f32.partialorder %v4577, 0.0
        %vm5310 = vcmp.gt.f32.partialorder %v4928, 0.0
        %vm5311 = vcmp.gt.f32.partialorder %v4930, 0.0
        %vm5312 = vcmp.gt.f32.partialorder %v3875, 0.0
        %vm5313 = vcmp.gt.f32.partialorder %v3877, 0.0
        %vm5314 = vcmp.gt.f32.partialorder %v4228, 0.0
        %vm5315 = vcmp.gt.f32.partialorder %v4230, 0.0
        %vm5316 = vcmp.gt.f32.partialorder %v4581, 0.0
        %vm5317 = vcmp.gt.f32.partialorder %v4583, 0.0
        %vm5318 = vcmp.gt.f32.partialorder %v4934, 0.0
        %vm5319 = vcmp.gt.f32.partialorder %v4936, 0.0
        %vm5320 = vcmp.gt.f32.partialorder %v3879, 0.0
        %vm5321 = vcmp.gt.f32.partialorder %v3881, 0.0
        %vm5322 = vcmp.gt.f32.partialorder %v4232, 0.0
        %vm5323 = vcmp.gt.f32.partialorder %v4234, 0.0
        %vm5324 = vcmp.gt.f32.partialorder %v4585, 0.0
        %vm5325 = vcmp.gt.f32.partialorder %v4587, 0.0
        %vm5326 = vcmp.gt.f32.partialorder %v4938, 0.0
        %vm5327 = vcmp.gt.f32.partialorder %v4940, 0.0
        %vm5328 = vcmp.gt.f32.partialorder %v3885, 0.0
        %vm5329 = vcmp.gt.f32.partialorder %v3887, 0.0
        %vm5330 = vcmp.gt.f32.partialorder %v4238, 0.0
        %vm5331 = vcmp.gt.f32.partialorder %v4240, 0.0
        %vm5332 = vcmp.gt.f32.partialorder %v4591, 0.0
        %vm5333 = vcmp.gt.f32.partialorder %v4593, 0.0
        %vm5334 = vcmp.gt.f32.partialorder %v4944, 0.0
        %vm5335 = vcmp.gt.f32.partialorder %v4946, 0.0
        %vm5336 = vcmp.gt.f32.partialorder %v3889, 0.0
        %vm5337 = vcmp.gt.f32.partialorder %v3891, 0.0
        %vm5338 = vcmp.gt.f32.partialorder %v4242, 0.0
        %vm5339 = vcmp.gt.f32.partialorder %v4244, 0.0
        %vm5340 = vcmp.gt.f32.partialorder %v4595, 0.0
        %vm5341 = vcmp.gt.f32.partialorder %v4597, 0.0
        %vm5342 = vcmp.gt.f32.partialorder %v4948, 0.0
        %vm5343 = vcmp.gt.f32.partialorder %v4950, 0.0
        %vm5344 = vcmp.gt.f32.partialorder %v3895, 0.0
        %vm5345 = vcmp.gt.f32.partialorder %v3897, 0.0
        %vm5346 = vcmp.gt.f32.partialorder %v4248, 0.0
        %vm5347 = vcmp.gt.f32.partialorder %v4250, 0.0
        %vm5348 = vcmp.gt.f32.partialorder %v4601, 0.0
        %vm5349 = vcmp.gt.f32.partialorder %v4603, 0.0
        %vm5350 = vcmp.gt.f32.partialorder %v4954, 0.0
        %vm5351 = vcmp.gt.f32.partialorder %v4956, 0.0
        %vm5352 = vcmp.gt.f32.partialorder %v3899, 0.0
        %vm5353 = vcmp.gt.f32.partialorder %v3901, 0.0
        %vm5354 = vcmp.gt.f32.partialorder %v4252, 0.0
        %vm5355 = vcmp.gt.f32.partialorder %v4254, 0.0
        %vm5356 = vcmp.gt.f32.partialorder %v4605, 0.0
        %vm5357 = vcmp.gt.f32.partialorder %v4607, 0.0
        %vm5358 = vcmp.gt.f32.partialorder %v4958, 0.0
        %vm5359 = vcmp.gt.f32.partialorder %v4960, 0.0
        %vm5360 = vcmp.gt.f32.partialorder %v3905, 0.0
        %vm5361 = vcmp.gt.f32.partialorder %v3907, 0.0
        %vm5362 = vcmp.gt.f32.partialorder %v4258, 0.0
        %vm5363 = vcmp.gt.f32.partialorder %v4260, 0.0
        %vm5364 = vcmp.gt.f32.partialorder %v4611, 0.0
        %vm5365 = vcmp.gt.f32.partialorder %v4613, 0.0
        %vm5366 = vcmp.gt.f32.partialorder %v4964, 0.0
        %vm5367 = vcmp.gt.f32.partialorder %v4966, 0.0
        %vm5368 = vcmp.gt.f32.partialorder %v3909, 0.0
        %vm5369 = vcmp.gt.f32.partialorder %v3911, 0.0
        %vm5370 = vcmp.gt.f32.partialorder %v4262, 0.0
        %vm5371 = vcmp.gt.f32.partialorder %v4264, 0.0
        %vm5372 = vcmp.gt.f32.partialorder %v4615, 0.0
        %vm5373 = vcmp.gt.f32.partialorder %v4617, 0.0
        %vm5374 = vcmp.gt.f32.partialorder %v4968, 0.0
        %vm5375 = vcmp.gt.f32.partialorder %v4970, 0.0
        %vm5376 = vcmp.gt.f32.partialorder %v3915, 0.0
        %vm5377 = vcmp.gt.f32.partialorder %v3917, 0.0
        %vm5378 = vcmp.gt.f32.partialorder %v4268, 0.0
        %vm5379 = vcmp.gt.f32.partialorder %v4270, 0.0
        %vm5380 = vcmp.gt.f32.partialorder %v4621, 0.0
        %vm5381 = vcmp.gt.f32.partialorder %v4623, 0.0
        %vm5382 = vcmp.gt.f32.partialorder %v4974, 0.0
        %vm5383 = vcmp.gt.f32.partialorder %v4976, 0.0
        %vm5384 = vcmp.gt.f32.partialorder %v3919, 0.0
        %vm5385 = vcmp.gt.f32.partialorder %v3921, 0.0
        %vm5386 = vcmp.gt.f32.partialorder %v4272, 0.0
        %vm5387 = vcmp.gt.f32.partialorder %v4274, 0.0
        %vm5388 = vcmp.gt.f32.partialorder %v4625, 0.0
        %vm5389 = vcmp.gt.f32.partialorder %v4627, 0.0
        %vm5390 = vcmp.gt.f32.partialorder %v4978, 0.0
        %vm5391 = vcmp.gt.f32.partialorder %v4980, 0.0
        %vm5392 = vcmp.gt.f32.partialorder %v3925, 0.0
        %vm5393 = vcmp.gt.f32.partialorder %v3927, 0.0
        %vm5394 = vcmp.gt.f32.partialorder %v4278, 0.0
        %vm5395 = vcmp.gt.f32.partialorder %v4280, 0.0
        %vm5396 = vcmp.gt.f32.partialorder %v4631, 0.0
        %vm5397 = vcmp.gt.f32.partialorder %v4633, 0.0
        %vm5398 = vcmp.gt.f32.partialorder %v4984, 0.0
        %vm5399 = vcmp.gt.f32.partialorder %v4986, 0.0
        %vm5400 = vcmp.gt.f32.partialorder %v3929, 0.0
        %vm5401 = vcmp.gt.f32.partialorder %v3931, 0.0
        %vm5402 = vcmp.gt.f32.partialorder %v4282, 0.0
        %vm5403 = vcmp.gt.f32.partialorder %v4284, 0.0
        %vm5404 = vcmp.gt.f32.partialorder %v4635, 0.0
        %vm5405 = vcmp.gt.f32.partialorder %v4637, 0.0
        %vm5406 = vcmp.gt.f32.partialorder %v4988, 0.0
        %vm5407 = vcmp.gt.f32.partialorder %v4990, 0.0
        %vm5408 = vcmp.gt.f32.partialorder %v3935, 0.0
        %vm5409 = vcmp.gt.f32.partialorder %v3937, 0.0
        %vm5410 = vcmp.gt.f32.partialorder %v4288, 0.0
        %vm5411 = vcmp.gt.f32.partialorder %v4290, 0.0
        %vm5412 = vcmp.gt.f32.partialorder %v4641, 0.0
        %vm5413 = vcmp.gt.f32.partialorder %v4643, 0.0
        %vm5414 = vcmp.gt.f32.partialorder %v4994, 0.0
        %vm5415 = vcmp.gt.f32.partialorder %v4996, 0.0
        %vm5416 = vcmp.gt.f32.partialorder %v3939, 0.0
        %vm5417 = vcmp.gt.f32.partialorder %v3941, 0.0
        %vm5418 = vcmp.gt.f32.partialorder %v4292, 0.0
        %vm5419 = vcmp.gt.f32.partialorder %v4294, 0.0
        %vm5420 = vcmp.gt.f32.partialorder %v4645, 0.0
        %vm5421 = vcmp.gt.f32.partialorder %v4647, 0.0
        %vm5422 = vcmp.gt.f32.partialorder %v4998, 0.0
        %vm5423 = vcmp.gt.f32.partialorder %v5000, 0.0
        %vm5424 = vcmp.gt.f32.partialorder %v3945, 0.0
        %vm5425 = vcmp.gt.f32.partialorder %v3947, 0.0
        %vm5426 = vcmp.gt.f32.partialorder %v4298, 0.0
        %vm5427 = vcmp.gt.f32.partialorder %v4300, 0.0
        %vm5428 = vcmp.gt.f32.partialorder %v4651, 0.0
        %vm5429 = vcmp.gt.f32.partialorder %v4653, 0.0
        %vm5430 = vcmp.gt.f32.partialorder %v5004, 0.0
        %vm5431 = vcmp.gt.f32.partialorder %v5006, 0.0
        %vm5432 = vcmp.gt.f32.partialorder %v3949, 0.0
        %vm5433 = vcmp.gt.f32.partialorder %v3951, 0.0
        %vm5434 = vcmp.gt.f32.partialorder %v4302, 0.0
        %vm5435 = vcmp.gt.f32.partialorder %v4304, 0.0
        %vm5436 = vcmp.gt.f32.partialorder %v4655, 0.0
        %vm5437 = vcmp.gt.f32.partialorder %v4657, 0.0
        %vm5438 = vcmp.gt.f32.partialorder %v5008, 0.0
        %vm5439 = vcmp.gt.f32.partialorder %v5010, 0.0
        %vm5440 = vcmp.gt.f32.partialorder %v3955, 0.0
        %vm5441 = vcmp.gt.f32.partialorder %v3957, 0.0
        %vm5442 = vcmp.gt.f32.partialorder %v4308, 0.0
        %vm5443 = vcmp.gt.f32.partialorder %v4310, 0.0
        %vm5444 = vcmp.gt.f32.partialorder %v4661, 0.0
        %vm5445 = vcmp.gt.f32.partialorder %v4663, 0.0
        %vm5446 = vcmp.gt.f32.partialorder %v5014, 0.0
        %vm5447 = vcmp.gt.f32.partialorder %v5016, 0.0
        %vm5448 = vcmp.gt.f32.partialorder %v3959, 0.0
        %vm5449 = vcmp.gt.f32.partialorder %v3961, 0.0
        %vm5450 = vcmp.gt.f32.partialorder %v4312, 0.0
        %vm5451 = vcmp.gt.f32.partialorder %v4314, 0.0
        %vm5452 = vcmp.gt.f32.partialorder %v4665, 0.0
        %vm5453 = vcmp.gt.f32.partialorder %v4667, 0.0
        %vm5454 = vcmp.gt.f32.partialorder %v5018, 0.0
        %vm5455 = vcmp.gt.f32.partialorder %v5020, 0.0
        %vm5456 = vcmp.gt.f32.partialorder %v3965, 0.0
        %vm5457 = vcmp.gt.f32.partialorder %v3967, 0.0
        %vm5458 = vcmp.gt.f32.partialorder %v4318, 0.0
        %vm5459 = vcmp.gt.f32.partialorder %v4320, 0.0
        %vm5460 = vcmp.gt.f32.partialorder %v4671, 0.0
        %vm5461 = vcmp.gt.f32.partialorder %v4673, 0.0
        %vm5462 = vcmp.gt.f32.partialorder %v5024, 0.0
        %vm5463 = vcmp.gt.f32.partialorder %v5026, 0.0
        %vm5464 = vcmp.gt.f32.partialorder %v3969, 0.0
        %vm5465 = vcmp.gt.f32.partialorder %v3971, 0.0
        %vm5466 = vcmp.gt.f32.partialorder %v4322, 0.0
        %vm5467 = vcmp.gt.f32.partialorder %v4324, 0.0
        %vm5468 = vcmp.gt.f32.partialorder %v4675, 0.0
        %vm5469 = vcmp.gt.f32.partialorder %v4677, 0.0
        %vm5470 = vcmp.gt.f32.partialorder %v5028, 0.0
        %vm5471 = vcmp.gt.f32.partialorder %v5030, 0.0
        %vm5472 = vcmp.gt.f32.partialorder %v3975, 0.0
        %vm5473 = vcmp.gt.f32.partialorder %v3977, 0.0
        %vm5474 = vcmp.gt.f32.partialorder %v4328, 0.0
        %vm5475 = vcmp.gt.f32.partialorder %v4330, 0.0
        %vm5476 = vcmp.gt.f32.partialorder %v4681, 0.0
        %vm5477 = vcmp.gt.f32.partialorder %v4683, 0.0
        %vm5478 = vcmp.gt.f32.partialorder %v5034, 0.0
        %vm5479 = vcmp.gt.f32.partialorder %v5036, 0.0
        %vm5480 = vcmp.gt.f32.partialorder %v3979, 0.0
        %vm5481 = vcmp.gt.f32.partialorder %v3981, 0.0
        %vm5482 = vcmp.gt.f32.partialorder %v4332, 0.0
        %vm5483 = vcmp.gt.f32.partialorder %v4334, 0.0
        %vm5484 = vcmp.gt.f32.partialorder %v4685, 0.0
        %vm5485 = vcmp.gt.f32.partialorder %v4687, 0.0
        %vm5486 = vcmp.gt.f32.partialorder %v5038, 0.0
        %vm5487 = vcmp.gt.f32.partialorder %v5040, 0.0
        %vm5488 = vcmp.gt.f32.partialorder %v3985, 0.0
        %vm5489 = vcmp.gt.f32.partialorder %v3987, 0.0
        %vm5490 = vcmp.gt.f32.partialorder %v4338, 0.0
        %vm5491 = vcmp.gt.f32.partialorder %v4340, 0.0
        %vm5492 = vcmp.gt.f32.partialorder %v4691, 0.0
        %vm5493 = vcmp.gt.f32.partialorder %v4693, 0.0
        %vm5494 = vcmp.gt.f32.partialorder %v5044, 0.0
        %vm5495 = vcmp.gt.f32.partialorder %v5046, 0.0
        %vm5496 = vcmp.gt.f32.partialorder %v3989, 0.0
        %vm5497 = vcmp.gt.f32.partialorder %v3991, 0.0
        %vm5498 = vcmp.gt.f32.partialorder %v4342, 0.0
        %vm5499 = vcmp.gt.f32.partialorder %v4344, 0.0
        %vm5500 = vcmp.gt.f32.partialorder %v4695, 0.0
        %vm5501 = vcmp.gt.f32.partialorder %v4697, 0.0
        %vm5502 = vcmp.gt.f32.partialorder %v5048, 0.0
        %vm5503 = vcmp.gt.f32.partialorder %v5050, 0.0
        %vm5504 = vcmp.gt.f32.partialorder %v3995, 0.0
        %vm5505 = vcmp.gt.f32.partialorder %v3997, 0.0
        %vm5506 = vcmp.gt.f32.partialorder %v4348, 0.0
        %vm5507 = vcmp.gt.f32.partialorder %v4350, 0.0
        %vm5508 = vcmp.gt.f32.partialorder %v4701, 0.0
        %vm5509 = vcmp.gt.f32.partialorder %v4703, 0.0
        %vm5510 = vcmp.gt.f32.partialorder %v5054, 0.0
        %vm5511 = vcmp.gt.f32.partialorder %v5056, 0.0
        %vm5512 = vcmp.gt.f32.partialorder %v3999, 0.0
        %vm5513 = vcmp.gt.f32.partialorder %v4001, 0.0
        %vm5514 = vcmp.gt.f32.partialorder %v4352, 0.0
        %vm5515 = vcmp.gt.f32.partialorder %v4354, 0.0
        %vm5516 = vcmp.gt.f32.partialorder %v4705, 0.0
        %vm5517 = vcmp.gt.f32.partialorder %v4707, 0.0
        %vm5518 = vcmp.gt.f32.partialorder %v5058, 0.0
        %vm5519 = vcmp.gt.f32.partialorder %v5060, 0.0
        %vm5520 = vcmp.gt.f32.partialorder %v4005, 0.0
        %vm5521 = vcmp.gt.f32.partialorder %v4007, 0.0
        %vm5522 = vcmp.gt.f32.partialorder %v4358, 0.0
        %vm5523 = vcmp.gt.f32.partialorder %v4360, 0.0
        %vm5524 = vcmp.gt.f32.partialorder %v4711, 0.0
        %vm5525 = vcmp.gt.f32.partialorder %v4713, 0.0
        %vm5526 = vcmp.gt.f32.partialorder %v5064, 0.0
        %vm5527 = vcmp.gt.f32.partialorder %v5066, 0.0
        %vm5528 = vcmp.gt.f32.partialorder %v4009, 0.0
        %vm5529 = vcmp.gt.f32.partialorder %v4011, 0.0
        %vm5530 = vcmp.gt.f32.partialorder %v4362, 0.0
        %vm5531 = vcmp.gt.f32.partialorder %v4364, 0.0
        %vm5532 = vcmp.gt.f32.partialorder %v4715, 0.0
        %vm5533 = vcmp.gt.f32.partialorder %v4717, 0.0
        %vm5534 = vcmp.gt.f32.partialorder %v5068, 0.0
        %vm5535 = vcmp.gt.f32.partialorder %v5070, 0.0
        %vm5536 = vcmp.gt.f32.partialorder %v4015, 0.0
        %vm5537 = vcmp.gt.f32.partialorder %v4017, 0.0
        %vm5538 = vcmp.gt.f32.partialorder %v4368, 0.0
        %vm5539 = vcmp.gt.f32.partialorder %v4370, 0.0
        %vm5540 = vcmp.gt.f32.partialorder %v4721, 0.0
        %vm5541 = vcmp.gt.f32.partialorder %v4723, 0.0
        %vm5542 = vcmp.gt.f32.partialorder %v5074, 0.0
        %vm5543 = vcmp.gt.f32.partialorder %v5076, 0.0
        %vm5544 = vcmp.gt.f32.partialorder %v4019, 0.0
        %vm5545 = vcmp.gt.f32.partialorder %v4021, 0.0
        %vm5546 = vcmp.gt.f32.partialorder %v4372, 0.0
        %vm5547 = vcmp.gt.f32.partialorder %v4374, 0.0
        %vm5548 = vcmp.gt.f32.partialorder %v4725, 0.0
        %vm5549 = vcmp.gt.f32.partialorder %v4727, 0.0
        %vm5550 = vcmp.gt.f32.partialorder %v5078, 0.0
        %vm5551 = vcmp.gt.f32.partialorder %v5080, 0.0
        %vm5552 = vcmp.gt.f32.partialorder %v4025, 0.0
        %vm5553 = vcmp.gt.f32.partialorder %v4027, 0.0
        %vm5554 = vcmp.gt.f32.partialorder %v4378, 0.0
        %vm5555 = vcmp.gt.f32.partialorder %v4380, 0.0
        %vm5556 = vcmp.gt.f32.partialorder %v4731, 0.0
        %vm5557 = vcmp.gt.f32.partialorder %v4733, 0.0
        %vm5558 = vcmp.gt.f32.partialorder %v5084, 0.0
        %vm5559 = vcmp.gt.f32.partialorder %v5086, 0.0
        %vm5560 = vcmp.gt.f32.partialorder %v4029, 0.0
        %vm5561 = vcmp.gt.f32.partialorder %v4031, 0.0
        %vm5562 = vcmp.gt.f32.partialorder %v4382, 0.0
        %vm5563 = vcmp.gt.f32.partialorder %v4384, 0.0
        %vm5564 = vcmp.gt.f32.partialorder %v4735, 0.0
        %vm5565 = vcmp.gt.f32.partialorder %v4737, 0.0
        %vm5566 = vcmp.gt.f32.partialorder %v5088, 0.0
        %vm5567 = vcmp.gt.f32.partialorder %v5090, 0.0
        %vm5568 = vcmp.gt.f32.partialorder %v4035, 0.0
        %vm5569 = vcmp.gt.f32.partialorder %v4037, 0.0
        %vm5570 = vcmp.gt.f32.partialorder %v4388, 0.0
        %vm5571 = vcmp.gt.f32.partialorder %v4390, 0.0
        %vm5572 = vcmp.gt.f32.partialorder %v4741, 0.0
        %vm5573 = vcmp.gt.f32.partialorder %v4743, 0.0
        %vm5574 = vcmp.gt.f32.partialorder %v5094, 0.0
        %vm5575 = vcmp.gt.f32.partialorder %v5096, 0.0
        %vm5576 = vcmp.gt.f32.partialorder %v4039, 0.0
        %vm5577 = vcmp.gt.f32.partialorder %v4041, 0.0
        %vm5578 = vcmp.gt.f32.partialorder %v4392, 0.0
        %vm5579 = vcmp.gt.f32.partialorder %v4394, 0.0
        %vm5580 = vcmp.gt.f32.partialorder %v4745, 0.0
        %vm5581 = vcmp.gt.f32.partialorder %v4747, 0.0
        %vm5582 = vcmp.gt.f32.partialorder %v5098, 0.0
        %vm5583 = vcmp.gt.f32.partialorder %v5100, 0.0
        %vm5584 = vcmp.gt.f32.partialorder %v4045, 0.0
        %vm5585 = vcmp.gt.f32.partialorder %v4047, 0.0
        %vm5586 = vcmp.gt.f32.partialorder %v4398, 0.0
        %vm5587 = vcmp.gt.f32.partialorder %v4400, 0.0
        %vm5588 = vcmp.gt.f32.partialorder %v4751, 0.0
        %vm5589 = vcmp.gt.f32.partialorder %v4753, 0.0
        %vm5590 = vcmp.gt.f32.partialorder %v5104, 0.0
        %vm5591 = vcmp.gt.f32.partialorder %v5106, 0.0
        %vm5592 = vcmp.gt.f32.partialorder %v4049, 0.0
        %vm5593 = vcmp.gt.f32.partialorder %v4051, 0.0
        %vm5594 = vcmp.gt.f32.partialorder %v4402, 0.0
        %vm5595 = vcmp.gt.f32.partialorder %v4404, 0.0
        %vm5596 = vcmp.gt.f32.partialorder %v4755, 0.0
        %vm5597 = vcmp.gt.f32.partialorder %v4757, 0.0
        %vm5598 = vcmp.gt.f32.partialorder %v5108, 0.0
        %vm5599 = vcmp.gt.f32.partialorder %v5110, 0.0
        %vm5600 = vcmp.gt.f32.partialorder %v4055, 0.0
        %vm5601 = vcmp.gt.f32.partialorder %v4057, 0.0
        %vm5602 = vcmp.gt.f32.partialorder %v4408, 0.0
        %vm5603 = vcmp.gt.f32.partialorder %v4410, 0.0
        %vm5604 = vcmp.gt.f32.partialorder %v4761, 0.0
        %vm5605 = vcmp.gt.f32.partialorder %v4763, 0.0
        %vm5606 = vcmp.gt.f32.partialorder %v5114, 0.0
        %vm5607 = vcmp.gt.f32.partialorder %v5116, 0.0
        %vm5608 = vcmp.gt.f32.partialorder %v4059, 0.0
        %vm5609 = vcmp.gt.f32.partialorder %v4061, 0.0
        %vm5610 = vcmp.gt.f32.partialorder %v4412, 0.0
        %vm5611 = vcmp.gt.f32.partialorder %v4414, 0.0
        %vm5612 = vcmp.gt.f32.partialorder %v4765, 0.0
        %vm5613 = vcmp.gt.f32.partialorder %v4767, 0.0
        %vm5614 = vcmp.gt.f32.partialorder %v5118, 0.0
        %vm5615 = vcmp.gt.f32.partialorder %v5120, 0.0
        %vm5616 = vcmp.gt.f32.partialorder %v4065, 0.0
        %vm5617 = vcmp.gt.f32.partialorder %v4067, 0.0
        %vm5618 = vcmp.gt.f32.partialorder %v4418, 0.0
        %vm5619 = vcmp.gt.f32.partialorder %v4420, 0.0
        %vm5620 = vcmp.gt.f32.partialorder %v4771, 0.0
        %vm5621 = vcmp.gt.f32.partialorder %v4773, 0.0
        %vm5622 = vcmp.gt.f32.partialorder %v5124, 0.0
        %vm5623 = vcmp.gt.f32.partialorder %v5126, 0.0
        %vm5624 = vcmp.gt.f32.partialorder %v4069, 0.0
        %vm5625 = vcmp.gt.f32.partialorder %v4071, 0.0
        %vm5626 = vcmp.gt.f32.partialorder %v4422, 0.0
        %vm5627 = vcmp.gt.f32.partialorder %v4424, 0.0
        %vm5628 = vcmp.gt.f32.partialorder %v4775, 0.0
        %vm5629 = vcmp.gt.f32.partialorder %v4777, 0.0
        %vm5630 = vcmp.gt.f32.partialorder %v5128, 0.0
        %vm5631 = vcmp.gt.f32.partialorder %v5130, 0.0
        %vm5632 = vcmp.gt.f32.partialorder %v4075, 0.0
        %vm5633 = vcmp.gt.f32.partialorder %v4077, 0.0
        %vm5634 = vcmp.gt.f32.partialorder %v4428, 0.0
        %vm5635 = vcmp.gt.f32.partialorder %v4430, 0.0
        %vm5636 = vcmp.gt.f32.partialorder %v4781, 0.0
        %vm5637 = vcmp.gt.f32.partialorder %v4783, 0.0
        %vm5638 = vcmp.gt.f32.partialorder %v5134, 0.0
        %vm5639 = vcmp.gt.f32.partialorder %v5136, 0.0
        %vm5640 = vcmp.gt.f32.partialorder %v4079, 0.0
        %vm5641 = vcmp.gt.f32.partialorder %v4081, 0.0
        %vm5642 = vcmp.gt.f32.partialorder %v4432, 0.0
        %vm5643 = vcmp.gt.f32.partialorder %v4434, 0.0
        %vm5644 = vcmp.gt.f32.partialorder %v4785, 0.0
        %vm5645 = vcmp.gt.f32.partialorder %v4787, 0.0
        %vm5646 = vcmp.gt.f32.partialorder %v5138, 0.0
        %vm5647 = vcmp.gt.f32.partialorder %v5140, 0.0
        %vm5648 = vcmp.gt.f32.partialorder %v4085, 0.0
        %vm5649 = vcmp.gt.f32.partialorder %v4087, 0.0
        %vm5650 = vcmp.gt.f32.partialorder %v4438, 0.0
        %vm5651 = vcmp.gt.f32.partialorder %v4440, 0.0
        %vm5652 = vcmp.gt.f32.partialorder %v4791, 0.0
        %vm5653 = vcmp.gt.f32.partialorder %v4793, 0.0
        %vm5654 = vcmp.gt.f32.partialorder %v5144, 0.0
        %vm5655 = vcmp.gt.f32.partialorder %v5146, 0.0
        %vm5656 = vcmp.gt.f32.partialorder %v4089, 0.0
        %vm5657 = vcmp.gt.f32.partialorder %v4091, 0.0
        %vm5658 = vcmp.gt.f32.partialorder %v4442, 0.0
        %vm5659 = vcmp.gt.f32.partialorder %v4444, 0.0
        %vm5660 = vcmp.gt.f32.partialorder %v4795, 0.0
        %vm5661 = vcmp.gt.f32.partialorder %v4797, 0.0
        %vm5662 = vcmp.gt.f32.partialorder %v5148, 0.0
        %vm5663 = vcmp.gt.f32.partialorder %v5150, 0.0
        %v5664 = vmul.f32 %v3775, 0.3
        %v5665 = vmul.f32 %v3777, 0.3
        %v5666 = vmul.f32 %v4128, 0.3
        %v5667 = vmul.f32 %v4130, 0.3
        %v5668 = vmul.f32 %v4481, 0.3
        %v5669 = vmul.f32 %v4483, 0.3
        %v5670 = vmul.f32 %v4834, 0.3
        %v5671 = vmul.f32 %v4836, 0.3
        %v5672 = vmul.f32 %v3779, 0.3
        %v5673 = vmul.f32 %v3781, 0.3
        %v5674 = vmul.f32 %v4132, 0.3
        %v5675 = vmul.f32 %v4134, 0.3
        %v5676 = vmul.f32 %v4485, 0.3
        %v5677 = vmul.f32 %v4487, 0.3
        %v5678 = vmul.f32 %v4838, 0.3
        %v5679 = vmul.f32 %v4840, 0.3
        %v5680 = vmul.f32 %v3785, 0.3
        %v5681 = vmul.f32 %v3787, 0.3
        %v5682 = vmul.f32 %v4138, 0.3
        %v5683 = vmul.f32 %v4140, 0.3
        %v5684 = vmul.f32 %v4491, 0.3
        %v5685 = vmul.f32 %v4493, 0.3
        %v5686 = vmul.f32 %v4844, 0.3
        %v5687 = vmul.f32 %v4846, 0.3
        %v5688 = vmul.f32 %v3789, 0.3
        %v5689 = vmul.f32 %v3791, 0.3
        %v5690 = vmul.f32 %v4142, 0.3
        %v5691 = vmul.f32 %v4144, 0.3
        %v5692 = vmul.f32 %v4495, 0.3
        %v5693 = vmul.f32 %v4497, 0.3
        %v5694 = vmul.f32 %v4848, 0.3
        %v5695 = vmul.f32 %v4850, 0.3
        %v5696 = vmul.f32 %v3795, 0.3
        %v5697 = vmul.f32 %v3797, 0.3
        %v5698 = vmul.f32 %v4148, 0.3
        %v5699 = vmul.f32 %v4150, 0.3
        %v5700 = vmul.f32 %v4501, 0.3
        %v5701 = vmul.f32 %v4503, 0.3
        %v5702 = vmul.f32 %v4854, 0.3
        %v5703 = vmul.f32 %v4856, 0.3
        %v5704 = vmul.f32 %v3799, 0.3
        %v5705 = vmul.f32 %v3801, 0.3
        %v5706 = vmul.f32 %v4152, 0.3
        %v5707 = vmul.f32 %v4154, 0.3
        %v5708 = vmul.f32 %v4505, 0.3
        %v5709 = vmul.f32 %v4507, 0.3
        %v5710 = vmul.f32 %v4858, 0.3
        %v5711 = vmul.f32 %v4860, 0.3
        %v5712 = vmul.f32 %v3805, 0.3
        %v5713 = vmul.f32 %v3807, 0.3
        %v5714 = vmul.f32 %v4158, 0.3
        %v5715 = vmul.f32 %v4160, 0.3
        %v5716 = vmul.f32 %v4511, 0.3
        %v5717 = vmul.f32 %v4513, 0.3
        %v5718 = vmul.f32 %v4864, 0.3
        %v5719 = vmul.f32 %v4866, 0.3
        %v5720 = vmul.f32 %v3809, 0.3
        %v5721 = vmul.f32 %v3811, 0.3
        %v5722 = vmul.f32 %v4162, 0.3
        %v5723 = vmul.f32 %v4164, 0.3
        %v5724 = vmul.f32 %v4515, 0.3
        %v5725 = vmul.f32 %v4517, 0.3
        %v5726 = vmul.f32 %v4868, 0.3
        %v5727 = vmul.f32 %v4870, 0.3
        %v5728 = vmul.f32 %v3815, 0.3
        %v5729 = vmul.f32 %v3817, 0.3
        %v5730 = vmul.f32 %v4168, 0.3
        %v5731 = vmul.f32 %v4170, 0.3
        %v5732 = vmul.f32 %v4521, 0.3
        %v5733 = vmul.f32 %v4523, 0.3
        %v5734 = vmul.f32 %v4874, 0.3
        %v5735 = vmul.f32 %v4876, 0.3
        %v5736 = vmul.f32 %v3819, 0.3
        %v5737 = vmul.f32 %v3821, 0.3
        %v5738 = vmul.f32 %v4172, 0.3
        %v5739 = vmul.f32 %v4174, 0.3
        %v5740 = vmul.f32 %v4525, 0.3
        %v5741 = vmul.f32 %v4527, 0.3
        %v5742 = vmul.f32 %v4878, 0.3
        %v5743 = vmul.f32 %v4880, 0.3
        %v5744 = vmul.f32 %v3825, 0.3
        %v5745 = vmul.f32 %v3827, 0.3
        %v5746 = vmul.f32 %v4178, 0.3
        %v5747 = vmul.f32 %v4180, 0.3
        %v5748 = vmul.f32 %v4531, 0.3
        %v5749 = vmul.f32 %v4533, 0.3
        %v5750 = vmul.f32 %v4884, 0.3
        %v5751 = vmul.f32 %v4886, 0.3
        %v5752 = vmul.f32 %v3829, 0.3
        %v5753 = vmul.f32 %v3831, 0.3
        %v5754 = vmul.f32 %v4182, 0.3
        %v5755 = vmul.f32 %v4184, 0.3
        %v5756 = vmul.f32 %v4535, 0.3
        %v5757 = vmul.f32 %v4537, 0.3
        %v5758 = vmul.f32 %v4888, 0.3
        %v5759 = vmul.f32 %v4890, 0.3
        %v5760 = vmul.f32 %v3835, 0.3
        %v5761 = vmul.f32 %v3837, 0.3
        %v5762 = vmul.f32 %v4188, 0.3
        %v5763 = vmul.f32 %v4190, 0.3
        %v5764 = vmul.f32 %v4541, 0.3
        %v5765 = vmul.f32 %v4543, 0.3
        %v5766 = vmul.f32 %v4894, 0.3
        %v5767 = vmul.f32 %v4896, 0.3
        %v5768 = vmul.f32 %v3839, 0.3
        %v5769 = vmul.f32 %v3841, 0.3
        %v5770 = vmul.f32 %v4192, 0.3
        %v5771 = vmul.f32 %v4194, 0.3
        %v5772 = vmul.f32 %v4545, 0.3
        %v5773 = vmul.f32 %v4547, 0.3
        %v5774 = vmul.f32 %v4898, 0.3
        %v5775 = vmul.f32 %v4900, 0.3
        %v5776 = vmul.f32 %v3845, 0.3
        %v5777 = vmul.f32 %v3847, 0.3
        %v5778 = vmul.f32 %v4198, 0.3
        %v5779 = vmul.f32 %v4200, 0.3
        %v5780 = vmul.f32 %v4551, 0.3
        %v5781 = vmul.f32 %v4553, 0.3
        %v5782 = vmul.f32 %v4904, 0.3
        %v5783 = vmul.f32 %v4906, 0.3
        %v5784 = vmul.f32 %v3849, 0.3
        %v5785 = vmul.f32 %v3851, 0.3
        %v5786 = vmul.f32 %v4202, 0.3
        %v5787 = vmul.f32 %v4204, 0.3
        %v5788 = vmul.f32 %v4555, 0.3
        %v5789 = vmul.f32 %v4557, 0.3
        %v5790 = vmul.f32 %v4908, 0.3
        %v5791 = vmul.f32 %v4910, 0.3
        %v5792 = vmul.f32 %v3855, 0.3
        %v5793 = vmul.f32 %v3857, 0.3
        %v5794 = vmul.f32 %v4208, 0.3
        %v5795 = vmul.f32 %v4210, 0.3
        %v5796 = vmul.f32 %v4561, 0.3
        %v5797 = vmul.f32 %v4563, 0.3
        %v5798 = vmul.f32 %v4914, 0.3
        %v5799 = vmul.f32 %v4916, 0.3
        %v5800 = vmul.f32 %v3859, 0.3
        %v5801 = vmul.f32 %v3861, 0.3
        %v5802 = vmul.f32 %v4212, 0.3
        %v5803 = vmul.f32 %v4214, 0.3
        %v5804 = vmul.f32 %v4565, 0.3
        %v5805 = vmul.f32 %v4567, 0.3
        %v5806 = vmul.f32 %v4918, 0.3
        %v5807 = vmul.f32 %v4920, 0.3
        %v5808 = vmul.f32 %v3865, 0.3
        %v5809 = vmul.f32 %v3867, 0.3
        %v5810 = vmul.f32 %v4218, 0.3
        %v5811 = vmul.f32 %v4220, 0.3
        %v5812 = vmul.f32 %v4571, 0.3
        %v5813 = vmul.f32 %v4573, 0.3
        %v5814 = vmul.f32 %v4924, 0.3
        %v5815 = vmul.f32 %v4926, 0.3
        %v5816 = vmul.f32 %v3869, 0.3
        %v5817 = vmul.f32 %v3871, 0.3
        %v5818 = vmul.f32 %v4222, 0.3
        %v5819 = vmul.f32 %v4224, 0.3
        %v5820 = vmul.f32 %v4575, 0.3
        %v5821 = vmul.f32 %v4577, 0.3
        %v5822 = vmul.f32 %v4928, 0.3
        %v5823 = vmul.f32 %v4930, 0.3
        %v5824 = vmul.f32 %v3875, 0.3
        %v5825 = vmul.f32 %v3877, 0.3
        %v5826 = vmul.f32 %v4228, 0.3
        %v5827 = vmul.f32 %v4230, 0.3
        %v5828 = vmul.f32 %v4581, 0.3
        %v5829 = vmul.f32 %v4583, 0.3
        %v5830 = vmul.f32 %v4934, 0.3
        %v5831 = vmul.f32 %v4936, 0.3
        %v5832 = vmul.f32 %v3879, 0.3
        %v5833 = vmul.f32 %v3881, 0.3
        %v5834 = vmul.f32 %v4232, 0.3
        %v5835 = vmul.f32 %v4234, 0.3
        %v5836 = vmul.f32 %v4585, 0.3
        %v5837 = vmul.f32 %v4587, 0.3
        %v5838 = vmul.f32 %v4938, 0.3
        %v5839 = vmul.f32 %v4940, 0.3
        %v5840 = vmul.f32 %v3885, 0.3
        %v5841 = vmul.f32 %v3887, 0.3
        %v5842 = vmul.f32 %v4238, 0.3
        %v5843 = vmul.f32 %v4240, 0.3
        %v5844 = vmul.f32 %v4591, 0.3
        %v5845 = vmul.f32 %v4593, 0.3
        %v5846 = vmul.f32 %v4944, 0.3
        %v5847 = vmul.f32 %v4946, 0.3
        %v5848 = vmul.f32 %v3889, 0.3
        %v5849 = vmul.f32 %v3891, 0.3
        %v5850 = vmul.f32 %v4242, 0.3
        %v5851 = vmul.f32 %v4244, 0.3
        %v5852 = vmul.f32 %v4595, 0.3
        %v5853 = vmul.f32 %v4597, 0.3
        %v5854 = vmul.f32 %v4948, 0.3
        %v5855 = vmul.f32 %v4950, 0.3
        %v5856 = vmul.f32 %v3895, 0.3
        %v5857 = vmul.f32 %v3897, 0.3
        %v5858 = vmul.f32 %v4248, 0.3
        %v5859 = vmul.f32 %v4250, 0.3
        %v5860 = vmul.f32 %v4601, 0.3
        %v5861 = vmul.f32 %v4603, 0.3
        %v5862 = vmul.f32 %v4954, 0.3
        %v5863 = vmul.f32 %v4956, 0.3
        %v5864 = vmul.f32 %v3899, 0.3
        %v5865 = vmul.f32 %v3901, 0.3
        %v5866 = vmul.f32 %v4252, 0.3
        %v5867 = vmul.f32 %v4254, 0.3
        %v5868 = vmul.f32 %v4605, 0.3
        %v5869 = vmul.f32 %v4607, 0.3
        %v5870 = vmul.f32 %v4958, 0.3
        %v5871 = vmul.f32 %v4960, 0.3
        %v5872 = vmul.f32 %v3905, 0.3
        %v5873 = vmul.f32 %v3907, 0.3
        %v5874 = vmul.f32 %v4258, 0.3
        %v5875 = vmul.f32 %v4260, 0.3
        %v5876 = vmul.f32 %v4611, 0.3
        %v5877 = vmul.f32 %v4613, 0.3
        %v5878 = vmul.f32 %v4964, 0.3
        %v5879 = vmul.f32 %v4966, 0.3
        %v5880 = vmul.f32 %v3909, 0.3
        %v5881 = vmul.f32 %v3911, 0.3
        %v5882 = vmul.f32 %v4262, 0.3
        %v5883 = vmul.f32 %v4264, 0.3
        %v5884 = vmul.f32 %v4615, 0.3
        %v5885 = vmul.f32 %v4617, 0.3
        %v5886 = vmul.f32 %v4968, 0.3
        %v5887 = vmul.f32 %v4970, 0.3
        %v5888 = vmul.f32 %v3915, 0.3
        %v5889 = vmul.f32 %v3917, 0.3
        %v5890 = vmul.f32 %v4268, 0.3
        %v5891 = vmul.f32 %v4270, 0.3
        %v5892 = vmul.f32 %v4621, 0.3
        %v5893 = vmul.f32 %v4623, 0.3
        %v5894 = vmul.f32 %v4974, 0.3
        %v5895 = vmul.f32 %v4976, 0.3
        %v5896 = vmul.f32 %v3919, 0.3
        %v5897 = vmul.f32 %v3921, 0.3
        %v5898 = vmul.f32 %v4272, 0.3
        %v5899 = vmul.f32 %v4274, 0.3
        %v5900 = vmul.f32 %v4625, 0.3
        %v5901 = vmul.f32 %v4627, 0.3
        %v5902 = vmul.f32 %v4978, 0.3
        %v5903 = vmul.f32 %v4980, 0.3
        %v5904 = vmul.f32 %v3925, 0.3
        %v5905 = vmul.f32 %v3927, 0.3
        %v5906 = vmul.f32 %v4278, 0.3
        %v5907 = vmul.f32 %v4280, 0.3
        %v5908 = vmul.f32 %v4631, 0.3
        %v5909 = vmul.f32 %v4633, 0.3
        %v5910 = vmul.f32 %v4984, 0.3
        %v5911 = vmul.f32 %v4986, 0.3
        %v5912 = vmul.f32 %v3929, 0.3
        %v5913 = vmul.f32 %v3931, 0.3
        %v5914 = vmul.f32 %v4282, 0.3
        %v5915 = vmul.f32 %v4284, 0.3
        %v5916 = vmul.f32 %v4635, 0.3
        %v5917 = vmul.f32 %v4637, 0.3
        %v5918 = vmul.f32 %v4988, 0.3
        %v5919 = vmul.f32 %v4990, 0.3
        %v5920 = vmul.f32 %v3935, 0.3
        %v5921 = vmul.f32 %v3937, 0.3
        %v5922 = vmul.f32 %v4288, 0.3
        %v5923 = vmul.f32 %v4290, 0.3
        %v5924 = vmul.f32 %v4641, 0.3
        %v5925 = vmul.f32 %v4643, 0.3
        %v5926 = vmul.f32 %v4994, 0.3
        %v5927 = vmul.f32 %v4996, 0.3
        %v5928 = vmul.f32 %v3939, 0.3
        %v5929 = vmul.f32 %v3941, 0.3
        %v5930 = vmul.f32 %v4292, 0.3
        %v5931 = vmul.f32 %v4294, 0.3
        %v5932 = vmul.f32 %v4645, 0.3
        %v5933 = vmul.f32 %v4647, 0.3
        %v5934 = vmul.f32 %v4998, 0.3
        %v5935 = vmul.f32 %v5000, 0.3
        %v5936 = vmul.f32 %v3945, 0.3
        %v5937 = vmul.f32 %v3947, 0.3
        %v5938 = vmul.f32 %v4298, 0.3
        %v5939 = vmul.f32 %v4300, 0.3
        %v5940 = vmul.f32 %v4651, 0.3
        %v5941 = vmul.f32 %v4653, 0.3
        %v5942 = vmul.f32 %v5004, 0.3
        %v5943 = vmul.f32 %v5006, 0.3
        %v5944 = vmul.f32 %v3949, 0.3
        %v5945 = vmul.f32 %v3951, 0.3
        %v5946 = vmul.f32 %v4302, 0.3
        %v5947 = vmul.f32 %v4304, 0.3
        %v5948 = vmul.f32 %v4655, 0.3
        %v5949 = vmul.f32 %v4657, 0.3
        %v5950 = vmul.f32 %v5008, 0.3
        %v5951 = vmul.f32 %v5010, 0.3
        %v5952 = vmul.f32 %v3955, 0.3
        %v5953 = vmul.f32 %v3957, 0.3
        %v5954 = vmul.f32 %v4308, 0.3
        %v5955 = vmul.f32 %v4310, 0.3
        %v5956 = vmul.f32 %v4661, 0.3
        %v5957 = vmul.f32 %v4663, 0.3
        %v5958 = vmul.f32 %v5014, 0.3
        %v5959 = vmul.f32 %v5016, 0.3
        %v5960 = vmul.f32 %v3959, 0.3
        %v5961 = vmul.f32 %v3961, 0.3
        %v5962 = vmul.f32 %v4312, 0.3
        %v5963 = vmul.f32 %v4314, 0.3
        %v5964 = vmul.f32 %v4665, 0.3
        %v5965 = vmul.f32 %v4667, 0.3
        %v5966 = vmul.f32 %v5018, 0.3
        %v5967 = vmul.f32 %v5020, 0.3
        %v5968 = vmul.f32 %v3965, 0.3
        %v5969 = vmul.f32 %v3967, 0.3
        %v5970 = vmul.f32 %v4318, 0.3
        %v5971 = vmul.f32 %v4320, 0.3
        %v5972 = vmul.f32 %v4671, 0.3
        %v5973 = vmul.f32 %v4673, 0.3
        %v5974 = vmul.f32 %v5024, 0.3
        %v5975 = vmul.f32 %v5026, 0.3
        %v5976 = vmul.f32 %v3969, 0.3
        %v5977 = vmul.f32 %v3971, 0.3
        %v5978 = vmul.f32 %v4322, 0.3
        %v5979 = vmul.f32 %v4324, 0.3
        %v5980 = vmul.f32 %v4675, 0.3
        %v5981 = vmul.f32 %v4677, 0.3
        %v5982 = vmul.f32 %v5028, 0.3
        %v5983 = vmul.f32 %v5030, 0.3
        %v5984 = vmul.f32 %v3975, 0.3
        %v5985 = vmul.f32 %v3977, 0.3
        %v5986 = vmul.f32 %v4328, 0.3
        %v5987 = vmul.f32 %v4330, 0.3
        %v5988 = vmul.f32 %v4681, 0.3
        %v5989 = vmul.f32 %v4683, 0.3
        %v5990 = vmul.f32 %v5034, 0.3
        %v5991 = vmul.f32 %v5036, 0.3
        %v5992 = vmul.f32 %v3979, 0.3
        %v5993 = vmul.f32 %v3981, 0.3
        %v5994 = vmul.f32 %v4332, 0.3
        %v5995 = vmul.f32 %v4334, 0.3
        %v5996 = vmul.f32 %v4685, 0.3
        %v5997 = vmul.f32 %v4687, 0.3
        %v5998 = vmul.f32 %v5038, 0.3
        %v5999 = vmul.f32 %v5040, 0.3
        %v6000 = vmul.f32 %v3985, 0.3
        %v6001 = vmul.f32 %v3987, 0.3
        %v6002 = vmul.f32 %v4338, 0.3
        %v6003 = vmul.f32 %v4340, 0.3
        %v6004 = vmul.f32 %v4691, 0.3
        %v6005 = vmul.f32 %v4693, 0.3
        %v6006 = vmul.f32 %v5044, 0.3
        %v6007 = vmul.f32 %v5046, 0.3
        %v6008 = vmul.f32 %v3989, 0.3
        %v6009 = vmul.f32 %v3991, 0.3
        %v6010 = vmul.f32 %v4342, 0.3
        %v6011 = vmul.f32 %v4344, 0.3
        %v6012 = vmul.f32 %v4695, 0.3
        %v6013 = vmul.f32 %v4697, 0.3
        %v6014 = vmul.f32 %v5048, 0.3
        %v6015 = vmul.f32 %v5050, 0.3
        %v6016 = vmul.f32 %v3995, 0.3
        %v6017 = vmul.f32 %v3997, 0.3
        %v6018 = vmul.f32 %v4348, 0.3
        %v6019 = vmul.f32 %v4350, 0.3
        %v6020 = vmul.f32 %v4701, 0.3
        %v6021 = vmul.f32 %v4703, 0.3
        %v6022 = vmul.f32 %v5054, 0.3
        %v6023 = vmul.f32 %v5056, 0.3
        %v6024 = vmul.f32 %v3999, 0.3
        %v6025 = vmul.f32 %v4001, 0.3
        %v6026 = vmul.f32 %v4352, 0.3
        %v6027 = vmul.f32 %v4354, 0.3
        %v6028 = vmul.f32 %v4705, 0.3
        %v6029 = vmul.f32 %v4707, 0.3
        %v6030 = vmul.f32 %v5058, 0.3
        %v6031 = vmul.f32 %v5060, 0.3
        %v6032 = vmul.f32 %v4005, 0.3
        %v6033 = vmul.f32 %v4007, 0.3
        %v6034 = vmul.f32 %v4358, 0.3
        %v6035 = vmul.f32 %v4360, 0.3
        %v6036 = vmul.f32 %v4711, 0.3
        %v6037 = vmul.f32 %v4713, 0.3
        %v6038 = vmul.f32 %v5064, 0.3
        %v6039 = vmul.f32 %v5066, 0.3
        %v6040 = vmul.f32 %v4009, 0.3
        %v6041 = vmul.f32 %v4011, 0.3
        %v6042 = vmul.f32 %v4362, 0.3
        %v6043 = vmul.f32 %v4364, 0.3
        %v6044 = vmul.f32 %v4715, 0.3
        %v6045 = vmul.f32 %v4717, 0.3
        %v6046 = vmul.f32 %v5068, 0.3
        %v6047 = vmul.f32 %v5070, 0.3
        %v6048 = vmul.f32 %v4015, 0.3
        %v6049 = vmul.f32 %v4017, 0.3
        %v6050 = vmul.f32 %v4368, 0.3
        %v6051 = vmul.f32 %v4370, 0.3
        %v6052 = vmul.f32 %v4721, 0.3
        %v6053 = vmul.f32 %v4723, 0.3
        %v6054 = vmul.f32 %v5074, 0.3
        %v6055 = vmul.f32 %v5076, 0.3
        %v6056 = vmul.f32 %v4019, 0.3
        %v6057 = vmul.f32 %v4021, 0.3
        %v6058 = vmul.f32 %v4372, 0.3
        %v6059 = vmul.f32 %v4374, 0.3
        %v6060 = vmul.f32 %v4725, 0.3
        %v6061 = vmul.f32 %v4727, 0.3
        %v6062 = vmul.f32 %v5078, 0.3
        %v6063 = vmul.f32 %v5080, 0.3
        %v6064 = vmul.f32 %v4025, 0.3
        %v6065 = vmul.f32 %v4027, 0.3
        %v6066 = vmul.f32 %v4378, 0.3
        %v6067 = vmul.f32 %v4380, 0.3
        %v6068 = vmul.f32 %v4731, 0.3
        %v6069 = vmul.f32 %v4733, 0.3
        %v6070 = vmul.f32 %v5084, 0.3
        %v6071 = vmul.f32 %v5086, 0.3
        %v6072 = vmul.f32 %v4029, 0.3
        %v6073 = vmul.f32 %v4031, 0.3
        %v6074 = vmul.f32 %v4382, 0.3
        %v6075 = vmul.f32 %v4384, 0.3
        %v6076 = vmul.f32 %v4735, 0.3
        %v6077 = vmul.f32 %v4737, 0.3
        %v6078 = vmul.f32 %v5088, 0.3
        %v6079 = vmul.f32 %v5090, 0.3
        %v6080 = vmul.f32 %v4035, 0.3
        %v6081 = vmul.f32 %v4037, 0.3
        %v6082 = vmul.f32 %v4388, 0.3
        %v6083 = vmul.f32 %v4390, 0.3
        %v6084 = vmul.f32 %v4741, 0.3
        %v6085 = vmul.f32 %v4743, 0.3
        %v6086 = vmul.f32 %v5094, 0.3
        %v6087 = vmul.f32 %v5096, 0.3
        %v6088 = vmul.f32 %v4039, 0.3
        %v6089 = vmul.f32 %v4041, 0.3
        %v6090 = vmul.f32 %v4392, 0.3
        %v6091 = vmul.f32 %v4394, 0.3
        %v6092 = vmul.f32 %v4745, 0.3
        %v6093 = vmul.f32 %v4747, 0.3
        %v6094 = vmul.f32 %v5098, 0.3
        %v6095 = vmul.f32 %v5100, 0.3
        %v6096 = vmul.f32 %v4045, 0.3
        %v6097 = vmul.f32 %v4047, 0.3
        %v6098 = vmul.f32 %v4398, 0.3
        %v6099 = vmul.f32 %v4400, 0.3
        %v6100 = vmul.f32 %v4751, 0.3
        %v6101 = vmul.f32 %v4753, 0.3
        %v6102 = vmul.f32 %v5104, 0.3
        %v6103 = vmul.f32 %v5106, 0.3
        %v6104 = vmul.f32 %v4049, 0.3
        %v6105 = vmul.f32 %v4051, 0.3
        %v6106 = vmul.f32 %v4402, 0.3
        %v6107 = vmul.f32 %v4404, 0.3
        %v6108 = vmul.f32 %v4755, 0.3
        %v6109 = vmul.f32 %v4757, 0.3
        %v6110 = vmul.f32 %v5108, 0.3
        %v6111 = vmul.f32 %v5110, 0.3
        %v6112 = vmul.f32 %v4055, 0.3
        %v6113 = vmul.f32 %v4057, 0.3
        %v6114 = vmul.f32 %v4408, 0.3
        %v6115 = vmul.f32 %v4410, 0.3
        %v6116 = vmul.f32 %v4761, 0.3
        %v6117 = vmul.f32 %v4763, 0.3
        %v6118 = vmul.f32 %v5114, 0.3
        %v6119 = vmul.f32 %v5116, 0.3
        %v6120 = vmul.f32 %v4059, 0.3
        %v6121 = vmul.f32 %v4061, 0.3
        %v6122 = vmul.f32 %v4412, 0.3
        %v6123 = vmul.f32 %v4414, 0.3
        %v6124 = vmul.f32 %v4765, 0.3
        %v6125 = vmul.f32 %v4767, 0.3
        %v6126 = vmul.f32 %v5118, 0.3
        %v6127 = vmul.f32 %v5120, 0.3
        %v6128 = vmul.f32 %v4065, 0.3
        %v6129 = vmul.f32 %v4067, 0.3
        %v6130 = vmul.f32 %v4418, 0.3
        %v6131 = vmul.f32 %v4420, 0.3
        %v6132 = vmul.f32 %v4771, 0.3
        %v6133 = vmul.f32 %v4773, 0.3
        %v6134 = vmul.f32 %v5124, 0.3
        %v6135 = vmul.f32 %v5126, 0.3
        %v6136 = vmul.f32 %v4069, 0.3
        %v6137 = vmul.f32 %v4071, 0.3
        %v6138 = vmul.f32 %v4422, 0.3
        %v6139 = vmul.f32 %v4424, 0.3
        %v6140 = vmul.f32 %v4775, 0.3
        %v6141 = vmul.f32 %v4777, 0.3
        %v6142 = vmul.f32 %v5128, 0.3
        %v6143 = vmul.f32 %v5130, 0.3
        %v6144 = vmul.f32 %v4075, 0.3
        %v6145 = vmul.f32 %v4077, 0.3
        %v6146 = vmul.f32 %v4428, 0.3
        %v6147 = vmul.f32 %v4430, 0.3
        %v6148 = vmul.f32 %v4781, 0.3
        %v6149 = vmul.f32 %v4783, 0.3
        %v6150 = vmul.f32 %v5134, 0.3
        %v6151 = vmul.f32 %v5136, 0.3
        %v6152 = vmul.f32 %v4079, 0.3
        %v6153 = vmul.f32 %v4081, 0.3
        %v6154 = vmul.f32 %v4432, 0.3
        %v6155 = vmul.f32 %v4434, 0.3
        %v6156 = vmul.f32 %v4785, 0.3
        %v6157 = vmul.f32 %v4787, 0.3
        %v6158 = vmul.f32 %v5138, 0.3
        %v6159 = vmul.f32 %v5140, 0.3
        %v6160 = vmul.f32 %v4085, 0.3
        %v6161 = vmul.f32 %v4087, 0.3
        %v6162 = vmul.f32 %v4438, 0.3
        %v6163 = vmul.f32 %v4440, 0.3
        %v6164 = vmul.f32 %v4791, 0.3
        %v6165 = vmul.f32 %v4793, 0.3
        %v6166 = vmul.f32 %v5144, 0.3
        %v6167 = vmul.f32 %v5146, 0.3
        %v6168 = vmul.f32 %v4089, 0.3
        %v6169 = vmul.f32 %v4091, 0.3
        %v6170 = vmul.f32 %v4442, 0.3
        %v6171 = vmul.f32 %v4444, 0.3
        %v6172 = vmul.f32 %v4795, 0.3
        %v6173 = vmul.f32 %v4797, 0.3
        %v6174 = vmul.f32 %v5148, 0.3
        %v6175 = vmul.f32 %v5150, 0.3
        %v6176 = vsel %vm5152, %v3775, %v5664
        %v6177 = vsel %vm5153, %v3777, %v5665
        %v6178 = vsel %vm5154, %v4128, %v5666
        %v6179 = vsel %vm5155, %v4130, %v5667
        %v6180 = vsel %vm5156, %v4481, %v5668
        %v6181 = vsel %vm5157, %v4483, %v5669
        %v6182 = vsel %vm5158, %v4834, %v5670
        %v6183 = vsel %vm5159, %v4836, %v5671
        %v6184 = vsel %vm5160, %v3779, %v5672
        %v6185 = vsel %vm5161, %v3781, %v5673
        %v6186 = vsel %vm5162, %v4132, %v5674
        %v6187 = vsel %vm5163, %v4134, %v5675
        %v6188 = vsel %vm5164, %v4485, %v5676
        %v6189 = vsel %vm5165, %v4487, %v5677
        %v6190 = vsel %vm5166, %v4838, %v5678
        %v6191 = vsel %vm5167, %v4840, %v5679
        %v6192 = vsel %vm5168, %v3785, %v5680
        %v6193 = vsel %vm5169, %v3787, %v5681
        %v6194 = vsel %vm5170, %v4138, %v5682
        %v6195 = vsel %vm5171, %v4140, %v5683
        %v6196 = vsel %vm5172, %v4491, %v5684
        %v6197 = vsel %vm5173, %v4493, %v5685
        %v6198 = vsel %vm5174, %v4844, %v5686
        %v6199 = vsel %vm5175, %v4846, %v5687
        %v6200 = vsel %vm5176, %v3789, %v5688
        %v6201 = vsel %vm5177, %v3791, %v5689
        %v6202 = vsel %vm5178, %v4142, %v5690
        %v6203 = vsel %vm5179, %v4144, %v5691
        %v6204 = vsel %vm5180, %v4495, %v5692
        %v6205 = vsel %vm5181, %v4497, %v5693
        %v6206 = vsel %vm5182, %v4848, %v5694
        %v6207 = vsel %vm5183, %v4850, %v5695
        %v6208 = vsel %vm5184, %v3795, %v5696
        %v6209 = vsel %vm5185, %v3797, %v5697
        %v6210 = vsel %vm5186, %v4148, %v5698
        %v6211 = vsel %vm5187, %v4150, %v5699
        %v6212 = vsel %vm5188, %v4501, %v5700
        %v6213 = vsel %vm5189, %v4503, %v5701
        %v6214 = vsel %vm5190, %v4854, %v5702
        %v6215 = vsel %vm5191, %v4856, %v5703
        %v6216 = vsel %vm5192, %v3799, %v5704
        %v6217 = vsel %vm5193, %v3801, %v5705
        %v6218 = vsel %vm5194, %v4152, %v5706
        %v6219 = vsel %vm5195, %v4154, %v5707
        %v6220 = vsel %vm5196, %v4505, %v5708
        %v6221 = vsel %vm5197, %v4507, %v5709
        %v6222 = vsel %vm5198, %v4858, %v5710
        %v6223 = vsel %vm5199, %v4860, %v5711
        %v6224 = vsel %vm5200, %v3805, %v5712
        %v6225 = vsel %vm5201, %v3807, %v5713
        %v6226 = vsel %vm5202, %v4158, %v5714
        %v6227 = vsel %vm5203, %v4160, %v5715
        %v6228 = vsel %vm5204, %v4511, %v5716
        %v6229 = vsel %vm5205, %v4513, %v5717
        %v6230 = vsel %vm5206, %v4864, %v5718
        %v6231 = vsel %vm5207, %v4866, %v5719
        %v6232 = vsel %vm5208, %v3809, %v5720
        %v6233 = vsel %vm5209, %v3811, %v5721
        %v6234 = vsel %vm5210, %v4162, %v5722
        %v6235 = vsel %vm5211, %v4164, %v5723
        %v6236 = vsel %vm5212, %v4515, %v5724
        %v6237 = vsel %vm5213, %v4517, %v5725
        %v6238 = vsel %vm5214, %v4868, %v5726
        %v6239 = vsel %vm5215, %v4870, %v5727
        %v6240 = vsel %vm5216, %v3815, %v5728
        %v6241 = vsel %vm5217, %v3817, %v5729
        %v6242 = vsel %vm5218, %v4168, %v5730
        %v6243 = vsel %vm5219, %v4170, %v5731
        %v6244 = vsel %vm5220, %v4521, %v5732
        %v6245 = vsel %vm5221, %v4523, %v5733
        %v6246 = vsel %vm5222, %v4874, %v5734
        %v6247 = vsel %vm5223, %v4876, %v5735
        %v6248 = vsel %vm5224, %v3819, %v5736
        %v6249 = vsel %vm5225, %v3821, %v5737
        %v6250 = vsel %vm5226, %v4172, %v5738
        %v6251 = vsel %vm5227, %v4174, %v5739
        %v6252 = vsel %vm5228, %v4525, %v5740
        %v6253 = vsel %vm5229, %v4527, %v5741
        %v6254 = vsel %vm5230, %v4878, %v5742
        %v6255 = vsel %vm5231, %v4880, %v5743
        %v6256 = vsel %vm5232, %v3825, %v5744
        %v6257 = vsel %vm5233, %v3827, %v5745
        %v6258 = vsel %vm5234, %v4178, %v5746
        %v6259 = vsel %vm5235, %v4180, %v5747
        %v6260 = vsel %vm5236, %v4531, %v5748
        %v6261 = vsel %vm5237, %v4533, %v5749
        %v6262 = vsel %vm5238, %v4884, %v5750
        %v6263 = vsel %vm5239, %v4886, %v5751
        %v6264 = vsel %vm5240, %v3829, %v5752
        %v6265 = vsel %vm5241, %v3831, %v5753
        %v6266 = vsel %vm5242, %v4182, %v5754
        %v6267 = vsel %vm5243, %v4184, %v5755
        %v6268 = vsel %vm5244, %v4535, %v5756
        %v6269 = vsel %vm5245, %v4537, %v5757
        %v6270 = vsel %vm5246, %v4888, %v5758
        %v6271 = vsel %vm5247, %v4890, %v5759
        %v6272 = vsel %vm5248, %v3835, %v5760
        %v6273 = vsel %vm5249, %v3837, %v5761
        %v6274 = vsel %vm5250, %v4188, %v5762
        %v6275 = vsel %vm5251, %v4190, %v5763
        %v6276 = vsel %vm5252, %v4541, %v5764
        %v6277 = vsel %vm5253, %v4543, %v5765
        %v6278 = vsel %vm5254, %v4894, %v5766
        %v6279 = vsel %vm5255, %v4896, %v5767
        %v6280 = vsel %vm5256, %v3839, %v5768
        %v6281 = vsel %vm5257, %v3841, %v5769
        %v6282 = vsel %vm5258, %v4192, %v5770
        %v6283 = vsel %vm5259, %v4194, %v5771
        %v6284 = vsel %vm5260, %v4545, %v5772
        %v6285 = vsel %vm5261, %v4547, %v5773
        %v6286 = vsel %vm5262, %v4898, %v5774
        %v6287 = vsel %vm5263, %v4900, %v5775
        %v6288 = vsel %vm5264, %v3845, %v5776
        %v6289 = vsel %vm5265, %v3847, %v5777
        %v6290 = vsel %vm5266, %v4198, %v5778
        %v6291 = vsel %vm5267, %v4200, %v5779
        %v6292 = vsel %vm5268, %v4551, %v5780
        %v6293 = vsel %vm5269, %v4553, %v5781
        %v6294 = vsel %vm5270, %v4904, %v5782
        %v6295 = vsel %vm5271, %v4906, %v5783
        %v6296 = vsel %vm5272, %v3849, %v5784
        %v6297 = vsel %vm5273, %v3851, %v5785
        %v6298 = vsel %vm5274, %v4202, %v5786
        %v6299 = vsel %vm5275, %v4204, %v5787
        %v6300 = vsel %vm5276, %v4555, %v5788
        %v6301 = vsel %vm5277, %v4557, %v5789
        %v6302 = vsel %vm5278, %v4908, %v5790
        %v6303 = vsel %vm5279, %v4910, %v5791
        %v6304 = vsel %vm5280, %v3855, %v5792
        %v6305 = vsel %vm5281, %v3857, %v5793
        %v6306 = vsel %vm5282, %v4208, %v5794
        %v6307 = vsel %vm5283, %v4210, %v5795
        %v6308 = vsel %vm5284, %v4561, %v5796
        %v6309 = vsel %vm5285, %v4563, %v5797
        %v6310 = vsel %vm5286, %v4914, %v5798
        %v6311 = vsel %vm5287, %v4916, %v5799
        %v6312 = vsel %vm5288, %v3859, %v5800
        %v6313 = vsel %vm5289, %v3861, %v5801
        %v6314 = vsel %vm5290, %v4212, %v5802
        %v6315 = vsel %vm5291, %v4214, %v5803
        %v6316 = vsel %vm5292, %v4565, %v5804
        %v6317 = vsel %vm5293, %v4567, %v5805
        %v6318 = vsel %vm5294, %v4918, %v5806
        %v6319 = vsel %vm5295, %v4920, %v5807
        %v6320 = vsel %vm5296, %v3865, %v5808
        %v6321 = vsel %vm5297, %v3867, %v5809
        %v6322 = vsel %vm5298, %v4218, %v5810
        %v6323 = vsel %vm5299, %v4220, %v5811
        %v6324 = vsel %vm5300, %v4571, %v5812
        %v6325 = vsel %vm5301, %v4573, %v5813
        %v6326 = vsel %vm5302, %v4924, %v5814
        %v6327 = vsel %vm5303, %v4926, %v5815
        %v6328 = vsel %vm5304, %v3869, %v5816
        %v6329 = vsel %vm5305, %v3871, %v5817
        %v6330 = vsel %vm5306, %v4222, %v5818
        %v6331 = vsel %vm5307, %v4224, %v5819
        %v6332 = vsel %vm5308, %v4575, %v5820
        %v6333 = vsel %vm5309, %v4577, %v5821
        %v6334 = vsel %vm5310, %v4928, %v5822
        %v6335 = vsel %vm5311, %v4930, %v5823
        %v6336 = vsel %vm5312, %v3875, %v5824
        %v6337 = vsel %vm5313, %v3877, %v5825
        %v6338 = vsel %vm5314, %v4228, %v5826
        %v6339 = vsel %vm5315, %v4230, %v5827
        %v6340 = vsel %vm5316, %v4581, %v5828
        %v6341 = vsel %vm5317, %v4583, %v5829
        %v6342 = vsel %vm5318, %v4934, %v5830
        %v6343 = vsel %vm5319, %v4936, %v5831
        %v6344 = vsel %vm5320, %v3879, %v5832
        %v6345 = vsel %vm5321, %v3881, %v5833
        %v6346 = vsel %vm5322, %v4232, %v5834
        %v6347 = vsel %vm5323, %v4234, %v5835
        %v6348 = vsel %vm5324, %v4585, %v5836
        %v6349 = vsel %vm5325, %v4587, %v5837
        %v6350 = vsel %vm5326, %v4938, %v5838
        %v6351 = vsel %vm5327, %v4940, %v5839
        %v6352 = vsel %vm5328, %v3885, %v5840
        %v6353 = vsel %vm5329, %v3887, %v5841
        %v6354 = vsel %vm5330, %v4238, %v5842
        %v6355 = vsel %vm5331, %v4240, %v5843
        %v6356 = vsel %vm5332, %v4591, %v5844
        %v6357 = vsel %vm5333, %v4593, %v5845
        %v6358 = vsel %vm5334, %v4944, %v5846
        %v6359 = vsel %vm5335, %v4946, %v5847
        %v6360 = vsel %vm5336, %v3889, %v5848
        %v6361 = vsel %vm5337, %v3891, %v5849
        %v6362 = vsel %vm5338, %v4242, %v5850
        %v6363 = vsel %vm5339, %v4244, %v5851
        %v6364 = vsel %vm5340, %v4595, %v5852
        %v6365 = vsel %vm5341, %v4597, %v5853
        %v6366 = vsel %vm5342, %v4948, %v5854
        %v6367 = vsel %vm5343, %v4950, %v5855
        %v6368 = vsel %vm5344, %v3895, %v5856
        %v6369 = vsel %vm5345, %v3897, %v5857
        %v6370 = vsel %vm5346, %v4248, %v5858
        %v6371 = vsel %vm5347, %v4250, %v5859
        %v6372 = vsel %vm5348, %v4601, %v5860
        %v6373 = vsel %vm5349, %v4603, %v5861
        %v6374 = vsel %vm5350, %v4954, %v5862
        %v6375 = vsel %vm5351, %v4956, %v5863
        %v6376 = vsel %vm5352, %v3899, %v5864
        %v6377 = vsel %vm5353, %v3901, %v5865
        %v6378 = vsel %vm5354, %v4252, %v5866
        %v6379 = vsel %vm5355, %v4254, %v5867
        %v6380 = vsel %vm5356, %v4605, %v5868
        %v6381 = vsel %vm5357, %v4607, %v5869
        %v6382 = vsel %vm5358, %v4958, %v5870
        %v6383 = vsel %vm5359, %v4960, %v5871
        %v6384 = vsel %vm5360, %v3905, %v5872
        %v6385 = vsel %vm5361, %v3907, %v5873
        %v6386 = vsel %vm5362, %v4258, %v5874
        %v6387 = vsel %vm5363, %v4260, %v5875
        %v6388 = vsel %vm5364, %v4611, %v5876
        %v6389 = vsel %vm5365, %v4613, %v5877
        %v6390 = vsel %vm5366, %v4964, %v5878
        %v6391 = vsel %vm5367, %v4966, %v5879
        %v6392 = vsel %vm5368, %v3909, %v5880
        %v6393 = vsel %vm5369, %v3911, %v5881
        %v6394 = vsel %vm5370, %v4262, %v5882
        %v6395 = vsel %vm5371, %v4264, %v5883
        %v6396 = vsel %vm5372, %v4615, %v5884
        %v6397 = vsel %vm5373, %v4617, %v5885
        %v6398 = vsel %vm5374, %v4968, %v5886
        %v6399 = vsel %vm5375, %v4970, %v5887
        %v6400 = vsel %vm5376, %v3915, %v5888
        %v6401 = vsel %vm5377, %v3917, %v5889
        %v6402 = vsel %vm5378, %v4268, %v5890
        %v6403 = vsel %vm5379, %v4270, %v5891
        %v6404 = vsel %vm5380, %v4621, %v5892
        %v6405 = vsel %vm5381, %v4623, %v5893
        %v6406 = vsel %vm5382, %v4974, %v5894
        %v6407 = vsel %vm5383, %v4976, %v5895
        %v6408 = vsel %vm5384, %v3919, %v5896
        %v6409 = vsel %vm5385, %v3921, %v5897
        %v6410 = vsel %vm5386, %v4272, %v5898
        %v6411 = vsel %vm5387, %v4274, %v5899
        %v6412 = vsel %vm5388, %v4625, %v5900
        %v6413 = vsel %vm5389, %v4627, %v5901
        %v6414 = vsel %vm5390, %v4978, %v5902
        %v6415 = vsel %vm5391, %v4980, %v5903
        %v6416 = vsel %vm5392, %v3925, %v5904
        %v6417 = vsel %vm5393, %v3927, %v5905
        %v6418 = vsel %vm5394, %v4278, %v5906
        %v6419 = vsel %vm5395, %v4280, %v5907
        %v6420 = vsel %vm5396, %v4631, %v5908
        %v6421 = vsel %vm5397, %v4633, %v5909
        %v6422 = vsel %vm5398, %v4984, %v5910
        %v6423 = vsel %vm5399, %v4986, %v5911
        %v6424 = vsel %vm5400, %v3929, %v5912
        %v6425 = vsel %vm5401, %v3931, %v5913
        %v6426 = vsel %vm5402, %v4282, %v5914
        %v6427 = vsel %vm5403, %v4284, %v5915
        %v6428 = vsel %vm5404, %v4635, %v5916
        %v6429 = vsel %vm5405, %v4637, %v5917
        %v6430 = vsel %vm5406, %v4988, %v5918
        %v6431 = vsel %vm5407, %v4990, %v5919
        %v6432 = vsel %vm5408, %v3935, %v5920
        %v6433 = vsel %vm5409, %v3937, %v5921
        %v6434 = vsel %vm5410, %v4288, %v5922
        %v6435 = vsel %vm5411, %v4290, %v5923
        %v6436 = vsel %vm5412, %v4641, %v5924
        %v6437 = vsel %vm5413, %v4643, %v5925
        %v6438 = vsel %vm5414, %v4994, %v5926
        %v6439 = vsel %vm5415, %v4996, %v5927
        %v6440 = vsel %vm5416, %v3939, %v5928
        %v6441 = vsel %vm5417, %v3941, %v5929
        %v6442 = vsel %vm5418, %v4292, %v5930
        %v6443 = vsel %vm5419, %v4294, %v5931
        %v6444 = vsel %vm5420, %v4645, %v5932
        %v6445 = vsel %vm5421, %v4647, %v5933
        %v6446 = vsel %vm5422, %v4998, %v5934
        %v6447 = vsel %vm5423, %v5000, %v5935
        %v6448 = vsel %vm5424, %v3945, %v5936
        %v6449 = vsel %vm5425, %v3947, %v5937
        %v6450 = vsel %vm5426, %v4298, %v5938
        %v6451 = vsel %vm5427, %v4300, %v5939
        %v6452 = vsel %vm5428, %v4651, %v5940
        %v6453 = vsel %vm5429, %v4653, %v5941
        %v6454 = vsel %vm5430, %v5004, %v5942
        %v6455 = vsel %vm5431, %v5006, %v5943
        %v6456 = vsel %vm5432, %v3949, %v5944
        %v6457 = vsel %vm5433, %v3951, %v5945
        %v6458 = vsel %vm5434, %v4302, %v5946
        %v6459 = vsel %vm5435, %v4304, %v5947
        %v6460 = vsel %vm5436, %v4655, %v5948
        %v6461 = vsel %vm5437, %v4657, %v5949
        %v6462 = vsel %vm5438, %v5008, %v5950
        %v6463 = vsel %vm5439, %v5010, %v5951
        %v6464 = vsel %vm5440, %v3955, %v5952
        %v6465 = vsel %vm5441, %v3957, %v5953
        %v6466 = vsel %vm5442, %v4308, %v5954
        %v6467 = vsel %vm5443, %v4310, %v5955
        %v6468 = vsel %vm5444, %v4661, %v5956
        %v6469 = vsel %vm5445, %v4663, %v5957
        %v6470 = vsel %vm5446, %v5014, %v5958
        %v6471 = vsel %vm5447, %v5016, %v5959
        %v6472 = vsel %vm5448, %v3959, %v5960
        %v6473 = vsel %vm5449, %v3961, %v5961
        %v6474 = vsel %vm5450, %v4312, %v5962
        %v6475 = vsel %vm5451, %v4314, %v5963
        %v6476 = vsel %vm5452, %v4665, %v5964
        %v6477 = vsel %vm5453, %v4667, %v5965
        %v6478 = vsel %vm5454, %v5018, %v5966
        %v6479 = vsel %vm5455, %v5020, %v5967
        %v6480 = vsel %vm5456, %v3965, %v5968
        %v6481 = vsel %vm5457, %v3967, %v5969
        %v6482 = vsel %vm5458, %v4318, %v5970
        %v6483 = vsel %vm5459, %v4320, %v5971
        %v6484 = vsel %vm5460, %v4671, %v5972
        %v6485 = vsel %vm5461, %v4673, %v5973
        %v6486 = vsel %vm5462, %v5024, %v5974
        %v6487 = vsel %vm5463, %v5026, %v5975
        %v6488 = vsel %vm5464, %v3969, %v5976
        %v6489 = vsel %vm5465, %v3971, %v5977
        %v6490 = vsel %vm5466, %v4322, %v5978
        %v6491 = vsel %vm5467, %v4324, %v5979
        %v6492 = vsel %vm5468, %v4675, %v5980
        %v6493 = vsel %vm5469, %v4677, %v5981
        %v6494 = vsel %vm5470, %v5028, %v5982
        %v6495 = vsel %vm5471, %v5030, %v5983
        %v6496 = vsel %vm5472, %v3975, %v5984
        %v6497 = vsel %vm5473, %v3977, %v5985
        %v6498 = vsel %vm5474, %v4328, %v5986
        %v6499 = vsel %vm5475, %v4330, %v5987
        %v6500 = vsel %vm5476, %v4681, %v5988
        %v6501 = vsel %vm5477, %v4683, %v5989
        %v6502 = vsel %vm5478, %v5034, %v5990
        %v6503 = vsel %vm5479, %v5036, %v5991
        %v6504 = vsel %vm5480, %v3979, %v5992
        %v6505 = vsel %vm5481, %v3981, %v5993
        %v6506 = vsel %vm5482, %v4332, %v5994
        %v6507 = vsel %vm5483, %v4334, %v5995
        %v6508 = vsel %vm5484, %v4685, %v5996
        %v6509 = vsel %vm5485, %v4687, %v5997
        %v6510 = vsel %vm5486, %v5038, %v5998
        %v6511 = vsel %vm5487, %v5040, %v5999
        %v6512 = vsel %vm5488, %v3985, %v6000
        %v6513 = vsel %vm5489, %v3987, %v6001
        %v6514 = vsel %vm5490, %v4338, %v6002
        %v6515 = vsel %vm5491, %v4340, %v6003
        %v6516 = vsel %vm5492, %v4691, %v6004
        %v6517 = vsel %vm5493, %v4693, %v6005
        %v6518 = vsel %vm5494, %v5044, %v6006
        %v6519 = vsel %vm5495, %v5046, %v6007
        %v6520 = vsel %vm5496, %v3989, %v6008
        %v6521 = vsel %vm5497, %v3991, %v6009
        %v6522 = vsel %vm5498, %v4342, %v6010
        %v6523 = vsel %vm5499, %v4344, %v6011
        %v6524 = vsel %vm5500, %v4695, %v6012
        %v6525 = vsel %vm5501, %v4697, %v6013
        %v6526 = vsel %vm5502, %v5048, %v6014
        %v6527 = vsel %vm5503, %v5050, %v6015
        %v6528 = vsel %vm5504, %v3995, %v6016
        %v6529 = vsel %vm5505, %v3997, %v6017
        %v6530 = vsel %vm5506, %v4348, %v6018
        %v6531 = vsel %vm5507, %v4350, %v6019
        %v6532 = vsel %vm5508, %v4701, %v6020
        %v6533 = vsel %vm5509, %v4703, %v6021
        %v6534 = vsel %vm5510, %v5054, %v6022
        %v6535 = vsel %vm5511, %v5056, %v6023
        %v6536 = vsel %vm5512, %v3999, %v6024
        %v6537 = vsel %vm5513, %v4001, %v6025
        %v6538 = vsel %vm5514, %v4352, %v6026
        %v6539 = vsel %vm5515, %v4354, %v6027
        %v6540 = vsel %vm5516, %v4705, %v6028
        %v6541 = vsel %vm5517, %v4707, %v6029
        %v6542 = vsel %vm5518, %v5058, %v6030
        %v6543 = vsel %vm5519, %v5060, %v6031
        %v6544 = vsel %vm5520, %v4005, %v6032
        %v6545 = vsel %vm5521, %v4007, %v6033
        %v6546 = vsel %vm5522, %v4358, %v6034
        %v6547 = vsel %vm5523, %v4360, %v6035
        %v6548 = vsel %vm5524, %v4711, %v6036
        %v6549 = vsel %vm5525, %v4713, %v6037
        %v6550 = vsel %vm5526, %v5064, %v6038
        %v6551 = vsel %vm5527, %v5066, %v6039
        %v6552 = vsel %vm5528, %v4009, %v6040
        %v6553 = vsel %vm5529, %v4011, %v6041
        %v6554 = vsel %vm5530, %v4362, %v6042
        %v6555 = vsel %vm5531, %v4364, %v6043
        %v6556 = vsel %vm5532, %v4715, %v6044
        %v6557 = vsel %vm5533, %v4717, %v6045
        %v6558 = vsel %vm5534, %v5068, %v6046
        %v6559 = vsel %vm5535, %v5070, %v6047
        %v6560 = vsel %vm5536, %v4015, %v6048
        %v6561 = vsel %vm5537, %v4017, %v6049
        %v6562 = vsel %vm5538, %v4368, %v6050
        %v6563 = vsel %vm5539, %v4370, %v6051
        %v6564 = vsel %vm5540, %v4721, %v6052
        %v6565 = vsel %vm5541, %v4723, %v6053
        %v6566 = vsel %vm5542, %v5074, %v6054
        %v6567 = vsel %vm5543, %v5076, %v6055
        %v6568 = vsel %vm5544, %v4019, %v6056
        %v6569 = vsel %vm5545, %v4021, %v6057
        %v6570 = vsel %vm5546, %v4372, %v6058
        %v6571 = vsel %vm5547, %v4374, %v6059
        %v6572 = vsel %vm5548, %v4725, %v6060
        %v6573 = vsel %vm5549, %v4727, %v6061
        %v6574 = vsel %vm5550, %v5078, %v6062
        %v6575 = vsel %vm5551, %v5080, %v6063
        %v6576 = vsel %vm5552, %v4025, %v6064
        %v6577 = vsel %vm5553, %v4027, %v6065
        %v6578 = vsel %vm5554, %v4378, %v6066
        %v6579 = vsel %vm5555, %v4380, %v6067
        %v6580 = vsel %vm5556, %v4731, %v6068
        %v6581 = vsel %vm5557, %v4733, %v6069
        %v6582 = vsel %vm5558, %v5084, %v6070
        %v6583 = vsel %vm5559, %v5086, %v6071
        %v6584 = vsel %vm5560, %v4029, %v6072
        %v6585 = vsel %vm5561, %v4031, %v6073
        %v6586 = vsel %vm5562, %v4382, %v6074
        %v6587 = vsel %vm5563, %v4384, %v6075
        %v6588 = vsel %vm5564, %v4735, %v6076
        %v6589 = vsel %vm5565, %v4737, %v6077
        %v6590 = vsel %vm5566, %v5088, %v6078
        %v6591 = vsel %vm5567, %v5090, %v6079
        %v6592 = vsel %vm5568, %v4035, %v6080
        %v6593 = vsel %vm5569, %v4037, %v6081
        %v6594 = vsel %vm5570, %v4388, %v6082
        %v6595 = vsel %vm5571, %v4390, %v6083
        %v6596 = vsel %vm5572, %v4741, %v6084
        %v6597 = vsel %vm5573, %v4743, %v6085
        %v6598 = vsel %vm5574, %v5094, %v6086
        %v6599 = vsel %vm5575, %v5096, %v6087
        %v6600 = vsel %vm5576, %v4039, %v6088
        %v6601 = vsel %vm5577, %v4041, %v6089
        %v6602 = vsel %vm5578, %v4392, %v6090
        %v6603 = vsel %vm5579, %v4394, %v6091
        %v6604 = vsel %vm5580, %v4745, %v6092
        %v6605 = vsel %vm5581, %v4747, %v6093
        %v6606 = vsel %vm5582, %v5098, %v6094
        %v6607 = vsel %vm5583, %v5100, %v6095
        %v6608 = vsel %vm5584, %v4045, %v6096
        %v6609 = vsel %vm5585, %v4047, %v6097
        %v6610 = vsel %vm5586, %v4398, %v6098
        %v6611 = vsel %vm5587, %v4400, %v6099
        %v6612 = vsel %vm5588, %v4751, %v6100
        %v6613 = vsel %vm5589, %v4753, %v6101
        %v6614 = vsel %vm5590, %v5104, %v6102
        %v6615 = vsel %vm5591, %v5106, %v6103
        %v6616 = vsel %vm5592, %v4049, %v6104
        %v6617 = vsel %vm5593, %v4051, %v6105
        %v6618 = vsel %vm5594, %v4402, %v6106
        %v6619 = vsel %vm5595, %v4404, %v6107
        %v6620 = vsel %vm5596, %v4755, %v6108
        %v6621 = vsel %vm5597, %v4757, %v6109
        %v6622 = vsel %vm5598, %v5108, %v6110
        %v6623 = vsel %vm5599, %v5110, %v6111
        %v6624 = vsel %vm5600, %v4055, %v6112
        %v6625 = vsel %vm5601, %v4057, %v6113
        %v6626 = vsel %vm5602, %v4408, %v6114
        %v6627 = vsel %vm5603, %v4410, %v6115
        %v6628 = vsel %vm5604, %v4761, %v6116
        %v6629 = vsel %vm5605, %v4763, %v6117
        %v6630 = vsel %vm5606, %v5114, %v6118
        %v6631 = vsel %vm5607, %v5116, %v6119
        %v6632 = vsel %vm5608, %v4059, %v6120
        %v6633 = vsel %vm5609, %v4061, %v6121
        %v6634 = vsel %vm5610, %v4412, %v6122
        %v6635 = vsel %vm5611, %v4414, %v6123
        %v6636 = vsel %vm5612, %v4765, %v6124
        %v6637 = vsel %vm5613, %v4767, %v6125
        %v6638 = vsel %vm5614, %v5118, %v6126
        %v6639 = vsel %vm5615, %v5120, %v6127
        %v6640 = vsel %vm5616, %v4065, %v6128
        %v6641 = vsel %vm5617, %v4067, %v6129
        %v6642 = vsel %vm5618, %v4418, %v6130
        %v6643 = vsel %vm5619, %v4420, %v6131
        %v6644 = vsel %vm5620, %v4771, %v6132
        %v6645 = vsel %vm5621, %v4773, %v6133
        %v6646 = vsel %vm5622, %v5124, %v6134
        %v6647 = vsel %vm5623, %v5126, %v6135
        %v6648 = vsel %vm5624, %v4069, %v6136
        %v6649 = vsel %vm5625, %v4071, %v6137
        %v6650 = vsel %vm5626, %v4422, %v6138
        %v6651 = vsel %vm5627, %v4424, %v6139
        %v6652 = vsel %vm5628, %v4775, %v6140
        %v6653 = vsel %vm5629, %v4777, %v6141
        %v6654 = vsel %vm5630, %v5128, %v6142
        %v6655 = vsel %vm5631, %v5130, %v6143
        %v6656 = vsel %vm5632, %v4075, %v6144
        %v6657 = vsel %vm5633, %v4077, %v6145
        %v6658 = vsel %vm5634, %v4428, %v6146
        %v6659 = vsel %vm5635, %v4430, %v6147
        %v6660 = vsel %vm5636, %v4781, %v6148
        %v6661 = vsel %vm5637, %v4783, %v6149
        %v6662 = vsel %vm5638, %v5134, %v6150
        %v6663 = vsel %vm5639, %v5136, %v6151
        %v6664 = vsel %vm5640, %v4079, %v6152
        %v6665 = vsel %vm5641, %v4081, %v6153
        %v6666 = vsel %vm5642, %v4432, %v6154
        %v6667 = vsel %vm5643, %v4434, %v6155
        %v6668 = vsel %vm5644, %v4785, %v6156
        %v6669 = vsel %vm5645, %v4787, %v6157
        %v6670 = vsel %vm5646, %v5138, %v6158
        %v6671 = vsel %vm5647, %v5140, %v6159
        %v6672 = vsel %vm5648, %v4085, %v6160
        %v6673 = vsel %vm5649, %v4087, %v6161
        %v6674 = vsel %vm5650, %v4438, %v6162
        %v6675 = vsel %vm5651, %v4440, %v6163
        %v6676 = vsel %vm5652, %v4791, %v6164
        %v6677 = vsel %vm5653, %v4793, %v6165
        %v6678 = vsel %vm5654, %v5144, %v6166
        %v6679 = vsel %vm5655, %v5146, %v6167
        %v6680 = vsel %vm5656, %v4089, %v6168
        %v6681 = vsel %vm5657, %v4091, %v6169
        %v6682 = vsel %vm5658, %v4442, %v6170
        %v6683 = vsel %vm5659, %v4444, %v6171
        %v6684 = vsel %vm5660, %v4795, %v6172
        %v6685 = vsel %vm5661, %v4797, %v6173
        %v6686 = vsel %vm5662, %v5148, %v6174
        %v6687 = vsel %vm5663, %v5150, %v6175
        %v6688 = vpack.c.bf16 %v6184, %v6176
        %v6689 = vpack.c.bf16 %v6185, %v6177
        %v6690 = vpack.c.bf16 %v6186, %v6178
        %v6691 = vpack.c.bf16 %v6187, %v6179
        %v6692 = vpack.c.bf16 %v6188, %v6180
        %v6693 = vpack.c.bf16 %v6189, %v6181
        %v6694 = vpack.c.bf16 %v6190, %v6182
        %v6695 = vpack.c.bf16 %v6191, %v6183
        %v6696 = vpack.c.bf16 %v6200, %v6192
        %v6697 = vpack.c.bf16 %v6201, %v6193
        %v6698 = vpack.c.bf16 %v6202, %v6194
        %v6699 = vpack.c.bf16 %v6203, %v6195
        %v6700 = vpack.c.bf16 %v6204, %v6196
        %v6701 = vpack.c.bf16 %v6205, %v6197
        %v6702 = vpack.c.bf16 %v6206, %v6198
        %v6703 = vpack.c.bf16 %v6207, %v6199
        %v6704 = vpack.c.bf16 %v6216, %v6208
        %v6705 = vpack.c.bf16 %v6217, %v6209
        %v6706 = vpack.c.bf16 %v6218, %v6210
        %v6707 = vpack.c.bf16 %v6219, %v6211
        %v6708 = vpack.c.bf16 %v6220, %v6212
        %v6709 = vpack.c.bf16 %v6221, %v6213
        %v6710 = vpack.c.bf16 %v6222, %v6214
        %v6711 = vpack.c.bf16 %v6223, %v6215
        %v6712 = vpack.c.bf16 %v6232, %v6224
        %v6713 = vpack.c.bf16 %v6233, %v6225
        %v6714 = vpack.c.bf16 %v6234, %v6226
        %v6715 = vpack.c.bf16 %v6235, %v6227
        %v6716 = vpack.c.bf16 %v6236, %v6228
        %v6717 = vpack.c.bf16 %v6237, %v6229
        %v6718 = vpack.c.bf16 %v6238, %v6230
        %v6719 = vpack.c.bf16 %v6239, %v6231
        %v6720 = vpack.c.bf16 %v6248, %v6240
        %v6721 = vpack.c.bf16 %v6249, %v6241
        %v6722 = vpack.c.bf16 %v6250, %v6242
        %v6723 = vpack.c.bf16 %v6251, %v6243
        %v6724 = vpack.c.bf16 %v6252, %v6244
        %v6725 = vpack.c.bf16 %v6253, %v6245
        %v6726 = vpack.c.bf16 %v6254, %v6246
        %v6727 = vpack.c.bf16 %v6255, %v6247
        %v6728 = vpack.c.bf16 %v6264, %v6256
        %v6729 = vpack.c.bf16 %v6265, %v6257
        %v6730 = vpack.c.bf16 %v6266, %v6258
        %v6731 = vpack.c.bf16 %v6267, %v6259
        %v6732 = vpack.c.bf16 %v6268, %v6260
        %v6733 = vpack.c.bf16 %v6269, %v6261
        %v6734 = vpack.c.bf16 %v6270, %v6262
        %v6735 = vpack.c.bf16 %v6271, %v6263
        %v6736 = vpack.c.bf16 %v6280, %v6272
        %v6737 = vpack.c.bf16 %v6281, %v6273
        %v6738 = vpack.c.bf16 %v6282, %v6274
        %v6739 = vpack.c.bf16 %v6283, %v6275
        %v6740 = vpack.c.bf16 %v6284, %v6276
        %v6741 = vpack.c.bf16 %v6285, %v6277
        %v6742 = vpack.c.bf16 %v6286, %v6278
        %v6743 = vpack.c.bf16 %v6287, %v6279
        %v6744 = vpack.c.bf16 %v6296, %v6288
        %v6745 = vpack.c.bf16 %v6297, %v6289
        %v6746 = vpack.c.bf16 %v6298, %v6290
        %v6747 = vpack.c.bf16 %v6299, %v6291
        %v6748 = vpack.c.bf16 %v6300, %v6292
        %v6749 = vpack.c.bf16 %v6301, %v6293
        %v6750 = vpack.c.bf16 %v6302, %v6294
        %v6751 = vpack.c.bf16 %v6303, %v6295
        %v6752 = vpack.c.bf16 %v6312, %v6304
        %v6753 = vpack.c.bf16 %v6313, %v6305
        %v6754 = vpack.c.bf16 %v6314, %v6306
        %v6755 = vpack.c.bf16 %v6315, %v6307
        %v6756 = vpack.c.bf16 %v6316, %v6308
        %v6757 = vpack.c.bf16 %v6317, %v6309
        %v6758 = vpack.c.bf16 %v6318, %v6310
        %v6759 = vpack.c.bf16 %v6319, %v6311
        %v6760 = vpack.c.bf16 %v6328, %v6320
        %v6761 = vpack.c.bf16 %v6329, %v6321
        %v6762 = vpack.c.bf16 %v6330, %v6322
        %v6763 = vpack.c.bf16 %v6331, %v6323
        %v6764 = vpack.c.bf16 %v6332, %v6324
        %v6765 = vpack.c.bf16 %v6333, %v6325
        %v6766 = vpack.c.bf16 %v6334, %v6326
        %v6767 = vpack.c.bf16 %v6335, %v6327
        %v6768 = vpack.c.bf16 %v6344, %v6336
        %v6769 = vpack.c.bf16 %v6345, %v6337
        %v6770 = vpack.c.bf16 %v6346, %v6338
        %v6771 = vpack.c.bf16 %v6347, %v6339
        %v6772 = vpack.c.bf16 %v6348, %v6340
        %v6773 = vpack.c.bf16 %v6349, %v6341
        %v6774 = vpack.c.bf16 %v6350, %v6342
        %v6775 = vpack.c.bf16 %v6351, %v6343
        %v6776 = vpack.c.bf16 %v6360, %v6352
        %v6777 = vpack.c.bf16 %v6361, %v6353
        %v6778 = vpack.c.bf16 %v6362, %v6354
        %v6779 = vpack.c.bf16 %v6363, %v6355
        %v6780 = vpack.c.bf16 %v6364, %v6356
        %v6781 = vpack.c.bf16 %v6365, %v6357
        %v6782 = vpack.c.bf16 %v6366, %v6358
        %v6783 = vpack.c.bf16 %v6367, %v6359
        %v6784 = vpack.c.bf16 %v6376, %v6368
        %v6785 = vpack.c.bf16 %v6377, %v6369
        %v6786 = vpack.c.bf16 %v6378, %v6370
        %v6787 = vpack.c.bf16 %v6379, %v6371
        %v6788 = vpack.c.bf16 %v6380, %v6372
        %v6789 = vpack.c.bf16 %v6381, %v6373
        %v6790 = vpack.c.bf16 %v6382, %v6374
        %v6791 = vpack.c.bf16 %v6383, %v6375
        %v6792 = vpack.c.bf16 %v6392, %v6384
        %v6793 = vpack.c.bf16 %v6393, %v6385
        %v6794 = vpack.c.bf16 %v6394, %v6386
        %v6795 = vpack.c.bf16 %v6395, %v6387
        %v6796 = vpack.c.bf16 %v6396, %v6388
        %v6797 = vpack.c.bf16 %v6397, %v6389
        %v6798 = vpack.c.bf16 %v6398, %v6390
        %v6799 = vpack.c.bf16 %v6399, %v6391
        %v6800 = vpack.c.bf16 %v6408, %v6400
        %v6801 = vpack.c.bf16 %v6409, %v6401
        %v6802 = vpack.c.bf16 %v6410, %v6402
        %v6803 = vpack.c.bf16 %v6411, %v6403
        %v6804 = vpack.c.bf16 %v6412, %v6404
        %v6805 = vpack.c.bf16 %v6413, %v6405
        %v6806 = vpack.c.bf16 %v6414, %v6406
        %v6807 = vpack.c.bf16 %v6415, %v6407
        %v6808 = vpack.c.bf16 %v6424, %v6416
        %v6809 = vpack.c.bf16 %v6425, %v6417
        %v6810 = vpack.c.bf16 %v6426, %v6418
        %v6811 = vpack.c.bf16 %v6427, %v6419
        %v6812 = vpack.c.bf16 %v6428, %v6420
        %v6813 = vpack.c.bf16 %v6429, %v6421
        %v6814 = vpack.c.bf16 %v6430, %v6422
        %v6815 = vpack.c.bf16 %v6431, %v6423
        %v6816 = vpack.c.bf16 %v6440, %v6432
        %v6817 = vpack.c.bf16 %v6441, %v6433
        %v6818 = vpack.c.bf16 %v6442, %v6434
        %v6819 = vpack.c.bf16 %v6443, %v6435
        %v6820 = vpack.c.bf16 %v6444, %v6436
        %v6821 = vpack.c.bf16 %v6445, %v6437
        %v6822 = vpack.c.bf16 %v6446, %v6438
        %v6823 = vpack.c.bf16 %v6447, %v6439
        %v6824 = vpack.c.bf16 %v6456, %v6448
        %v6825 = vpack.c.bf16 %v6457, %v6449
        %v6826 = vpack.c.bf16 %v6458, %v6450
        %v6827 = vpack.c.bf16 %v6459, %v6451
        %v6828 = vpack.c.bf16 %v6460, %v6452
        %v6829 = vpack.c.bf16 %v6461, %v6453
        %v6830 = vpack.c.bf16 %v6462, %v6454
        %v6831 = vpack.c.bf16 %v6463, %v6455
        %v6832 = vpack.c.bf16 %v6472, %v6464
        %v6833 = vpack.c.bf16 %v6473, %v6465
        %v6834 = vpack.c.bf16 %v6474, %v6466
        %v6835 = vpack.c.bf16 %v6475, %v6467
        %v6836 = vpack.c.bf16 %v6476, %v6468
        %v6837 = vpack.c.bf16 %v6477, %v6469
        %v6838 = vpack.c.bf16 %v6478, %v6470
        %v6839 = vpack.c.bf16 %v6479, %v6471
        %v6840 = vpack.c.bf16 %v6488, %v6480
        %v6841 = vpack.c.bf16 %v6489, %v6481
        %v6842 = vpack.c.bf16 %v6490, %v6482
        %v6843 = vpack.c.bf16 %v6491, %v6483
        %v6844 = vpack.c.bf16 %v6492, %v6484
        %v6845 = vpack.c.bf16 %v6493, %v6485
        %v6846 = vpack.c.bf16 %v6494, %v6486
        %v6847 = vpack.c.bf16 %v6495, %v6487
        %v6848 = vpack.c.bf16 %v6504, %v6496
        %v6849 = vpack.c.bf16 %v6505, %v6497
        %v6850 = vpack.c.bf16 %v6506, %v6498
        %v6851 = vpack.c.bf16 %v6507, %v6499
        %v6852 = vpack.c.bf16 %v6508, %v6500
        %v6853 = vpack.c.bf16 %v6509, %v6501
        %v6854 = vpack.c.bf16 %v6510, %v6502
        %v6855 = vpack.c.bf16 %v6511, %v6503
        %v6856 = vpack.c.bf16 %v6520, %v6512
        %v6857 = vpack.c.bf16 %v6521, %v6513
        %v6858 = vpack.c.bf16 %v6522, %v6514
        %v6859 = vpack.c.bf16 %v6523, %v6515
        %v6860 = vpack.c.bf16 %v6524, %v6516
        %v6861 = vpack.c.bf16 %v6525, %v6517
        %v6862 = vpack.c.bf16 %v6526, %v6518
        %v6863 = vpack.c.bf16 %v6527, %v6519
        %v6864 = vpack.c.bf16 %v6536, %v6528
        %v6865 = vpack.c.bf16 %v6537, %v6529
        %v6866 = vpack.c.bf16 %v6538, %v6530
        %v6867 = vpack.c.bf16 %v6539, %v6531
        %v6868 = vpack.c.bf16 %v6540, %v6532
        %v6869 = vpack.c.bf16 %v6541, %v6533
        %v6870 = vpack.c.bf16 %v6542, %v6534
        %v6871 = vpack.c.bf16 %v6543, %v6535
        %v6872 = vpack.c.bf16 %v6552, %v6544
        %v6873 = vpack.c.bf16 %v6553, %v6545
        %v6874 = vpack.c.bf16 %v6554, %v6546
        %v6875 = vpack.c.bf16 %v6555, %v6547
        %v6876 = vpack.c.bf16 %v6556, %v6548
        %v6877 = vpack.c.bf16 %v6557, %v6549
        %v6878 = vpack.c.bf16 %v6558, %v6550
        %v6879 = vpack.c.bf16 %v6559, %v6551
        %v6880 = vpack.c.bf16 %v6568, %v6560
        %v6881 = vpack.c.bf16 %v6569, %v6561
        %v6882 = vpack.c.bf16 %v6570, %v6562
        %v6883 = vpack.c.bf16 %v6571, %v6563
        %v6884 = vpack.c.bf16 %v6572, %v6564
        %v6885 = vpack.c.bf16 %v6573, %v6565
        %v6886 = vpack.c.bf16 %v6574, %v6566
        %v6887 = vpack.c.bf16 %v6575, %v6567
        %v6888 = vpack.c.bf16 %v6584, %v6576
        %v6889 = vpack.c.bf16 %v6585, %v6577
        %v6890 = vpack.c.bf16 %v6586, %v6578
        %v6891 = vpack.c.bf16 %v6587, %v6579
        %v6892 = vpack.c.bf16 %v6588, %v6580
        %v6893 = vpack.c.bf16 %v6589, %v6581
        %v6894 = vpack.c.bf16 %v6590, %v6582
        %v6895 = vpack.c.bf16 %v6591, %v6583
        %v6896 = vpack.c.bf16 %v6600, %v6592
        %v6897 = vpack.c.bf16 %v6601, %v6593
        %v6898 = vpack.c.bf16 %v6602, %v6594
        %v6899 = vpack.c.bf16 %v6603, %v6595
        %v6900 = vpack.c.bf16 %v6604, %v6596
        %v6901 = vpack.c.bf16 %v6605, %v6597
        %v6902 = vpack.c.bf16 %v6606, %v6598
        %v6903 = vpack.c.bf16 %v6607, %v6599
        %v6904 = vpack.c.bf16 %v6616, %v6608
        %v6905 = vpack.c.bf16 %v6617, %v6609
        %v6906 = vpack.c.bf16 %v6618, %v6610
        %v6907 = vpack.c.bf16 %v6619, %v6611
        %v6908 = vpack.c.bf16 %v6620, %v6612
        %v6909 = vpack.c.bf16 %v6621, %v6613
        %v6910 = vpack.c.bf16 %v6622, %v6614
        %v6911 = vpack.c.bf16 %v6623, %v6615
        %v6912 = vpack.c.bf16 %v6632, %v6624
        %v6913 = vpack.c.bf16 %v6633, %v6625
        %v6914 = vpack.c.bf16 %v6634, %v6626
        %v6915 = vpack.c.bf16 %v6635, %v6627
        %v6916 = vpack.c.bf16 %v6636, %v6628
        %v6917 = vpack.c.bf16 %v6637, %v6629
        %v6918 = vpack.c.bf16 %v6638, %v6630
        %v6919 = vpack.c.bf16 %v6639, %v6631
        %v6920 = vpack.c.bf16 %v6648, %v6640
        %v6921 = vpack.c.bf16 %v6649, %v6641
        %v6922 = vpack.c.bf16 %v6650, %v6642
        %v6923 = vpack.c.bf16 %v6651, %v6643
        %v6924 = vpack.c.bf16 %v6652, %v6644
        %v6925 = vpack.c.bf16 %v6653, %v6645
        %v6926 = vpack.c.bf16 %v6654, %v6646
        %v6927 = vpack.c.bf16 %v6655, %v6647
        %v6928 = vpack.c.bf16 %v6664, %v6656
        %v6929 = vpack.c.bf16 %v6665, %v6657
        %v6930 = vpack.c.bf16 %v6666, %v6658
        %v6931 = vpack.c.bf16 %v6667, %v6659
        %v6932 = vpack.c.bf16 %v6668, %v6660
        %v6933 = vpack.c.bf16 %v6669, %v6661
        %v6934 = vpack.c.bf16 %v6670, %v6662
        %v6935 = vpack.c.bf16 %v6671, %v6663
        %v6936 = vpack.c.bf16 %v6680, %v6672
        %v6937 = vpack.c.bf16 %v6681, %v6673
        %v6938 = vpack.c.bf16 %v6682, %v6674
        %v6939 = vpack.c.bf16 %v6683, %v6675
        %v6940 = vpack.c.bf16 %v6684, %v6676
        %v6941 = vpack.c.bf16 %v6685, %v6677
        %v6942 = vpack.c.bf16 %v6686, %v6678
        %v6943 = vpack.c.bf16 %v6687, %v6679
        %v6944 = vmax.bf16 %v6688, %v6696
        %v6945 = vmax.bf16 %v6944, %v6704
        %v6946 = vmax.bf16 %v6945, %v6712
        %v6947 = vmax.bf16 %v6946, %v6720
        %v6948 = vmax.bf16 %v6947, %v6728
        %v6949 = vmax.bf16 %v6948, %v6736
        %v6950 = vmax.bf16 %v6949, %v6744
        %v6951 = vunpack.i.l.bf16 %v6950
        %v6952 = vunpack.i.h.bf16 %v6950
        %v6953 = vmax.f32 %v6951, %v6952
        %v6954 = vrot.slane %v6953, 4
        %v6955 = vmax.f32 %v6953, %v6954
        %v6956 = vrot.slane %v6955, 2
        %v6957 = vmax.f32 %v6955, %v6956
        %v6958 = vrot.slane %v6957, 1
        %v6959 = vmax.f32 %v6957, %v6958
        %v6960 = vpack.i.bf16 %v6959, %v6959
        %v6961 = vmax.bf16 %v6689, %v6697
        %v6962 = vmax.bf16 %v6961, %v6705
        %v6963 = vmax.bf16 %v6962, %v6713
        %v6964 = vmax.bf16 %v6963, %v6721
        %v6965 = vmax.bf16 %v6964, %v6729
        %v6966 = vmax.bf16 %v6965, %v6737
        %v6967 = vmax.bf16 %v6966, %v6745
        %v6968 = vunpack.i.l.bf16 %v6967
        %v6969 = vunpack.i.h.bf16 %v6967
        %v6970 = vmax.f32 %v6968, %v6969
        %v6971 = vrot.slane %v6970, 4
        %v6972 = vmax.f32 %v6970, %v6971
        %v6973 = vrot.slane %v6972, 2
        %v6974 = vmax.f32 %v6972, %v6973
        %v6975 = vrot.slane %v6974, 1
        %v6976 = vmax.f32 %v6974, %v6975
        %v6977 = vpack.i.bf16 %v6976, %v6976
        %v6978 = vmax.bf16 %v6690, %v6698
        %v6979 = vmax.bf16 %v6978, %v6706
        %v6980 = vmax.bf16 %v6979, %v6714
        %v6981 = vmax.bf16 %v6980, %v6722
        %v6982 = vmax.bf16 %v6981, %v6730
        %v6983 = vmax.bf16 %v6982, %v6738
        %v6984 = vmax.bf16 %v6983, %v6746
        %v6985 = vunpack.i.l.bf16 %v6984
        %v6986 = vunpack.i.h.bf16 %v6984
        %v6987 = vmax.f32 %v6985, %v6986
        %v6988 = vrot.slane %v6987, 4
        %v6989 = vmax.f32 %v6987, %v6988
        %v6990 = vrot.slane %v6989, 2
        %v6991 = vmax.f32 %v6989, %v6990
        %v6992 = vrot.slane %v6991, 1
        %v6993 = vmax.f32 %v6991, %v6992
        %v6994 = vpack.i.bf16 %v6993, %v6993
        %v6995 = vmax.bf16 %v6691, %v6699
        %v6996 = vmax.bf16 %v6995, %v6707
        %v6997 = vmax.bf16 %v6996, %v6715
        %v6998 = vmax.bf16 %v6997, %v6723
        %v6999 = vmax.bf16 %v6998, %v6731
        %v7000 = vmax.bf16 %v6999, %v6739
        %v7001 = vmax.bf16 %v7000, %v6747
        %v7002 = vunpack.i.l.bf16 %v7001
        %v7003 = vunpack.i.h.bf16 %v7001
        %v7004 = vmax.f32 %v7002, %v7003
        %v7005 = vrot.slane %v7004, 4
        %v7006 = vmax.f32 %v7004, %v7005
        %v7007 = vrot.slane %v7006, 2
        %v7008 = vmax.f32 %v7006, %v7007
        %v7009 = vrot.slane %v7008, 1
        %v7010 = vmax.f32 %v7008, %v7009
        %v7011 = vpack.i.bf16 %v7010, %v7010
        %v7012 = vmax.bf16 %v6692, %v6700
        %v7013 = vmax.bf16 %v7012, %v6708
        %v7014 = vmax.bf16 %v7013, %v6716
        %v7015 = vmax.bf16 %v7014, %v6724
        %v7016 = vmax.bf16 %v7015, %v6732
        %v7017 = vmax.bf16 %v7016, %v6740
        %v7018 = vmax.bf16 %v7017, %v6748
        %v7019 = vunpack.i.l.bf16 %v7018
        %v7020 = vunpack.i.h.bf16 %v7018
        %v7021 = vmax.f32 %v7019, %v7020
        %v7022 = vrot.slane %v7021, 4
        %v7023 = vmax.f32 %v7021, %v7022
        %v7024 = vrot.slane %v7023, 2
        %v7025 = vmax.f32 %v7023, %v7024
        %v7026 = vrot.slane %v7025, 1
        %v7027 = vmax.f32 %v7025, %v7026
        %v7028 = vpack.i.bf16 %v7027, %v7027
        %v7029 = vmax.bf16 %v6693, %v6701
        %v7030 = vmax.bf16 %v7029, %v6709
        %v7031 = vmax.bf16 %v7030, %v6717
        %v7032 = vmax.bf16 %v7031, %v6725
        %v7033 = vmax.bf16 %v7032, %v6733
        %v7034 = vmax.bf16 %v7033, %v6741
        %v7035 = vmax.bf16 %v7034, %v6749
        %v7036 = vunpack.i.l.bf16 %v7035
        %v7037 = vunpack.i.h.bf16 %v7035
        %v7038 = vmax.f32 %v7036, %v7037
        %v7039 = vrot.slane %v7038, 4
        %v7040 = vmax.f32 %v7038, %v7039
        %v7041 = vrot.slane %v7040, 2
        %v7042 = vmax.f32 %v7040, %v7041
        %v7043 = vrot.slane %v7042, 1
        %v7044 = vmax.f32 %v7042, %v7043
        %v7045 = vpack.i.bf16 %v7044, %v7044
        %v7046 = vmax.bf16 %v6694, %v6702
        %v7047 = vmax.bf16 %v7046, %v6710
        %v7048 = vmax.bf16 %v7047, %v6718
        %v7049 = vmax.bf16 %v7048, %v6726
        %v7050 = vmax.bf16 %v7049, %v6734
        %v7051 = vmax.bf16 %v7050, %v6742
        %v7052 = vmax.bf16 %v7051, %v6750
        %v7053 = vunpack.i.l.bf16 %v7052
        %v7054 = vunpack.i.h.bf16 %v7052
        %v7055 = vmax.f32 %v7053, %v7054
        %v7056 = vrot.slane %v7055, 4
        %v7057 = vmax.f32 %v7055, %v7056
        %v7058 = vrot.slane %v7057, 2
        %v7059 = vmax.f32 %v7057, %v7058
        %v7060 = vrot.slane %v7059, 1
        %v7061 = vmax.f32 %v7059, %v7060
        %v7062 = vpack.i.bf16 %v7061, %v7061
        %v7063 = vmax.bf16 %v6695, %v6703
        %v7064 = vmax.bf16 %v7063, %v6711
        %v7065 = vmax.bf16 %v7064, %v6719
        %v7066 = vmax.bf16 %v7065, %v6727
        %v7067 = vmax.bf16 %v7066, %v6735
        %v7068 = vmax.bf16 %v7067, %v6743
        %v7069 = vmax.bf16 %v7068, %v6751
        %v7070 = vunpack.i.l.bf16 %v7069
        %v7071 = vunpack.i.h.bf16 %v7069
        %v7072 = vmax.f32 %v7070, %v7071
        %v7073 = vrot.slane %v7072, 4
        %v7074 = vmax.f32 %v7072, %v7073
        %v7075 = vrot.slane %v7074, 2
        %v7076 = vmax.f32 %v7074, %v7075
        %v7077 = vrot.slane %v7076, 1
        %v7078 = vmax.f32 %v7076, %v7077
        %v7079 = vpack.i.bf16 %v7078, %v7078
        %v7080 = vmax.bf16 %v6752, %v6760
        %v7081 = vmax.bf16 %v7080, %v6768
        %v7082 = vmax.bf16 %v7081, %v6776
        %v7083 = vmax.bf16 %v7082, %v6784
        %v7084 = vmax.bf16 %v7083, %v6792
        %v7085 = vmax.bf16 %v7084, %v6800
        %v7086 = vmax.bf16 %v7085, %v6808
        %v7087 = vunpack.i.l.bf16 %v7086
        %v7088 = vunpack.i.h.bf16 %v7086
        %v7089 = vmax.f32 %v7087, %v7088
        %v7090 = vrot.slane %v7089, 4
        %v7091 = vmax.f32 %v7089, %v7090
        %v7092 = vrot.slane %v7091, 2
        %v7093 = vmax.f32 %v7091, %v7092
        %v7094 = vrot.slane %v7093, 1
        %v7095 = vmax.f32 %v7093, %v7094
        %v7096 = vpack.i.bf16 %v7095, %v7095
        %v7097 = vmax.bf16 %v6753, %v6761
        %v7098 = vmax.bf16 %v7097, %v6769
        %v7099 = vmax.bf16 %v7098, %v6777
        %v7100 = vmax.bf16 %v7099, %v6785
        %v7101 = vmax.bf16 %v7100, %v6793
        %v7102 = vmax.bf16 %v7101, %v6801
        %v7103 = vmax.bf16 %v7102, %v6809
        %v7104 = vunpack.i.l.bf16 %v7103
        %v7105 = vunpack.i.h.bf16 %v7103
        %v7106 = vmax.f32 %v7104, %v7105
        %v7107 = vrot.slane %v7106, 4
        %v7108 = vmax.f32 %v7106, %v7107
        %v7109 = vrot.slane %v7108, 2
        %v7110 = vmax.f32 %v7108, %v7109
        %v7111 = vrot.slane %v7110, 1
        %v7112 = vmax.f32 %v7110, %v7111
        %v7113 = vpack.i.bf16 %v7112, %v7112
        %v7114 = vmax.bf16 %v6754, %v6762
        %v7115 = vmax.bf16 %v7114, %v6770
        %v7116 = vmax.bf16 %v7115, %v6778
        %v7117 = vmax.bf16 %v7116, %v6786
        %v7118 = vmax.bf16 %v7117, %v6794
        %v7119 = vmax.bf16 %v7118, %v6802
        %v7120 = vmax.bf16 %v7119, %v6810
        %v7121 = vunpack.i.l.bf16 %v7120
        %v7122 = vunpack.i.h.bf16 %v7120
        %v7123 = vmax.f32 %v7121, %v7122
        %v7124 = vrot.slane %v7123, 4
        %v7125 = vmax.f32 %v7123, %v7124
        %v7126 = vrot.slane %v7125, 2
        %v7127 = vmax.f32 %v7125, %v7126
        %v7128 = vrot.slane %v7127, 1
        %v7129 = vmax.f32 %v7127, %v7128
        %v7130 = vpack.i.bf16 %v7129, %v7129
        %v7131 = vmax.bf16 %v6755, %v6763
        %v7132 = vmax.bf16 %v7131, %v6771
        %v7133 = vmax.bf16 %v7132, %v6779
        %v7134 = vmax.bf16 %v7133, %v6787
        %v7135 = vmax.bf16 %v7134, %v6795
        %v7136 = vmax.bf16 %v7135, %v6803
        %v7137 = vmax.bf16 %v7136, %v6811
        %v7138 = vunpack.i.l.bf16 %v7137
        %v7139 = vunpack.i.h.bf16 %v7137
        %v7140 = vmax.f32 %v7138, %v7139
        %v7141 = vrot.slane %v7140, 4
        %v7142 = vmax.f32 %v7140, %v7141
        %v7143 = vrot.slane %v7142, 2
        %v7144 = vmax.f32 %v7142, %v7143
        %v7145 = vrot.slane %v7144, 1
        %v7146 = vmax.f32 %v7144, %v7145
        %v7147 = vpack.i.bf16 %v7146, %v7146
        %v7148 = vmax.bf16 %v6756, %v6764
        %v7149 = vmax.bf16 %v7148, %v6772
        %v7150 = vmax.bf16 %v7149, %v6780
        %v7151 = vmax.bf16 %v7150, %v6788
        %v7152 = vmax.bf16 %v7151, %v6796
        %v7153 = vmax.bf16 %v7152, %v6804
        %v7154 = vmax.bf16 %v7153, %v6812
        %v7155 = vunpack.i.l.bf16 %v7154
        %v7156 = vunpack.i.h.bf16 %v7154
        %v7157 = vmax.f32 %v7155, %v7156
        %v7158 = vrot.slane %v7157, 4
        %v7159 = vmax.f32 %v7157, %v7158
        %v7160 = vrot.slane %v7159, 2
        %v7161 = vmax.f32 %v7159, %v7160
        %v7162 = vrot.slane %v7161, 1
        %v7163 = vmax.f32 %v7161, %v7162
        %v7164 = vpack.i.bf16 %v7163, %v7163
        %v7165 = vmax.bf16 %v6757, %v6765
        %v7166 = vmax.bf16 %v7165, %v6773
        %v7167 = vmax.bf16 %v7166, %v6781
        %v7168 = vmax.bf16 %v7167, %v6789
        %v7169 = vmax.bf16 %v7168, %v6797
        %v7170 = vmax.bf16 %v7169, %v6805
        %v7171 = vmax.bf16 %v7170, %v6813
        %v7172 = vunpack.i.l.bf16 %v7171
        %v7173 = vunpack.i.h.bf16 %v7171
        %v7174 = vmax.f32 %v7172, %v7173
        %v7175 = vrot.slane %v7174, 4
        %v7176 = vmax.f32 %v7174, %v7175
        %v7177 = vrot.slane %v7176, 2
        %v7178 = vmax.f32 %v7176, %v7177
        %v7179 = vrot.slane %v7178, 1
        %v7180 = vmax.f32 %v7178, %v7179
        %v7181 = vpack.i.bf16 %v7180, %v7180
        %v7182 = vmax.bf16 %v6758, %v6766
        %v7183 = vmax.bf16 %v7182, %v6774
        %v7184 = vmax.bf16 %v7183, %v6782
        %v7185 = vmax.bf16 %v7184, %v6790
        %v7186 = vmax.bf16 %v7185, %v6798
        %v7187 = vmax.bf16 %v7186, %v6806
        %v7188 = vmax.bf16 %v7187, %v6814
        %v7189 = vunpack.i.l.bf16 %v7188
        %v7190 = vunpack.i.h.bf16 %v7188
        %v7191 = vmax.f32 %v7189, %v7190
        %v7192 = vrot.slane %v7191, 4
        %v7193 = vmax.f32 %v7191, %v7192
        %v7194 = vrot.slane %v7193, 2
        %v7195 = vmax.f32 %v7193, %v7194
        %v7196 = vrot.slane %v7195, 1
        %v7197 = vmax.f32 %v7195, %v7196
        %v7198 = vpack.i.bf16 %v7197, %v7197
        %v7199 = vmax.bf16 %v6759, %v6767
        %v7200 = vmax.bf16 %v7199, %v6775
        %v7201 = vmax.bf16 %v7200, %v6783
        %v7202 = vmax.bf16 %v7201, %v6791
        %v7203 = vmax.bf16 %v7202, %v6799
        %v7204 = vmax.bf16 %v7203, %v6807
        %v7205 = vmax.bf16 %v7204, %v6815
        %v7206 = vunpack.i.l.bf16 %v7205
        %v7207 = vunpack.i.h.bf16 %v7205
        %v7208 = vmax.f32 %v7206, %v7207
        %v7209 = vrot.slane %v7208, 4
        %v7210 = vmax.f32 %v7208, %v7209
        %v7211 = vrot.slane %v7210, 2
        %v7212 = vmax.f32 %v7210, %v7211
        %v7213 = vrot.slane %v7212, 1
        %v7214 = vmax.f32 %v7212, %v7213
        %v7215 = vpack.i.bf16 %v7214, %v7214
        %v7216 = vmax.bf16 %v6816, %v6824
        %v7217 = vmax.bf16 %v7216, %v6832
        %v7218 = vmax.bf16 %v7217, %v6840
        %v7219 = vmax.bf16 %v7218, %v6848
        %v7220 = vmax.bf16 %v7219, %v6856
        %v7221 = vmax.bf16 %v7220, %v6864
        %v7222 = vmax.bf16 %v7221, %v6872
        %v7223 = vunpack.i.l.bf16 %v7222
        %v7224 = vunpack.i.h.bf16 %v7222
        %v7225 = vmax.f32 %v7223, %v7224
        %v7226 = vrot.slane %v7225, 4
        %v7227 = vmax.f32 %v7225, %v7226
        %v7228 = vrot.slane %v7227, 2
        %v7229 = vmax.f32 %v7227, %v7228
        %v7230 = vrot.slane %v7229, 1
        %v7231 = vmax.f32 %v7229, %v7230
        %v7232 = vpack.i.bf16 %v7231, %v7231
        %v7233 = vmax.bf16 %v6817, %v6825
        %v7234 = vmax.bf16 %v7233, %v6833
        %v7235 = vmax.bf16 %v7234, %v6841
        %v7236 = vmax.bf16 %v7235, %v6849
        %v7237 = vmax.bf16 %v7236, %v6857
        %v7238 = vmax.bf16 %v7237, %v6865
        %v7239 = vmax.bf16 %v7238, %v6873
        %v7240 = vunpack.i.l.bf16 %v7239
        %v7241 = vunpack.i.h.bf16 %v7239
        %v7242 = vmax.f32 %v7240, %v7241
        %v7243 = vrot.slane %v7242, 4
        %v7244 = vmax.f32 %v7242, %v7243
        %v7245 = vrot.slane %v7244, 2
        %v7246 = vmax.f32 %v7244, %v7245
        %v7247 = vrot.slane %v7246, 1
        %v7248 = vmax.f32 %v7246, %v7247
        %v7249 = vpack.i.bf16 %v7248, %v7248
        %v7250 = vmax.bf16 %v6818, %v6826
        %v7251 = vmax.bf16 %v7250, %v6834
        %v7252 = vmax.bf16 %v7251, %v6842
        %v7253 = vmax.bf16 %v7252, %v6850
        %v7254 = vmax.bf16 %v7253, %v6858
        %v7255 = vmax.bf16 %v7254, %v6866
        %v7256 = vmax.bf16 %v7255, %v6874
        %v7257 = vunpack.i.l.bf16 %v7256
        %v7258 = vunpack.i.h.bf16 %v7256
        %v7259 = vmax.f32 %v7257, %v7258
        %v7260 = vrot.slane %v7259, 4
        %v7261 = vmax.f32 %v7259, %v7260
        %v7262 = vrot.slane %v7261, 2
        %v7263 = vmax.f32 %v7261, %v7262
        %v7264 = vrot.slane %v7263, 1
        %v7265 = vmax.f32 %v7263, %v7264
        %v7266 = vpack.i.bf16 %v7265, %v7265
        %v7267 = vmax.bf16 %v6819, %v6827
        %v7268 = vmax.bf16 %v7267, %v6835
        %v7269 = vmax.bf16 %v7268, %v6843
        %v7270 = vmax.bf16 %v7269, %v6851
        %v7271 = vmax.bf16 %v7270, %v6859
        %v7272 = vmax.bf16 %v7271, %v6867
        %v7273 = vmax.bf16 %v7272, %v6875
        %v7274 = vunpack.i.l.bf16 %v7273
        %v7275 = vunpack.i.h.bf16 %v7273
        %v7276 = vmax.f32 %v7274, %v7275
        %v7277 = vrot.slane %v7276, 4
        %v7278 = vmax.f32 %v7276, %v7277
        %v7279 = vrot.slane %v7278, 2
        %v7280 = vmax.f32 %v7278, %v7279
        %v7281 = vrot.slane %v7280, 1
        %v7282 = vmax.f32 %v7280, %v7281
        %v7283 = vpack.i.bf16 %v7282, %v7282
        %v7284 = vmax.bf16 %v6820, %v6828
        %v7285 = vmax.bf16 %v7284, %v6836
        %v7286 = vmax.bf16 %v7285, %v6844
        %v7287 = vmax.bf16 %v7286, %v6852
        %v7288 = vmax.bf16 %v7287, %v6860
        %v7289 = vmax.bf16 %v7288, %v6868
        %v7290 = vmax.bf16 %v7289, %v6876
        %v7291 = vunpack.i.l.bf16 %v7290
        %v7292 = vunpack.i.h.bf16 %v7290
        %v7293 = vmax.f32 %v7291, %v7292
        %v7294 = vrot.slane %v7293, 4
        %v7295 = vmax.f32 %v7293, %v7294
        %v7296 = vrot.slane %v7295, 2
        %v7297 = vmax.f32 %v7295, %v7296
        %v7298 = vrot.slane %v7297, 1
        %v7299 = vmax.f32 %v7297, %v7298
        %v7300 = vpack.i.bf16 %v7299, %v7299
        %v7301 = vmax.bf16 %v6821, %v6829
        %v7302 = vmax.bf16 %v7301, %v6837
        %v7303 = vmax.bf16 %v7302, %v6845
        %v7304 = vmax.bf16 %v7303, %v6853
        %v7305 = vmax.bf16 %v7304, %v6861
        %v7306 = vmax.bf16 %v7305, %v6869
        %v7307 = vmax.bf16 %v7306, %v6877
        %v7308 = vunpack.i.l.bf16 %v7307
        %v7309 = vunpack.i.h.bf16 %v7307
        %v7310 = vmax.f32 %v7308, %v7309
        %v7311 = vrot.slane %v7310, 4
        %v7312 = vmax.f32 %v7310, %v7311
        %v7313 = vrot.slane %v7312, 2
        %v7314 = vmax.f32 %v7312, %v7313
        %v7315 = vrot.slane %v7314, 1
        %v7316 = vmax.f32 %v7314, %v7315
        %v7317 = vpack.i.bf16 %v7316, %v7316
        %v7318 = vmax.bf16 %v6822, %v6830
        %v7319 = vmax.bf16 %v7318, %v6838
        %v7320 = vmax.bf16 %v7319, %v6846
        %v7321 = vmax.bf16 %v7320, %v6854
        %v7322 = vmax.bf16 %v7321, %v6862
        %v7323 = vmax.bf16 %v7322, %v6870
        %v7324 = vmax.bf16 %v7323, %v6878
        %v7325 = vunpack.i.l.bf16 %v7324
        %v7326 = vunpack.i.h.bf16 %v7324
        %v7327 = vmax.f32 %v7325, %v7326
        %v7328 = vrot.slane %v7327, 4
        %v7329 = vmax.f32 %v7327, %v7328
        %v7330 = vrot.slane %v7329, 2
        %v7331 = vmax.f32 %v7329, %v7330
        %v7332 = vrot.slane %v7331, 1
        %v7333 = vmax.f32 %v7331, %v7332
        %v7334 = vpack.i.bf16 %v7333, %v7333
        %v7335 = vmax.bf16 %v6823, %v6831
        %v7336 = vmax.bf16 %v7335, %v6839
        %v7337 = vmax.bf16 %v7336, %v6847
        %v7338 = vmax.bf16 %v7337, %v6855
        %v7339 = vmax.bf16 %v7338, %v6863
        %v7340 = vmax.bf16 %v7339, %v6871
        %v7341 = vmax.bf16 %v7340, %v6879
        %v7342 = vunpack.i.l.bf16 %v7341
        %v7343 = vunpack.i.h.bf16 %v7341
        %v7344 = vmax.f32 %v7342, %v7343
        %v7345 = vrot.slane %v7344, 4
        %v7346 = vmax.f32 %v7344, %v7345
        %v7347 = vrot.slane %v7346, 2
        %v7348 = vmax.f32 %v7346, %v7347
        %v7349 = vrot.slane %v7348, 1
        %v7350 = vmax.f32 %v7348, %v7349
        %v7351 = vpack.i.bf16 %v7350, %v7350
        %v7352 = vmax.bf16 %v6880, %v6888
        %v7353 = vmax.bf16 %v7352, %v6896
        %v7354 = vmax.bf16 %v7353, %v6904
        %v7355 = vmax.bf16 %v7354, %v6912
        %v7356 = vmax.bf16 %v7355, %v6920
        %v7357 = vmax.bf16 %v7356, %v6928
        %v7358 = vmax.bf16 %v7357, %v6936
        %v7359 = vunpack.i.l.bf16 %v7358
        %v7360 = vunpack.i.h.bf16 %v7358
        %v7361 = vmax.f32 %v7359, %v7360
        %v7362 = vrot.slane %v7361, 4
        %v7363 = vmax.f32 %v7361, %v7362
        %v7364 = vrot.slane %v7363, 2
        %v7365 = vmax.f32 %v7363, %v7364
        %v7366 = vrot.slane %v7365, 1
        %v7367 = vmax.f32 %v7365, %v7366
        %v7368 = vpack.i.bf16 %v7367, %v7367
        %v7369 = vmax.bf16 %v6881, %v6889
        %v7370 = vmax.bf16 %v7369, %v6897
        %v7371 = vmax.bf16 %v7370, %v6905
        %v7372 = vmax.bf16 %v7371, %v6913
        %v7373 = vmax.bf16 %v7372, %v6921
        %v7374 = vmax.bf16 %v7373, %v6929
        %v7375 = vmax.bf16 %v7374, %v6937
        %v7376 = vunpack.i.l.bf16 %v7375
        %v7377 = vunpack.i.h.bf16 %v7375
        %v7378 = vmax.f32 %v7376, %v7377
        %v7379 = vrot.slane %v7378, 4
        %v7380 = vmax.f32 %v7378, %v7379
        %v7381 = vrot.slane %v7380, 2
        %v7382 = vmax.f32 %v7380, %v7381
        %v7383 = vrot.slane %v7382, 1
        %v7384 = vmax.f32 %v7382, %v7383
        %v7385 = vpack.i.bf16 %v7384, %v7384
        %v7386 = vmax.bf16 %v6882, %v6890
        %v7387 = vmax.bf16 %v7386, %v6898
        %v7388 = vmax.bf16 %v7387, %v6906
        %v7389 = vmax.bf16 %v7388, %v6914
        %v7390 = vmax.bf16 %v7389, %v6922
        %v7391 = vmax.bf16 %v7390, %v6930
        %v7392 = vmax.bf16 %v7391, %v6938
        %v7393 = vunpack.i.l.bf16 %v7392
        %v7394 = vunpack.i.h.bf16 %v7392
        %v7395 = vmax.f32 %v7393, %v7394
        %v7396 = vrot.slane %v7395, 4
        %v7397 = vmax.f32 %v7395, %v7396
        %v7398 = vrot.slane %v7397, 2
        %v7399 = vmax.f32 %v7397, %v7398
        %v7400 = vrot.slane %v7399, 1
        %v7401 = vmax.f32 %v7399, %v7400
        %v7402 = vpack.i.bf16 %v7401, %v7401
        %v7403 = vmax.bf16 %v6883, %v6891
        %v7404 = vmax.bf16 %v7403, %v6899
        %v7405 = vmax.bf16 %v7404, %v6907
        %v7406 = vmax.bf16 %v7405, %v6915
        %v7407 = vmax.bf16 %v7406, %v6923
        %v7408 = vmax.bf16 %v7407, %v6931
        %v7409 = vmax.bf16 %v7408, %v6939
        %v7410 = vunpack.i.l.bf16 %v7409
        %v7411 = vunpack.i.h.bf16 %v7409
        %v7412 = vmax.f32 %v7410, %v7411
        %v7413 = vrot.slane %v7412, 4
        %v7414 = vmax.f32 %v7412, %v7413
        %v7415 = vrot.slane %v7414, 2
        %v7416 = vmax.f32 %v7414, %v7415
        %v7417 = vrot.slane %v7416, 1
        %v7418 = vmax.f32 %v7416, %v7417
        %v7419 = vpack.i.bf16 %v7418, %v7418
        %v7420 = vmax.bf16 %v6884, %v6892
        %v7421 = vmax.bf16 %v7420, %v6900
        %v7422 = vmax.bf16 %v7421, %v6908
        %v7423 = vmax.bf16 %v7422, %v6916
        %v7424 = vmax.bf16 %v7423, %v6924
        %v7425 = vmax.bf16 %v7424, %v6932
        %v7426 = vmax.bf16 %v7425, %v6940
        %v7427 = vunpack.i.l.bf16 %v7426
        %v7428 = vunpack.i.h.bf16 %v7426
        %v7429 = vmax.f32 %v7427, %v7428
        %v7430 = vrot.slane %v7429, 4
        %v7431 = vmax.f32 %v7429, %v7430
        %v7432 = vrot.slane %v7431, 2
        %v7433 = vmax.f32 %v7431, %v7432
        %v7434 = vrot.slane %v7433, 1
        %v7435 = vmax.f32 %v7433, %v7434
        %v7436 = vpack.i.bf16 %v7435, %v7435
        %v7437 = vmax.bf16 %v6885, %v6893
        %v7438 = vmax.bf16 %v7437, %v6901
        %v7439 = vmax.bf16 %v7438, %v6909
        %v7440 = vmax.bf16 %v7439, %v6917
        %v7441 = vmax.bf16 %v7440, %v6925
        %v7442 = vmax.bf16 %v7441, %v6933
        %v7443 = vmax.bf16 %v7442, %v6941
        %v7444 = vunpack.i.l.bf16 %v7443
        %v7445 = vunpack.i.h.bf16 %v7443
        %v7446 = vmax.f32 %v7444, %v7445
        %v7447 = vrot.slane %v7446, 4
        %v7448 = vmax.f32 %v7446, %v7447
        %v7449 = vrot.slane %v7448, 2
        %v7450 = vmax.f32 %v7448, %v7449
        %v7451 = vrot.slane %v7450, 1
        %v7452 = vmax.f32 %v7450, %v7451
        %v7453 = vpack.i.bf16 %v7452, %v7452
        %v7454 = vmax.bf16 %v6886, %v6894
        %v7455 = vmax.bf16 %v7454, %v6902
        %v7456 = vmax.bf16 %v7455, %v6910
        %v7457 = vmax.bf16 %v7456, %v6918
        %v7458 = vmax.bf16 %v7457, %v6926
        %v7459 = vmax.bf16 %v7458, %v6934
        %v7460 = vmax.bf16 %v7459, %v6942
        %v7461 = vunpack.i.l.bf16 %v7460
        %v7462 = vunpack.i.h.bf16 %v7460
        %v7463 = vmax.f32 %v7461, %v7462
        %v7464 = vrot.slane %v7463, 4
        %v7465 = vmax.f32 %v7463, %v7464
        %v7466 = vrot.slane %v7465, 2
        %v7467 = vmax.f32 %v7465, %v7466
        %v7468 = vrot.slane %v7467, 1
        %v7469 = vmax.f32 %v7467, %v7468
        %v7470 = vpack.i.bf16 %v7469, %v7469
        %v7471 = vmax.bf16 %v6887, %v6895
        %v7472 = vmax.bf16 %v7471, %v6903
        %v7473 = vmax.bf16 %v7472, %v6911
        %v7474 = vmax.bf16 %v7473, %v6919
        %v7475 = vmax.bf16 %v7474, %v6927
        %v7476 = vmax.bf16 %v7475, %v6935
        %v7477 = vmax.bf16 %v7476, %v6943
        %v7478 = vunpack.i.l.bf16 %v7477
        %v7479 = vunpack.i.h.bf16 %v7477
        %v7480 = vmax.f32 %v7478, %v7479
        %v7481 = vrot.slane %v7480, 4
        %v7482 = vmax.f32 %v7480, %v7481
        %v7483 = vrot.slane %v7482, 2
        %v7484 = vmax.f32 %v7482, %v7483
        %v7485 = vrot.slane %v7484, 1
        %v7486 = vmax.f32 %v7484, %v7485
        %v7487 = vpack.i.bf16 %v7486, %v7486
        %v7488 = vld [vmem:[#allocation2] sm:$0xff]
        %v7489 = vld [vmem:[#allocation2 + $0x8] sm:$0xff]
        %v7490 = vld [vmem:[#allocation2 + $0x10] sm:$0xff]
        %v7491 = vld [vmem:[#allocation2 + $0x18] sm:$0xff]
        %v7492 = vld [vmem:[#allocation2 + $0x20] sm:$0xff]
        %v7493 = vld [vmem:[#allocation2 + $0x28] sm:$0xff]
        %v7494 = vld [vmem:[#allocation2 + $0x30] sm:$0xff]
        %v7495 = vld [vmem:[#allocation2 + $0x38] sm:$0xff]
        %v7496 = vld [vmem:[#allocation2 + $0x40] sm:$0xff]
        %v7497 = vld [vmem:[#allocation2 + $0x48] sm:$0xff]
        %v7498 = vld [vmem:[#allocation2 + $0x50] sm:$0xff]
        %v7499 = vld [vmem:[#allocation2 + $0x58] sm:$0xff]
        %v7500 = vld [vmem:[#allocation2 + $0x60] sm:$0xff]
        %v7501 = vld [vmem:[#allocation2 + $0x68] sm:$0xff]
        %v7502 = vld [vmem:[#allocation2 + $0x70] sm:$0xff]
        %v7503 = vld [vmem:[#allocation2 + $0x78] sm:$0xff]
        %v7504 = vld [vmem:[#allocation2 + $0x80] sm:$0xff]
        %v7505 = vld [vmem:[#allocation2 + $0x88] sm:$0xff]
        %v7506 = vld [vmem:[#allocation2 + $0x90] sm:$0xff]
        %v7507 = vld [vmem:[#allocation2 + $0x98] sm:$0xff]
        %v7508 = vld [vmem:[#allocation2 + $0xa0] sm:$0xff]
        %v7509 = vld [vmem:[#allocation2 + $0xa8] sm:$0xff]
        %v7510 = vld [vmem:[#allocation2 + $0xb0] sm:$0xff]
        %v7511 = vld [vmem:[#allocation2 + $0xb8] sm:$0xff]
        %v7512 = vld [vmem:[#allocation2 + $0xc0] sm:$0xff]
        %v7513 = vld [vmem:[#allocation2 + $0xc8] sm:$0xff]
        %v7514 = vld [vmem:[#allocation2 + $0xd0] sm:$0xff]
        %v7515 = vld [vmem:[#allocation2 + $0xd8] sm:$0xff]
        %v7516 = vld [vmem:[#allocation2 + $0xe0] sm:$0xff]
        %v7517 = vld [vmem:[#allocation2 + $0xe8] sm:$0xff]
        %v7518 = vld [vmem:[#allocation2 + $0xf0] sm:$0xff]
        %v7519 = vld [vmem:[#allocation2 + $0xf8] sm:$0xff]
        %v7520 = vld [vmem:[#allocation2 + $0x100] sm:$0xff]
        %v7521 = vld [vmem:[#allocation2 + $0x108] sm:$0xff]
        %v7522 = vld [vmem:[#allocation2 + $0x110] sm:$0xff]
        %v7523 = vld [vmem:[#allocation2 + $0x118] sm:$0xff]
        %v7524 = vld [vmem:[#allocation2 + $0x120] sm:$0xff]
        %v7525 = vld [vmem:[#allocation2 + $0x128] sm:$0xff]
        %v7526 = vld [vmem:[#allocation2 + $0x130] sm:$0xff]
        %v7527 = vld [vmem:[#allocation2 + $0x138] sm:$0xff]
        %v7528 = vld [vmem:[#allocation2 + $0x140] sm:$0xff]
        %v7529 = vld [vmem:[#allocation2 + $0x148] sm:$0xff]
        %v7530 = vld [vmem:[#allocation2 + $0x150] sm:$0xff]
        %v7531 = vld [vmem:[#allocation2 + $0x158] sm:$0xff]
        %v7532 = vld [vmem:[#allocation2 + $0x160] sm:$0xff]
        %v7533 = vld [vmem:[#allocation2 + $0x168] sm:$0xff]
        %v7534 = vld [vmem:[#allocation2 + $0x170] sm:$0xff]
        %v7535 = vld [vmem:[#allocation2 + $0x178] sm:$0xff]
        %v7536 = vld [vmem:[#allocation2 + $0x180] sm:$0xff]
        %v7537 = vld [vmem:[#allocation2 + $0x188] sm:$0xff]
        %v7538 = vld [vmem:[#allocation2 + $0x190] sm:$0xff]
        %v7539 = vld [vmem:[#allocation2 + $0x198] sm:$0xff]
        %v7540 = vld [vmem:[#allocation2 + $0x1a0] sm:$0xff]
        %v7541 = vld [vmem:[#allocation2 + $0x1a8] sm:$0xff]
        %v7542 = vld [vmem:[#allocation2 + $0x1b0] sm:$0xff]
        %v7543 = vld [vmem:[#allocation2 + $0x1b8] sm:$0xff]
        %v7544 = vld [vmem:[#allocation2 + $0x1c0] sm:$0xff]
        %v7545 = vld [vmem:[#allocation2 + $0x1c8] sm:$0xff]
        %v7546 = vld [vmem:[#allocation2 + $0x1d0] sm:$0xff]
        %v7547 = vld [vmem:[#allocation2 + $0x1d8] sm:$0xff]
        %v7548 = vld [vmem:[#allocation2 + $0x1e0] sm:$0xff]
        %v7549 = vld [vmem:[#allocation2 + $0x1e8] sm:$0xff]
        %v7550 = vld [vmem:[#allocation2 + $0x1f0] sm:$0xff]
        %v7551 = vld [vmem:[#allocation2 + $0x1f8] sm:$0xff]
        %v7552 = vld [vmem:[#allocation2 + $0x200] sm:$0xff]
        %v7553 = vld [vmem:[#allocation2 + $0x208] sm:$0xff]
        %v7554 = vld [vmem:[#allocation2 + $0x210] sm:$0xff]
        %v7555 = vld [vmem:[#allocation2 + $0x218] sm:$0xff]
        %v7556 = vld [vmem:[#allocation2 + $0x220] sm:$0xff]
        %v7557 = vld [vmem:[#allocation2 + $0x228] sm:$0xff]
        %v7558 = vld [vmem:[#allocation2 + $0x230] sm:$0xff]
        %v7559 = vld [vmem:[#allocation2 + $0x238] sm:$0xff]
        %v7560 = vld [vmem:[#allocation2 + $0x240] sm:$0xff]
        %v7561 = vld [vmem:[#allocation2 + $0x248] sm:$0xff]
        %v7562 = vld [vmem:[#allocation2 + $0x250] sm:$0xff]
        %v7563 = vld [vmem:[#allocation2 + $0x258] sm:$0xff]
        %v7564 = vld [vmem:[#allocation2 + $0x260] sm:$0xff]
        %v7565 = vld [vmem:[#allocation2 + $0x268] sm:$0xff]
        %v7566 = vld [vmem:[#allocation2 + $0x270] sm:$0xff]
        %v7567 = vld [vmem:[#allocation2 + $0x278] sm:$0xff]
        %v7568 = vld [vmem:[#allocation2 + $0x280] sm:$0xff]
        %v7569 = vld [vmem:[#allocation2 + $0x288] sm:$0xff]
        %v7570 = vld [vmem:[#allocation2 + $0x290] sm:$0xff]
        %v7571 = vld [vmem:[#allocation2 + $0x298] sm:$0xff]
        %v7572 = vld [vmem:[#allocation2 + $0x2a0] sm:$0xff]
        %v7573 = vld [vmem:[#allocation2 + $0x2a8] sm:$0xff]
        %v7574 = vld [vmem:[#allocation2 + $0x2b0] sm:$0xff]
        %v7575 = vld [vmem:[#allocation2 + $0x2b8] sm:$0xff]
        %v7576 = vld [vmem:[#allocation2 + $0x2c0] sm:$0xff]
        %v7577 = vld [vmem:[#allocation2 + $0x2c8] sm:$0xff]
        %v7578 = vld [vmem:[#allocation2 + $0x2d0] sm:$0xff]
        %v7579 = vld [vmem:[#allocation2 + $0x2d8] sm:$0xff]
        %v7580 = vld [vmem:[#allocation2 + $0x2e0] sm:$0xff]
        %v7581 = vld [vmem:[#allocation2 + $0x2e8] sm:$0xff]
        %v7582 = vld [vmem:[#allocation2 + $0x2f0] sm:$0xff]
        %v7583 = vld [vmem:[#allocation2 + $0x2f8] sm:$0xff]
        %v7584 = vld [vmem:[#allocation2 + $0x300] sm:$0xff]
        %v7585 = vld [vmem:[#allocation2 + $0x308] sm:$0xff]
        %v7586 = vld [vmem:[#allocation2 + $0x310] sm:$0xff]
        %v7587 = vld [vmem:[#allocation2 + $0x318] sm:$0xff]
        %v7588 = vld [vmem:[#allocation2 + $0x320] sm:$0xff]
        %v7589 = vld [vmem:[#allocation2 + $0x328] sm:$0xff]
        %v7590 = vld [vmem:[#allocation2 + $0x330] sm:$0xff]
        %v7591 = vld [vmem:[#allocation2 + $0x338] sm:$0xff]
        %v7592 = vld [vmem:[#allocation2 + $0x340] sm:$0xff]
        %v7593 = vld [vmem:[#allocation2 + $0x348] sm:$0xff]
        %v7594 = vld [vmem:[#allocation2 + $0x350] sm:$0xff]
        %v7595 = vld [vmem:[#allocation2 + $0x358] sm:$0xff]
        %v7596 = vld [vmem:[#allocation2 + $0x360] sm:$0xff]
        %v7597 = vld [vmem:[#allocation2 + $0x368] sm:$0xff]
        %v7598 = vld [vmem:[#allocation2 + $0x370] sm:$0xff]
        %v7599 = vld [vmem:[#allocation2 + $0x378] sm:$0xff]
        %v7600 = vld [vmem:[#allocation2 + $0x380] sm:$0xff]
        %v7601 = vld [vmem:[#allocation2 + $0x388] sm:$0xff]
        %v7602 = vld [vmem:[#allocation2 + $0x390] sm:$0xff]
        %v7603 = vld [vmem:[#allocation2 + $0x398] sm:$0xff]
        %v7604 = vld [vmem:[#allocation2 + $0x3a0] sm:$0xff]
        %v7605 = vld [vmem:[#allocation2 + $0x3a8] sm:$0xff]
        %v7606 = vld [vmem:[#allocation2 + $0x3b0] sm:$0xff]
        %v7607 = vld [vmem:[#allocation2 + $0x3b8] sm:$0xff]
        %v7608 = vld [vmem:[#allocation2 + $0x3c0] sm:$0xff]
        %v7609 = vld [vmem:[#allocation2 + $0x3c8] sm:$0xff]
        %v7610 = vld [vmem:[#allocation2 + $0x3d0] sm:$0xff]
        %v7611 = vld [vmem:[#allocation2 + $0x3d8] sm:$0xff]
        %v7612 = vld [vmem:[#allocation2 + $0x3e0] sm:$0xff]
        %v7613 = vld [vmem:[#allocation2 + $0x3e8] sm:$0xff]
        %v7614 = vld [vmem:[#allocation2 + $0x3f0] sm:$0xff]
        %v7615 = vld [vmem:[#allocation2 + $0x3f8] sm:$0xff]
        %v7616 = vld [vmem:[#allocation2 + $0x400] sm:$0xff]
        %v7617 = vld [vmem:[#allocation2 + $0x408] sm:$0xff]
        %v7618 = vld [vmem:[#allocation2 + $0x410] sm:$0xff]
        %v7619 = vld [vmem:[#allocation2 + $0x418] sm:$0xff]
        %v7620 = vld [vmem:[#allocation2 + $0x420] sm:$0xff]
        %v7621 = vld [vmem:[#allocation2 + $0x428] sm:$0xff]
        %v7622 = vld [vmem:[#allocation2 + $0x430] sm:$0xff]
        %v7623 = vld [vmem:[#allocation2 + $0x438] sm:$0xff]
        %v7624 = vld [vmem:[#allocation2 + $0x440] sm:$0xff]
        %v7625 = vld [vmem:[#allocation2 + $0x448] sm:$0xff]
        %v7626 = vld [vmem:[#allocation2 + $0x450] sm:$0xff]
        %v7627 = vld [vmem:[#allocation2 + $0x458] sm:$0xff]
        %v7628 = vld [vmem:[#allocation2 + $0x460] sm:$0xff]
        %v7629 = vld [vmem:[#allocation2 + $0x468] sm:$0xff]
        %v7630 = vld [vmem:[#allocation2 + $0x470] sm:$0xff]
        %v7631 = vld [vmem:[#allocation2 + $0x478] sm:$0xff]
        %v7632 = vld [vmem:[#allocation2 + $0x480] sm:$0xff]
        %v7633 = vld [vmem:[#allocation2 + $0x488] sm:$0xff]
        %v7634 = vld [vmem:[#allocation2 + $0x490] sm:$0xff]
        %v7635 = vld [vmem:[#allocation2 + $0x498] sm:$0xff]
        %v7636 = vld [vmem:[#allocation2 + $0x4a0] sm:$0xff]
        %v7637 = vld [vmem:[#allocation2 + $0x4a8] sm:$0xff]
        %v7638 = vld [vmem:[#allocation2 + $0x4b0] sm:$0xff]
        %v7639 = vld [vmem:[#allocation2 + $0x4b8] sm:$0xff]
        %v7640 = vld [vmem:[#allocation2 + $0x4c0] sm:$0xff]
        %v7641 = vld [vmem:[#allocation2 + $0x4c8] sm:$0xff]
        %v7642 = vld [vmem:[#allocation2 + $0x4d0] sm:$0xff]
        %v7643 = vld [vmem:[#allocation2 + $0x4d8] sm:$0xff]
        %v7644 = vld [vmem:[#allocation2 + $0x4e0] sm:$0xff]
        %v7645 = vld [vmem:[#allocation2 + $0x4e8] sm:$0xff]
        %v7646 = vld [vmem:[#allocation2 + $0x4f0] sm:$0xff]
        %v7647 = vld [vmem:[#allocation2 + $0x4f8] sm:$0xff]
        %v7648 = vld [vmem:[#allocation2 + $0x500] sm:$0xff]
        %v7649 = vld [vmem:[#allocation2 + $0x508] sm:$0xff]
        %v7650 = vld [vmem:[#allocation2 + $0x510] sm:$0xff]
        %v7651 = vld [vmem:[#allocation2 + $0x518] sm:$0xff]
        %v7652 = vld [vmem:[#allocation2 + $0x520] sm:$0xff]
        %v7653 = vld [vmem:[#allocation2 + $0x528] sm:$0xff]
        %v7654 = vld [vmem:[#allocation2 + $0x530] sm:$0xff]
        %v7655 = vld [vmem:[#allocation2 + $0x538] sm:$0xff]
        %v7656 = vld [vmem:[#allocation2 + $0x540] sm:$0xff]
        %v7657 = vld [vmem:[#allocation2 + $0x548] sm:$0xff]
        %v7658 = vld [vmem:[#allocation2 + $0x550] sm:$0xff]
        %v7659 = vld [vmem:[#allocation2 + $0x558] sm:$0xff]
        %v7660 = vld [vmem:[#allocation2 + $0x560] sm:$0xff]
        %v7661 = vld [vmem:[#allocation2 + $0x568] sm:$0xff]
        %v7662 = vld [vmem:[#allocation2 + $0x570] sm:$0xff]
        %v7663 = vld [vmem:[#allocation2 + $0x578] sm:$0xff]
        %v7664 = vld [vmem:[#allocation2 + $0x580] sm:$0xff]
        %v7665 = vld [vmem:[#allocation2 + $0x588] sm:$0xff]
        %v7666 = vld [vmem:[#allocation2 + $0x590] sm:$0xff]
        %v7667 = vld [vmem:[#allocation2 + $0x598] sm:$0xff]
        %v7668 = vld [vmem:[#allocation2 + $0x5a0] sm:$0xff]
        %v7669 = vld [vmem:[#allocation2 + $0x5a8] sm:$0xff]
        %v7670 = vld [vmem:[#allocation2 + $0x5b0] sm:$0xff]
        %v7671 = vld [vmem:[#allocation2 + $0x5b8] sm:$0xff]
        %v7672 = vld [vmem:[#allocation2 + $0x5c0] sm:$0xff]
        %v7673 = vld [vmem:[#allocation2 + $0x5c8] sm:$0xff]
        %v7674 = vld [vmem:[#allocation2 + $0x5d0] sm:$0xff]
        %v7675 = vld [vmem:[#allocation2 + $0x5d8] sm:$0xff]
        %v7676 = vld [vmem:[#allocation2 + $0x5e0] sm:$0xff]
        %v7677 = vld [vmem:[#allocation2 + $0x5e8] sm:$0xff]
        %v7678 = vld [vmem:[#allocation2 + $0x5f0] sm:$0xff]
        %v7679 = vld [vmem:[#allocation2 + $0x5f8] sm:$0xff]
        %v7680 = vld [vmem:[#allocation2 + $0x600] sm:$0xff]
        %v7681 = vld [vmem:[#allocation2 + $0x608] sm:$0xff]
        %v7682 = vld [vmem:[#allocation2 + $0x610] sm:$0xff]
        %v7683 = vld [vmem:[#allocation2 + $0x618] sm:$0xff]
        %v7684 = vld [vmem:[#allocation2 + $0x620] sm:$0xff]
        %v7685 = vld [vmem:[#allocation2 + $0x628] sm:$0xff]
        %v7686 = vld [vmem:[#allocation2 + $0x630] sm:$0xff]
        %v7687 = vld [vmem:[#allocation2 + $0x638] sm:$0xff]
        %v7688 = vld [vmem:[#allocation2 + $0x640] sm:$0xff]
        %v7689 = vld [vmem:[#allocation2 + $0x648] sm:$0xff]
        %v7690 = vld [vmem:[#allocation2 + $0x650] sm:$0xff]
        %v7691 = vld [vmem:[#allocation2 + $0x658] sm:$0xff]
        %v7692 = vld [vmem:[#allocation2 + $0x660] sm:$0xff]
        %v7693 = vld [vmem:[#allocation2 + $0x668] sm:$0xff]
        %v7694 = vld [vmem:[#allocation2 + $0x670] sm:$0xff]
        %v7695 = vld [vmem:[#allocation2 + $0x678] sm:$0xff]
        %v7696 = vld [vmem:[#allocation2 + $0x680] sm:$0xff]
        %v7697 = vld [vmem:[#allocation2 + $0x688] sm:$0xff]
        %v7698 = vld [vmem:[#allocation2 + $0x690] sm:$0xff]
        %v7699 = vld [vmem:[#allocation2 + $0x698] sm:$0xff]
        %v7700 = vld [vmem:[#allocation2 + $0x6a0] sm:$0xff]
        %v7701 = vld [vmem:[#allocation2 + $0x6a8] sm:$0xff]
        %v7702 = vld [vmem:[#allocation2 + $0x6b0] sm:$0xff]
        %v7703 = vld [vmem:[#allocation2 + $0x6b8] sm:$0xff]
        %v7704 = vld [vmem:[#allocation2 + $0x6c0] sm:$0xff]
        %v7705 = vld [vmem:[#allocation2 + $0x6c8] sm:$0xff]
        %v7706 = vld [vmem:[#allocation2 + $0x6d0] sm:$0xff]
        %v7707 = vld [vmem:[#allocation2 + $0x6d8] sm:$0xff]
        %v7708 = vld [vmem:[#allocation2 + $0x6e0] sm:$0xff]
        %v7709 = vld [vmem:[#allocation2 + $0x6e8] sm:$0xff]
        %v7710 = vld [vmem:[#allocation2 + $0x6f0] sm:$0xff]
        %v7711 = vld [vmem:[#allocation2 + $0x6f8] sm:$0xff]
        %v7712 = vld [vmem:[#allocation2 + $0x700] sm:$0xff]
        %v7713 = vld [vmem:[#allocation2 + $0x708] sm:$0xff]
        %v7714 = vld [vmem:[#allocation2 + $0x710] sm:$0xff]
        %v7715 = vld [vmem:[#allocation2 + $0x718] sm:$0xff]
        %v7716 = vld [vmem:[#allocation2 + $0x720] sm:$0xff]
        %v7717 = vld [vmem:[#allocation2 + $0x728] sm:$0xff]
        %v7718 = vld [vmem:[#allocation2 + $0x730] sm:$0xff]
        %v7719 = vld [vmem:[#allocation2 + $0x738] sm:$0xff]
        %v7720 = vld [vmem:[#allocation2 + $0x740] sm:$0xff]
        %v7721 = vld [vmem:[#allocation2 + $0x748] sm:$0xff]
        %v7722 = vld [vmem:[#allocation2 + $0x750] sm:$0xff]
        %v7723 = vld [vmem:[#allocation2 + $0x758] sm:$0xff]
        %v7724 = vld [vmem:[#allocation2 + $0x760] sm:$0xff]
        %v7725 = vld [vmem:[#allocation2 + $0x768] sm:$0xff]
        %v7726 = vld [vmem:[#allocation2 + $0x770] sm:$0xff]
        %v7727 = vld [vmem:[#allocation2 + $0x778] sm:$0xff]
        %v7728 = vld [vmem:[#allocation2 + $0x780] sm:$0xff]
        %v7729 = vld [vmem:[#allocation2 + $0x788] sm:$0xff]
        %v7730 = vld [vmem:[#allocation2 + $0x790] sm:$0xff]
        %v7731 = vld [vmem:[#allocation2 + $0x798] sm:$0xff]
        %v7732 = vld [vmem:[#allocation2 + $0x7a0] sm:$0xff]
        %v7733 = vld [vmem:[#allocation2 + $0x7a8] sm:$0xff]
        %v7734 = vld [vmem:[#allocation2 + $0x7b0] sm:$0xff]
        %v7735 = vld [vmem:[#allocation2 + $0x7b8] sm:$0xff]
        %v7736 = vld [vmem:[#allocation2 + $0x7c0] sm:$0xff]
        %v7737 = vld [vmem:[#allocation2 + $0x7c8] sm:$0xff]
        %v7738 = vld [vmem:[#allocation2 + $0x7d0] sm:$0xff]
        %v7739 = vld [vmem:[#allocation2 + $0x7d8] sm:$0xff]
        %v7740 = vld [vmem:[#allocation2 + $0x7e0] sm:$0xff]
        %v7741 = vld [vmem:[#allocation2 + $0x7e8] sm:$0xff]
        %v7742 = vld [vmem:[#allocation2 + $0x7f0] sm:$0xff]
        %v7743 = vld [vmem:[#allocation2 + $0x7f8] sm:$0xff]
        %v7744 = vld [vmem:[%s10] sm:$0xf]
        %v7746 = vlaneseq
        %v7747 = vshrl.u32 %v7746, 7
        %v7748 = vsub.s32 0, %v7747
        %v7749 = vrot.slane %v7744, %v7748
        %v7750 = vlaneseq
        %v7751 = vshrl.u32 %v7750, 7
        %v7752 = vsub.s32 1, %v7751
        %v7753 = vrot.slane %v7744, %v7752
        %v7754 = vlaneseq
        %v7755 = vshrl.u32 %v7754, 7
        %v7756 = vsub.s32 2, %v7755
        %v7757 = vrot.slane %v7744, %v7756
        %v7758 = vlaneseq
        %v7759 = vshrl.u32 %v7758, 7
        %v7760 = vsub.s32 3, %v7759
        %v7761 = vrot.slane %v7744, %v7760
        %v7798 = vunpack.c.l.b16 %v6960
        %v7799 = vunpack.c.l.b16 %v6977
        %v7800 = vunpack.c.l.b16 %v6994
        %v7801 = vunpack.c.l.b16 %v7011
        %v7802 = vunpack.c.l.b16 %v7028
        %v7803 = vunpack.c.l.b16 %v7045
        %v7804 = vunpack.c.l.b16 %v7062
        %v7805 = vunpack.c.l.b16 %v7079
        %v7806 = vunpack.c.l.b16 %v7096
        %v7807 = vunpack.c.l.b16 %v7113
        %v7808 = vunpack.c.l.b16 %v7130
        %v7809 = vunpack.c.l.b16 %v7147
        %v7810 = vunpack.c.l.b16 %v7164
        %v7811 = vunpack.c.l.b16 %v7181
        %v7812 = vunpack.c.l.b16 %v7198
        %v7813 = vunpack.c.l.b16 %v7215
        %v7814 = vunpack.c.l.b16 %v7232
        %v7815 = vunpack.c.l.b16 %v7249
        %v7816 = vunpack.c.l.b16 %v7266
        %v7817 = vunpack.c.l.b16 %v7283
        %v7818 = vunpack.c.l.b16 %v7300
        %v7819 = vunpack.c.l.b16 %v7317
        %v7820 = vunpack.c.l.b16 %v7334
        %v7821 = vunpack.c.l.b16 %v7351
        %v7822 = vunpack.c.l.b16 %v7368
        %v7823 = vunpack.c.l.b16 %v7385
        %v7824 = vunpack.c.l.b16 %v7402
        %v7825 = vunpack.c.l.b16 %v7419
        %v7826 = vunpack.c.l.b16 %v7436
        %v7827 = vunpack.c.l.b16 %v7453
        %v7828 = vunpack.c.l.b16 %v7470
        %v7829 = vunpack.c.l.b16 %v7487
        %vm7830 = vcmask 1041409
        %v7831 = vsel %vm7830, %v7806, %v7798
        %vm7832 = vcmask 1042434
        %v7833 = vsel %vm7832, %v7814, %v7831
        %vm7834 = vcmask 1043459
        %v7835 = vsel %vm7834, %v7822, %v7833
        %v7836 = vsel %vm7830, %v7807, %v7799
        %v7837 = vsel %vm7832, %v7815, %v7836
        %v7838 = vsel %vm7834, %v7823, %v7837
        %v7839 = vsel %vm7830, %v7808, %v7800
        %v7840 = vsel %vm7832, %v7816, %v7839
        %v7841 = vsel %vm7834, %v7824, %v7840
        %v7842 = vsel %vm7830, %v7809, %v7801
        %v7843 = vsel %vm7832, %v7817, %v7842
        %v7844 = vsel %vm7834, %v7825, %v7843
        %v7845 = vsel %vm7830, %v7810, %v7802
        %v7846 = vsel %vm7832, %v7818, %v7845
        %v7847 = vsel %vm7834, %v7826, %v7846
        %v7848 = vsel %vm7830, %v7811, %v7803
        %v7849 = vsel %vm7832, %v7819, %v7848
        %v7850 = vsel %vm7834, %v7827, %v7849
        %v7851 = vsel %vm7830, %v7812, %v7804
        %v7852 = vsel %vm7832, %v7820, %v7851
        %v7853 = vsel %vm7834, %v7828, %v7852
        %v7854 = vsel %vm7830, %v7813, %v7805
        %v7855 = vsel %vm7832, %v7821, %v7854
        %v7856 = vsel %vm7834, %v7829, %v7855
        %v7857 = vpack.c.b16 %v7835, %v7835
        %v7858 = vpack.c.b16 %v7838, %v7838
        %v7859 = vpack.c.b16 %v7841, %v7841
        %v7860 = vpack.c.b16 %v7844, %v7844
        %v7861 = vpack.c.b16 %v7847, %v7847
        %v7862 = vpack.c.b16 %v7850, %v7850
        %v7863 = vpack.c.b16 %v7853, %v7853
        %v7864 = vpack.c.b16 %v7856, %v7856
        %v8129 = vunpack.c.l.b16 %v7488
        %v8130 = vunpack.c.h.b16 %v7488
        %v8131 = vunpack.c.l.b16 %v7489
        %v8132 = vunpack.c.h.b16 %v7489
        %v8133 = vunpack.c.l.b16 %v7490
        %v8134 = vunpack.c.h.b16 %v7490
        %v8135 = vunpack.c.l.b16 %v7491
        %v8136 = vunpack.c.h.b16 %v7491
        %v8137 = vunpack.c.l.b16 %v7492
        %v8138 = vunpack.c.h.b16 %v7492
        %v8139 = vunpack.c.l.b16 %v7493
        %v8140 = vunpack.c.h.b16 %v7493
        %v8141 = vunpack.c.l.b16 %v7494
        %v8142 = vunpack.c.h.b16 %v7494
        %v8143 = vunpack.c.l.b16 %v7495
        %v8144 = vunpack.c.h.b16 %v7495
        %v8145 = vunpack.c.l.b16 %v7496
        %v8146 = vunpack.c.h.b16 %v7496
        %v8147 = vunpack.c.l.b16 %v7497
        %v8148 = vunpack.c.h.b16 %v7497
        %v8149 = vunpack.c.l.b16 %v7498
        %v8150 = vunpack.c.h.b16 %v7498
        %v8151 = vunpack.c.l.b16 %v7499
        %v8152 = vunpack.c.h.b16 %v7499
        %v8153 = vunpack.c.l.b16 %v7500
        %v8154 = vunpack.c.h.b16 %v7500
        %v8155 = vunpack.c.l.b16 %v7501
        %v8156 = vunpack.c.h.b16 %v7501
        %v8157 = vunpack.c.l.b16 %v7502
        %v8158 = vunpack.c.h.b16 %v7502
        %v8159 = vunpack.c.l.b16 %v7503
        %v8160 = vunpack.c.h.b16 %v7503
        %v8161 = vunpack.c.l.b16 %v7504
        %v8162 = vunpack.c.h.b16 %v7504
        %v8163 = vunpack.c.l.b16 %v7505
        %v8164 = vunpack.c.h.b16 %v7505
        %v8165 = vunpack.c.l.b16 %v7506
        %v8166 = vunpack.c.h.b16 %v7506
        %v8167 = vunpack.c.l.b16 %v7507
        %v8168 = vunpack.c.h.b16 %v7507
        %v8169 = vunpack.c.l.b16 %v7508
        %v8170 = vunpack.c.h.b16 %v7508
        %v8171 = vunpack.c.l.b16 %v7509
        %v8172 = vunpack.c.h.b16 %v7509
        %v8173 = vunpack.c.l.b16 %v7510
        %v8174 = vunpack.c.h.b16 %v7510
        %v8175 = vunpack.c.l.b16 %v7511
        %v8176 = vunpack.c.h.b16 %v7511
        %v8177 = vunpack.c.l.b16 %v7512
        %v8178 = vunpack.c.h.b16 %v7512
        %v8179 = vunpack.c.l.b16 %v7513
        %v8180 = vunpack.c.h.b16 %v7513
        %v8181 = vunpack.c.l.b16 %v7514
        %v8182 = vunpack.c.h.b16 %v7514
        %v8183 = vunpack.c.l.b16 %v7515
        %v8184 = vunpack.c.h.b16 %v7515
        %v8185 = vunpack.c.l.b16 %v7516
        %v8186 = vunpack.c.h.b16 %v7516
        %v8187 = vunpack.c.l.b16 %v7517
        %v8188 = vunpack.c.h.b16 %v7517
        %v8189 = vunpack.c.l.b16 %v7518
        %v8190 = vunpack.c.h.b16 %v7518
        %v8191 = vunpack.c.l.b16 %v7519
        %v8192 = vunpack.c.h.b16 %v7519
        %v8193 = vunpack.c.l.b16 %v7520
        %v8194 = vunpack.c.h.b16 %v7520
        %v8195 = vunpack.c.l.b16 %v7521
        %v8196 = vunpack.c.h.b16 %v7521
        %v8197 = vunpack.c.l.b16 %v7522
        %v8198 = vunpack.c.h.b16 %v7522
        %v8199 = vunpack.c.l.b16 %v7523
        %v8200 = vunpack.c.h.b16 %v7523
        %v8201 = vunpack.c.l.b16 %v7524
        %v8202 = vunpack.c.h.b16 %v7524
        %v8203 = vunpack.c.l.b16 %v7525
        %v8204 = vunpack.c.h.b16 %v7525
        %v8205 = vunpack.c.l.b16 %v7526
        %v8206 = vunpack.c.h.b16 %v7526
        %v8207 = vunpack.c.l.b16 %v7527
        %v8208 = vunpack.c.h.b16 %v7527
        %v8209 = vunpack.c.l.b16 %v7528
        %v8210 = vunpack.c.h.b16 %v7528
        %v8211 = vunpack.c.l.b16 %v7529
        %v8212 = vunpack.c.h.b16 %v7529
        %v8213 = vunpack.c.l.b16 %v7530
        %v8214 = vunpack.c.h.b16 %v7530
        %v8215 = vunpack.c.l.b16 %v7531
        %v8216 = vunpack.c.h.b16 %v7531
        %v8217 = vunpack.c.l.b16 %v7532
        %v8218 = vunpack.c.h.b16 %v7532
        %v8219 = vunpack.c.l.b16 %v7533
        %v8220 = vunpack.c.h.b16 %v7533
        %v8221 = vunpack.c.l.b16 %v7534
        %v8222 = vunpack.c.h.b16 %v7534
        %v8223 = vunpack.c.l.b16 %v7535
        %v8224 = vunpack.c.h.b16 %v7535
        %v8225 = vunpack.c.l.b16 %v7536
        %v8226 = vunpack.c.h.b16 %v7536
        %v8227 = vunpack.c.l.b16 %v7537
        %v8228 = vunpack.c.h.b16 %v7537
        %v8229 = vunpack.c.l.b16 %v7538
        %v8230 = vunpack.c.h.b16 %v7538
        %v8231 = vunpack.c.l.b16 %v7539
        %v8232 = vunpack.c.h.b16 %v7539
        %v8233 = vunpack.c.l.b16 %v7540
        %v8234 = vunpack.c.h.b16 %v7540
        %v8235 = vunpack.c.l.b16 %v7541
        %v8236 = vunpack.c.h.b16 %v7541
        %v8237 = vunpack.c.l.b16 %v7542
        %v8238 = vunpack.c.h.b16 %v7542
        %v8239 = vunpack.c.l.b16 %v7543
        %v8240 = vunpack.c.h.b16 %v7543
        %v8241 = vunpack.c.l.b16 %v7544
        %v8242 = vunpack.c.h.b16 %v7544
        %v8243 = vunpack.c.l.b16 %v7545
        %v8244 = vunpack.c.h.b16 %v7545
        %v8245 = vunpack.c.l.b16 %v7546
        %v8246 = vunpack.c.h.b16 %v7546
        %v8247 = vunpack.c.l.b16 %v7547
        %v8248 = vunpack.c.h.b16 %v7547
        %v8249 = vunpack.c.l.b16 %v7548
        %v8250 = vunpack.c.h.b16 %v7548
        %v8251 = vunpack.c.l.b16 %v7549
        %v8252 = vunpack.c.h.b16 %v7549
        %v8253 = vunpack.c.l.b16 %v7550
        %v8254 = vunpack.c.h.b16 %v7550
        %v8255 = vunpack.c.l.b16 %v7551
        %v8256 = vunpack.c.h.b16 %v7551
        %v8257 = vunpack.c.l.b16 %v7552
        %v8258 = vunpack.c.h.b16 %v7552
        %v8259 = vunpack.c.l.b16 %v7553
        %v8260 = vunpack.c.h.b16 %v7553
        %v8261 = vunpack.c.l.b16 %v7554
        %v8262 = vunpack.c.h.b16 %v7554
        %v8263 = vunpack.c.l.b16 %v7555
        %v8264 = vunpack.c.h.b16 %v7555
        %v8265 = vunpack.c.l.b16 %v7556
        %v8266 = vunpack.c.h.b16 %v7556
        %v8267 = vunpack.c.l.b16 %v7557
        %v8268 = vunpack.c.h.b16 %v7557
        %v8269 = vunpack.c.l.b16 %v7558
        %v8270 = vunpack.c.h.b16 %v7558
        %v8271 = vunpack.c.l.b16 %v7559
        %v8272 = vunpack.c.h.b16 %v7559
        %v8273 = vunpack.c.l.b16 %v7560
        %v8274 = vunpack.c.h.b16 %v7560
        %v8275 = vunpack.c.l.b16 %v7561
        %v8276 = vunpack.c.h.b16 %v7561
        %v8277 = vunpack.c.l.b16 %v7562
        %v8278 = vunpack.c.h.b16 %v7562
        %v8279 = vunpack.c.l.b16 %v7563
        %v8280 = vunpack.c.h.b16 %v7563
        %v8281 = vunpack.c.l.b16 %v7564
        %v8282 = vunpack.c.h.b16 %v7564
        %v8283 = vunpack.c.l.b16 %v7565
        %v8284 = vunpack.c.h.b16 %v7565
        %v8285 = vunpack.c.l.b16 %v7566
        %v8286 = vunpack.c.h.b16 %v7566
        %v8287 = vunpack.c.l.b16 %v7567
        %v8288 = vunpack.c.h.b16 %v7567
        %v8289 = vunpack.c.l.b16 %v7568
        %v8290 = vunpack.c.h.b16 %v7568
        %v8291 = vunpack.c.l.b16 %v7569
        %v8292 = vunpack.c.h.b16 %v7569
        %v8293 = vunpack.c.l.b16 %v7570
        %v8294 = vunpack.c.h.b16 %v7570
        %v8295 = vunpack.c.l.b16 %v7571
        %v8296 = vunpack.c.h.b16 %v7571
        %v8297 = vunpack.c.l.b16 %v7572
        %v8298 = vunpack.c.h.b16 %v7572
        %v8299 = vunpack.c.l.b16 %v7573
        %v8300 = vunpack.c.h.b16 %v7573
        %v8301 = vunpack.c.l.b16 %v7574
        %v8302 = vunpack.c.h.b16 %v7574
        %v8303 = vunpack.c.l.b16 %v7575
        %v8304 = vunpack.c.h.b16 %v7575
        %v8305 = vunpack.c.l.b16 %v7576
        %v8306 = vunpack.c.h.b16 %v7576
        %v8307 = vunpack.c.l.b16 %v7577
        %v8308 = vunpack.c.h.b16 %v7577
        %v8309 = vunpack.c.l.b16 %v7578
        %v8310 = vunpack.c.h.b16 %v7578
        %v8311 = vunpack.c.l.b16 %v7579
        %v8312 = vunpack.c.h.b16 %v7579
        %v8313 = vunpack.c.l.b16 %v7580
        %v8314 = vunpack.c.h.b16 %v7580
        %v8315 = vunpack.c.l.b16 %v7581
        %v8316 = vunpack.c.h.b16 %v7581
        %v8317 = vunpack.c.l.b16 %v7582
        %v8318 = vunpack.c.h.b16 %v7582
        %v8319 = vunpack.c.l.b16 %v7583
        %v8320 = vunpack.c.h.b16 %v7583
        %v8321 = vunpack.c.l.b16 %v7584
        %v8322 = vunpack.c.h.b16 %v7584
        %v8323 = vunpack.c.l.b16 %v7585
        %v8324 = vunpack.c.h.b16 %v7585
        %v8325 = vunpack.c.l.b16 %v7586
        %v8326 = vunpack.c.h.b16 %v7586
        %v8327 = vunpack.c.l.b16 %v7587
        %v8328 = vunpack.c.h.b16 %v7587
        %v8329 = vunpack.c.l.b16 %v7588
        %v8330 = vunpack.c.h.b16 %v7588
        %v8331 = vunpack.c.l.b16 %v7589
        %v8332 = vunpack.c.h.b16 %v7589
        %v8333 = vunpack.c.l.b16 %v7590
        %v8334 = vunpack.c.h.b16 %v7590
        %v8335 = vunpack.c.l.b16 %v7591
        %v8336 = vunpack.c.h.b16 %v7591
        %v8337 = vunpack.c.l.b16 %v7592
        %v8338 = vunpack.c.h.b16 %v7592
        %v8339 = vunpack.c.l.b16 %v7593
        %v8340 = vunpack.c.h.b16 %v7593
        %v8341 = vunpack.c.l.b16 %v7594
        %v8342 = vunpack.c.h.b16 %v7594
        %v8343 = vunpack.c.l.b16 %v7595
        %v8344 = vunpack.c.h.b16 %v7595
        %v8345 = vunpack.c.l.b16 %v7596
        %v8346 = vunpack.c.h.b16 %v7596
        %v8347 = vunpack.c.l.b16 %v7597
        %v8348 = vunpack.c.h.b16 %v7597
        %v8349 = vunpack.c.l.b16 %v7598
        %v8350 = vunpack.c.h.b16 %v7598
        %v8351 = vunpack.c.l.b16 %v7599
        %v8352 = vunpack.c.h.b16 %v7599
        %v8353 = vunpack.c.l.b16 %v7600
        %v8354 = vunpack.c.h.b16 %v7600
        %v8355 = vunpack.c.l.b16 %v7601
        %v8356 = vunpack.c.h.b16 %v7601
        %v8357 = vunpack.c.l.b16 %v7602
        %v8358 = vunpack.c.h.b16 %v7602
        %v8359 = vunpack.c.l.b16 %v7603
        %v8360 = vunpack.c.h.b16 %v7603
        %v8361 = vunpack.c.l.b16 %v7604
        %v8362 = vunpack.c.h.b16 %v7604
        %v8363 = vunpack.c.l.b16 %v7605
        %v8364 = vunpack.c.h.b16 %v7605
        %v8365 = vunpack.c.l.b16 %v7606
        %v8366 = vunpack.c.h.b16 %v7606
        %v8367 = vunpack.c.l.b16 %v7607
        %v8368 = vunpack.c.h.b16 %v7607
        %v8369 = vunpack.c.l.b16 %v7608
        %v8370 = vunpack.c.h.b16 %v7608
        %v8371 = vunpack.c.l.b16 %v7609
        %v8372 = vunpack.c.h.b16 %v7609
        %v8373 = vunpack.c.l.b16 %v7610
        %v8374 = vunpack.c.h.b16 %v7610
        %v8375 = vunpack.c.l.b16 %v7611
        %v8376 = vunpack.c.h.b16 %v7611
        %v8377 = vunpack.c.l.b16 %v7612
        %v8378 = vunpack.c.h.b16 %v7612
        %v8379 = vunpack.c.l.b16 %v7613
        %v8380 = vunpack.c.h.b16 %v7613
        %v8381 = vunpack.c.l.b16 %v7614
        %v8382 = vunpack.c.h.b16 %v7614
        %v8383 = vunpack.c.l.b16 %v7615
        %v8384 = vunpack.c.h.b16 %v7615
        %v8385 = vunpack.c.l.b16 %v7616
        %v8386 = vunpack.c.h.b16 %v7616
        %v8387 = vunpack.c.l.b16 %v7617
        %v8388 = vunpack.c.h.b16 %v7617
        %v8389 = vunpack.c.l.b16 %v7618
        %v8390 = vunpack.c.h.b16 %v7618
        %v8391 = vunpack.c.l.b16 %v7619
        %v8392 = vunpack.c.h.b16 %v7619
        %v8393 = vunpack.c.l.b16 %v7620
        %v8394 = vunpack.c.h.b16 %v7620
        %v8395 = vunpack.c.l.b16 %v7621
        %v8396 = vunpack.c.h.b16 %v7621
        %v8397 = vunpack.c.l.b16 %v7622
        %v8398 = vunpack.c.h.b16 %v7622
        %v8399 = vunpack.c.l.b16 %v7623
        %v8400 = vunpack.c.h.b16 %v7623
        %v8401 = vunpack.c.l.b16 %v7624
        %v8402 = vunpack.c.h.b16 %v7624
        %v8403 = vunpack.c.l.b16 %v7625
        %v8404 = vunpack.c.h.b16 %v7625
        %v8405 = vunpack.c.l.b16 %v7626
        %v8406 = vunpack.c.h.b16 %v7626
        %v8407 = vunpack.c.l.b16 %v7627
        %v8408 = vunpack.c.h.b16 %v7627
        %v8409 = vunpack.c.l.b16 %v7628
        %v8410 = vunpack.c.h.b16 %v7628
        %v8411 = vunpack.c.l.b16 %v7629
        %v8412 = vunpack.c.h.b16 %v7629
        %v8413 = vunpack.c.l.b16 %v7630
        %v8414 = vunpack.c.h.b16 %v7630
        %v8415 = vunpack.c.l.b16 %v7631
        %v8416 = vunpack.c.h.b16 %v7631
        %v8417 = vunpack.c.l.b16 %v7632
        %v8418 = vunpack.c.h.b16 %v7632
        %v8419 = vunpack.c.l.b16 %v7633
        %v8420 = vunpack.c.h.b16 %v7633
        %v8421 = vunpack.c.l.b16 %v7634
        %v8422 = vunpack.c.h.b16 %v7634
        %v8423 = vunpack.c.l.b16 %v7635
        %v8424 = vunpack.c.h.b16 %v7635
        %v8425 = vunpack.c.l.b16 %v7636
        %v8426 = vunpack.c.h.b16 %v7636
        %v8427 = vunpack.c.l.b16 %v7637
        %v8428 = vunpack.c.h.b16 %v7637
        %v8429 = vunpack.c.l.b16 %v7638
        %v8430 = vunpack.c.h.b16 %v7638
        %v8431 = vunpack.c.l.b16 %v7639
        %v8432 = vunpack.c.h.b16 %v7639
        %v8433 = vunpack.c.l.b16 %v7640
        %v8434 = vunpack.c.h.b16 %v7640
        %v8435 = vunpack.c.l.b16 %v7641
        %v8436 = vunpack.c.h.b16 %v7641
        %v8437 = vunpack.c.l.b16 %v7642
        %v8438 = vunpack.c.h.b16 %v7642
        %v8439 = vunpack.c.l.b16 %v7643
        %v8440 = vunpack.c.h.b16 %v7643
        %v8441 = vunpack.c.l.b16 %v7644
        %v8442 = vunpack.c.h.b16 %v7644
        %v8443 = vunpack.c.l.b16 %v7645
        %v8444 = vunpack.c.h.b16 %v7645
        %v8445 = vunpack.c.l.b16 %v7646
        %v8446 = vunpack.c.h.b16 %v7646
        %v8447 = vunpack.c.l.b16 %v7647
        %v8448 = vunpack.c.h.b16 %v7647
        %v8449 = vunpack.c.l.b16 %v7648
        %v8450 = vunpack.c.h.b16 %v7648
        %v8451 = vunpack.c.l.b16 %v7649
        %v8452 = vunpack.c.h.b16 %v7649
        %v8453 = vunpack.c.l.b16 %v7650
        %v8454 = vunpack.c.h.b16 %v7650
        %v8455 = vunpack.c.l.b16 %v7651
        %v8456 = vunpack.c.h.b16 %v7651
        %v8457 = vunpack.c.l.b16 %v7652
        %v8458 = vunpack.c.h.b16 %v7652
        %v8459 = vunpack.c.l.b16 %v7653
        %v8460 = vunpack.c.h.b16 %v7653
        %v8461 = vunpack.c.l.b16 %v7654
        %v8462 = vunpack.c.h.b16 %v7654
        %v8463 = vunpack.c.l.b16 %v7655
        %v8464 = vunpack.c.h.b16 %v7655
        %v8465 = vunpack.c.l.b16 %v7656
        %v8466 = vunpack.c.h.b16 %v7656
        %v8467 = vunpack.c.l.b16 %v7657
        %v8468 = vunpack.c.h.b16 %v7657
        %v8469 = vunpack.c.l.b16 %v7658
        %v8470 = vunpack.c.h.b16 %v7658
        %v8471 = vunpack.c.l.b16 %v7659
        %v8472 = vunpack.c.h.b16 %v7659
        %v8473 = vunpack.c.l.b16 %v7660
        %v8474 = vunpack.c.h.b16 %v7660
        %v8475 = vunpack.c.l.b16 %v7661
        %v8476 = vunpack.c.h.b16 %v7661
        %v8477 = vunpack.c.l.b16 %v7662
        %v8478 = vunpack.c.h.b16 %v7662
        %v8479 = vunpack.c.l.b16 %v7663
        %v8480 = vunpack.c.h.b16 %v7663
        %v8481 = vunpack.c.l.b16 %v7664
        %v8482 = vunpack.c.h.b16 %v7664
        %v8483 = vunpack.c.l.b16 %v7665
        %v8484 = vunpack.c.h.b16 %v7665
        %v8485 = vunpack.c.l.b16 %v7666
        %v8486 = vunpack.c.h.b16 %v7666
        %v8487 = vunpack.c.l.b16 %v7667
        %v8488 = vunpack.c.h.b16 %v7667
        %v8489 = vunpack.c.l.b16 %v7668
        %v8490 = vunpack.c.h.b16 %v7668
        %v8491 = vunpack.c.l.b16 %v7669
        %v8492 = vunpack.c.h.b16 %v7669
        %v8493 = vunpack.c.l.b16 %v7670
        %v8494 = vunpack.c.h.b16 %v7670
        %v8495 = vunpack.c.l.b16 %v7671
        %v8496 = vunpack.c.h.b16 %v7671
        %v8497 = vunpack.c.l.b16 %v7672
        %v8498 = vunpack.c.h.b16 %v7672
        %v8499 = vunpack.c.l.b16 %v7673
        %v8500 = vunpack.c.h.b16 %v7673
        %v8501 = vunpack.c.l.b16 %v7674
        %v8502 = vunpack.c.h.b16 %v7674
        %v8503 = vunpack.c.l.b16 %v7675
        %v8504 = vunpack.c.h.b16 %v7675
        %v8505 = vunpack.c.l.b16 %v7676
        %v8506 = vunpack.c.h.b16 %v7676
        %v8507 = vunpack.c.l.b16 %v7677
        %v8508 = vunpack.c.h.b16 %v7677
        %v8509 = vunpack.c.l.b16 %v7678
        %v8510 = vunpack.c.h.b16 %v7678
        %v8511 = vunpack.c.l.b16 %v7679
        %v8512 = vunpack.c.h.b16 %v7679
        %v8513 = vunpack.c.l.b16 %v7680
        %v8514 = vunpack.c.h.b16 %v7680
        %v8515 = vunpack.c.l.b16 %v7681
        %v8516 = vunpack.c.h.b16 %v7681
        %v8517 = vunpack.c.l.b16 %v7682
        %v8518 = vunpack.c.h.b16 %v7682
        %v8519 = vunpack.c.l.b16 %v7683
        %v8520 = vunpack.c.h.b16 %v7683
        %v8521 = vunpack.c.l.b16 %v7684
        %v8522 = vunpack.c.h.b16 %v7684
        %v8523 = vunpack.c.l.b16 %v7685
        %v8524 = vunpack.c.h.b16 %v7685
        %v8525 = vunpack.c.l.b16 %v7686
        %v8526 = vunpack.c.h.b16 %v7686
        %v8527 = vunpack.c.l.b16 %v7687
        %v8528 = vunpack.c.h.b16 %v7687
        %v8529 = vunpack.c.l.b16 %v7688
        %v8530 = vunpack.c.h.b16 %v7688
        %v8531 = vunpack.c.l.b16 %v7689
        %v8532 = vunpack.c.h.b16 %v7689
        %v8533 = vunpack.c.l.b16 %v7690
        %v8534 = vunpack.c.h.b16 %v7690
        %v8535 = vunpack.c.l.b16 %v7691
        %v8536 = vunpack.c.h.b16 %v7691
        %v8537 = vunpack.c.l.b16 %v7692
        %v8538 = vunpack.c.h.b16 %v7692
        %v8539 = vunpack.c.l.b16 %v7693
        %v8540 = vunpack.c.h.b16 %v7693
        %v8541 = vunpack.c.l.b16 %v7694
        %v8542 = vunpack.c.h.b16 %v7694
        %v8543 = vunpack.c.l.b16 %v7695
        %v8544 = vunpack.c.h.b16 %v7695
        %v8545 = vunpack.c.l.b16 %v7696
        %v8546 = vunpack.c.h.b16 %v7696
        %v8547 = vunpack.c.l.b16 %v7697
        %v8548 = vunpack.c.h.b16 %v7697
        %v8549 = vunpack.c.l.b16 %v7698
        %v8550 = vunpack.c.h.b16 %v7698
        %v8551 = vunpack.c.l.b16 %v7699
        %v8552 = vunpack.c.h.b16 %v7699
        %v8553 = vunpack.c.l.b16 %v7700
        %v8554 = vunpack.c.h.b16 %v7700
        %v8555 = vunpack.c.l.b16 %v7701
        %v8556 = vunpack.c.h.b16 %v7701
        %v8557 = vunpack.c.l.b16 %v7702
        %v8558 = vunpack.c.h.b16 %v7702
        %v8559 = vunpack.c.l.b16 %v7703
        %v8560 = vunpack.c.h.b16 %v7703
        %v8561 = vunpack.c.l.b16 %v7704
        %v8562 = vunpack.c.h.b16 %v7704
        %v8563 = vunpack.c.l.b16 %v7705
        %v8564 = vunpack.c.h.b16 %v7705
        %v8565 = vunpack.c.l.b16 %v7706
        %v8566 = vunpack.c.h.b16 %v7706
        %v8567 = vunpack.c.l.b16 %v7707
        %v8568 = vunpack.c.h.b16 %v7707
        %v8569 = vunpack.c.l.b16 %v7708
        %v8570 = vunpack.c.h.b16 %v7708
        %v8571 = vunpack.c.l.b16 %v7709
        %v8572 = vunpack.c.h.b16 %v7709
        %v8573 = vunpack.c.l.b16 %v7710
        %v8574 = vunpack.c.h.b16 %v7710
        %v8575 = vunpack.c.l.b16 %v7711
        %v8576 = vunpack.c.h.b16 %v7711
        %v8577 = vunpack.c.l.b16 %v7712
        %v8578 = vunpack.c.h.b16 %v7712
        %v8579 = vunpack.c.l.b16 %v7713
        %v8580 = vunpack.c.h.b16 %v7713
        %v8581 = vunpack.c.l.b16 %v7714
        %v8582 = vunpack.c.h.b16 %v7714
        %v8583 = vunpack.c.l.b16 %v7715
        %v8584 = vunpack.c.h.b16 %v7715
        %v8585 = vunpack.c.l.b16 %v7716
        %v8586 = vunpack.c.h.b16 %v7716
        %v8587 = vunpack.c.l.b16 %v7717
        %v8588 = vunpack.c.h.b16 %v7717
        %v8589 = vunpack.c.l.b16 %v7718
        %v8590 = vunpack.c.h.b16 %v7718
        %v8591 = vunpack.c.l.b16 %v7719
        %v8592 = vunpack.c.h.b16 %v7719
        %v8593 = vunpack.c.l.b16 %v7720
        %v8594 = vunpack.c.h.b16 %v7720
        %v8595 = vunpack.c.l.b16 %v7721
        %v8596 = vunpack.c.h.b16 %v7721
        %v8597 = vunpack.c.l.b16 %v7722
        %v8598 = vunpack.c.h.b16 %v7722
        %v8599 = vunpack.c.l.b16 %v7723
        %v8600 = vunpack.c.h.b16 %v7723
        %v8601 = vunpack.c.l.b16 %v7724
        %v8602 = vunpack.c.h.b16 %v7724
        %v8603 = vunpack.c.l.b16 %v7725
        %v8604 = vunpack.c.h.b16 %v7725
        %v8605 = vunpack.c.l.b16 %v7726
        %v8606 = vunpack.c.h.b16 %v7726
        %v8607 = vunpack.c.l.b16 %v7727
        %v8608 = vunpack.c.h.b16 %v7727
        %v8609 = vunpack.c.l.b16 %v7728
        %v8610 = vunpack.c.h.b16 %v7728
        %v8611 = vunpack.c.l.b16 %v7729
        %v8612 = vunpack.c.h.b16 %v7729
        %v8613 = vunpack.c.l.b16 %v7730
        %v8614 = vunpack.c.h.b16 %v7730
        %v8615 = vunpack.c.l.b16 %v7731
        %v8616 = vunpack.c.h.b16 %v7731
        %v8617 = vunpack.c.l.b16 %v7732
        %v8618 = vunpack.c.h.b16 %v7732
        %v8619 = vunpack.c.l.b16 %v7733
        %v8620 = vunpack.c.h.b16 %v7733
        %v8621 = vunpack.c.l.b16 %v7734
        %v8622 = vunpack.c.h.b16 %v7734
        %v8623 = vunpack.c.l.b16 %v7735
        %v8624 = vunpack.c.h.b16 %v7735
        %v8625 = vunpack.c.l.b16 %v7736
        %v8626 = vunpack.c.h.b16 %v7736
        %v8627 = vunpack.c.l.b16 %v7737
        %v8628 = vunpack.c.h.b16 %v7737
        %v8629 = vunpack.c.l.b16 %v7738
        %v8630 = vunpack.c.h.b16 %v7738
        %v8631 = vunpack.c.l.b16 %v7739
        %v8632 = vunpack.c.h.b16 %v7739
        %v8633 = vunpack.c.l.b16 %v7740
        %v8634 = vunpack.c.h.b16 %v7740
        %v8635 = vunpack.c.l.b16 %v7741
        %v8636 = vunpack.c.h.b16 %v7741
        %v8637 = vunpack.c.l.b16 %v7742
        %v8638 = vunpack.c.h.b16 %v7742
        %v8639 = vunpack.c.l.b16 %v7743
        %v8640 = vunpack.c.h.b16 %v7743
        %v8641 = vpack.c.b16 %v8133, %v8129
        %v8642 = vpack.c.b16 %v8134, %v8130
        %v8643 = vpack.c.b16 %v8135, %v8131
        %v8644 = vpack.c.b16 %v8136, %v8132
        %v8645 = vpack.c.b16 %v8141, %v8137
        %v8646 = vpack.c.b16 %v8142, %v8138
        %v8647 = vpack.c.b16 %v8143, %v8139
        %v8648 = vpack.c.b16 %v8144, %v8140
        %v8649 = vpack.c.b16 %v8149, %v8145
        %v8650 = vpack.c.b16 %v8150, %v8146
        %v8651 = vpack.c.b16 %v8151, %v8147
        %v8652 = vpack.c.b16 %v8152, %v8148
        %v8653 = vpack.c.b16 %v8157, %v8153
        %v8654 = vpack.c.b16 %v8158, %v8154
        %v8655 = vpack.c.b16 %v8159, %v8155
        %v8656 = vpack.c.b16 %v8160, %v8156
        %v8657 = vpack.c.b16 %v8165, %v8161
        %v8658 = vpack.c.b16 %v8166, %v8162
        %v8659 = vpack.c.b16 %v8167, %v8163
        %v8660 = vpack.c.b16 %v8168, %v8164
        %v8661 = vpack.c.b16 %v8173, %v8169
        %v8662 = vpack.c.b16 %v8174, %v8170
        %v8663 = vpack.c.b16 %v8175, %v8171
        %v8664 = vpack.c.b16 %v8176, %v8172
        %v8665 = vpack.c.b16 %v8181, %v8177
        %v8666 = vpack.c.b16 %v8182, %v8178
        %v8667 = vpack.c.b16 %v8183, %v8179
        %v8668 = vpack.c.b16 %v8184, %v8180
        %v8669 = vpack.c.b16 %v8189, %v8185
        %v8670 = vpack.c.b16 %v8190, %v8186
        %v8671 = vpack.c.b16 %v8191, %v8187
        %v8672 = vpack.c.b16 %v8192, %v8188
        %v8673 = vpack.c.b16 %v8197, %v8193
        %v8674 = vpack.c.b16 %v8198, %v8194
        %v8675 = vpack.c.b16 %v8199, %v8195
        %v8676 = vpack.c.b16 %v8200, %v8196
        %v8677 = vpack.c.b16 %v8205, %v8201
        %v8678 = vpack.c.b16 %v8206, %v8202
        %v8679 = vpack.c.b16 %v8207, %v8203
        %v8680 = vpack.c.b16 %v8208, %v8204
        %v8681 = vpack.c.b16 %v8213, %v8209
        %v8682 = vpack.c.b16 %v8214, %v8210
        %v8683 = vpack.c.b16 %v8215, %v8211
        %v8684 = vpack.c.b16 %v8216, %v8212
        %v8685 = vpack.c.b16 %v8221, %v8217
        %v8686 = vpack.c.b16 %v8222, %v8218
        %v8687 = vpack.c.b16 %v8223, %v8219
        %v8688 = vpack.c.b16 %v8224, %v8220
        %v8689 = vpack.c.b16 %v8229, %v8225
        %v8690 = vpack.c.b16 %v8230, %v8226
        %v8691 = vpack.c.b16 %v8231, %v8227
        %v8692 = vpack.c.b16 %v8232, %v8228
        %v8693 = vpack.c.b16 %v8237, %v8233
        %v8694 = vpack.c.b16 %v8238, %v8234
        %v8695 = vpack.c.b16 %v8239, %v8235
        %v8696 = vpack.c.b16 %v8240, %v8236
        %v8697 = vpack.c.b16 %v8245, %v8241
        %v8698 = vpack.c.b16 %v8246, %v8242
        %v8699 = vpack.c.b16 %v8247, %v8243
        %v8700 = vpack.c.b16 %v8248, %v8244
        %v8701 = vpack.c.b16 %v8253, %v8249
        %v8702 = vpack.c.b16 %v8254, %v8250
        %v8703 = vpack.c.b16 %v8255, %v8251
        %v8704 = vpack.c.b16 %v8256, %v8252
        %v8705 = vpack.c.b16 %v8261, %v8257
        %v8706 = vpack.c.b16 %v8262, %v8258
        %v8707 = vpack.c.b16 %v8263, %v8259
        %v8708 = vpack.c.b16 %v8264, %v8260
        %v8709 = vpack.c.b16 %v8269, %v8265
        %v8710 = vpack.c.b16 %v8270, %v8266
        %v8711 = vpack.c.b16 %v8271, %v8267
        %v8712 = vpack.c.b16 %v8272, %v8268
        %v8713 = vpack.c.b16 %v8277, %v8273
        %v8714 = vpack.c.b16 %v8278, %v8274
        %v8715 = vpack.c.b16 %v8279, %v8275
        %v8716 = vpack.c.b16 %v8280, %v8276
        %v8717 = vpack.c.b16 %v8285, %v8281
        %v8718 = vpack.c.b16 %v8286, %v8282
        %v8719 = vpack.c.b16 %v8287, %v8283
        %v8720 = vpack.c.b16 %v8288, %v8284
        %v8721 = vpack.c.b16 %v8293, %v8289
        %v8722 = vpack.c.b16 %v8294, %v8290
        %v8723 = vpack.c.b16 %v8295, %v8291
        %v8724 = vpack.c.b16 %v8296, %v8292
        %v8725 = vpack.c.b16 %v8301, %v8297
        %v8726 = vpack.c.b16 %v8302, %v8298
        %v8727 = vpack.c.b16 %v8303, %v8299
        %v8728 = vpack.c.b16 %v8304, %v8300
        %v8729 = vpack.c.b16 %v8309, %v8305
        %v8730 = vpack.c.b16 %v8310, %v8306
        %v8731 = vpack.c.b16 %v8311, %v8307
        %v8732 = vpack.c.b16 %v8312, %v8308
        %v8733 = vpack.c.b16 %v8317, %v8313
        %v8734 = vpack.c.b16 %v8318, %v8314
        %v8735 = vpack.c.b16 %v8319, %v8315
        %v8736 = vpack.c.b16 %v8320, %v8316
        %v8737 = vpack.c.b16 %v8325, %v8321
        %v8738 = vpack.c.b16 %v8326, %v8322
        %v8739 = vpack.c.b16 %v8327, %v8323
        %v8740 = vpack.c.b16 %v8328, %v8324
        %v8741 = vpack.c.b16 %v8333, %v8329
        %v8742 = vpack.c.b16 %v8334, %v8330
        %v8743 = vpack.c.b16 %v8335, %v8331
        %v8744 = vpack.c.b16 %v8336, %v8332
        %v8745 = vpack.c.b16 %v8341, %v8337
        %v8746 = vpack.c.b16 %v8342, %v8338
        %v8747 = vpack.c.b16 %v8343, %v8339
        %v8748 = vpack.c.b16 %v8344, %v8340
        %v8749 = vpack.c.b16 %v8349, %v8345
        %v8750 = vpack.c.b16 %v8350, %v8346
        %v8751 = vpack.c.b16 %v8351, %v8347
        %v8752 = vpack.c.b16 %v8352, %v8348
        %v8753 = vpack.c.b16 %v8357, %v8353
        %v8754 = vpack.c.b16 %v8358, %v8354
        %v8755 = vpack.c.b16 %v8359, %v8355
        %v8756 = vpack.c.b16 %v8360, %v8356
        %v8757 = vpack.c.b16 %v8365, %v8361
        %v8758 = vpack.c.b16 %v8366, %v8362
        %v8759 = vpack.c.b16 %v8367, %v8363
        %v8760 = vpack.c.b16 %v8368, %v8364
        %v8761 = vpack.c.b16 %v8373, %v8369
        %v8762 = vpack.c.b16 %v8374, %v8370
        %v8763 = vpack.c.b16 %v8375, %v8371
        %v8764 = vpack.c.b16 %v8376, %v8372
        %v8765 = vpack.c.b16 %v8381, %v8377
        %v8766 = vpack.c.b16 %v8382, %v8378
        %v8767 = vpack.c.b16 %v8383, %v8379
        %v8768 = vpack.c.b16 %v8384, %v8380
        %v8769 = vpack.c.b16 %v8389, %v8385
        %v8770 = vpack.c.b16 %v8390, %v8386
        %v8771 = vpack.c.b16 %v8391, %v8387
        %v8772 = vpack.c.b16 %v8392, %v8388
        %v8773 = vpack.c.b16 %v8397, %v8393
        %v8774 = vpack.c.b16 %v8398, %v8394
        %v8775 = vpack.c.b16 %v8399, %v8395
        %v8776 = vpack.c.b16 %v8400, %v8396
        %v8777 = vpack.c.b16 %v8405, %v8401
        %v8778 = vpack.c.b16 %v8406, %v8402
        %v8779 = vpack.c.b16 %v8407, %v8403
        %v8780 = vpack.c.b16 %v8408, %v8404
        %v8781 = vpack.c.b16 %v8413, %v8409
        %v8782 = vpack.c.b16 %v8414, %v8410
        %v8783 = vpack.c.b16 %v8415, %v8411
        %v8784 = vpack.c.b16 %v8416, %v8412
        %v8785 = vpack.c.b16 %v8421, %v8417
        %v8786 = vpack.c.b16 %v8422, %v8418
        %v8787 = vpack.c.b16 %v8423, %v8419
        %v8788 = vpack.c.b16 %v8424, %v8420
        %v8789 = vpack.c.b16 %v8429, %v8425
        %v8790 = vpack.c.b16 %v8430, %v8426
        %v8791 = vpack.c.b16 %v8431, %v8427
        %v8792 = vpack.c.b16 %v8432, %v8428
        %v8793 = vpack.c.b16 %v8437, %v8433
        %v8794 = vpack.c.b16 %v8438, %v8434
        %v8795 = vpack.c.b16 %v8439, %v8435
        %v8796 = vpack.c.b16 %v8440, %v8436
        %v8797 = vpack.c.b16 %v8445, %v8441
        %v8798 = vpack.c.b16 %v8446, %v8442
        %v8799 = vpack.c.b16 %v8447, %v8443
        %v8800 = vpack.c.b16 %v8448, %v8444
        %v8801 = vpack.c.b16 %v8453, %v8449
        %v8802 = vpack.c.b16 %v8454, %v8450
        %v8803 = vpack.c.b16 %v8455, %v8451
        %v8804 = vpack.c.b16 %v8456, %v8452
        %v8805 = vpack.c.b16 %v8461, %v8457
        %v8806 = vpack.c.b16 %v8462, %v8458
        %v8807 = vpack.c.b16 %v8463, %v8459
        %v8808 = vpack.c.b16 %v8464, %v8460
        %v8809 = vpack.c.b16 %v8469, %v8465
        %v8810 = vpack.c.b16 %v8470, %v8466
        %v8811 = vpack.c.b16 %v8471, %v8467
        %v8812 = vpack.c.b16 %v8472, %v8468
        %v8813 = vpack.c.b16 %v8477, %v8473
        %v8814 = vpack.c.b16 %v8478, %v8474
        %v8815 = vpack.c.b16 %v8479, %v8475
        %v8816 = vpack.c.b16 %v8480, %v8476
        %v8817 = vpack.c.b16 %v8485, %v8481
        %v8818 = vpack.c.b16 %v8486, %v8482
        %v8819 = vpack.c.b16 %v8487, %v8483
        %v8820 = vpack.c.b16 %v8488, %v8484
        %v8821 = vpack.c.b16 %v8493, %v8489
        %v8822 = vpack.c.b16 %v8494, %v8490
        %v8823 = vpack.c.b16 %v8495, %v8491
        %v8824 = vpack.c.b16 %v8496, %v8492
        %v8825 = vpack.c.b16 %v8501, %v8497
        %v8826 = vpack.c.b16 %v8502, %v8498
        %v8827 = vpack.c.b16 %v8503, %v8499
        %v8828 = vpack.c.b16 %v8504, %v8500
        %v8829 = vpack.c.b16 %v8509, %v8505
        %v8830 = vpack.c.b16 %v8510, %v8506
        %v8831 = vpack.c.b16 %v8511, %v8507
        %v8832 = vpack.c.b16 %v8512, %v8508
        %v8833 = vpack.c.b16 %v8517, %v8513
        %v8834 = vpack.c.b16 %v8518, %v8514
        %v8835 = vpack.c.b16 %v8519, %v8515
        %v8836 = vpack.c.b16 %v8520, %v8516
        %v8837 = vpack.c.b16 %v8525, %v8521
        %v8838 = vpack.c.b16 %v8526, %v8522
        %v8839 = vpack.c.b16 %v8527, %v8523
        %v8840 = vpack.c.b16 %v8528, %v8524
        %v8841 = vpack.c.b16 %v8533, %v8529
        %v8842 = vpack.c.b16 %v8534, %v8530
        %v8843 = vpack.c.b16 %v8535, %v8531
        %v8844 = vpack.c.b16 %v8536, %v8532
        %v8845 = vpack.c.b16 %v8541, %v8537
        %v8846 = vpack.c.b16 %v8542, %v8538
        %v8847 = vpack.c.b16 %v8543, %v8539
        %v8848 = vpack.c.b16 %v8544, %v8540
        %v8849 = vpack.c.b16 %v8549, %v8545
        %v8850 = vpack.c.b16 %v8550, %v8546
        %v8851 = vpack.c.b16 %v8551, %v8547
        %v8852 = vpack.c.b16 %v8552, %v8548
        %v8853 = vpack.c.b16 %v8557, %v8553
        %v8854 = vpack.c.b16 %v8558, %v8554
        %v8855 = vpack.c.b16 %v8559, %v8555
        %v8856 = vpack.c.b16 %v8560, %v8556
        %v8857 = vpack.c.b16 %v8565, %v8561
        %v8858 = vpack.c.b16 %v8566, %v8562
        %v8859 = vpack.c.b16 %v8567, %v8563
        %v8860 = vpack.c.b16 %v8568, %v8564
        %v8861 = vpack.c.b16 %v8573, %v8569
        %v8862 = vpack.c.b16 %v8574, %v8570
        %v8863 = vpack.c.b16 %v8575, %v8571
        %v8864 = vpack.c.b16 %v8576, %v8572
        %v8865 = vpack.c.b16 %v8581, %v8577
        %v8866 = vpack.c.b16 %v8582, %v8578
        %v8867 = vpack.c.b16 %v8583, %v8579
        %v8868 = vpack.c.b16 %v8584, %v8580
        %v8869 = vpack.c.b16 %v8589, %v8585
        %v8870 = vpack.c.b16 %v8590, %v8586
        %v8871 = vpack.c.b16 %v8591, %v8587
        %v8872 = vpack.c.b16 %v8592, %v8588
        %v8873 = vpack.c.b16 %v8597, %v8593
        %v8874 = vpack.c.b16 %v8598, %v8594
        %v8875 = vpack.c.b16 %v8599, %v8595
        %v8876 = vpack.c.b16 %v8600, %v8596
        %v8877 = vpack.c.b16 %v8605, %v8601
        %v8878 = vpack.c.b16 %v8606, %v8602
        %v8879 = vpack.c.b16 %v8607, %v8603
        %v8880 = vpack.c.b16 %v8608, %v8604
        %v8881 = vpack.c.b16 %v8613, %v8609
        %v8882 = vpack.c.b16 %v8614, %v8610
        %v8883 = vpack.c.b16 %v8615, %v8611
        %v8884 = vpack.c.b16 %v8616, %v8612
        %v8885 = vpack.c.b16 %v8621, %v8617
        %v8886 = vpack.c.b16 %v8622, %v8618
        %v8887 = vpack.c.b16 %v8623, %v8619
        %v8888 = vpack.c.b16 %v8624, %v8620
        %v8889 = vpack.c.b16 %v8629, %v8625
        %v8890 = vpack.c.b16 %v8630, %v8626
        %v8891 = vpack.c.b16 %v8631, %v8627
        %v8892 = vpack.c.b16 %v8632, %v8628
        %v8893 = vpack.c.b16 %v8637, %v8633
        %v8894 = vpack.c.b16 %v8638, %v8634
        %v8895 = vpack.c.b16 %v8639, %v8635
        %v8896 = vpack.c.b16 %v8640, %v8636
        %9153 = vmatprep.subr.bf16.mxu0 %v8642
        %9154 = vmatpush1.bf16.msra.mxu0 %v8641
        %9155 = vmatprep.subr.bf16.mxu0 %v8646
        %9156 = vmatpush1.bf16.msra.mxu0 %v8645
        %9157 = vmatprep.subr.bf16.mxu0 %v8650
        %9158 = vmatpush1.bf16.msra.mxu0 %v8649
        %9159 = vmatprep.subr.bf16.mxu0 %v8654
        %9160 = vmatpush1.bf16.msra.mxu0 %v8653
        %9161 = vmatprep.subr.bf16.mxu0 %v8658
        %9162 = vmatpush1.bf16.msra.mxu0 %v8657
        %9163 = vmatprep.subr.bf16.mxu0 %v8662
        %9164 = vmatpush1.bf16.msra.mxu0 %v8661
        %9165 = vmatprep.subr.bf16.mxu0 %v8666
        %9166 = vmatpush1.bf16.msra.mxu0 %v8665
        %9167 = vmatprep.subr.bf16.mxu0 %v8670
        %9168 = vmatpush1.bf16.msra.mxu0 %v8669
        %9169 = vmatprep.subr.bf16.mxu0 %v8674
        %9170 = vmatpush1.bf16.msra.mxu0 %v8673
        %9171 = vmatprep.subr.bf16.mxu0 %v8678
        %9172 = vmatpush1.bf16.msra.mxu0 %v8677
        %9173 = vmatprep.subr.bf16.mxu0 %v8682
        %9174 = vmatpush1.bf16.msra.mxu0 %v8681
        %9175 = vmatprep.subr.bf16.mxu0 %v8686
        %9176 = vmatpush1.bf16.msra.mxu0 %v8685
        %9177 = vmatprep.subr.bf16.mxu0 %v8690
        %9178 = vmatpush1.bf16.msra.mxu0 %v8689
        %9179 = vmatprep.subr.bf16.mxu0 %v8694
        %9180 = vmatpush1.bf16.msra.mxu0 %v8693
        %9181 = vmatprep.subr.bf16.mxu0 %v8698
        %9182 = vmatpush1.bf16.msra.mxu0 %v8697
        %9183 = vmatprep.subr.bf16.mxu0 %v8702
        %9184 = vmatpush1.bf16.msra.mxu0 %v8701
        %9185 = vmatprep.mubr.bf16.mxu0 %v7858
        %9186 = vmatmul.mubr.bf16.gmra.mrb[0].mxu0 %v7857
        %v9187 = vpop.f32.mrb[0].mxu0
        %v9188 = vadd.f32 %v7749, %v9187
        %v9189 = vpop.f32.mrb[0].mxu0
        %v9190 = vadd.f32 %v7753, %v9189
        %v9191 = vpop.f32.mrb[0].mxu0
        %v9192 = vpop.f32.mrb[0].mxu0
        %9193 = vdwg.mxu0
        %9194 = vmatprep.subr.bf16.mxu0 %v8706
        %9195 = vmatpush1.bf16.msra.mxu0 %v8705
        %9196 = vmatprep.subr.bf16.mxu0 %v8710
        %9197 = vmatpush1.bf16.msra.mxu0 %v8709
        %9198 = vmatprep.subr.bf16.mxu0 %v8714
        %9199 = vmatpush1.bf16.msra.mxu0 %v8713
        %9200 = vmatprep.subr.bf16.mxu0 %v8718
        %9201 = vmatpush1.bf16.msra.mxu0 %v8717
        %9202 = vmatprep.subr.bf16.mxu0 %v8722
        %9203 = vmatpush1.bf16.msra.mxu0 %v8721
        %9204 = vmatprep.subr.bf16.mxu0 %v8726
        %9205 = vmatpush1.bf16.msra.mxu0 %v8725
        %9206 = vmatprep.subr.bf16.mxu0 %v8730
        %9207 = vmatpush1.bf16.msra.mxu0 %v8729
        %9208 = vmatprep.subr.bf16.mxu0 %v8734
        %9209 = vmatpush1.bf16.msra.mxu0 %v8733
        %9210 = vmatprep.subr.bf16.mxu0 %v8738
        %9211 = vmatpush1.bf16.msra.mxu0 %v8737
        %9212 = vmatprep.subr.bf16.mxu0 %v8742
        %9213 = vmatpush1.bf16.msra.mxu0 %v8741
        %9214 = vmatprep.subr.bf16.mxu0 %v8746
        %9215 = vmatpush1.bf16.msra.mxu0 %v8745
        %9216 = vmatprep.subr.bf16.mxu0 %v8750
        %9217 = vmatpush1.bf16.msra.mxu0 %v8749
        %9218 = vmatprep.subr.bf16.mxu0 %v8754
        %9219 = vmatpush1.bf16.msra.mxu0 %v8753
        %9220 = vmatprep.subr.bf16.mxu0 %v8758
        %9221 = vmatpush1.bf16.msra.mxu0 %v8757
        %9222 = vmatprep.subr.bf16.mxu0 %v8762
        %9223 = vmatpush1.bf16.msra.mxu0 %v8761
        %9224 = vmatprep.subr.bf16.mxu0 %v8766
        %9225 = vmatpush1.bf16.msra.mxu0 %v8765
        %9226 = vmatprep.mubr.bf16.mxu0 %v7860
        %9227 = vmatmul.mubr.bf16.gmra.mrb[0].mxu0 %v7859
        %v9228 = vpop.f32.mrb[0].mxu0
        %v9229 = vadd.f32 %v9188, %v9228
        %v9230 = vpop.f32.mrb[0].mxu0
        %v9231 = vadd.f32 %v9190, %v9230
        %v9232 = vpop.f32.mrb[0].mxu0
        %v9233 = vpop.f32.mrb[0].mxu0
        %9234 = vdwg.mxu0
        %9235 = vmatprep.subr.bf16.mxu0 %v8770
        %9236 = vmatpush1.bf16.msra.mxu0 %v8769
        %9237 = vmatprep.subr.bf16.mxu0 %v8774
        %9238 = vmatpush1.bf16.msra.mxu0 %v8773
        %9239 = vmatprep.subr.bf16.mxu0 %v8778
        %9240 = vmatpush1.bf16.msra.mxu0 %v8777
        %9241 = vmatprep.subr.bf16.mxu0 %v8782
        %9242 = vmatpush1.bf16.msra.mxu0 %v8781
        %9243 = vmatprep.subr.bf16.mxu0 %v8786
        %9244 = vmatpush1.bf16.msra.mxu0 %v8785
        %9245 = vmatprep.subr.bf16.mxu0 %v8790
        %9246 = vmatpush1.bf16.msra.mxu0 %v8789
        %9247 = vmatprep.subr.bf16.mxu0 %v8794
        %9248 = vmatpush1.bf16.msra.mxu0 %v8793
        %9249 = vmatprep.subr.bf16.mxu0 %v8798
        %9250 = vmatpush1.bf16.msra.mxu0 %v8797
        %9251 = vmatprep.subr.bf16.mxu0 %v8802
        %9252 = vmatpush1.bf16.msra.mxu0 %v8801
        %9253 = vmatprep.subr.bf16.mxu0 %v8806
        %9254 = vmatpush1.bf16.msra.mxu0 %v8805
        %9255 = vmatprep.subr.bf16.mxu0 %v8810
        %9256 = vmatpush1.bf16.msra.mxu0 %v8809
        %9257 = vmatprep.subr.bf16.mxu0 %v8814
        %9258 = vmatpush1.bf16.msra.mxu0 %v8813
        %9259 = vmatprep.subr.bf16.mxu0 %v8818
        %9260 = vmatpush1.bf16.msra.mxu0 %v8817
        %9261 = vmatprep.subr.bf16.mxu0 %v8822
        %9262 = vmatpush1.bf16.msra.mxu0 %v8821
        %9263 = vmatprep.subr.bf16.mxu0 %v8826
        %9264 = vmatpush1.bf16.msra.mxu0 %v8825
        %9265 = vmatprep.subr.bf16.mxu0 %v8830
        %9266 = vmatpush1.bf16.msra.mxu0 %v8829
        %9267 = vmatprep.mubr.bf16.mxu0 %v7862
        %9268 = vmatmul.mubr.bf16.gmra.mrb[0].mxu0 %v7861
        %v9269 = vpop.f32.mrb[0].mxu0
        %v9270 = vadd.f32 %v9229, %v9269
        %v9271 = vpop.f32.mrb[0].mxu0
        %v9272 = vadd.f32 %v9231, %v9271
        %v9273 = vpop.f32.mrb[0].mxu0
        %v9274 = vpop.f32.mrb[0].mxu0
        %9275 = vdwg.mxu0
        %9276 = vmatprep.subr.bf16.mxu0 %v8834
        %9277 = vmatpush1.bf16.msra.mxu0 %v8833
        %9278 = vmatprep.subr.bf16.mxu0 %v8838
        %9279 = vmatpush1.bf16.msra.mxu0 %v8837
        %9280 = vmatprep.subr.bf16.mxu0 %v8842
        %9281 = vmatpush1.bf16.msra.mxu0 %v8841
        %9282 = vmatprep.subr.bf16.mxu0 %v8846
        %9283 = vmatpush1.bf16.msra.mxu0 %v8845
        %9284 = vmatprep.subr.bf16.mxu0 %v8850
        %9285 = vmatpush1.bf16.msra.mxu0 %v8849
        %9286 = vmatprep.subr.bf16.mxu0 %v8854
        %9287 = vmatpush1.bf16.msra.mxu0 %v8853
        %9288 = vmatprep.subr.bf16.mxu0 %v8858
        %9289 = vmatpush1.bf16.msra.mxu0 %v8857
        %9290 = vmatprep.subr.bf16.mxu0 %v8862
        %9291 = vmatpush1.bf16.msra.mxu0 %v8861
        %9292 = vmatprep.subr.bf16.mxu0 %v8866
        %9293 = vmatpush1.bf16.msra.mxu0 %v8865
        %9294 = vmatprep.subr.bf16.mxu0 %v8870
        %9295 = vmatpush1.bf16.msra.mxu0 %v8869
        %9296 = vmatprep.subr.bf16.mxu0 %v8874
        %9297 = vmatpush1.bf16.msra.mxu0 %v8873
        %9298 = vmatprep.subr.bf16.mxu0 %v8878
        %9299 = vmatpush1.bf16.msra.mxu0 %v8877
        %9300 = vmatprep.subr.bf16.mxu0 %v8882
        %9301 = vmatpush1.bf16.msra.mxu0 %v8881
        %9302 = vmatprep.subr.bf16.mxu0 %v8886
        %9303 = vmatpush1.bf16.msra.mxu0 %v8885
        %9304 = vmatprep.subr.bf16.mxu0 %v8890
        %9305 = vmatpush1.bf16.msra.mxu0 %v8889
        %9306 = vmatprep.subr.bf16.mxu0 %v8894
        %9307 = vmatpush1.bf16.msra.mxu0 %v8893
        %9308 = vmatprep.mubr.bf16.mxu0 %v7864
        %9309 = vmatmul.mubr.bf16.gmra.mrb[0].mxu0 %v7863
        %v9310 = vpop.f32.mrb[0].mxu0
        %v9311 = vadd.f32 %v9270, %v9310
        %v9312 = vpop.f32.mrb[0].mxu0
        %v9313 = vadd.f32 %v9272, %v9312
        %v9314 = vpop.f32.mrb[0].mxu0
        %v9315 = vpop.f32.mrb[0].mxu0
        %9316 = vdwg.mxu0
        %9317 = vmatprep.subr.bf16.mxu0 %v8644
        %9318 = vmatpush1.bf16.msra.mxu0 %v8643
        %9319 = vmatprep.subr.bf16.mxu0 %v8648
        %9320 = vmatpush1.bf16.msra.mxu0 %v8647
        %9321 = vmatprep.subr.bf16.mxu0 %v8652
        %9322 = vmatpush1.bf16.msra.mxu0 %v8651
        %9323 = vmatprep.subr.bf16.mxu0 %v8656
        %9324 = vmatpush1.bf16.msra.mxu0 %v8655
        %9325 = vmatprep.subr.bf16.mxu0 %v8660
        %9326 = vmatpush1.bf16.msra.mxu0 %v8659
        %9327 = vmatprep.subr.bf16.mxu0 %v8664
        %9328 = vmatpush1.bf16.msra.mxu0 %v8663
        %9329 = vmatprep.subr.bf16.mxu0 %v8668
        %9330 = vmatpush1.bf16.msra.mxu0 %v8667
        %9331 = vmatprep.subr.bf16.mxu0 %v8672
        %9332 = vmatpush1.bf16.msra.mxu0 %v8671
        %9333 = vmatprep.subr.bf16.mxu0 %v8676
        %9334 = vmatpush1.bf16.msra.mxu0 %v8675
        %9335 = vmatprep.subr.bf16.mxu0 %v8680
        %9336 = vmatpush1.bf16.msra.mxu0 %v8679
        %9337 = vmatprep.subr.bf16.mxu0 %v8684
        %9338 = vmatpush1.bf16.msra.mxu0 %v8683
        %9339 = vmatprep.subr.bf16.mxu0 %v8688
        %9340 = vmatpush1.bf16.msra.mxu0 %v8687
        %9341 = vmatprep.subr.bf16.mxu0 %v8692
        %9342 = vmatpush1.bf16.msra.mxu0 %v8691
        %9343 = vmatprep.subr.bf16.mxu0 %v8696
        %9344 = vmatpush1.bf16.msra.mxu0 %v8695
        %9345 = vmatprep.subr.bf16.mxu0 %v8700
        %9346 = vmatpush1.bf16.msra.mxu0 %v8699
        %9347 = vmatprep.subr.bf16.mxu0 %v8704
        %9348 = vmatpush1.bf16.msra.mxu0 %v8703
        %9349 = vmatprep.mubr.bf16.mxu0 %v7858
        %9350 = vmatmul.mubr.bf16.gmra.mrb[0].mxu0 %v7857
        %v9351 = vpop.f32.mrb[0].mxu0
        %v9352 = vadd.f32 %v7757, %v9351
        %v9353 = vpop.f32.mrb[0].mxu0
        %v9354 = vadd.f32 %v7761, %v9353
        %v9355 = vpop.f32.mrb[0].mxu0
        %v9356 = vpop.f32.mrb[0].mxu0
        %9357 = vdwg.mxu0
        %9358 = vmatprep.subr.bf16.mxu0 %v8708
        %9359 = vmatpush1.bf16.msra.mxu0 %v8707
        %9360 = vmatprep.subr.bf16.mxu0 %v8712
        %9361 = vmatpush1.bf16.msra.mxu0 %v8711
        %9362 = vmatprep.subr.bf16.mxu0 %v8716
        %9363 = vmatpush1.bf16.msra.mxu0 %v8715
        %9364 = vmatprep.subr.bf16.mxu0 %v8720
        %9365 = vmatpush1.bf16.msra.mxu0 %v8719
        %9366 = vmatprep.subr.bf16.mxu0 %v8724
        %9367 = vmatpush1.bf16.msra.mxu0 %v8723
        %9368 = vmatprep.subr.bf16.mxu0 %v8728
        %9369 = vmatpush1.bf16.msra.mxu0 %v8727
        %9370 = vmatprep.subr.bf16.mxu0 %v8732
        %9371 = vmatpush1.bf16.msra.mxu0 %v8731
        %9372 = vmatprep.subr.bf16.mxu0 %v8736
        %9373 = vmatpush1.bf16.msra.mxu0 %v8735
        %9374 = vmatprep.subr.bf16.mxu0 %v8740
        %9375 = vmatpush1.bf16.msra.mxu0 %v8739
        %9376 = vmatprep.subr.bf16.mxu0 %v8744
        %9377 = vmatpush1.bf16.msra.mxu0 %v8743
        %9378 = vmatprep.subr.bf16.mxu0 %v8748
        %9379 = vmatpush1.bf16.msra.mxu0 %v8747
        %9380 = vmatprep.subr.bf16.mxu0 %v8752
        %9381 = vmatpush1.bf16.msra.mxu0 %v8751
        %9382 = vmatprep.subr.bf16.mxu0 %v8756
        %9383 = vmatpush1.bf16.msra.mxu0 %v8755
        %9384 = vmatprep.subr.bf16.mxu0 %v8760
        %9385 = vmatpush1.bf16.msra.mxu0 %v8759
        %9386 = vmatprep.subr.bf16.mxu0 %v8764
        %9387 = vmatpush1.bf16.msra.mxu0 %v8763
        %9388 = vmatprep.subr.bf16.mxu0 %v8768
        %9389 = vmatpush1.bf16.msra.mxu0 %v8767
        %9390 = vmatprep.mubr.bf16.mxu0 %v7860
        %9391 = vmatmul.mubr.bf16.gmra.mrb[0].mxu0 %v7859
        %v9392 = vpop.f32.mrb[0].mxu0
        %v9393 = vadd.f32 %v9352, %v9392
        %v9394 = vpop.f32.mrb[0].mxu0
        %v9395 = vadd.f32 %v9354, %v9394
        %v9396 = vpop.f32.mrb[0].mxu0
        %v9397 = vpop.f32.mrb[0].mxu0
        %9398 = vdwg.mxu0
        %9399 = vmatprep.subr.bf16.mxu0 %v8772
        %9400 = vmatpush1.bf16.msra.mxu0 %v8771
        %9401 = vmatprep.subr.bf16.mxu0 %v8776
        %9402 = vmatpush1.bf16.msra.mxu0 %v8775
        %9403 = vmatprep.subr.bf16.mxu0 %v8780
        %9404 = vmatpush1.bf16.msra.mxu0 %v8779
        %9405 = vmatprep.subr.bf16.mxu0 %v8784
        %9406 = vmatpush1.bf16.msra.mxu0 %v8783
        %9407 = vmatprep.subr.bf16.mxu0 %v8788
        %9408 = vmatpush1.bf16.msra.mxu0 %v8787
        %9409 = vmatprep.subr.bf16.mxu0 %v8792
        %9410 = vmatpush1.bf16.msra.mxu0 %v8791
        %9411 = vmatprep.subr.bf16.mxu0 %v8796
        %9412 = vmatpush1.bf16.msra.mxu0 %v8795
        %9413 = vmatprep.subr.bf16.mxu0 %v8800
        %9414 = vmatpush1.bf16.msra.mxu0 %v8799
        %9415 = vmatprep.subr.bf16.mxu0 %v8804
        %9416 = vmatpush1.bf16.msra.mxu0 %v8803
        %9417 = vmatprep.subr.bf16.mxu0 %v8808
        %9418 = vmatpush1.bf16.msra.mxu0 %v8807
        %9419 = vmatprep.subr.bf16.mxu0 %v8812
        %9420 = vmatpush1.bf16.msra.mxu0 %v8811
        %9421 = vmatprep.subr.bf16.mxu0 %v8816
        %9422 = vmatpush1.bf16.msra.mxu0 %v8815
        %9423 = vmatprep.subr.bf16.mxu0 %v8820
        %9424 = vmatpush1.bf16.msra.mxu0 %v8819
        %9425 = vmatprep.subr.bf16.mxu0 %v8824
        %9426 = vmatpush1.bf16.msra.mxu0 %v8823
        %9427 = vmatprep.subr.bf16.mxu0 %v8828
        %9428 = vmatpush1.bf16.msra.mxu0 %v8827
        %9429 = vmatprep.subr.bf16.mxu0 %v8832
        %9430 = vmatpush1.bf16.msra.mxu0 %v8831
        %9431 = vmatprep.mubr.bf16.mxu0 %v7862
        %9432 = vmatmul.mubr.bf16.gmra.mrb[0].mxu0 %v7861
        %v9433 = vpop.f32.mrb[0].mxu0
        %v9434 = vadd.f32 %v9393, %v9433
        %v9435 = vpop.f32.mrb[0].mxu0
        %v9436 = vadd.f32 %v9395, %v9435
        %v9437 = vpop.f32.mrb[0].mxu0
        %v9438 = vpop.f32.mrb[0].mxu0
        %9439 = vdwg.mxu0
        %9440 = vmatprep.subr.bf16.mxu0 %v8836
        %9441 = vmatpush1.bf16.msra.mxu0 %v8835
        %9442 = vmatprep.subr.bf16.mxu0 %v8840
        %9443 = vmatpush1.bf16.msra.mxu0 %v8839
        %9444 = vmatprep.subr.bf16.mxu0 %v8844
        %9445 = vmatpush1.bf16.msra.mxu0 %v8843
        %9446 = vmatprep.subr.bf16.mxu0 %v8848
        %9447 = vmatpush1.bf16.msra.mxu0 %v8847
        %9448 = vmatprep.subr.bf16.mxu0 %v8852
        %9449 = vmatpush1.bf16.msra.mxu0 %v8851
        %9450 = vmatprep.subr.bf16.mxu0 %v8856
        %9451 = vmatpush1.bf16.msra.mxu0 %v8855
        %9452 = vmatprep.subr.bf16.mxu0 %v8860
        %9453 = vmatpush1.bf16.msra.mxu0 %v8859
        %9454 = vmatprep.subr.bf16.mxu0 %v8864
        %9455 = vmatpush1.bf16.msra.mxu0 %v8863
        %9456 = vmatprep.subr.bf16.mxu0 %v8868
        %9457 = vmatpush1.bf16.msra.mxu0 %v8867
        %9458 = vmatprep.subr.bf16.mxu0 %v8872
        %9459 = vmatpush1.bf16.msra.mxu0 %v8871
        %9460 = vmatprep.subr.bf16.mxu0 %v8876
        %9461 = vmatpush1.bf16.msra.mxu0 %v8875
        %9462 = vmatprep.subr.bf16.mxu0 %v8880
        %9463 = vmatpush1.bf16.msra.mxu0 %v8879
        %9464 = vmatprep.subr.bf16.mxu0 %v8884
        %9465 = vmatpush1.bf16.msra.mxu0 %v8883
        %9466 = vmatprep.subr.bf16.mxu0 %v8888
        %9467 = vmatpush1.bf16.msra.mxu0 %v8887
        %9468 = vmatprep.subr.bf16.mxu0 %v8892
        %9469 = vmatpush1.bf16.msra.mxu0 %v8891
        %9470 = vmatprep.subr.bf16.mxu0 %v8896
        %9471 = vmatpush1.bf16.msra.mxu0 %v8895
        %9472 = vmatprep.mubr.bf16.mxu0 %v7864
        %9473 = vmatmul.mubr.bf16.gmra.mrb[0].mxu0 %v7863
        %v9474 = vpop.f32.mrb[0].mxu0
        %v9475 = vadd.f32 %v9434, %v9474
        %v9476 = vpop.f32.mrb[0].mxu0
        %v9477 = vadd.f32 %v9436, %v9476
        %v9478 = vpop.f32.mrb[0].mxu0
        %v9479 = vpop.f32.mrb[0].mxu0
        %9480 = vdwg.mxu0
        %vm9481 = vcmp.gt.f32.partialorder %v9311, 0.0
        %vm9482 = vcmp.gt.f32.partialorder %v9313, 0.0
        %vm9483 = vcmp.gt.f32.partialorder %v9475, 0.0
        %vm9484 = vcmp.gt.f32.partialorder %v9477, 0.0
        %v9485 = vmul.f32 %v9311, 0.3
        %v9486 = vmul.f32 %v9313, 0.3
        %v9487 = vmul.f32 %v9475, 0.3
        %v9488 = vmul.f32 %v9477, 0.3
        %v9489 = vsel %vm9481, %v9311, %v9485
        %v9490 = vsel %vm9482, %v9313, %v9486
        %v9491 = vsel %vm9483, %v9475, %v9487
        %v9492 = vsel %vm9484, %v9477, %v9488
        %v9493 = vpack.c.bf16 %v9489, %v9489
        %v9494 = vpack.c.bf16 %v9490, %v9490
        %v9495 = vpack.c.bf16 %v9491, %v9491
        %v9496 = vpack.c.bf16 %v9492, %v9492
        %v9497 = vld [vmem:[#allocation5] sm:$0xff]
        %v9498 = vld [vmem:[#allocation5 + $0x8] sm:$0xff]
        %v9499 = vld [vmem:[#allocation5 + $0x10] sm:$0xff]
        %v9500 = vld [vmem:[#allocation5 + $0x18] sm:$0xff]
        %v9501 = vld [vmem:[#allocation5 + $0x20] sm:$0xff]
        %v9502 = vld [vmem:[#allocation5 + $0x28] sm:$0xff]
        %v9503 = vld [vmem:[#allocation5 + $0x30] sm:$0xff]
        %v9504 = vld [vmem:[#allocation5 + $0x38] sm:$0xff]
        %v9505 = vld [vmem:[#allocation5 + $0x40] sm:$0xff]
        %v9506 = vld [vmem:[#allocation5 + $0x48] sm:$0xff]
        %v9507 = vld [vmem:[#allocation5 + $0x50] sm:$0xff]
        %v9508 = vld [vmem:[#allocation5 + $0x58] sm:$0xff]
        %v9509 = vld [vmem:[#allocation5 + $0x60] sm:$0xff]
        %v9510 = vld [vmem:[#allocation5 + $0x68] sm:$0xff]
        %v9511 = vld [vmem:[#allocation5 + $0x70] sm:$0xff]
        %v9512 = vld [vmem:[#allocation5 + $0x78] sm:$0xff]
        %v9513 = vld [vmem:[#allocation5 + $0x80] sm:$0xff]
        %v9514 = vld [vmem:[#allocation5 + $0x88] sm:$0xff]
        %v9515 = vld [vmem:[#allocation5 + $0x90] sm:$0xff]
        %v9516 = vld [vmem:[#allocation5 + $0x98] sm:$0xff]
        %v9517 = vld [vmem:[#allocation5 + $0xa0] sm:$0xff]
        %v9518 = vld [vmem:[#allocation5 + $0xa8] sm:$0xff]
        %v9519 = vld [vmem:[#allocation5 + $0xb0] sm:$0xff]
        %v9520 = vld [vmem:[#allocation5 + $0xb8] sm:$0xff]
        %v9521 = vld [vmem:[#allocation5 + $0xc0] sm:$0xff]
        %v9522 = vld [vmem:[#allocation5 + $0xc8] sm:$0xff]
        %v9523 = vld [vmem:[#allocation5 + $0xd0] sm:$0xff]
        %v9524 = vld [vmem:[#allocation5 + $0xd8] sm:$0xff]
        %v9525 = vld [vmem:[#allocation5 + $0xe0] sm:$0xff]
        %v9526 = vld [vmem:[#allocation5 + $0xe8] sm:$0xff]
        %v9527 = vld [vmem:[#allocation5 + $0xf0] sm:$0xff]
        %v9528 = vld [vmem:[#allocation5 + $0xf8] sm:$0xff]
        %v9529 = vld [vmem:[#allocation5 + $0x100] sm:$0xff]
        %v9530 = vld [vmem:[#allocation5 + $0x108] sm:$0xff]
        %v9531 = vld [vmem:[#allocation5 + $0x110] sm:$0xff]
        %v9532 = vld [vmem:[#allocation5 + $0x118] sm:$0xff]
        %v9533 = vld [vmem:[#allocation5 + $0x120] sm:$0xff]
        %v9534 = vld [vmem:[#allocation5 + $0x128] sm:$0xff]
        %v9535 = vld [vmem:[#allocation5 + $0x130] sm:$0xff]
        %v9536 = vld [vmem:[#allocation5 + $0x138] sm:$0xff]
        %v9537 = vld [vmem:[#allocation5 + $0x140] sm:$0xff]
        %v9538 = vld [vmem:[#allocation5 + $0x148] sm:$0xff]
        %v9539 = vld [vmem:[#allocation5 + $0x150] sm:$0xff]
        %v9540 = vld [vmem:[#allocation5 + $0x158] sm:$0xff]
        %v9541 = vld [vmem:[#allocation5 + $0x160] sm:$0xff]
        %v9542 = vld [vmem:[#allocation5 + $0x168] sm:$0xff]
        %v9543 = vld [vmem:[#allocation5 + $0x170] sm:$0xff]
        %v9544 = vld [vmem:[#allocation5 + $0x178] sm:$0xff]
        %v9545 = vld [vmem:[#allocation5 + $0x180] sm:$0xff]
        %v9546 = vld [vmem:[#allocation5 + $0x188] sm:$0xff]
        %v9547 = vld [vmem:[#allocation5 + $0x190] sm:$0xff]
        %v9548 = vld [vmem:[#allocation5 + $0x198] sm:$0xff]
        %v9549 = vld [vmem:[#allocation5 + $0x1a0] sm:$0xff]
        %v9550 = vld [vmem:[#allocation5 + $0x1a8] sm:$0xff]
        %v9551 = vld [vmem:[#allocation5 + $0x1b0] sm:$0xff]
        %v9552 = vld [vmem:[#allocation5 + $0x1b8] sm:$0xff]
        %v9553 = vld [vmem:[#allocation5 + $0x1c0] sm:$0xff]
        %v9554 = vld [vmem:[#allocation5 + $0x1c8] sm:$0xff]
        %v9555 = vld [vmem:[#allocation5 + $0x1d0] sm:$0xff]
        %v9556 = vld [vmem:[#allocation5 + $0x1d8] sm:$0xff]
        %v9557 = vld [vmem:[#allocation5 + $0x1e0] sm:$0xff]
        %v9558 = vld [vmem:[#allocation5 + $0x1e8] sm:$0xff]
        %v9559 = vld [vmem:[#allocation5 + $0x1f0] sm:$0xff]
        %v9560 = vld [vmem:[#allocation5 + $0x1f8] sm:$0xff]
        %v9561 = vld [vmem:[#allocation5 + $0x200] sm:$0xff]
        %v9562 = vld [vmem:[#allocation5 + $0x208] sm:$0xff]
        %v9563 = vld [vmem:[#allocation5 + $0x210] sm:$0xff]
        %v9564 = vld [vmem:[#allocation5 + $0x218] sm:$0xff]
        %v9565 = vld [vmem:[#allocation5 + $0x220] sm:$0xff]
        %v9566 = vld [vmem:[#allocation5 + $0x228] sm:$0xff]
        %v9567 = vld [vmem:[#allocation5 + $0x230] sm:$0xff]
        %v9568 = vld [vmem:[#allocation5 + $0x238] sm:$0xff]
        %v9569 = vld [vmem:[#allocation5 + $0x240] sm:$0xff]
        %v9570 = vld [vmem:[#allocation5 + $0x248] sm:$0xff]
        %v9571 = vld [vmem:[#allocation5 + $0x250] sm:$0xff]
        %v9572 = vld [vmem:[#allocation5 + $0x258] sm:$0xff]
        %v9573 = vld [vmem:[#allocation5 + $0x260] sm:$0xff]
        %v9574 = vld [vmem:[#allocation5 + $0x268] sm:$0xff]
        %v9575 = vld [vmem:[#allocation5 + $0x270] sm:$0xff]
        %v9576 = vld [vmem:[#allocation5 + $0x278] sm:$0xff]
        %v9577 = vld [vmem:[#allocation5 + $0x280] sm:$0xff]
        %v9578 = vld [vmem:[#allocation5 + $0x288] sm:$0xff]
        %v9579 = vld [vmem:[#allocation5 + $0x290] sm:$0xff]
        %v9580 = vld [vmem:[#allocation5 + $0x298] sm:$0xff]
        %v9581 = vld [vmem:[#allocation5 + $0x2a0] sm:$0xff]
        %v9582 = vld [vmem:[#allocation5 + $0x2a8] sm:$0xff]
        %v9583 = vld [vmem:[#allocation5 + $0x2b0] sm:$0xff]
        %v9584 = vld [vmem:[#allocation5 + $0x2b8] sm:$0xff]
        %v9585 = vld [vmem:[#allocation5 + $0x2c0] sm:$0xff]
        %v9586 = vld [vmem:[#allocation5 + $0x2c8] sm:$0xff]
        %v9587 = vld [vmem:[#allocation5 + $0x2d0] sm:$0xff]
        %v9588 = vld [vmem:[#allocation5 + $0x2d8] sm:$0xff]
        %v9589 = vld [vmem:[#allocation5 + $0x2e0] sm:$0xff]
        %v9590 = vld [vmem:[#allocation5 + $0x2e8] sm:$0xff]
        %v9591 = vld [vmem:[#allocation5 + $0x2f0] sm:$0xff]
        %v9592 = vld [vmem:[#allocation5 + $0x2f8] sm:$0xff]
        %v9593 = vld [vmem:[#allocation5 + $0x300] sm:$0xff]
        %v9594 = vld [vmem:[#allocation5 + $0x308] sm:$0xff]
        %v9595 = vld [vmem:[#allocation5 + $0x310] sm:$0xff]
        %v9596 = vld [vmem:[#allocation5 + $0x318] sm:$0xff]
        %v9597 = vld [vmem:[#allocation5 + $0x320] sm:$0xff]
        %v9598 = vld [vmem:[#allocation5 + $0x328] sm:$0xff]
        %v9599 = vld [vmem:[#allocation5 + $0x330] sm:$0xff]
        %v9600 = vld [vmem:[#allocation5 + $0x338] sm:$0xff]
        %v9601 = vld [vmem:[#allocation5 + $0x340] sm:$0xff]
        %v9602 = vld [vmem:[#allocation5 + $0x348] sm:$0xff]
        %v9603 = vld [vmem:[#allocation5 + $0x350] sm:$0xff]
        %v9604 = vld [vmem:[#allocation5 + $0x358] sm:$0xff]
        %v9605 = vld [vmem:[#allocation5 + $0x360] sm:$0xff]
        %v9606 = vld [vmem:[#allocation5 + $0x368] sm:$0xff]
        %v9607 = vld [vmem:[#allocation5 + $0x370] sm:$0xff]
        %v9608 = vld [vmem:[#allocation5 + $0x378] sm:$0xff]
        %v9609 = vld [vmem:[#allocation5 + $0x380] sm:$0xff]
        %v9610 = vld [vmem:[#allocation5 + $0x388] sm:$0xff]
        %v9611 = vld [vmem:[#allocation5 + $0x390] sm:$0xff]
        %v9612 = vld [vmem:[#allocation5 + $0x398] sm:$0xff]
        %v9613 = vld [vmem:[#allocation5 + $0x3a0] sm:$0xff]
        %v9614 = vld [vmem:[#allocation5 + $0x3a8] sm:$0xff]
        %v9615 = vld [vmem:[#allocation5 + $0x3b0] sm:$0xff]
        %v9616 = vld [vmem:[#allocation5 + $0x3b8] sm:$0xff]
        %v9617 = vld [vmem:[#allocation5 + $0x3c0] sm:$0xff]
        %v9618 = vld [vmem:[#allocation5 + $0x3c8] sm:$0xff]
        %v9619 = vld [vmem:[#allocation5 + $0x3d0] sm:$0xff]
        %v9620 = vld [vmem:[#allocation5 + $0x3d8] sm:$0xff]
        %v9621 = vld [vmem:[#allocation5 + $0x3e0] sm:$0xff]
        %v9622 = vld [vmem:[#allocation5 + $0x3e8] sm:$0xff]
        %v9623 = vld [vmem:[#allocation5 + $0x3f0] sm:$0xff]
        %v9624 = vld [vmem:[#allocation5 + $0x3f8] sm:$0xff]
        %v9625 = vld [vmem:[%s12] sm:$0xf]
        %v9627 = vlaneseq
        %v9628 = vshrl.u32 %v9627, 7
        %v9629 = vsub.s32 0, %v9628
        %v9630 = vrot.slane %v9625, %v9629
        %v9631 = vlaneseq
        %v9632 = vshrl.u32 %v9631, 7
        %v9633 = vsub.s32 1, %v9632
        %v9634 = vrot.slane %v9625, %v9633
        %v9635 = vlaneseq
        %v9636 = vshrl.u32 %v9635, 7
        %v9637 = vsub.s32 2, %v9636
        %v9638 = vrot.slane %v9625, %v9637
        %v9639 = vlaneseq
        %v9640 = vshrl.u32 %v9639, 7
        %v9641 = vsub.s32 3, %v9640
        %v9642 = vrot.slane %v9625, %v9641
        %v9775 = vunpack.c.l.b16 %v9497
        %v9776 = vunpack.c.h.b16 %v9497
        %v9777 = vunpack.c.l.b16 %v9498
        %v9778 = vunpack.c.h.b16 %v9498
        %v9779 = vunpack.c.l.b16 %v9499
        %v9780 = vunpack.c.h.b16 %v9499
        %v9781 = vunpack.c.l.b16 %v9500
        %v9782 = vunpack.c.h.b16 %v9500
        %v9783 = vunpack.c.l.b16 %v9501
        %v9784 = vunpack.c.h.b16 %v9501
        %v9785 = vunpack.c.l.b16 %v9502
        %v9786 = vunpack.c.h.b16 %v9502
        %v9787 = vunpack.c.l.b16 %v9503
        %v9788 = vunpack.c.h.b16 %v9503
        %v9789 = vunpack.c.l.b16 %v9504
        %v9790 = vunpack.c.h.b16 %v9504
        %v9791 = vunpack.c.l.b16 %v9505
        %v9792 = vunpack.c.h.b16 %v9505
        %v9793 = vunpack.c.l.b16 %v9506
        %v9794 = vunpack.c.h.b16 %v9506
        %v9795 = vunpack.c.l.b16 %v9507
        %v9796 = vunpack.c.h.b16 %v9507
        %v9797 = vunpack.c.l.b16 %v9508
        %v9798 = vunpack.c.h.b16 %v9508
        %v9799 = vunpack.c.l.b16 %v9509
        %v9800 = vunpack.c.h.b16 %v9509
        %v9801 = vunpack.c.l.b16 %v9510
        %v9802 = vunpack.c.h.b16 %v9510
        %v9803 = vunpack.c.l.b16 %v9511
        %v9804 = vunpack.c.h.b16 %v9511
        %v9805 = vunpack.c.l.b16 %v9512
        %v9806 = vunpack.c.h.b16 %v9512
        %v9807 = vunpack.c.l.b16 %v9513
        %v9808 = vunpack.c.h.b16 %v9513
        %v9809 = vunpack.c.l.b16 %v9514
        %v9810 = vunpack.c.h.b16 %v9514
        %v9811 = vunpack.c.l.b16 %v9515
        %v9812 = vunpack.c.h.b16 %v9515
        %v9813 = vunpack.c.l.b16 %v9516
        %v9814 = vunpack.c.h.b16 %v9516
        %v9815 = vunpack.c.l.b16 %v9517
        %v9816 = vunpack.c.h.b16 %v9517
        %v9817 = vunpack.c.l.b16 %v9518
        %v9818 = vunpack.c.h.b16 %v9518
        %v9819 = vunpack.c.l.b16 %v9519
        %v9820 = vunpack.c.h.b16 %v9519
        %v9821 = vunpack.c.l.b16 %v9520
        %v9822 = vunpack.c.h.b16 %v9520
        %v9823 = vunpack.c.l.b16 %v9521
        %v9824 = vunpack.c.h.b16 %v9521
        %v9825 = vunpack.c.l.b16 %v9522
        %v9826 = vunpack.c.h.b16 %v9522
        %v9827 = vunpack.c.l.b16 %v9523
        %v9828 = vunpack.c.h.b16 %v9523
        %v9829 = vunpack.c.l.b16 %v9524
        %v9830 = vunpack.c.h.b16 %v9524
        %v9831 = vunpack.c.l.b16 %v9525
        %v9832 = vunpack.c.h.b16 %v9525
        %v9833 = vunpack.c.l.b16 %v9526
        %v9834 = vunpack.c.h.b16 %v9526
        %v9835 = vunpack.c.l.b16 %v9527
        %v9836 = vunpack.c.h.b16 %v9527
        %v9837 = vunpack.c.l.b16 %v9528
        %v9838 = vunpack.c.h.b16 %v9528
        %v9839 = vunpack.c.l.b16 %v9529
        %v9840 = vunpack.c.h.b16 %v9529
        %v9841 = vunpack.c.l.b16 %v9530
        %v9842 = vunpack.c.h.b16 %v9530
        %v9843 = vunpack.c.l.b16 %v9531
        %v9844 = vunpack.c.h.b16 %v9531
        %v9845 = vunpack.c.l.b16 %v9532
        %v9846 = vunpack.c.h.b16 %v9532
        %v9847 = vunpack.c.l.b16 %v9533
        %v9848 = vunpack.c.h.b16 %v9533
        %v9849 = vunpack.c.l.b16 %v9534
        %v9850 = vunpack.c.h.b16 %v9534
        %v9851 = vunpack.c.l.b16 %v9535
        %v9852 = vunpack.c.h.b16 %v9535
        %v9853 = vunpack.c.l.b16 %v9536
        %v9854 = vunpack.c.h.b16 %v9536
        %v9855 = vunpack.c.l.b16 %v9537
        %v9856 = vunpack.c.h.b16 %v9537
        %v9857 = vunpack.c.l.b16 %v9538
        %v9858 = vunpack.c.h.b16 %v9538
        %v9859 = vunpack.c.l.b16 %v9539
        %v9860 = vunpack.c.h.b16 %v9539
        %v9861 = vunpack.c.l.b16 %v9540
        %v9862 = vunpack.c.h.b16 %v9540
        %v9863 = vunpack.c.l.b16 %v9541
        %v9864 = vunpack.c.h.b16 %v9541
        %v9865 = vunpack.c.l.b16 %v9542
        %v9866 = vunpack.c.h.b16 %v9542
        %v9867 = vunpack.c.l.b16 %v9543
        %v9868 = vunpack.c.h.b16 %v9543
        %v9869 = vunpack.c.l.b16 %v9544
        %v9870 = vunpack.c.h.b16 %v9544
        %v9871 = vunpack.c.l.b16 %v9545
        %v9872 = vunpack.c.h.b16 %v9545
        %v9873 = vunpack.c.l.b16 %v9546
        %v9874 = vunpack.c.h.b16 %v9546
        %v9875 = vunpack.c.l.b16 %v9547
        %v9876 = vunpack.c.h.b16 %v9547
        %v9877 = vunpack.c.l.b16 %v9548
        %v9878 = vunpack.c.h.b16 %v9548
        %v9879 = vunpack.c.l.b16 %v9549
        %v9880 = vunpack.c.h.b16 %v9549
        %v9881 = vunpack.c.l.b16 %v9550
        %v9882 = vunpack.c.h.b16 %v9550
        %v9883 = vunpack.c.l.b16 %v9551
        %v9884 = vunpack.c.h.b16 %v9551
        %v9885 = vunpack.c.l.b16 %v9552
        %v9886 = vunpack.c.h.b16 %v9552
        %v9887 = vunpack.c.l.b16 %v9553
        %v9888 = vunpack.c.h.b16 %v9553
        %v9889 = vunpack.c.l.b16 %v9554
        %v9890 = vunpack.c.h.b16 %v9554
        %v9891 = vunpack.c.l.b16 %v9555
        %v9892 = vunpack.c.h.b16 %v9555
        %v9893 = vunpack.c.l.b16 %v9556
        %v9894 = vunpack.c.h.b16 %v9556
        %v9895 = vunpack.c.l.b16 %v9557
        %v9896 = vunpack.c.h.b16 %v9557
        %v9897 = vunpack.c.l.b16 %v9558
        %v9898 = vunpack.c.h.b16 %v9558
        %v9899 = vunpack.c.l.b16 %v9559
        %v9900 = vunpack.c.h.b16 %v9559
        %v9901 = vunpack.c.l.b16 %v9560
        %v9902 = vunpack.c.h.b16 %v9560
        %v9903 = vunpack.c.l.b16 %v9561
        %v9904 = vunpack.c.h.b16 %v9561
        %v9905 = vunpack.c.l.b16 %v9562
        %v9906 = vunpack.c.h.b16 %v9562
        %v9907 = vunpack.c.l.b16 %v9563
        %v9908 = vunpack.c.h.b16 %v9563
        %v9909 = vunpack.c.l.b16 %v9564
        %v9910 = vunpack.c.h.b16 %v9564
        %v9911 = vunpack.c.l.b16 %v9565
        %v9912 = vunpack.c.h.b16 %v9565
        %v9913 = vunpack.c.l.b16 %v9566
        %v9914 = vunpack.c.h.b16 %v9566
        %v9915 = vunpack.c.l.b16 %v9567
        %v9916 = vunpack.c.h.b16 %v9567
        %v9917 = vunpack.c.l.b16 %v9568
        %v9918 = vunpack.c.h.b16 %v9568
        %v9919 = vunpack.c.l.b16 %v9569
        %v9920 = vunpack.c.h.b16 %v9569
        %v9921 = vunpack.c.l.b16 %v9570
        %v9922 = vunpack.c.h.b16 %v9570
        %v9923 = vunpack.c.l.b16 %v9571
        %v9924 = vunpack.c.h.b16 %v9571
        %v9925 = vunpack.c.l.b16 %v9572
        %v9926 = vunpack.c.h.b16 %v9572
        %v9927 = vunpack.c.l.b16 %v9573
        %v9928 = vunpack.c.h.b16 %v9573
        %v9929 = vunpack.c.l.b16 %v9574
        %v9930 = vunpack.c.h.b16 %v9574
        %v9931 = vunpack.c.l.b16 %v9575
        %v9932 = vunpack.c.h.b16 %v9575
        %v9933 = vunpack.c.l.b16 %v9576
        %v9934 = vunpack.c.h.b16 %v9576
        %v9935 = vunpack.c.l.b16 %v9577
        %v9936 = vunpack.c.h.b16 %v9577
        %v9937 = vunpack.c.l.b16 %v9578
        %v9938 = vunpack.c.h.b16 %v9578
        %v9939 = vunpack.c.l.b16 %v9579
        %v9940 = vunpack.c.h.b16 %v9579
        %v9941 = vunpack.c.l.b16 %v9580
        %v9942 = vunpack.c.h.b16 %v9580
        %v9943 = vunpack.c.l.b16 %v9581
        %v9944 = vunpack.c.h.b16 %v9581
        %v9945 = vunpack.c.l.b16 %v9582
        %v9946 = vunpack.c.h.b16 %v9582
        %v9947 = vunpack.c.l.b16 %v9583
        %v9948 = vunpack.c.h.b16 %v9583
        %v9949 = vunpack.c.l.b16 %v9584
        %v9950 = vunpack.c.h.b16 %v9584
        %v9951 = vunpack.c.l.b16 %v9585
        %v9952 = vunpack.c.h.b16 %v9585
        %v9953 = vunpack.c.l.b16 %v9586
        %v9954 = vunpack.c.h.b16 %v9586
        %v9955 = vunpack.c.l.b16 %v9587
        %v9956 = vunpack.c.h.b16 %v9587
        %v9957 = vunpack.c.l.b16 %v9588
        %v9958 = vunpack.c.h.b16 %v9588
        %v9959 = vunpack.c.l.b16 %v9589
        %v9960 = vunpack.c.h.b16 %v9589
        %v9961 = vunpack.c.l.b16 %v9590
        %v9962 = vunpack.c.h.b16 %v9590
        %v9963 = vunpack.c.l.b16 %v9591
        %v9964 = vunpack.c.h.b16 %v9591
        %v9965 = vunpack.c.l.b16 %v9592
        %v9966 = vunpack.c.h.b16 %v9592
        %v9967 = vunpack.c.l.b16 %v9593
        %v9968 = vunpack.c.h.b16 %v9593
        %v9969 = vunpack.c.l.b16 %v9594
        %v9970 = vunpack.c.h.b16 %v9594
        %v9971 = vunpack.c.l.b16 %v9595
        %v9972 = vunpack.c.h.b16 %v9595
        %v9973 = vunpack.c.l.b16 %v9596
        %v9974 = vunpack.c.h.b16 %v9596
        %v9975 = vunpack.c.l.b16 %v9597
        %v9976 = vunpack.c.h.b16 %v9597
        %v9977 = vunpack.c.l.b16 %v9598
        %v9978 = vunpack.c.h.b16 %v9598
        %v9979 = vunpack.c.l.b16 %v9599
        %v9980 = vunpack.c.h.b16 %v9599
        %v9981 = vunpack.c.l.b16 %v9600
        %v9982 = vunpack.c.h.b16 %v9600
        %v9983 = vunpack.c.l.b16 %v9601
        %v9984 = vunpack.c.h.b16 %v9601
        %v9985 = vunpack.c.l.b16 %v9602
        %v9986 = vunpack.c.h.b16 %v9602
        %v9987 = vunpack.c.l.b16 %v9603
        %v9988 = vunpack.c.h.b16 %v9603
        %v9989 = vunpack.c.l.b16 %v9604
        %v9990 = vunpack.c.h.b16 %v9604
        %v9991 = vunpack.c.l.b16 %v9605
        %v9992 = vunpack.c.h.b16 %v9605
        %v9993 = vunpack.c.l.b16 %v9606
        %v9994 = vunpack.c.h.b16 %v9606
        %v9995 = vunpack.c.l.b16 %v9607
        %v9996 = vunpack.c.h.b16 %v9607
        %v9997 = vunpack.c.l.b16 %v9608
        %v9998 = vunpack.c.h.b16 %v9608
        %v9999 = vunpack.c.l.b16 %v9609
        %v10000 = vunpack.c.h.b16 %v9609
        %v10001 = vunpack.c.l.b16 %v9610
        %v10002 = vunpack.c.h.b16 %v9610
        %v10003 = vunpack.c.l.b16 %v9611
        %v10004 = vunpack.c.h.b16 %v9611
        %v10005 = vunpack.c.l.b16 %v9612
        %v10006 = vunpack.c.h.b16 %v9612
        %v10007 = vunpack.c.l.b16 %v9613
        %v10008 = vunpack.c.h.b16 %v9613
        %v10009 = vunpack.c.l.b16 %v9614
        %v10010 = vunpack.c.h.b16 %v9614
        %v10011 = vunpack.c.l.b16 %v9615
        %v10012 = vunpack.c.h.b16 %v9615
        %v10013 = vunpack.c.l.b16 %v9616
        %v10014 = vunpack.c.h.b16 %v9616
        %v10015 = vunpack.c.l.b16 %v9617
        %v10016 = vunpack.c.h.b16 %v9617
        %v10017 = vunpack.c.l.b16 %v9618
        %v10018 = vunpack.c.h.b16 %v9618
        %v10019 = vunpack.c.l.b16 %v9619
        %v10020 = vunpack.c.h.b16 %v9619
        %v10021 = vunpack.c.l.b16 %v9620
        %v10022 = vunpack.c.h.b16 %v9620
        %v10023 = vunpack.c.l.b16 %v9621
        %v10024 = vunpack.c.h.b16 %v9621
        %v10025 = vunpack.c.l.b16 %v9622
        %v10026 = vunpack.c.h.b16 %v9622
        %v10027 = vunpack.c.l.b16 %v9623
        %v10028 = vunpack.c.h.b16 %v9623
        %v10029 = vunpack.c.l.b16 %v9624
        %v10030 = vunpack.c.h.b16 %v9624
        %v10031 = vpack.c.b16 %v9779, %v9775
        %v10032 = vpack.c.b16 %v9780, %v9776
        %v10033 = vpack.c.b16 %v9781, %v9777
        %v10034 = vpack.c.b16 %v9782, %v9778
        %v10035 = vpack.c.b16 %v9787, %v9783
        %v10036 = vpack.c.b16 %v9788, %v9784
        %v10037 = vpack.c.b16 %v9789, %v9785
        %v10038 = vpack.c.b16 %v9790, %v9786
        %v10039 = vpack.c.b16 %v9795, %v9791
        %v10040 = vpack.c.b16 %v9796, %v9792
        %v10041 = vpack.c.b16 %v9797, %v9793
        %v10042 = vpack.c.b16 %v9798, %v9794
        %v10043 = vpack.c.b16 %v9803, %v9799
        %v10044 = vpack.c.b16 %v9804, %v9800
        %v10045 = vpack.c.b16 %v9805, %v9801
        %v10046 = vpack.c.b16 %v9806, %v9802
        %v10047 = vpack.c.b16 %v9811, %v9807
        %v10048 = vpack.c.b16 %v9812, %v9808
        %v10049 = vpack.c.b16 %v9813, %v9809
        %v10050 = vpack.c.b16 %v9814, %v9810
        %v10051 = vpack.c.b16 %v9819, %v9815
        %v10052 = vpack.c.b16 %v9820, %v9816
        %v10053 = vpack.c.b16 %v9821, %v9817
        %v10054 = vpack.c.b16 %v9822, %v9818
        %v10055 = vpack.c.b16 %v9827, %v9823
        %v10056 = vpack.c.b16 %v9828, %v9824
        %v10057 = vpack.c.b16 %v9829, %v9825
        %v10058 = vpack.c.b16 %v9830, %v9826
        %v10059 = vpack.c.b16 %v9835, %v9831
        %v10060 = vpack.c.b16 %v9836, %v9832
        %v10061 = vpack.c.b16 %v9837, %v9833
        %v10062 = vpack.c.b16 %v9838, %v9834
        %v10063 = vpack.c.b16 %v9843, %v9839
        %v10064 = vpack.c.b16 %v9844, %v9840
        %v10065 = vpack.c.b16 %v9845, %v9841
        %v10066 = vpack.c.b16 %v9846, %v9842
        %v10067 = vpack.c.b16 %v9851, %v9847
        %v10068 = vpack.c.b16 %v9852, %v9848
        %v10069 = vpack.c.b16 %v9853, %v9849
        %v10070 = vpack.c.b16 %v9854, %v9850
        %v10071 = vpack.c.b16 %v9859, %v9855
        %v10072 = vpack.c.b16 %v9860, %v9856
        %v10073 = vpack.c.b16 %v9861, %v9857
        %v10074 = vpack.c.b16 %v9862, %v9858
        %v10075 = vpack.c.b16 %v9867, %v9863
        %v10076 = vpack.c.b16 %v9868, %v9864
        %v10077 = vpack.c.b16 %v9869, %v9865
        %v10078 = vpack.c.b16 %v9870, %v9866
        %v10079 = vpack.c.b16 %v9875, %v9871
        %v10080 = vpack.c.b16 %v9876, %v9872
        %v10081 = vpack.c.b16 %v9877, %v9873
        %v10082 = vpack.c.b16 %v9878, %v9874
        %v10083 = vpack.c.b16 %v9883, %v9879
        %v10084 = vpack.c.b16 %v9884, %v9880
        %v10085 = vpack.c.b16 %v9885, %v9881
        %v10086 = vpack.c.b16 %v9886, %v9882
        %v10087 = vpack.c.b16 %v9891, %v9887
        %v10088 = vpack.c.b16 %v9892, %v9888
        %v10089 = vpack.c.b16 %v9893, %v9889
        %v10090 = vpack.c.b16 %v9894, %v9890
        %v10091 = vpack.c.b16 %v9899, %v9895
        %v10092 = vpack.c.b16 %v9900, %v9896
        %v10093 = vpack.c.b16 %v9901, %v9897
        %v10094 = vpack.c.b16 %v9902, %v9898
        %v10095 = vpack.c.b16 %v9907, %v9903
        %v10096 = vpack.c.b16 %v9908, %v9904
        %v10097 = vpack.c.b16 %v9909, %v9905
        %v10098 = vpack.c.b16 %v9910, %v9906
        %v10099 = vpack.c.b16 %v9915, %v9911
        %v10100 = vpack.c.b16 %v9916, %v9912
        %v10101 = vpack.c.b16 %v9917, %v9913
        %v10102 = vpack.c.b16 %v9918, %v9914
        %v10103 = vpack.c.b16 %v9923, %v9919
        %v10104 = vpack.c.b16 %v9924, %v9920
        %v10105 = vpack.c.b16 %v9925, %v9921
        %v10106 = vpack.c.b16 %v9926, %v9922
        %v10107 = vpack.c.b16 %v9931, %v9927
        %v10108 = vpack.c.b16 %v9932, %v9928
        %v10109 = vpack.c.b16 %v9933, %v9929
        %v10110 = vpack.c.b16 %v9934, %v9930
        %v10111 = vpack.c.b16 %v9939, %v9935
        %v10112 = vpack.c.b16 %v9940, %v9936
        %v10113 = vpack.c.b16 %v9941, %v9937
        %v10114 = vpack.c.b16 %v9942, %v9938
        %v10115 = vpack.c.b16 %v9947, %v9943
        %v10116 = vpack.c.b16 %v9948, %v9944
        %v10117 = vpack.c.b16 %v9949, %v9945
        %v10118 = vpack.c.b16 %v9950, %v9946
        %v10119 = vpack.c.b16 %v9955, %v9951
        %v10120 = vpack.c.b16 %v9956, %v9952
        %v10121 = vpack.c.b16 %v9957, %v9953
        %v10122 = vpack.c.b16 %v9958, %v9954
        %v10123 = vpack.c.b16 %v9963, %v9959
        %v10124 = vpack.c.b16 %v9964, %v9960
        %v10125 = vpack.c.b16 %v9965, %v9961
        %v10126 = vpack.c.b16 %v9966, %v9962
        %v10127 = vpack.c.b16 %v9971, %v9967
        %v10128 = vpack.c.b16 %v9972, %v9968
        %v10129 = vpack.c.b16 %v9973, %v9969
        %v10130 = vpack.c.b16 %v9974, %v9970
        %v10131 = vpack.c.b16 %v9979, %v9975
        %v10132 = vpack.c.b16 %v9980, %v9976
        %v10133 = vpack.c.b16 %v9981, %v9977
        %v10134 = vpack.c.b16 %v9982, %v9978
        %v10135 = vpack.c.b16 %v9987, %v9983
        %v10136 = vpack.c.b16 %v9988, %v9984
        %v10137 = vpack.c.b16 %v9989, %v9985
        %v10138 = vpack.c.b16 %v9990, %v9986
        %v10139 = vpack.c.b16 %v9995, %v9991
        %v10140 = vpack.c.b16 %v9996, %v9992
        %v10141 = vpack.c.b16 %v9997, %v9993
        %v10142 = vpack.c.b16 %v9998, %v9994
        %v10143 = vpack.c.b16 %v10003, %v9999
        %v10144 = vpack.c.b16 %v10004, %v10000
        %v10145 = vpack.c.b16 %v10005, %v10001
        %v10146 = vpack.c.b16 %v10006, %v10002
        %v10147 = vpack.c.b16 %v10011, %v10007
        %v10148 = vpack.c.b16 %v10012, %v10008
        %v10149 = vpack.c.b16 %v10013, %v10009
        %v10150 = vpack.c.b16 %v10014, %v10010
        %v10151 = vpack.c.b16 %v10019, %v10015
        %v10152 = vpack.c.b16 %v10020, %v10016
        %v10153 = vpack.c.b16 %v10021, %v10017
        %v10154 = vpack.c.b16 %v10022, %v10018
        %v10155 = vpack.c.b16 %v10027, %v10023
        %v10156 = vpack.c.b16 %v10028, %v10024
        %v10157 = vpack.c.b16 %v10029, %v10025
        %v10158 = vpack.c.b16 %v10030, %v10026
        %10287 = vmatprep.subr.bf16.mxu0 %v10032
        %10288 = vmatpush1.bf16.msra.mxu0 %v10031
        %10289 = vmatprep.subr.bf16.mxu0 %v10036
        %10290 = vmatpush1.bf16.msra.mxu0 %v10035
        %10291 = vmatprep.subr.bf16.mxu0 %v10040
        %10292 = vmatpush1.bf16.msra.mxu0 %v10039
        %10293 = vmatprep.subr.bf16.mxu0 %v10044
        %10294 = vmatpush1.bf16.msra.mxu0 %v10043
        %10295 = vmatprep.subr.bf16.mxu0 %v10048
        %10296 = vmatpush1.bf16.msra.mxu0 %v10047
        %10297 = vmatprep.subr.bf16.mxu0 %v10052
        %10298 = vmatpush1.bf16.msra.mxu0 %v10051
        %10299 = vmatprep.subr.bf16.mxu0 %v10056
        %10300 = vmatpush1.bf16.msra.mxu0 %v10055
        %10301 = vmatprep.subr.bf16.mxu0 %v10060
        %10302 = vmatpush1.bf16.msra.mxu0 %v10059
        %10303 = vmatprep.subr.bf16.mxu0 %v10064
        %10304 = vmatpush1.bf16.msra.mxu0 %v10063
        %10305 = vmatprep.subr.bf16.mxu0 %v10068
        %10306 = vmatpush1.bf16.msra.mxu0 %v10067
        %10307 = vmatprep.subr.bf16.mxu0 %v10072
        %10308 = vmatpush1.bf16.msra.mxu0 %v10071
        %10309 = vmatprep.subr.bf16.mxu0 %v10076
        %10310 = vmatpush1.bf16.msra.mxu0 %v10075
        %10311 = vmatprep.subr.bf16.mxu0 %v10080
        %10312 = vmatpush1.bf16.msra.mxu0 %v10079
        %10313 = vmatprep.subr.bf16.mxu0 %v10084
        %10314 = vmatpush1.bf16.msra.mxu0 %v10083
        %10315 = vmatprep.subr.bf16.mxu0 %v10088
        %10316 = vmatpush1.bf16.msra.mxu0 %v10087
        %10317 = vmatprep.subr.bf16.mxu0 %v10092
        %10318 = vmatpush1.bf16.msra.mxu0 %v10091
        %10319 = vmatprep.mubr.bf16.mxu0 %v9494
        %10320 = vmatmul.mubr.bf16.gmra.mrb[0].mxu0 %v9493
        %v10321 = vpop.f32.mrb[0].mxu0
        %v10322 = vadd.f32 %v9630, %v10321
        %v10323 = vpop.f32.mrb[0].mxu0
        %v10324 = vadd.f32 %v9634, %v10323
        %v10325 = vpop.f32.mrb[0].mxu0
        %v10326 = vpop.f32.mrb[0].mxu0
        %10327 = vdwg.mxu0
        %10328 = vmatprep.subr.bf16.mxu0 %v10096
        %10329 = vmatpush1.bf16.msra.mxu0 %v10095
        %10330 = vmatprep.subr.bf16.mxu0 %v10100
        %10331 = vmatpush1.bf16.msra.mxu0 %v10099
        %10332 = vmatprep.subr.bf16.mxu0 %v10104
        %10333 = vmatpush1.bf16.msra.mxu0 %v10103
        %10334 = vmatprep.subr.bf16.mxu0 %v10108
        %10335 = vmatpush1.bf16.msra.mxu0 %v10107
        %10336 = vmatprep.subr.bf16.mxu0 %v10112
        %10337 = vmatpush1.bf16.msra.mxu0 %v10111
        %10338 = vmatprep.subr.bf16.mxu0 %v10116
        %10339 = vmatpush1.bf16.msra.mxu0 %v10115
        %10340 = vmatprep.subr.bf16.mxu0 %v10120
        %10341 = vmatpush1.bf16.msra.mxu0 %v10119
        %10342 = vmatprep.subr.bf16.mxu0 %v10124
        %10343 = vmatpush1.bf16.msra.mxu0 %v10123
        %10344 = vmatprep.subr.bf16.mxu0 %v10128
        %10345 = vmatpush1.bf16.msra.mxu0 %v10127
        %10346 = vmatprep.subr.bf16.mxu0 %v10132
        %10347 = vmatpush1.bf16.msra.mxu0 %v10131
        %10348 = vmatprep.subr.bf16.mxu0 %v10136
        %10349 = vmatpush1.bf16.msra.mxu0 %v10135
        %10350 = vmatprep.subr.bf16.mxu0 %v10140
        %10351 = vmatpush1.bf16.msra.mxu0 %v10139
        %10352 = vmatprep.subr.bf16.mxu0 %v10144
        %10353 = vmatpush1.bf16.msra.mxu0 %v10143
        %10354 = vmatprep.subr.bf16.mxu0 %v10148
        %10355 = vmatpush1.bf16.msra.mxu0 %v10147
        %10356 = vmatprep.subr.bf16.mxu0 %v10152
        %10357 = vmatpush1.bf16.msra.mxu0 %v10151
        %10358 = vmatprep.subr.bf16.mxu0 %v10156
        %10359 = vmatpush1.bf16.msra.mxu0 %v10155
        %10360 = vmatprep.mubr.bf16.mxu0 %v9496
        %10361 = vmatmul.mubr.bf16.gmra.mrb[0].mxu0 %v9495
        %v10362 = vpop.f32.mrb[0].mxu0
        %v10363 = vadd.f32 %v10322, %v10362
        %v10364 = vpop.f32.mrb[0].mxu0
        %v10365 = vadd.f32 %v10324, %v10364
        %v10366 = vpop.f32.mrb[0].mxu0
        %v10367 = vpop.f32.mrb[0].mxu0
        %10368 = vdwg.mxu0
        %10369 = vmatprep.subr.bf16.mxu0 %v10034
        %10370 = vmatpush1.bf16.msra.mxu0 %v10033
        %10371 = vmatprep.subr.bf16.mxu0 %v10038
        %10372 = vmatpush1.bf16.msra.mxu0 %v10037
        %10373 = vmatprep.subr.bf16.mxu0 %v10042
        %10374 = vmatpush1.bf16.msra.mxu0 %v10041
        %10375 = vmatprep.subr.bf16.mxu0 %v10046
        %10376 = vmatpush1.bf16.msra.mxu0 %v10045
        %10377 = vmatprep.subr.bf16.mxu0 %v10050
        %10378 = vmatpush1.bf16.msra.mxu0 %v10049
        %10379 = vmatprep.subr.bf16.mxu0 %v10054
        %10380 = vmatpush1.bf16.msra.mxu0 %v10053
        %10381 = vmatprep.subr.bf16.mxu0 %v10058
        %10382 = vmatpush1.bf16.msra.mxu0 %v10057
        %10383 = vmatprep.subr.bf16.mxu0 %v10062
        %10384 = vmatpush1.bf16.msra.mxu0 %v10061
        %10385 = vmatprep.subr.bf16.mxu0 %v10066
        %10386 = vmatpush1.bf16.msra.mxu0 %v10065
        %10387 = vmatprep.subr.bf16.mxu0 %v10070
        %10388 = vmatpush1.bf16.msra.mxu0 %v10069
        %10389 = vmatprep.subr.bf16.mxu0 %v10074
        %10390 = vmatpush1.bf16.msra.mxu0 %v10073
        %10391 = vmatprep.subr.bf16.mxu0 %v10078
        %10392 = vmatpush1.bf16.msra.mxu0 %v10077
        %10393 = vmatprep.subr.bf16.mxu0 %v10082
        %10394 = vmatpush1.bf16.msra.mxu0 %v10081
        %10395 = vmatprep.subr.bf16.mxu0 %v10086
        %10396 = vmatpush1.bf16.msra.mxu0 %v10085
        %10397 = vmatprep.subr.bf16.mxu0 %v10090
        %10398 = vmatpush1.bf16.msra.mxu0 %v10089
        %10399 = vmatprep.subr.bf16.mxu0 %v10094
        %10400 = vmatpush1.bf16.msra.mxu0 %v10093
        %10401 = vmatprep.mubr.bf16.mxu0 %v9494
        %10402 = vmatmul.mubr.bf16.gmra.mrb[0].mxu0 %v9493
        %v10403 = vpop.f32.mrb[0].mxu0
        %v10404 = vadd.f32 %v9638, %v10403
        %v10405 = vpop.f32.mrb[0].mxu0
        %v10406 = vadd.f32 %v9642, %v10405
        %v10407 = vpop.f32.mrb[0].mxu0
        %v10408 = vpop.f32.mrb[0].mxu0
        %10409 = vdwg.mxu0
        %10410 = vmatprep.subr.bf16.mxu0 %v10098
        %10411 = vmatpush1.bf16.msra.mxu0 %v10097
        %10412 = vmatprep.subr.bf16.mxu0 %v10102
        %10413 = vmatpush1.bf16.msra.mxu0 %v10101
        %10414 = vmatprep.subr.bf16.mxu0 %v10106
        %10415 = vmatpush1.bf16.msra.mxu0 %v10105
        %10416 = vmatprep.subr.bf16.mxu0 %v10110
        %10417 = vmatpush1.bf16.msra.mxu0 %v10109
        %10418 = vmatprep.subr.bf16.mxu0 %v10114
        %10419 = vmatpush1.bf16.msra.mxu0 %v10113
        %10420 = vmatprep.subr.bf16.mxu0 %v10118
        %10421 = vmatpush1.bf16.msra.mxu0 %v10117
        %10422 = vmatprep.subr.bf16.mxu0 %v10122
        %10423 = vmatpush1.bf16.msra.mxu0 %v10121
        %10424 = vmatprep.subr.bf16.mxu0 %v10126
        %10425 = vmatpush1.bf16.msra.mxu0 %v10125
        %10426 = vmatprep.subr.bf16.mxu0 %v10130
        %10427 = vmatpush1.bf16.msra.mxu0 %v10129
        %10428 = vmatprep.subr.bf16.mxu0 %v10134
        %10429 = vmatpush1.bf16.msra.mxu0 %v10133
        %10430 = vmatprep.subr.bf16.mxu0 %v10138
        %10431 = vmatpush1.bf16.msra.mxu0 %v10137
        %10432 = vmatprep.subr.bf16.mxu0 %v10142
        %10433 = vmatpush1.bf16.msra.mxu0 %v10141
        %10434 = vmatprep.subr.bf16.mxu0 %v10146
        %10435 = vmatpush1.bf16.msra.mxu0 %v10145
        %10436 = vmatprep.subr.bf16.mxu0 %v10150
        %10437 = vmatpush1.bf16.msra.mxu0 %v10149
        %10438 = vmatprep.subr.bf16.mxu0 %v10154
        %10439 = vmatpush1.bf16.msra.mxu0 %v10153
        %10440 = vmatprep.subr.bf16.mxu0 %v10158
        %10441 = vmatpush1.bf16.msra.mxu0 %v10157
        %10442 = vmatprep.mubr.bf16.mxu0 %v9496
        %10443 = vmatmul.mubr.bf16.gmra.mrb[0].mxu0 %v9495
        %v10444 = vpop.f32.mrb[0].mxu0
        %v10445 = vadd.f32 %v10404, %v10444
        %v10446 = vpop.f32.mrb[0].mxu0
        %v10447 = vadd.f32 %v10406, %v10446
        %v10448 = vpop.f32.mrb[0].mxu0
        %v10449 = vpop.f32.mrb[0].mxu0
        %10450 = vdwg.mxu0
        %vm10451 = vcmp.gt.f32.partialorder %v10363, 0.0
        %vm10452 = vcmp.gt.f32.partialorder %v10365, 0.0
        %vm10453 = vcmp.gt.f32.partialorder %v10445, 0.0
        %vm10454 = vcmp.gt.f32.partialorder %v10447, 0.0
        %v10455 = vmul.f32 %v10363, 0.3
        %v10456 = vmul.f32 %v10365, 0.3
        %v10457 = vmul.f32 %v10445, 0.3
        %v10458 = vmul.f32 %v10447, 0.3
        %v10459 = vsel %vm10451, %v10363, %v10455
        %v10460 = vsel %vm10452, %v10365, %v10456
        %v10461 = vsel %vm10453, %v10445, %v10457
        %v10462 = vsel %vm10454, %v10447, %v10458
        %v10463 = vpack.c.bf16 %v10459, %v10459
        %v10464 = vpack.c.bf16 %v10460, %v10460
        %v10465 = vpack.c.bf16 %v10461, %v10461
        %v10466 = vpack.c.bf16 %v10462, %v10462
        %v10467 = vld [vmem:[%s13] sm:$0xf]
        %v10468 = vld [vmem:[%s13 + $0x4] sm:$0xf]
        %v10469 = vld [vmem:[%s13 + $0x8] sm:$0xf]
        %v10470 = vld [vmem:[%s13 + $0xc] sm:$0xf]
        %v10471 = vld [vmem:[%s13 + $0x10] sm:$0xf]
        %v10472 = vld [vmem:[%s13 + $0x14] sm:$0xf]
        %v10473 = vld [vmem:[%s13 + $0x18] sm:$0xf]
        %v10474 = vld [vmem:[%s13 + $0x1c] sm:$0xf]
        %v10475 = vld [vmem:[%s13 + $0x20] sm:$0xf]
        %v10476 = vld [vmem:[%s13 + $0x24] sm:$0xf]
        %v10477 = vld [vmem:[%s13 + $0x28] sm:$0xf]
        %v10478 = vld [vmem:[%s13 + $0x2c] sm:$0xf]
        %v10479 = vld [vmem:[%s13 + $0x30] sm:$0xf]
        %v10480 = vld [vmem:[%s13 + $0x34] sm:$0xf]
        %v10481 = vld [vmem:[%s13 + $0x38] sm:$0xf]
        %v10482 = vld [vmem:[%s13 + $0x3c] sm:$0xf]
        %v10483 = vld [vmem:[%s13 + $0x40] sm:$0xf]
        %v10484 = vld [vmem:[%s13 + $0x44] sm:$0xf]
        %v10485 = vld [vmem:[%s13 + $0x48] sm:$0xf]
        %v10486 = vld [vmem:[%s13 + $0x4c] sm:$0xf]
        %v10487 = vld [vmem:[%s13 + $0x50] sm:$0xf]
        %v10488 = vld [vmem:[%s13 + $0x54] sm:$0xf]
        %v10489 = vld [vmem:[%s13 + $0x58] sm:$0xf]
        %v10490 = vld [vmem:[%s13 + $0x5c] sm:$0xf]
        %v10491 = vld [vmem:[%s13 + $0x60] sm:$0xf]
        %v10492 = vld [vmem:[%s13 + $0x64] sm:$0xf]
        %v10493 = vld [vmem:[%s13 + $0x68] sm:$0xf]
        %v10494 = vld [vmem:[%s13 + $0x6c] sm:$0xf]
        %v10495 = vld [vmem:[%s13 + $0x70] sm:$0xf]
        %v10496 = vld [vmem:[%s13 + $0x74] sm:$0xf]
        %v10497 = vld [vmem:[%s13 + $0x78] sm:$0xf]
        %v10498 = vld [vmem:[%s13 + $0x7c] sm:$0xf]
        %v10499 = vld [vmem:[%s13 + $0x80] sm:$0xf]
        %v10500 = vld [vmem:[%s13 + $0x84] sm:$0xf]
        %v10501 = vld [vmem:[%s13 + $0x88] sm:$0xf]
        %v10502 = vld [vmem:[%s13 + $0x8c] sm:$0xf]
        %v10503 = vld [vmem:[%s13 + $0x90] sm:$0xf]
        %v10504 = vld [vmem:[%s13 + $0x94] sm:$0xf]
        %v10505 = vld [vmem:[%s13 + $0x98] sm:$0xf]
        %v10506 = vld [vmem:[%s13 + $0x9c] sm:$0xf]
        %v10507 = vld [vmem:[%s13 + $0xa0] sm:$0xf]
        %v10508 = vld [vmem:[%s13 + $0xa4] sm:$0xf]
        %v10509 = vld [vmem:[%s13 + $0xa8] sm:$0xf]
        %v10510 = vld [vmem:[%s13 + $0xac] sm:$0xf]
        %v10511 = vld [vmem:[%s13 + $0xb0] sm:$0xf]
        %v10512 = vld [vmem:[%s13 + $0xb4] sm:$0xf]
        %v10513 = vld [vmem:[%s13 + $0xb8] sm:$0xf]
        %v10514 = vld [vmem:[%s13 + $0xbc] sm:$0xf]
        %v10515 = vld [vmem:[%s13 + $0xc0] sm:$0xf]
        %v10516 = vld [vmem:[%s13 + $0xc4] sm:$0xf]
        %v10517 = vld [vmem:[%s13 + $0xc8] sm:$0xf]
        %v10518 = vld [vmem:[%s13 + $0xcc] sm:$0xf]
        %v10519 = vld [vmem:[%s13 + $0xd0] sm:$0xf]
        %v10520 = vld [vmem:[%s13 + $0xd4] sm:$0xf]
        %v10521 = vld [vmem:[%s13 + $0xd8] sm:$0xf]
        %v10522 = vld [vmem:[%s13 + $0xdc] sm:$0xf]
        %v10523 = vld [vmem:[%s13 + $0xe0] sm:$0xf]
        %v10524 = vld [vmem:[%s13 + $0xe4] sm:$0xf]
        %v10525 = vld [vmem:[%s13 + $0xe8] sm:$0xf]
        %v10526 = vld [vmem:[%s13 + $0xec] sm:$0xf]
        %v10527 = vld [vmem:[%s13 + $0xf0] sm:$0xf]
        %v10528 = vld [vmem:[%s13 + $0xf4] sm:$0xf]
        %v10529 = vld [vmem:[%s13 + $0xf8] sm:$0xf]
        %v10530 = vld [vmem:[%s13 + $0xfc] sm:$0xf]
        %v10531 = vld [vmem:[%s14] sm:$0x1]
        %v10533 = vlaneseq
        %v10534 = vshrl.u32 %v10533, 7
        %v10535 = vsub.s32 0, %v10534
        %v10536 = vrot.slane %v10531, %v10535
        %v10602 = vunpack.c.l.b16 %v10467
        %v10603 = vunpack.c.l.b16 %v10468
        %v10604 = vunpack.c.l.b16 %v10469
        %v10605 = vunpack.c.l.b16 %v10470
        %v10606 = vunpack.c.l.b16 %v10471
        %v10607 = vunpack.c.l.b16 %v10472
        %v10608 = vunpack.c.l.b16 %v10473
        %v10609 = vunpack.c.l.b16 %v10474
        %v10610 = vunpack.c.l.b16 %v10475
        %v10611 = vunpack.c.l.b16 %v10476
        %v10612 = vunpack.c.l.b16 %v10477
        %v10613 = vunpack.c.l.b16 %v10478
        %v10614 = vunpack.c.l.b16 %v10479
        %v10615 = vunpack.c.l.b16 %v10480
        %v10616 = vunpack.c.l.b16 %v10481
        %v10617 = vunpack.c.l.b16 %v10482
        %v10618 = vunpack.c.l.b16 %v10483
        %v10619 = vunpack.c.l.b16 %v10484
        %v10620 = vunpack.c.l.b16 %v10485
        %v10621 = vunpack.c.l.b16 %v10486
        %v10622 = vunpack.c.l.b16 %v10487
        %v10623 = vunpack.c.l.b16 %v10488
        %v10624 = vunpack.c.l.b16 %v10489
        %v10625 = vunpack.c.l.b16 %v10490
        %v10626 = vunpack.c.l.b16 %v10491
        %v10627 = vunpack.c.l.b16 %v10492
        %v10628 = vunpack.c.l.b16 %v10493
        %v10629 = vunpack.c.l.b16 %v10494
        %v10630 = vunpack.c.l.b16 %v10495
        %v10631 = vunpack.c.l.b16 %v10496
        %v10632 = vunpack.c.l.b16 %v10497
        %v10633 = vunpack.c.l.b16 %v10498
        %v10634 = vunpack.c.l.b16 %v10499
        %v10635 = vunpack.c.l.b16 %v10500
        %v10636 = vunpack.c.l.b16 %v10501
        %v10637 = vunpack.c.l.b16 %v10502
        %v10638 = vunpack.c.l.b16 %v10503
        %v10639 = vunpack.c.l.b16 %v10504
        %v10640 = vunpack.c.l.b16 %v10505
        %v10641 = vunpack.c.l.b16 %v10506
        %v10642 = vunpack.c.l.b16 %v10507
        %v10643 = vunpack.c.l.b16 %v10508
        %v10644 = vunpack.c.l.b16 %v10509
        %v10645 = vunpack.c.l.b16 %v10510
        %v10646 = vunpack.c.l.b16 %v10511
        %v10647 = vunpack.c.l.b16 %v10512
        %v10648 = vunpack.c.l.b16 %v10513
        %v10649 = vunpack.c.l.b16 %v10514
        %v10650 = vunpack.c.l.b16 %v10515
        %v10651 = vunpack.c.l.b16 %v10516
        %v10652 = vunpack.c.l.b16 %v10517
        %v10653 = vunpack.c.l.b16 %v10518
        %v10654 = vunpack.c.l.b16 %v10519
        %v10655 = vunpack.c.l.b16 %v10520
        %v10656 = vunpack.c.l.b16 %v10521
        %v10657 = vunpack.c.l.b16 %v10522
        %v10658 = vunpack.c.l.b16 %v10523
        %v10659 = vunpack.c.l.b16 %v10524
        %v10660 = vunpack.c.l.b16 %v10525
        %v10661 = vunpack.c.l.b16 %v10526
        %v10662 = vunpack.c.l.b16 %v10527
        %v10663 = vunpack.c.l.b16 %v10528
        %v10664 = vunpack.c.l.b16 %v10529
        %v10665 = vunpack.c.l.b16 %v10530
        %v10666 = vpack.c.b16 %v10603, %v10602
        %v10667 = vpack.c.b16 %v10605, %v10604
        %v10668 = vpack.c.b16 %v10607, %v10606
        %v10669 = vpack.c.b16 %v10609, %v10608
        %v10670 = vpack.c.b16 %v10611, %v10610
        %v10671 = vpack.c.b16 %v10613, %v10612
        %v10672 = vpack.c.b16 %v10615, %v10614
        %v10673 = vpack.c.b16 %v10617, %v10616
        %v10674 = vpack.c.b16 %v10619, %v10618
        %v10675 = vpack.c.b16 %v10621, %v10620
        %v10676 = vpack.c.b16 %v10623, %v10622
        %v10677 = vpack.c.b16 %v10625, %v10624
        %v10678 = vpack.c.b16 %v10627, %v10626
        %v10679 = vpack.c.b16 %v10629, %v10628
        %v10680 = vpack.c.b16 %v10631, %v10630
        %v10681 = vpack.c.b16 %v10633, %v10632
        %v10682 = vpack.c.b16 %v10635, %v10634
        %v10683 = vpack.c.b16 %v10637, %v10636
        %v10684 = vpack.c.b16 %v10639, %v10638
        %v10685 = vpack.c.b16 %v10641, %v10640
        %v10686 = vpack.c.b16 %v10643, %v10642
        %v10687 = vpack.c.b16 %v10645, %v10644
        %v10688 = vpack.c.b16 %v10647, %v10646
        %v10689 = vpack.c.b16 %v10649, %v10648
        %v10690 = vpack.c.b16 %v10651, %v10650
        %v10691 = vpack.c.b16 %v10653, %v10652
        %v10692 = vpack.c.b16 %v10655, %v10654
        %v10693 = vpack.c.b16 %v10657, %v10656
        %v10694 = vpack.c.b16 %v10659, %v10658
        %v10695 = vpack.c.b16 %v10661, %v10660
        %v10696 = vpack.c.b16 %v10663, %v10662
        %v10697 = vpack.c.b16 %v10665, %v10664
        %10730 = vmatprep.subr.bf16.mxu0 0
        %10731 = vmatpush1.bf16.msra.mxu0 %v10666
        %10732 = vmatprep.subr.bf16.mxu0 0
        %10733 = vmatpush1.bf16.msra.mxu0 %v10667
        %10734 = vmatprep.subr.bf16.mxu0 0
        %10735 = vmatpush1.bf16.msra.mxu0 %v10668
        %10736 = vmatprep.subr.bf16.mxu0 0
        %10737 = vmatpush1.bf16.msra.mxu0 %v10669
        %10738 = vmatprep.subr.bf16.mxu0 0
        %10739 = vmatpush1.bf16.msra.mxu0 %v10670
        %10740 = vmatprep.subr.bf16.mxu0 0
        %10741 = vmatpush1.bf16.msra.mxu0 %v10671
        %10742 = vmatprep.subr.bf16.mxu0 0
        %10743 = vmatpush1.bf16.msra.mxu0 %v10672
        %10744 = vmatprep.subr.bf16.mxu0 0
        %10745 = vmatpush1.bf16.msra.mxu0 %v10673
        %10746 = vmatprep.subr.bf16.mxu0 0
        %10747 = vmatpush1.bf16.msra.mxu0 %v10674
        %10748 = vmatprep.subr.bf16.mxu0 0
        %10749 = vmatpush1.bf16.msra.mxu0 %v10675
        %10750 = vmatprep.subr.bf16.mxu0 0
        %10751 = vmatpush1.bf16.msra.mxu0 %v10676
        %10752 = vmatprep.subr.bf16.mxu0 0
        %10753 = vmatpush1.bf16.msra.mxu0 %v10677
        %10754 = vmatprep.subr.bf16.mxu0 0
        %10755 = vmatpush1.bf16.msra.mxu0 %v10678
        %10756 = vmatprep.subr.bf16.mxu0 0
        %10757 = vmatpush1.bf16.msra.mxu0 %v10679
        %10758 = vmatprep.subr.bf16.mxu0 0
        %10759 = vmatpush1.bf16.msra.mxu0 %v10680
        %10760 = vmatprep.subr.bf16.mxu0 0
        %10761 = vmatpush1.bf16.msra.mxu0 %v10681
        %10762 = vmatprep.mubr.bf16.mxu0 %v10464
        %10763 = vmatmul.mubr.bf16.gmra.mrb[0].mxu0 %v10463
        %v10764 = vpop.f32.mrb[0].mxu0
        %v10765 = vadd.f32 %v10536, %v10764
        %v10766 = vpop.f32.mrb[0].mxu0
        %v10767 = vpop.f32.mrb[0].mxu0
        %v10768 = vpop.f32.mrb[0].mxu0
        %10769 = vdwg.mxu0
        %10770 = vmatprep.subr.bf16.mxu0 0
        %10771 = vmatpush1.bf16.msra.mxu0 %v10682
        %10772 = vmatprep.subr.bf16.mxu0 0
        %10773 = vmatpush1.bf16.msra.mxu0 %v10683
        %10774 = vmatprep.subr.bf16.mxu0 0
        %10775 = vmatpush1.bf16.msra.mxu0 %v10684
        %10776 = vmatprep.subr.bf16.mxu0 0
        %10777 = vmatpush1.bf16.msra.mxu0 %v10685
        %10778 = vmatprep.subr.bf16.mxu0 0
        %10779 = vmatpush1.bf16.msra.mxu0 %v10686
        %10780 = vmatprep.subr.bf16.mxu0 0
        %10781 = vmatpush1.bf16.msra.mxu0 %v10687
        %10782 = vmatprep.subr.bf16.mxu0 0
        %10783 = vmatpush1.bf16.msra.mxu0 %v10688
        %10784 = vmatprep.subr.bf16.mxu0 0
        %10785 = vmatpush1.bf16.msra.mxu0 %v10689
        %10786 = vmatprep.subr.bf16.mxu0 0
        %10787 = vmatpush1.bf16.msra.mxu0 %v10690
        %10788 = vmatprep.subr.bf16.mxu0 0
        %10789 = vmatpush1.bf16.msra.mxu0 %v10691
        %10790 = vmatprep.subr.bf16.mxu0 0
        %10791 = vmatpush1.bf16.msra.mxu0 %v10692
        %10792 = vmatprep.subr.bf16.mxu0 0
        %10793 = vmatpush1.bf16.msra.mxu0 %v10693
        %10794 = vmatprep.subr.bf16.mxu0 0
        %10795 = vmatpush1.bf16.msra.mxu0 %v10694
        %10796 = vmatprep.subr.bf16.mxu0 0
        %10797 = vmatpush1.bf16.msra.mxu0 %v10695
        %10798 = vmatprep.subr.bf16.mxu0 0
        %10799 = vmatpush1.bf16.msra.mxu0 %v10696
        %10800 = vmatprep.subr.bf16.mxu0 0
        %10801 = vmatpush1.bf16.msra.mxu0 %v10697
        %10802 = vmatprep.mubr.bf16.mxu0 %v10466
        %10803 = vmatmul.mubr.bf16.gmra.mrb[0].mxu0 %v10465
        %v10804 = vpop.f32.mrb[0].mxu0
        %v10805 = vadd.f32 %v10765, %v10804
        %v10806 = vpop.f32.mrb[0].mxu0
        %v10807 = vpop.f32.mrb[0].mxu0
        %v10808 = vpop.f32.mrb[0].mxu0
        %10809 = vdwg.mxu0
        %10810 = vst [vmem:[%s518] sm:$0xf] %v10805
        %s10811 = sand.u32 %s359, 1
        %s10812 = scalar_lea.sflag [#allocation4], %s10811
        %s10813 = sand.u32 %s359, 1
        %s10814 = smul.addr %s10813, 4
        %s10815 = scalar_lea.vmem [#allocation7], %s10814
        // Predicated region
        $region89: #{rotation_estimation_forward.1} parent=79 // pred_check
          %p10816 = pneg %p369
        $region90: #{rotation_estimation_forward.1} parent=79 // pred_check_branch
          %10818 = sbr.rel (%p10816) target = $region92
        $region91: #{rotation_estimation_forward.1} parent=79 // pred_region
          %s10820 = ssub.s32 64, 64
          %10821 = vsyncadd %s10812, %s10820
          %s10822 = smul.addr %s31, 64
          %s10823 = scalar_lea.hbm %s15, %s10822
          %s10825 = sshll.u32 %s10815, 4
          %s10826 = int_to_ptr.vmem [resolvable:$true] %s10825
          %10828 = dma.vmem_to_hbm [thread:$0]  %s10826, 64, %s10823, %s10812
        $region92: #{rotation_estimation_forward.1} parent=79 // pred_fallthru
          _
      $region80: #{rotation_estimation_forward.1} parent=5 // pred_fallthru
        _
      %p10829 = scmp.le.s32.totalorder 2, %s26
      // Predicated region
      $region93: #{rotation_estimation_forward.1} parent=5 // pred_check
        %p10830 = pneg %p10829
      $region94: #{rotation_estimation_forward.1} parent=5 // pred_check_branch
        %10832 = sbr.rel (%p10830) target = $region96
      $region95: #{rotation_estimation_forward.1} parent=5 // pred_region
        %s10833 = ssub.s32 %s26, 2
        // Predicated region
        $region97: #{rotation_estimation_forward.1} parent=95 // pred_check
          %p10834 = pneg %p375
        $region98: #{rotation_estimation_forward.1} parent=95 // pred_check_branch
          %10836 = sbr.rel (%p10834) target = $region100
        $region99: #{rotation_estimation_forward.1} parent=95 // pred_region
          %s10837 = sand.u32 %s360, 1
          %s10838 = scalar_lea.sflag [#allocation4], %s10837
          %s10839 = sand.u32 %s360, 1
          %s10840 = smul.addr %s10839, 4
          %s10841 = scalar_lea.vmem [#allocation7], %s10840
          %10842 = dma.done %s10838, 64
        $region100: #{rotation_estimation_forward.1} parent=95 // pred_fallthru
          _
      $region96: #{rotation_estimation_forward.1} parent=5 // pred_fallthru
        _
    $region6: #{rotation_estimation_forward.1} parent=1 // loop_footer
      %s30 = sadd.s32 1, %s26
    $region7: #{rotation_estimation_forward.1} parent=1 // loop_footer_branch
      %25 = sbr.rel target = $region3
    $region8: #{rotation_estimation_forward.1} parent=1 // loop_exit
      _
    %10843 = vsyncpa [#allocation3], 1
    %s10844 = scalar_lea.sflag [#allocation3], 1
    %10845 = vsyncpa %s10844, 1
    %10846 = vsyncpa [#allocation6], 1
    %10847 = vsyncpa [#allocation4], 1
    %s10848 = scalar_lea.sflag [#allocation4], 1
    %10849 = vsyncpa %s10848, 1

</llo_original>
